<compile_context>
chip_gen: v7x
topology: tpu7x:2x2x1
jax: 0.10.0
libtpu: 0.0.40
codegen_flags: <defaults>
</compile_context>

<pallas_src>
import functools

import jax
import jax.numpy as jnp
from jax import lax
from jax.experimental import pallas as pl
from jax.experimental.pallas import tpu as pltpu


# ----------------------------------------------------------------------------- kernel
def _bottleneck_kernel(
    x_ref,                                   # (1, T, F, Cin)            bf16
    wh_ref, bh_ref,                          # (Cin, Cout) bf16, (1, Cout) f32
    wa0_ref, ba0_ref, wa1_ref, ba1_ref, wa2_ref, ba2_ref,   # temporal DW (K, Cout)/(1, Cout) f32
    wb0_ref, bb0_ref, wb1_ref, bb1_ref, wb2_ref, bb2_ref,   # freq     DW (K, Cout)/(1, Cout) f32
    *tail_refs,                              # tail weights/biases, out_ref, padt, padf
    pad_t, pad_f, fuse_cd,
):
    if fuse_cd:
        wcd_ref, bcd_ref, out_ref, padt_ref, padf_ref = tail_refs
    else:
        wc_ref, bc_ref, wd_ref, bd_ref, out_ref, padt_ref, padf_ref = tail_refs

    _, T, F, Cin = x_ref.shape
    Cout = out_ref.shape[3]

    # --- zero only the halo borders of the padded scratch buffers.  Interiors are
    #     always fully rewritten below.  Done every grid step (halo << interior) so the
    #     kernel stays correct when the batch axis is sharded across TensorCores.
    padt_ref[pl.ds(0, pad_t), :, :] = jnp.zeros((pad_t, F, Cout), jnp.float32)
    padt_ref[pl.ds(pad_t + T, pad_t), :, :] = jnp.zeros((pad_t, F, Cout), jnp.float32)
    padf_ref[:, pl.ds(0, pad_f), :] = jnp.zeros((T, pad_f, Cout), jnp.float32)
    padf_ref[:, pl.ds(pad_f + F, pad_f), :] = jnp.zeros((T, pad_f, Cout), jnp.float32)

    # --- a_head : 1x1 conv == channel matmul (bf16 MXU, f32 accumulate) + folded BN bias
    x = x_ref[0]                                                   # (T, F, Cin)  bf16
    xh = jnp.dot(x.reshape(T * F, Cin), wh_ref[...],
                 preferred_element_type=jnp.float32)               # (T*F, Cout)  f32
    xh = xh + bh_ref[...]
    padt_ref[pl.ds(pad_t, T), :, :] = xh.reshape(T, F, Cout)

    def dw_temporal(w_ref, b_ref):
        # depthwise [K,1] conv along T (BN scale pre-folded into w) -> +bias -> ReLU
        K = w_ref.shape[0]
        p = K // 2
        acc = padt_ref[pl.ds(pad_t - p, T), :, :] * w_ref[pl.ds(0, 1), :]
        for k in range(1, K):                                      # static unroll
            acc = acc + padt_ref[pl.ds(pad_t + k - p, T), :, :] * w_ref[pl.ds(k, 1), :]
        return jnp.maximum(acc + b_ref[...], 0.0)

    def dw_freq(w_ref, b_ref):
        # depthwise [1,K] conv along F over the branch value just stored into padf_ref
        K = w_ref.shape[0]
        p = K // 2
        acc = padf_ref[:, pl.ds(pad_f - p, F), :] * w_ref[pl.ds(0, 1), :]
        for k in range(1, K):                                      # static unroll
            acc = acc + padf_ref[:, pl.ds(pad_f + k - p, F), :] * w_ref[pl.ds(k, 1), :]
        return jnp.maximum(acc + b_ref[...], 0.0)

    # --- three DW branches, fused per branch so only one (T,F,Cout) intermediate lives.
    comb = None
    for wa_ref, ba_ref, wb_ref, bb_ref in (
        (wa0_ref, ba0_ref, wb0_ref, bb0_ref),      # branch "a"        (temp_k x 1, 1 x freq_k)
        (wa1_ref, ba1_ref, wb1_ref, bb1_ref),      # branch "a_small"  (3 x 1,      1 x 3)
        (wa2_ref, ba2_ref, wb2_ref, bb2_ref),      # branch "a_medium" (11 x 1,     1 x 11)
    ):
        t = dw_temporal(wa_ref, ba_ref)
        padf_ref[:, pl.ds(pad_f, F), :] = t
        y = dw_freq(wb_ref, bb_ref)
        comb = y if comb is None else comb + y

    combf = comb.reshape(T * F, Cout).astype(jnp.bfloat16)

    # --- tail 1x1 convs (+ folded BN bias); fused into one MXU pass when profitable
    if fuse_cd:
        z = jnp.dot(combf, wcd_ref[...], preferred_element_type=jnp.float32) + bcd_ref[...]
    else:
        zc = jnp.dot(combf, wc_ref[...], preferred_element_type=jnp.float32) + bc_ref[...]
        z = jnp.dot(zc.astype(jnp.bfloat16), wd_ref[...],
                    preferred_element_type=jnp.float32) + bd_ref[...]

    out_ref[...] = z.reshape(1, T, F, Cout).astype(out_ref.dtype)


# ----------------------------------------------------------------------------- wrapper
def msthreeway_dw_bottleneck_pallas(x_nchw, P, *, stride=1, stride_1x1=False, dilation=1):
    assert not stride_1x1, "stride_1x1=True not supported"
    assert dilation == 1, "dilation != 1 not supported"

    dim_in = x_nchw.shape[1]
    dim_out = P["w_head_oihw"].shape[0]
    dim_inner = P["w_c_oihw"].shape[0]

    # a_head is the only strided conv with stride_1x1=False, and only when
    # dim_in != dim_out.  A strided 1x1 conv (no padding) == subsample + unstrided 1x1.
    if dim_in != dim_out and stride > 1:
        x_nchw = x_nchw[:, :, ::stride, ::stride]

    # TODO(synk): keeping activations NHWC across layers would avoid this transpose's
    # extra HBM pass; kept to preserve the module's NCHW interface.
    x = jnp.transpose(x_nchw, (0, 2, 3, 1)).astype(jnp.bfloat16)   # (N, T, F, Cin)
    N, T, F, Cin = x.shape
    Cout, Cinner = dim_out, dim_inner
    f32 = jnp.float32

    def scale_bias(sb):
        return sb[0].astype(f32), sb[1].astype(f32)

    # ---- fold BN scales into the conv weights (done once, wrapper-side) -------------
    s_h, b_h = scale_bias(P["sb_head"])
    w_head = (P["w_head_oihw"][:, :, 0, 0].T * s_h[None, :]).astype(jnp.bfloat16)  # (Cin, Cout)
    bh = b_h[None, :]                                                              # (1, Cout)

    def dw_temporal_w(name, sbname):
        s, b = scale_bias(P[sbname])
        w = (P[name][:, 0, :, 0].T * s[None, :]).astype(f32)       # (K, Cout)
        return w, b[None, :]

    def dw_freq_w(name, sbname):
        s, b = scale_bias(P[sbname])
        w = (P[name][:, 0, 0, :].T * s[None, :]).astype(f32)       # (K, Cout)
        return w, b[None, :]

    wa0, ba0 = dw_temporal_w("w_a_oihw", "sb_a")
    wa1, ba1 = dw_temporal_w("w_a_small_oihw", "sb_a_small")
    wa2, ba2 = dw_temporal_w("w_a_medium_oihw", "sb_a_medium")
    wb0, bb0 = dw_freq_w("w_b_oihw", "sb_b")
    wb1, bb1 = dw_freq_w("w_b_small_oihw", "sb_b_small")
    wb2, bb2 = dw_freq_w("w_b_medium_oihw", "sb_b_medium")

    s_c, b_c = scale_bias(P["sb_c"])
    s_d, b_d = scale_bias(P["sb_d"])
    wc = P["w_c_oihw"][:, :, 0, 0].T * s_c[None, :]                # (Cout, Cinner) f32
    wd = P["w_d_oihw"][:, :, 0, 0].T * s_d[None, :]                # (Cinner, Cout) f32

    # fuse c & d (no nonlinearity between them) when it does not increase MXU work
    fuse_cd = Cout <= 2 * Cinner
    if fuse_cd:
        tail = [jnp.dot(wc, wd).astype(jnp.bfloat16),              # (Cout, Cout)
                (jnp.dot(b_c, wd) + b_d)[None, :]]                 # (1, Cout) f32
    else:
        tail = [wc.astype(jnp.bfloat16), b_c[None, :],
                wd.astype(jnp.bfloat16), b_d[None, :]]

    temp_k = wa0.shape[0]
    freq_k = wb0.shape[0]
    assert temp_k % 2 == 1 and freq_k % 2 == 1, "odd kernel sizes assumed"
    pad_t = max(temp_k // 2, 11 // 2)                              # covers the 11-tap branch
    pad_f = ((max(freq_k // 2, 11 // 2) + 7) // 8) * 8             # 8-aligned interior store

    kernel_inputs = [
        x,
        w_head, bh,
        wa0, ba0, wa1, ba1, wa2, ba2,
        wb0, bb0, wb1, bb1, wb2, bb2,
        *tail,
    ]

    in_specs = [pl.BlockSpec((1, T, F, Cin), lambda n: (n, 0, 0, 0))]
    for p in kernel_inputs[1:]:
        in_specs.append(pl.BlockSpec(p.shape, lambda n: (0, 0)))   # all params are 2-D

    scratch_shapes = [
        pltpu.VMEM((T + 2 * pad_t, F, Cout), jnp.float32),         # zero-padded along T
        pltpu.VMEM((T, F + 2 * pad_f, Cout), jnp.float32),         # zero-padded along F
    ]

    # ---- VMEM budget + cost estimate -------------------------------------------------
    blk_bytes = T * F * Cin * 2 + T * F * Cout * 4                 # one input + output block
    param_bytes = int(sum(p.size * p.dtype.itemsize for p in kernel_inputs[1:]))
    scratch_bytes = ((T + 2 * pad_t) * F * Cout + T * (F + 2 * pad_f) * Cout) * 4
    live_bytes = 6 * T * F * Cout * 4                              # rough bound on live values
    vmem_needed = 2 * (blk_bytes + param_bytes) + scratch_bytes + live_bytes
    vmem_limit = int(min(max(2 * vmem_needed, 16 * 1024 * 1024), 48 * 1024 * 1024))

    dw_taps = sum(w.shape[0] for w in (wa0, wa1, wa2, wb0, wb1, wb2))
    tail_flops = 2 * Cout * Cout if fuse_cd else 4 * Cout * Cinner
    flops = N * T * F * (2 * Cin * Cout + 2 * dw_taps * Cout + tail_flops)
    bytes_accessed = N * blk_bytes + param_bytes

    kernel = functools.partial(_bottleneck_kernel, pad_t=pad_t, pad_f=pad_f, fuse_cd=fuse_cd)

    out = pl.pallas_call(
        kernel,
        out_shape=jax.ShapeDtypeStruct((N, T, F, Cout), jnp.float32),
        grid_spec=pltpu.PrefetchScalarGridSpec(
            num_scalar_prefetch=0,
            grid=(N,),
            in_specs=in_specs,
            out_specs=pl.BlockSpec((1, T, F, Cout), lambda n: (n, 0, 0, 0)),
            scratch_shapes=scratch_shapes,
        ),
        compiler_params=pltpu.CompilerParams(
            dimension_semantics=("parallel",),                     # batch items independent
            vmem_limit_bytes=vmem_limit,
        ),
        cost_estimate=pl.CostEstimate(
            flops=int(flops), transcendentals=0, bytes_accessed=int(bytes_accessed)),
    )(*kernel_inputs)

    return jnp.transpose(out, (0, 3, 1, 2))                        # back to NCHW


# ----------------------------------------------------------------------------- params
def init_params(key, dim_in, dim_out, dim_inner, temp_k, freq_k, eps=1e-5):
    keys = iter(jax.random.split(key, 64))

    def conv_w(shape):
        fan_in = shape[1] * shape[2] * shape[3]
        return jax.random.normal(next(keys), shape, jnp.float32) / jnp.sqrt(float(fan_in))

    def bn_sb(c):
        gamma = 1.0 + 0.1 * jax.random.normal(next(keys), (c,), jnp.float32)
        beta = 0.1 * jax.random.normal(next(keys), (c,), jnp.float32)
        mean = 0.1 * jax.random.normal(next(keys), (c,), jnp.float32)
        var = 1.0 + 0.5 * jax.random.uniform(next(keys), (c,), jnp.float32)
        s = gamma / jnp.sqrt(var + eps)
        return jnp.stack([s, beta - mean * s], axis=0)             # (2, c): scale, bias

    P = {}
    P["w_head_oihw"] = conv_w((dim_out, dim_in, 1, 1))
    P["sb_head"] = bn_sb(dim_out)
    P["w_a_oihw"] = conv_w((dim_out, 1, temp_k, 1))
    P["w_a_small_oihw"] = conv_w((dim_out, 1, 3, 1))
    P["w_a_medium_oihw"] = conv_w((dim_out, 1, 11, 1))
    P["sb_a"] = bn_sb(dim_out)
    P["sb_a_small"] = bn_sb(dim_out)
    P["sb_a_medium"] = bn_sb(dim_out)
    P["w_b_oihw"] = conv_w((dim_out, 1, 1, freq_k))
    P["w_b_small_oihw"] = conv_w((dim_out, 1, 1, 3))
    P["w_b_medium_oihw"] = conv_w((dim_out, 1, 1, 11))
    P["sb_b"] = bn_sb(dim_out)
    P["sb_b_small"] = bn_sb(dim_out)
    P["sb_b_medium"] = bn_sb(dim_out)
    P["w_c_oihw"] = conv_w((dim_inner, dim_out, 1, 1))
    P["sb_c"] = bn_sb(dim_inner)
    P["w_d_oihw"] = conv_w((dim_out, dim_inner, 1, 1))
    P["sb_d"] = bn_sb(dim_out)
    return P


# ----------------------------------------------------------------------------- reference
def reference_forward(x_nchw, P):
    def conv(x, w, groups=1, padding=((0, 0), (0, 0))):
        return lax.conv_general_dilated(
            x, w, window_strides=(1, 1), padding=padding,
            dimension_numbers=("NCHW", "OIHW", "NCHW"),
            feature_group_count=groups)

    def bn(x, sb):
        return x * sb[0][None, :, None, None] + sb[1][None, :, None, None]

    relu = lambda v: jnp.maximum(v, 0.0)
    Cout = P["w_head_oihw"].shape[0]

    xh = bn(conv(x_nchw, P["w_head_oihw"]), P["sb_head"])

    def branch(wa, sba, wb, sbb):
        Ka, Kb = wa.shape[2], wb.shape[3]
        t = relu(bn(conv(xh, wa, groups=Cout, padding=((Ka // 2, Ka // 2), (0, 0))), sba))
        return relu(bn(conv(t, wb, groups=Cout, padding=((0, 0), (Kb // 2, Kb // 2))), sbb))

    x1 = branch(P["w_a_oihw"], P["sb_a"], P["w_b_oihw"], P["sb_b"])
    x2 = branch(P["w_a_small_oihw"], P["sb_a_small"], P["w_b_small_oihw"], P["sb_b_small"])
    x3 = branch(P["w_a_medium_oihw"], P["sb_a_medium"], P["w_b_medium_oihw"], P["sb_b_medium"])
    comb = x1 + x2 + x3
    zc = bn(conv(comb, P["w_c_oihw"]), P["sb_c"])
    zd = bn(conv(zc, P["w_d_oihw"]), P["sb_d"])
    return zd


# ----------------------------------------------------------------------------- main
if __name__ == "__main__":
    key = jax.random.PRNGKey(0)

    def run_case(cfg_key, N, dim_in, dim_out, dim_inner, T, F, temp_k, freq_k):
        kx, kp = jax.random.split(cfg_key)
        x = jax.random.normal(kx, (N, dim_in, T, F), jnp.float32)      # PyTorch NCHW
        params = init_params(kp, dim_in, dim_out, dim_inner, temp_k, freq_k)

        y = jax.block_until_ready(msthreeway_dw_bottleneck_pallas(x, params, stride=1))
        y_ref = reference_forward(x, params)
        assert y.shape == y_ref.shape == (N, dim_out, T, F)
        # bf16 MXU operands (f32 accumulation) -> mixed abs/rel tolerance vs f32 reference
        if not bool(jnp.allclose(y, y_ref, rtol=5e-2, atol=1e-1)):
            max_err = float(jnp.max(jnp.abs(y - y_ref)))
            raise AssertionError(f"mismatch vs reference: max abs err = {max_err}")

    k1, k2 = jax.random.split(key)
    # config A: dim_in != dim_out, fused c/d tail (Cout <= 2*Cinner)
    run_case(k1, N=2, dim_in=4, dim_out=8, dim_inner=16, T=16, F=16, temp_k=5, freq_k=5)
    # config B: dim_in == dim_out, unfused c/d tail (Cout > 2*Cinner), other kernel sizes
    run_case(k2, N=2, dim_in=16, dim_out=16, dim_inner=4, T=16, F=16, temp_k=7, freq_k=9)

    print("KERNEL_OK")
</pallas_src>

<mosaic_0001>
module attributes {stable_mosaic.version = 11 : i64} {
  func.func @_bottleneck_kernel(%arg0: i32, %arg1: memref<1x16x16x4xbf16, #tpu.memory_space<vmem>>, %arg2: memref<4x8xbf16, #tpu.memory_space<vmem>>, %arg3: memref<1x8xf32, #tpu.memory_space<vmem>>, %arg4: memref<5x8xf32, #tpu.memory_space<vmem>>, %arg5: memref<1x8xf32, #tpu.memory_space<vmem>>, %arg6: memref<3x8xf32, #tpu.memory_space<vmem>>, %arg7: memref<1x8xf32, #tpu.memory_space<vmem>>, %arg8: memref<11x8xf32, #tpu.memory_space<vmem>>, %arg9: memref<1x8xf32, #tpu.memory_space<vmem>>, %arg10: memref<5x8xf32, #tpu.memory_space<vmem>>, %arg11: memref<1x8xf32, #tpu.memory_space<vmem>>, %arg12: memref<3x8xf32, #tpu.memory_space<vmem>>, %arg13: memref<1x8xf32, #tpu.memory_space<vmem>>, %arg14: memref<11x8xf32, #tpu.memory_space<vmem>>, %arg15: memref<1x8xf32, #tpu.memory_space<vmem>>, %arg16: memref<8x8xbf16, #tpu.memory_space<vmem>>, %arg17: memref<1x8xf32, #tpu.memory_space<vmem>>, %arg18: memref<1x16x16x8xf32, #tpu.memory_space<vmem>>, %arg19: memref<26x16x8xf32, #tpu.memory_space<vmem>>, %arg20: memref<16x32x8xf32, #tpu.memory_space<vmem>>) attributes {dimension_semantics = [#tpu.dimension_semantics<parallel>], iteration_bounds = array<i64: 2>, scalar_prefetch = 0 : i64, scratch_operands = 2 : i64, tpu.core_type = #tpu.core_type<tc>, window_params = [{transform_indices = @transform_0, window_bounds = array<i64: 1, 16, 16, 4>}, {pipeline_mode = #tpu.pipeline_mode<synchronous>, transform_indices = @transform_1, window_bounds = array<i64: 4, 8>}, {pipeline_mode = #tpu.pipeline_mode<synchronous>, transform_indices = @transform_2, window_bounds = array<i64: 1, 8>}, {pipeline_mode = #tpu.pipeline_mode<synchronous>, transform_indices = @transform_3, window_bounds = array<i64: 5, 8>}, {pipeline_mode = #tpu.pipeline_mode<synchronous>, transform_indices = @transform_4, window_bounds = array<i64: 1, 8>}, {pipeline_mode = #tpu.pipeline_mode<synchronous>, transform_indices = @transform_5, window_bounds = array<i64: 3, 8>}, {pipeline_mode = #tpu.pipeline_mode<synchronous>, transform_indices = @transform_6, window_bounds = array<i64: 1, 8>}, {pipeline_mode = #tpu.pipeline_mode<synchronous>, transform_indices = @transform_7, window_bounds = array<i64: 11, 8>}, {pipeline_mode = #tpu.pipeline_mode<synchronous>, transform_indices = @transform_8, window_bounds = array<i64: 1, 8>}, {pipeline_mode = #tpu.pipeline_mode<synchronous>, transform_indices = @transform_9, window_bounds = array<i64: 5, 8>}, {pipeline_mode = #tpu.pipeline_mode<synchronous>, transform_indices = @transform_10, window_bounds = array<i64: 1, 8>}, {pipeline_mode = #tpu.pipeline_mode<synchronous>, transform_indices = @transform_11, window_bounds = array<i64: 3, 8>}, {pipeline_mode = #tpu.pipeline_mode<synchronous>, transform_indices = @transform_12, window_bounds = array<i64: 1, 8>}, {pipeline_mode = #tpu.pipeline_mode<synchronous>, transform_indices = @transform_13, window_bounds = array<i64: 11, 8>}, {pipeline_mode = #tpu.pipeline_mode<synchronous>, transform_indices = @transform_14, window_bounds = array<i64: 1, 8>}, {pipeline_mode = #tpu.pipeline_mode<synchronous>, transform_indices = @transform_15, window_bounds = array<i64: 8, 8>}, {pipeline_mode = #tpu.pipeline_mode<synchronous>, transform_indices = @transform_16, window_bounds = array<i64: 1, 8>}, {transform_indices = @transform_17, window_bounds = array<i64: 1, 16, 16, 8>}]} {
    %cst = arith.constant 0.000000e+00 : f32
    %0 = vector.broadcast %cst : f32 to vector<5x16x8xf32>
    %c0 = arith.constant 0 : index
    %c0_0 = arith.constant 0 : index
    %c0_1 = arith.constant 0 : index
    %1 = vector.load %arg19[%c0, %c0_0, %c0_1] : memref<26x16x8xf32, #tpu.memory_space<vmem>>, vector<5x16x8xf32>
    tpu.vector_store %arg19[%c0, %c0_0, %c0_1], %0 {strides = array<i32>} : memref<26x16x8xf32, #tpu.memory_space<vmem>>, vector<5x16x8xf32>,
    %cst_2 = arith.constant 0.000000e+00 : f32
    %2 = vector.broadcast %cst_2 : f32 to vector<5x16x8xf32>
    %c21 = arith.constant 21 : index
    %c0_3 = arith.constant 0 : index
    %c0_4 = arith.constant 0 : index
    %3 = vector.load %arg19[%c21, %c0_3, %c0_4] : memref<26x16x8xf32, #tpu.memory_space<vmem>>, vector<5x16x8xf32>
    tpu.vector_store %arg19[%c21, %c0_3, %c0_4], %2 {strides = array<i32>} : memref<26x16x8xf32, #tpu.memory_space<vmem>>, vector<5x16x8xf32>,
    %cst_5 = arith.constant 0.000000e+00 : f32
    %4 = vector.broadcast %cst_5 : f32 to vector<16x8x8xf32>
    %c0_6 = arith.constant 0 : index
    %c0_7 = arith.constant 0 : index
    %c0_8 = arith.constant 0 : index
    %5 = vector.load %arg20[%c0_6, %c0_7, %c0_8] : memref<16x32x8xf32, #tpu.memory_space<vmem>>, vector<16x8x8xf32>
    tpu.vector_store %arg20[%c0_6, %c0_7, %c0_8], %4 {strides = array<i32>} : memref<16x32x8xf32, #tpu.memory_space<vmem>>, vector<16x8x8xf32>,
    %cst_9 = arith.constant 0.000000e+00 : f32
    %6 = vector.broadcast %cst_9 : f32 to vector<16x8x8xf32>
    %c0_10 = arith.constant 0 : index
    %c24 = arith.constant 24 : index
    %c0_11 = arith.constant 0 : index
    %7 = vector.load %arg20[%c0_10, %c24, %c0_11] : memref<16x32x8xf32, #tpu.memory_space<vmem>>, vector<16x8x8xf32>
    tpu.vector_store %arg20[%c0_10, %c24, %c0_11], %6 {strides = array<i32>} : memref<16x32x8xf32, #tpu.memory_space<vmem>>, vector<16x8x8xf32>,
    %c0_12 = arith.constant 0 : index
    %c0_13 = arith.constant 0 : index
    %c0_14 = arith.constant 0 : index
    %c0_15 = arith.constant 0 : index
    %8 = vector.load %arg1[%c0_12, %c0_13, %c0_14, %c0_15] : memref<1x16x16x4xbf16, #tpu.memory_space<vmem>>, vector<1x16x16x4xbf16>
    %9 = vector.shape_cast %8 : vector<1x16x16x4xbf16> to vector<16x16x4xbf16>
    %10 = vector.shape_cast %9 : vector<16x16x4xbf16> to vector<256x4xbf16>
    %c0_16 = arith.constant 0 : index
    %c0_17 = arith.constant 0 : index
    %11 = vector.load %arg2[%c0_16, %c0_17] : memref<4x8xbf16, #tpu.memory_space<vmem>>, vector<4x8xbf16>
    %cst_18 = arith.constant dense<0.000000e+00> : vector<256x8xf32>
    %12 = tpu.matmul %10, %11, %cst_18 {dimension_numbers = #tpu.dot_dimension_numbers<[1], [0], [0], [1], [0, 0, 1, 1], [], []>} : vector<256x4xbf16>, vector<4x8xbf16>, vector<256x8xf32> -> vector<256x8xf32>
    %c0_19 = arith.constant 0 : index
    %c0_20 = arith.constant 0 : index
    %13 = vector.load %arg3[%c0_19, %c0_20] : memref<1x8xf32, #tpu.memory_space<vmem>>, vector<1x8xf32>
    %14 = vector.broadcast %13 : vector<1x8xf32> to vector<256x8xf32>
    %15 = arith.addf %12, %14 : vector<256x8xf32>
    %16 = vector.shape_cast %15 : vector<256x8xf32> to vector<16x16x8xf32>
    %c5 = arith.constant 5 : index
    %c0_21 = arith.constant 0 : index
    %c0_22 = arith.constant 0 : index
    %17 = vector.load %arg19[%c5, %c0_21, %c0_22] : memref<26x16x8xf32, #tpu.memory_space<vmem>>, vector<16x16x8xf32>
    tpu.vector_store %arg19[%c5, %c0_21, %c0_22], %16 {strides = array<i32>} : memref<26x16x8xf32, #tpu.memory_space<vmem>>, vector<16x16x8xf32>,
    %c3 = arith.constant 3 : index
    %c0_23 = arith.constant 0 : index
    %c0_24 = arith.constant 0 : index
    %18 = vector.load %arg19[%c3, %c0_23, %c0_24] : memref<26x16x8xf32, #tpu.memory_space<vmem>>, vector<16x16x8xf32>
    %c0_25 = arith.constant 0 : index
    %c0_26 = arith.constant 0 : index
    %19 = vector.load %arg4[%c0_25, %c0_26] : memref<5x8xf32, #tpu.memory_space<vmem>>, vector<1x8xf32>
    %20 = vector.shape_cast %19 : vector<1x8xf32> to vector<1x1x8xf32>
    %21 = vector.broadcast %20 : vector<1x1x8xf32> to vector<16x16x8xf32>
    %22 = arith.mulf %18, %21 : vector<16x16x8xf32>
    %c4 = arith.constant 4 : index
    %c0_27 = arith.constant 0 : index
    %c0_28 = arith.constant 0 : index
    %23 = vector.load %arg19[%c4, %c0_27, %c0_28] : memref<26x16x8xf32, #tpu.memory_space<vmem>>, vector<16x16x8xf32>
    %c1 = arith.constant 1 : index
    %c0_29 = arith.constant 0 : index
    %24 = vector.load %arg4[%c1, %c0_29] : memref<5x8xf32, #tpu.memory_space<vmem>>, vector<1x8xf32>
    %25 = vector.shape_cast %24 : vector<1x8xf32> to vector<1x1x8xf32>
    %26 = vector.broadcast %25 : vector<1x1x8xf32> to vector<16x16x8xf32>
    %27 = arith.mulf %23, %26 : vector<16x16x8xf32>
    %28 = arith.addf %22, %27 : vector<16x16x8xf32>
    %c5_30 = arith.constant 5 : index
    %c0_31 = arith.constant 0 : index
    %c0_32 = arith.constant 0 : index
    %29 = vector.load %arg19[%c5_30, %c0_31, %c0_32] : memref<26x16x8xf32, #tpu.memory_space<vmem>>, vector<16x16x8xf32>
    %c2 = arith.constant 2 : index
    %c0_33 = arith.constant 0 : index
    %30 = vector.load %arg4[%c2, %c0_33] : memref<5x8xf32, #tpu.memory_space<vmem>>, vector<1x8xf32>
    %31 = vector.shape_cast %30 : vector<1x8xf32> to vector<1x1x8xf32>
    %32 = vector.broadcast %31 : vector<1x1x8xf32> to vector<16x16x8xf32>
    %33 = arith.mulf %29, %32 : vector<16x16x8xf32>
    %34 = arith.addf %28, %33 : vector<16x16x8xf32>
    %c6 = arith.constant 6 : index
    %c0_34 = arith.constant 0 : index
    %c0_35 = arith.constant 0 : index
    %35 = vector.load %arg19[%c6, %c0_34, %c0_35] : memref<26x16x8xf32, #tpu.memory_space<vmem>>, vector<16x16x8xf32>
    %c3_36 = arith.constant 3 : index
    %c0_37 = arith.constant 0 : index
    %36 = vector.load %arg4[%c3_36, %c0_37] : memref<5x8xf32, #tpu.memory_space<vmem>>, vector<1x8xf32>
    %37 = vector.shape_cast %36 : vector<1x8xf32> to vector<1x1x8xf32>
    %38 = vector.broadcast %37 : vector<1x1x8xf32> to vector<16x16x8xf32>
    %39 = arith.mulf %35, %38 : vector<16x16x8xf32>
    %40 = arith.addf %34, %39 : vector<16x16x8xf32>
    %c7 = arith.constant 7 : index
    %c0_38 = arith.constant 0 : index
    %c0_39 = arith.constant 0 : index
    %41 = vector.load %arg19[%c7, %c0_38, %c0_39] : memref<26x16x8xf32, #tpu.memory_space<vmem>>, vector<16x16x8xf32>
    %c4_40 = arith.constant 4 : index
    %c0_41 = arith.constant 0 : index
    %42 = vector.load %arg4[%c4_40, %c0_41] : memref<5x8xf32, #tpu.memory_space<vmem>>, vector<1x8xf32>
    %43 = vector.shape_cast %42 : vector<1x8xf32> to vector<1x1x8xf32>
    %44 = vector.broadcast %43 : vector<1x1x8xf32> to vector<16x16x8xf32>
    %45 = arith.mulf %41, %44 : vector<16x16x8xf32>
    %46 = arith.addf %40, %45 : vector<16x16x8xf32>
    %c0_42 = arith.constant 0 : index
    %c0_43 = arith.constant 0 : index
    %47 = vector.load %arg5[%c0_42, %c0_43] : memref<1x8xf32, #tpu.memory_space<vmem>>, vector<1x8xf32>
    %48 = vector.shape_cast %47 : vector<1x8xf32> to vector<1x1x8xf32>
    %49 = vector.broadcast %48 : vector<1x1x8xf32> to vector<16x16x8xf32>
    %50 = arith.addf %46, %49 : vector<16x16x8xf32>
    %cst_44 = arith.constant 0.000000e+00 : f32
    %51 = vector.broadcast %cst_44 : f32 to vector<16x16x8xf32>
    %52 = arith.maximumf %50, %51 : vector<16x16x8xf32>
    %c0_45 = arith.constant 0 : index
    %c8 = arith.constant 8 : index
    %c0_46 = arith.constant 0 : index
    %53 = vector.load %arg20[%c0_45, %c8, %c0_46] : memref<16x32x8xf32, #tpu.memory_space<vmem>>, vector<16x16x8xf32>
    tpu.vector_store %arg20[%c0_45, %c8, %c0_46], %52 {strides = array<i32>} : memref<16x32x8xf32, #tpu.memory_space<vmem>>, vector<16x16x8xf32>,
    %c0_47 = arith.constant 0 : index
    %c6_48 = arith.constant 6 : index
    %c0_49 = arith.constant 0 : index
    %54 = vector.load %arg20[%c0_47, %c6_48, %c0_49] : memref<16x32x8xf32, #tpu.memory_space<vmem>>, vector<16x16x8xf32>
    %c0_50 = arith.constant 0 : index
    %c0_51 = arith.constant 0 : index
    %55 = vector.load %arg10[%c0_50, %c0_51] : memref<5x8xf32, #tpu.memory_space<vmem>>, vector<1x8xf32>
    %56 = vector.shape_cast %55 : vector<1x8xf32> to vector<1x1x8xf32>
    %57 = vector.broadcast %56 : vector<1x1x8xf32> to vector<16x16x8xf32>
    %58 = arith.mulf %54, %57 : vector<16x16x8xf32>
    %c0_52 = arith.constant 0 : index
    %c7_53 = arith.constant 7 : index
    %c0_54 = arith.constant 0 : index
    %59 = vector.load %arg20[%c0_52, %c7_53, %c0_54] : memref<16x32x8xf32, #tpu.memory_space<vmem>>, vector<16x16x8xf32>
    %c1_55 = arith.constant 1 : index
    %c0_56 = arith.constant 0 : index
    %60 = vector.load %arg10[%c1_55, %c0_56] : memref<5x8xf32, #tpu.memory_space<vmem>>, vector<1x8xf32>
    %61 = vector.shape_cast %60 : vector<1x8xf32> to vector<1x1x8xf32>
    %62 = vector.broadcast %61 : vector<1x1x8xf32> to vector<16x16x8xf32>
    %63 = arith.mulf %59, %62 : vector<16x16x8xf32>
    %64 = arith.addf %58, %63 : vector<16x16x8xf32>
    %c0_57 = arith.constant 0 : index
    %c8_58 = arith.constant 8 : index
    %c0_59 = arith.constant 0 : index
    %65 = vector.load %arg20[%c0_57, %c8_58, %c0_59] : memref<16x32x8xf32, #tpu.memory_space<vmem>>, vector<16x16x8xf32>
    %c2_60 = arith.constant 2 : index
    %c0_61 = arith.constant 0 : index
    %66 = vector.load %arg10[%c2_60, %c0_61] : memref<5x8xf32, #tpu.memory_space<vmem>>, vector<1x8xf32>
    %67 = vector.shape_cast %66 : vector<1x8xf32> to vector<1x1x8xf32>
    %68 = vector.broadcast %67 : vector<1x1x8xf32> to vector<16x16x8xf32>
    %69 = arith.mulf %65, %68 : vector<16x16x8xf32>
    %70 = arith.addf %64, %69 : vector<16x16x8xf32>
    %c0_62 = arith.constant 0 : index
    %c9 = arith.constant 9 : index
    %c0_63 = arith.constant 0 : index
    %71 = vector.load %arg20[%c0_62, %c9, %c0_63] : memref<16x32x8xf32, #tpu.memory_space<vmem>>, vector<16x16x8xf32>
    %c3_64 = arith.constant 3 : index
    %c0_65 = arith.constant 0 : index
    %72 = vector.load %arg10[%c3_64, %c0_65] : memref<5x8xf32, #tpu.memory_space<vmem>>, vector<1x8xf32>
    %73 = vector.shape_cast %72 : vector<1x8xf32> to vector<1x1x8xf32>
    %74 = vector.broadcast %73 : vector<1x1x8xf32> to vector<16x16x8xf32>
    %75 = arith.mulf %71, %74 : vector<16x16x8xf32>
    %76 = arith.addf %70, %75 : vector<16x16x8xf32>
    %c0_66 = arith.constant 0 : index
    %c10 = arith.constant 10 : index
    %c0_67 = arith.constant 0 : index
    %77 = vector.load %arg20[%c0_66, %c10, %c0_67] : memref<16x32x8xf32, #tpu.memory_space<vmem>>, vector<16x16x8xf32>
    %c4_68 = arith.constant 4 : index
    %c0_69 = arith.constant 0 : index
    %78 = vector.load %arg10[%c4_68, %c0_69] : memref<5x8xf32, #tpu.memory_space<vmem>>, vector<1x8xf32>
    %79 = vector.shape_cast %78 : vector<1x8xf32> to vector<1x1x8xf32>
    %80 = vector.broadcast %79 : vector<1x1x8xf32> to vector<16x16x8xf32>
    %81 = arith.mulf %77, %80 : vector<16x16x8xf32>
    %82 = arith.addf %76, %81 : vector<16x16x8xf32>
    %c0_70 = arith.constant 0 : index
    %c0_71 = arith.constant 0 : index
    %83 = vector.load %arg11[%c0_70, %c0_71] : memref<1x8xf32, #tpu.memory_space<vmem>>, vector<1x8xf32>
    %84 = vector.shape_cast %83 : vector<1x8xf32> to vector<1x1x8xf32>
    %85 = vector.broadcast %84 : vector<1x1x8xf32> to vector<16x16x8xf32>
    %86 = arith.addf %82, %85 : vector<16x16x8xf32>
    %cst_72 = arith.constant 0.000000e+00 : f32
    %87 = vector.broadcast %cst_72 : f32 to vector<16x16x8xf32>
    %88 = arith.maximumf %86, %87 : vector<16x16x8xf32>
    %c4_73 = arith.constant 4 : index
    %c0_74 = arith.constant 0 : index
    %c0_75 = arith.constant 0 : index
    %89 = vector.load %arg19[%c4_73, %c0_74, %c0_75] : memref<26x16x8xf32, #tpu.memory_space<vmem>>, vector<16x16x8xf32>
    %c0_76 = arith.constant 0 : index
    %c0_77 = arith.constant 0 : index
    %90 = vector.load %arg6[%c0_76, %c0_77] : memref<3x8xf32, #tpu.memory_space<vmem>>, vector<1x8xf32>
    %91 = vector.shape_cast %90 : vector<1x8xf32> to vector<1x1x8xf32>
    %92 = vector.broadcast %91 : vector<1x1x8xf32> to vector<16x16x8xf32>
    %93 = arith.mulf %89, %92 : vector<16x16x8xf32>
    %c5_78 = arith.constant 5 : index
    %c0_79 = arith.constant 0 : index
    %c0_80 = arith.constant 0 : index
    %94 = vector.load %arg19[%c5_78, %c0_79, %c0_80] : memref<26x16x8xf32, #tpu.memory_space<vmem>>, vector<16x16x8xf32>
    %c1_81 = arith.constant 1 : index
    %c0_82 = arith.constant 0 : index
    %95 = vector.load %arg6[%c1_81, %c0_82] : memref<3x8xf32, #tpu.memory_space<vmem>>, vector<1x8xf32>
    %96 = vector.shape_cast %95 : vector<1x8xf32> to vector<1x1x8xf32>
    %97 = vector.broadcast %96 : vector<1x1x8xf32> to vector<16x16x8xf32>
    %98 = arith.mulf %94, %97 : vector<16x16x8xf32>
    %99 = arith.addf %93, %98 : vector<16x16x8xf32>
    %c6_83 = arith.constant 6 : index
    %c0_84 = arith.constant 0 : index
    %c0_85 = arith.constant 0 : index
    %100 = vector.load %arg19[%c6_83, %c0_84, %c0_85] : memref<26x16x8xf32, #tpu.memory_space<vmem>>, vector<16x16x8xf32>
    %c2_86 = arith.constant 2 : index
    %c0_87 = arith.constant 0 : index
    %101 = vector.load %arg6[%c2_86, %c0_87] : memref<3x8xf32, #tpu.memory_space<vmem>>, vector<1x8xf32>
    %102 = vector.shape_cast %101 : vector<1x8xf32> to vector<1x1x8xf32>
    %103 = vector.broadcast %102 : vector<1x1x8xf32> to vector<16x16x8xf32>
    %104 = arith.mulf %100, %103 : vector<16x16x8xf32>
    %105 = arith.addf %99, %104 : vector<16x16x8xf32>
    %c0_88 = arith.constant 0 : index
    %c0_89 = arith.constant 0 : index
    %106 = vector.load %arg7[%c0_88, %c0_89] : memref<1x8xf32, #tpu.memory_space<vmem>>, vector<1x8xf32>
    %107 = vector.shape_cast %106 : vector<1x8xf32> to vector<1x1x8xf32>
    %108 = vector.broadcast %107 : vector<1x1x8xf32> to vector<16x16x8xf32>
    %109 = arith.addf %105, %108 : vector<16x16x8xf32>
    %cst_90 = arith.constant 0.000000e+00 : f32
    %110 = vector.broadcast %cst_90 : f32 to vector<16x16x8xf32>
    %111 = arith.maximumf %109, %110 : vector<16x16x8xf32>
    %c0_91 = arith.constant 0 : index
    %c8_92 = arith.constant 8 : index
    %c0_93 = arith.constant 0 : index
    %112 = vector.load %arg20[%c0_91, %c8_92, %c0_93] : memref<16x32x8xf32, #tpu.memory_space<vmem>>, vector<16x16x8xf32>
    tpu.vector_store %arg20[%c0_91, %c8_92, %c0_93], %111 {strides = array<i32>} : memref<16x32x8xf32, #tpu.memory_space<vmem>>, vector<16x16x8xf32>,
    %c0_94 = arith.constant 0 : index
    %c7_95 = arith.constant 7 : index
    %c0_96 = arith.constant 0 : index
    %113 = vector.load %arg20[%c0_94, %c7_95, %c0_96] : memref<16x32x8xf32, #tpu.memory_space<vmem>>, vector<16x16x8xf32>
    %c0_97 = arith.constant 0 : index
    %c0_98 = arith.constant 0 : index
    %114 = vector.load %arg12[%c0_97, %c0_98] : memref<3x8xf32, #tpu.memory_space<vmem>>, vector<1x8xf32>
    %115 = vector.shape_cast %114 : vector<1x8xf32> to vector<1x1x8xf32>
    %116 = vector.broadcast %115 : vector<1x1x8xf32> to vector<16x16x8xf32>
    %117 = arith.mulf %113, %116 : vector<16x16x8xf32>
    %c0_99 = arith.constant 0 : index
    %c8_100 = arith.constant 8 : index
    %c0_101 = arith.constant 0 : index
    %118 = vector.load %arg20[%c0_99, %c8_100, %c0_101] : memref<16x32x8xf32, #tpu.memory_space<vmem>>, vector<16x16x8xf32>
    %c1_102 = arith.constant 1 : index
    %c0_103 = arith.constant 0 : index
    %119 = vector.load %arg12[%c1_102, %c0_103] : memref<3x8xf32, #tpu.memory_space<vmem>>, vector<1x8xf32>
    %120 = vector.shape_cast %119 : vector<1x8xf32> to vector<1x1x8xf32>
    %121 = vector.broadcast %120 : vector<1x1x8xf32> to vector<16x16x8xf32>
    %122 = arith.mulf %118, %121 : vector<16x16x8xf32>
    %123 = arith.addf %117, %122 : vector<16x16x8xf32>
    %c0_104 = arith.constant 0 : index
    %c9_105 = arith.constant 9 : index
    %c0_106 = arith.constant 0 : index
    %124 = vector.load %arg20[%c0_104, %c9_105, %c0_106] : memref<16x32x8xf32, #tpu.memory_space<vmem>>, vector<16x16x8xf32>
    %c2_107 = arith.constant 2 : index
    %c0_108 = arith.constant 0 : index
    %125 = vector.load %arg12[%c2_107, %c0_108] : memref<3x8xf32, #tpu.memory_space<vmem>>, vector<1x8xf32>
    %126 = vector.shape_cast %125 : vector<1x8xf32> to vector<1x1x8xf32>
    %127 = vector.broadcast %126 : vector<1x1x8xf32> to vector<16x16x8xf32>
    %128 = arith.mulf %124, %127 : vector<16x16x8xf32>
    %129 = arith.addf %123, %128 : vector<16x16x8xf32>
    %c0_109 = arith.constant 0 : index
    %c0_110 = arith.constant 0 : index
    %130 = vector.load %arg13[%c0_109, %c0_110] : memref<1x8xf32, #tpu.memory_space<vmem>>, vector<1x8xf32>
    %131 = vector.shape_cast %130 : vector<1x8xf32> to vector<1x1x8xf32>
    %132 = vector.broadcast %131 : vector<1x1x8xf32> to vector<16x16x8xf32>
    %133 = arith.addf %129, %132 : vector<16x16x8xf32>
    %cst_111 = arith.constant 0.000000e+00 : f32
    %134 = vector.broadcast %cst_111 : f32 to vector<16x16x8xf32>
    %135 = arith.maximumf %133, %134 : vector<16x16x8xf32>
    %136 = arith.addf %88, %135 : vector<16x16x8xf32>
    %c0_112 = arith.constant 0 : index
    %c0_113 = arith.constant 0 : index
    %c0_114 = arith.constant 0 : index
    %137 = vector.load %arg19[%c0_112, %c0_113, %c0_114] : memref<26x16x8xf32, #tpu.memory_space<vmem>>, vector<16x16x8xf32>
    %c0_115 = arith.constant 0 : index
    %c0_116 = arith.constant 0 : index
    %138 = vector.load %arg8[%c0_115, %c0_116] : memref<11x8xf32, #tpu.memory_space<vmem>>, vector<1x8xf32>
    %139 = vector.shape_cast %138 : vector<1x8xf32> to vector<1x1x8xf32>
    %140 = vector.broadcast %139 : vector<1x1x8xf32> to vector<16x16x8xf32>
    %141 = arith.mulf %137, %140 : vector<16x16x8xf32>
    %c1_117 = arith.constant 1 : index
    %c0_118 = arith.constant 0 : index
    %c0_119 = arith.constant 0 : index
    %142 = vector.load %arg19[%c1_117, %c0_118, %c0_119] : memref<26x16x8xf32, #tpu.memory_space<vmem>>, vector<16x16x8xf32>
    %c1_120 = arith.constant 1 : index
    %c0_121 = arith.constant 0 : index
    %143 = vector.load %arg8[%c1_120, %c0_121] : memref<11x8xf32, #tpu.memory_space<vmem>>, vector<1x8xf32>
    %144 = vector.shape_cast %143 : vector<1x8xf32> to vector<1x1x8xf32>
    %145 = vector.broadcast %144 : vector<1x1x8xf32> to vector<16x16x8xf32>
    %146 = arith.mulf %142, %145 : vector<16x16x8xf32>
    %147 = arith.addf %141, %146 : vector<16x16x8xf32>
    %c2_122 = arith.constant 2 : index
    %c0_123 = arith.constant 0 : index
    %c0_124 = arith.constant 0 : index
    %148 = vector.load %arg19[%c2_122, %c0_123, %c0_124] : memref<26x16x8xf32, #tpu.memory_space<vmem>>, vector<16x16x8xf32>
    %c2_125 = arith.constant 2 : index
    %c0_126 = arith.constant 0 : index
    %149 = vector.load %arg8[%c2_125, %c0_126] : memref<11x8xf32, #tpu.memory_space<vmem>>, vector<1x8xf32>
    %150 = vector.shape_cast %149 : vector<1x8xf32> to vector<1x1x8xf32>
    %151 = vector.broadcast %150 : vector<1x1x8xf32> to vector<16x16x8xf32>
    %152 = arith.mulf %148, %151 : vector<16x16x8xf32>
    %153 = arith.addf %147, %152 : vector<16x16x8xf32>
    %c3_127 = arith.constant 3 : index
    %c0_128 = arith.constant 0 : index
    %c0_129 = arith.constant 0 : index
    %154 = vector.load %arg19[%c3_127, %c0_128, %c0_129] : memref<26x16x8xf32, #tpu.memory_space<vmem>>, vector<16x16x8xf32>
    %c3_130 = arith.constant 3 : index
    %c0_131 = arith.constant 0 : index
    %155 = vector.load %arg8[%c3_130, %c0_131] : memref<11x8xf32, #tpu.memory_space<vmem>>, vector<1x8xf32>
    %156 = vector.shape_cast %155 : vector<1x8xf32> to vector<1x1x8xf32>
    %157 = vector.broadcast %156 : vector<1x1x8xf32> to vector<16x16x8xf32>
    %158 = arith.mulf %154, %157 : vector<16x16x8xf32>
    %159 = arith.addf %153, %158 : vector<16x16x8xf32>
    %c4_132 = arith.constant 4 : index
    %c0_133 = arith.constant 0 : index
    %c0_134 = arith.constant 0 : index
    %160 = vector.load %arg19[%c4_132, %c0_133, %c0_134] : memref<26x16x8xf32, #tpu.memory_space<vmem>>, vector<16x16x8xf32>
    %c4_135 = arith.constant 4 : index
    %c0_136 = arith.constant 0 : index
    %161 = vector.load %arg8[%c4_135, %c0_136] : memref<11x8xf32, #tpu.memory_space<vmem>>, vector<1x8xf32>
    %162 = vector.shape_cast %161 : vector<1x8xf32> to vector<1x1x8xf32>
    %163 = vector.broadcast %162 : vector<1x1x8xf32> to vector<16x16x8xf32>
    %164 = arith.mulf %160, %163 : vector<16x16x8xf32>
    %165 = arith.addf %159, %164 : vector<16x16x8xf32>
    %c5_137 = arith.constant 5 : index
    %c0_138 = arith.constant 0 : index
    %c0_139 = arith.constant 0 : index
    %166 = vector.load %arg19[%c5_137, %c0_138, %c0_139] : memref<26x16x8xf32, #tpu.memory_space<vmem>>, vector<16x16x8xf32>
    %c5_140 = arith.constant 5 : index
    %c0_141 = arith.constant 0 : index
    %167 = vector.load %arg8[%c5_140, %c0_141] : memref<11x8xf32, #tpu.memory_space<vmem>>, vector<1x8xf32>
    %168 = vector.shape_cast %167 : vector<1x8xf32> to vector<1x1x8xf32>
    %169 = vector.broadcast %168 : vector<1x1x8xf32> to vector<16x16x8xf32>
    %170 = arith.mulf %166, %169 : vector<16x16x8xf32>
    %171 = arith.addf %165, %170 : vector<16x16x8xf32>
    %c6_142 = arith.constant 6 : index
    %c0_143 = arith.constant 0 : index
    %c0_144 = arith.constant 0 : index
    %172 = vector.load %arg19[%c6_142, %c0_143, %c0_144] : memref<26x16x8xf32, #tpu.memory_space<vmem>>, vector<16x16x8xf32>
    %c6_145 = arith.constant 6 : index
    %c0_146 = arith.constant 0 : index
    %173 = vector.load %arg8[%c6_145, %c0_146] : memref<11x8xf32, #tpu.memory_space<vmem>>, vector<1x8xf32>
    %174 = vector.shape_cast %173 : vector<1x8xf32> to vector<1x1x8xf32>
    %175 = vector.broadcast %174 : vector<1x1x8xf32> to vector<16x16x8xf32>
    %176 = arith.mulf %172, %175 : vector<16x16x8xf32>
    %177 = arith.addf %171, %176 : vector<16x16x8xf32>
    %c7_147 = arith.constant 7 : index
    %c0_148 = arith.constant 0 : index
    %c0_149 = arith.constant 0 : index
    %178 = vector.load %arg19[%c7_147, %c0_148, %c0_149] : memref<26x16x8xf32, #tpu.memory_space<vmem>>, vector<16x16x8xf32>
    %c7_150 = arith.constant 7 : index
    %c0_151 = arith.constant 0 : index
    %179 = vector.load %arg8[%c7_150, %c0_151] : memref<11x8xf32, #tpu.memory_space<vmem>>, vector<1x8xf32>
    %180 = vector.shape_cast %179 : vector<1x8xf32> to vector<1x1x8xf32>
    %181 = vector.broadcast %180 : vector<1x1x8xf32> to vector<16x16x8xf32>
    %182 = arith.mulf %178, %181 : vector<16x16x8xf32>
    %183 = arith.addf %177, %182 : vector<16x16x8xf32>
    %c8_152 = arith.constant 8 : index
    %c0_153 = arith.constant 0 : index
    %c0_154 = arith.constant 0 : index
    %184 = vector.load %arg19[%c8_152, %c0_153, %c0_154] : memref<26x16x8xf32, #tpu.memory_space<vmem>>, vector<16x16x8xf32>
    %c8_155 = arith.constant 8 : index
    %c0_156 = arith.constant 0 : index
    %185 = vector.load %arg8[%c8_155, %c0_156] : memref<11x8xf32, #tpu.memory_space<vmem>>, vector<1x8xf32>
    %186 = vector.shape_cast %185 : vector<1x8xf32> to vector<1x1x8xf32>
    %187 = vector.broadcast %186 : vector<1x1x8xf32> to vector<16x16x8xf32>
    %188 = arith.mulf %184, %187 : vector<16x16x8xf32>
    %189 = arith.addf %183, %188 : vector<16x16x8xf32>
    %c9_157 = arith.constant 9 : index
    %c0_158 = arith.constant 0 : index
    %c0_159 = arith.constant 0 : index
    %190 = vector.load %arg19[%c9_157, %c0_158, %c0_159] : memref<26x16x8xf32, #tpu.memory_space<vmem>>, vector<16x16x8xf32>
    %c9_160 = arith.constant 9 : index
    %c0_161 = arith.constant 0 : index
    %191 = vector.load %arg8[%c9_160, %c0_161] : memref<11x8xf32, #tpu.memory_space<vmem>>, vector<1x8xf32>
    %192 = vector.shape_cast %191 : vector<1x8xf32> to vector<1x1x8xf32>
    %193 = vector.broadcast %192 : vector<1x1x8xf32> to vector<16x16x8xf32>
    %194 = arith.mulf %190, %193 : vector<16x16x8xf32>
    %195 = arith.addf %189, %194 : vector<16x16x8xf32>
    %c10_162 = arith.constant 10 : index
    %c0_163 = arith.constant 0 : index
    %c0_164 = arith.constant 0 : index
    %196 = vector.load %arg19[%c10_162, %c0_163, %c0_164] : memref<26x16x8xf32, #tpu.memory_space<vmem>>, vector<16x16x8xf32>
    %c10_165 = arith.constant 10 : index
    %c0_166 = arith.constant 0 : index
    %197 = vector.load %arg8[%c10_165, %c0_166] : memref<11x8xf32, #tpu.memory_space<vmem>>, vector<1x8xf32>
    %198 = vector.shape_cast %197 : vector<1x8xf32> to vector<1x1x8xf32>
    %199 = vector.broadcast %198 : vector<1x1x8xf32> to vector<16x16x8xf32>
    %200 = arith.mulf %196, %199 : vector<16x16x8xf32>
    %201 = arith.addf %195, %200 : vector<16x16x8xf32>
    %c0_167 = arith.constant 0 : index
    %c0_168 = arith.constant 0 : index
    %202 = vector.load %arg9[%c0_167, %c0_168] : memref<1x8xf32, #tpu.memory_space<vmem>>, vector<1x8xf32>
    %203 = vector.shape_cast %202 : vector<1x8xf32> to vector<1x1x8xf32>
    %204 = vector.broadcast %203 : vector<1x1x8xf32> to vector<16x16x8xf32>
    %205 = arith.addf %201, %204 : vector<16x16x8xf32>
    %cst_169 = arith.constant 0.000000e+00 : f32
    %206 = vector.broadcast %cst_169 : f32 to vector<16x16x8xf32>
    %207 = arith.maximumf %205, %206 : vector<16x16x8xf32>
    %c0_170 = arith.constant 0 : index
    %c8_171 = arith.constant 8 : index
    %c0_172 = arith.constant 0 : index
    %208 = vector.load %arg20[%c0_170, %c8_171, %c0_172] : memref<16x32x8xf32, #tpu.memory_space<vmem>>, vector<16x16x8xf32>
    tpu.vector_store %arg20[%c0_170, %c8_171, %c0_172], %207 {strides = array<i32>} : memref<16x32x8xf32, #tpu.memory_space<vmem>>, vector<16x16x8xf32>,
    %c0_173 = arith.constant 0 : index
    %c3_174 = arith.constant 3 : index
    %c0_175 = arith.constant 0 : index
    %209 = vector.load %arg20[%c0_173, %c3_174, %c0_175] : memref<16x32x8xf32, #tpu.memory_space<vmem>>, vector<16x16x8xf32>
    %c0_176 = arith.constant 0 : index
    %c0_177 = arith.constant 0 : index
    %210 = vector.load %arg14[%c0_176, %c0_177] : memref<11x8xf32, #tpu.memory_space<vmem>>, vector<1x8xf32>
    %211 = vector.shape_cast %210 : vector<1x8xf32> to vector<1x1x8xf32>
    %212 = vector.broadcast %211 : vector<1x1x8xf32> to vector<16x16x8xf32>
    %213 = arith.mulf %209, %212 : vector<16x16x8xf32>
    %c0_178 = arith.constant 0 : index
    %c4_179 = arith.constant 4 : index
    %c0_180 = arith.constant 0 : index
    %214 = vector.load %arg20[%c0_178, %c4_179, %c0_180] : memref<16x32x8xf32, #tpu.memory_space<vmem>>, vector<16x16x8xf32>
    %c1_181 = arith.constant 1 : index
    %c0_182 = arith.constant 0 : index
    %215 = vector.load %arg14[%c1_181, %c0_182] : memref<11x8xf32, #tpu.memory_space<vmem>>, vector<1x8xf32>
    %216 = vector.shape_cast %215 : vector<1x8xf32> to vector<1x1x8xf32>
    %217 = vector.broadcast %216 : vector<1x1x8xf32> to vector<16x16x8xf32>
    %218 = arith.mulf %214, %217 : vector<16x16x8xf32>
    %219 = arith.addf %213, %218 : vector<16x16x8xf32>
    %c0_183 = arith.constant 0 : index
    %c5_184 = arith.constant 5 : index
    %c0_185 = arith.constant 0 : index
    %220 = vector.load %arg20[%c0_183, %c5_184, %c0_185] : memref<16x32x8xf32, #tpu.memory_space<vmem>>, vector<16x16x8xf32>
    %c2_186 = arith.constant 2 : index
    %c0_187 = arith.constant 0 : index
    %221 = vector.load %arg14[%c2_186, %c0_187] : memref<11x8xf32, #tpu.memory_space<vmem>>, vector<1x8xf32>
    %222 = vector.shape_cast %221 : vector<1x8xf32> to vector<1x1x8xf32>
    %223 = vector.broadcast %222 : vector<1x1x8xf32> to vector<16x16x8xf32>
    %224 = arith.mulf %220, %223 : vector<16x16x8xf32>
    %225 = arith.addf %219, %224 : vector<16x16x8xf32>
    %c0_188 = arith.constant 0 : index
    %c6_189 = arith.constant 6 : index
    %c0_190 = arith.constant 0 : index
    %226 = vector.load %arg20[%c0_188, %c6_189, %c0_190] : memref<16x32x8xf32, #tpu.memory_space<vmem>>, vector<16x16x8xf32>
    %c3_191 = arith.constant 3 : index
    %c0_192 = arith.constant 0 : index
    %227 = vector.load %arg14[%c3_191, %c0_192] : memref<11x8xf32, #tpu.memory_space<vmem>>, vector<1x8xf32>
    %228 = vector.shape_cast %227 : vector<1x8xf32> to vector<1x1x8xf32>
    %229 = vector.broadcast %228 : vector<1x1x8xf32> to vector<16x16x8xf32>
    %230 = arith.mulf %226, %229 : vector<16x16x8xf32>
    %231 = arith.addf %225, %230 : vector<16x16x8xf32>
    %c0_193 = arith.constant 0 : index
    %c7_194 = arith.constant 7 : index
    %c0_195 = arith.constant 0 : index
    %232 = vector.load %arg20[%c0_193, %c7_194, %c0_195] : memref<16x32x8xf32, #tpu.memory_space<vmem>>, vector<16x16x8xf32>
    %c4_196 = arith.constant 4 : index
    %c0_197 = arith.constant 0 : index
    %233 = vector.load %arg14[%c4_196, %c0_197] : memref<11x8xf32, #tpu.memory_space<vmem>>, vector<1x8xf32>
    %234 = vector.shape_cast %233 : vector<1x8xf32> to vector<1x1x8xf32>
    %235 = vector.broadcast %234 : vector<1x1x8xf32> to vector<16x16x8xf32>
    %236 = arith.mulf %232, %235 : vector<16x16x8xf32>
    %237 = arith.addf %231, %236 : vector<16x16x8xf32>
    %c0_198 = arith.constant 0 : index
    %c8_199 = arith.constant 8 : index
    %c0_200 = arith.constant 0 : index
    %238 = vector.load %arg20[%c0_198, %c8_199, %c0_200] : memref<16x32x8xf32, #tpu.memory_space<vmem>>, vector<16x16x8xf32>
    %c5_201 = arith.constant 5 : index
    %c0_202 = arith.constant 0 : index
    %239 = vector.load %arg14[%c5_201, %c0_202] : memref<11x8xf32, #tpu.memory_space<vmem>>, vector<1x8xf32>
    %240 = vector.shape_cast %239 : vector<1x8xf32> to vector<1x1x8xf32>
    %241 = vector.broadcast %240 : vector<1x1x8xf32> to vector<16x16x8xf32>
    %242 = arith.mulf %238, %241 : vector<16x16x8xf32>
    %243 = arith.addf %237, %242 : vector<16x16x8xf32>
    %c0_203 = arith.constant 0 : index
    %c9_204 = arith.constant 9 : index
    %c0_205 = arith.constant 0 : index
    %244 = vector.load %arg20[%c0_203, %c9_204, %c0_205] : memref<16x32x8xf32, #tpu.memory_space<vmem>>, vector<16x16x8xf32>
    %c6_206 = arith.constant 6 : index
    %c0_207 = arith.constant 0 : index
    %245 = vector.load %arg14[%c6_206, %c0_207] : memref<11x8xf32, #tpu.memory_space<vmem>>, vector<1x8xf32>
    %246 = vector.shape_cast %245 : vector<1x8xf32> to vector<1x1x8xf32>
    %247 = vector.broadcast %246 : vector<1x1x8xf32> to vector<16x16x8xf32>
    %248 = arith.mulf %244, %247 : vector<16x16x8xf32>
    %249 = arith.addf %243, %248 : vector<16x16x8xf32>
    %c0_208 = arith.constant 0 : index
    %c10_209 = arith.constant 10 : index
    %c0_210 = arith.constant 0 : index
    %250 = vector.load %arg20[%c0_208, %c10_209, %c0_210] : memref<16x32x8xf32, #tpu.memory_space<vmem>>, vector<16x16x8xf32>
    %c7_211 = arith.constant 7 : index
    %c0_212 = arith.constant 0 : index
    %251 = vector.load %arg14[%c7_211, %c0_212] : memref<11x8xf32, #tpu.memory_space<vmem>>, vector<1x8xf32>
    %252 = vector.shape_cast %251 : vector<1x8xf32> to vector<1x1x8xf32>
    %253 = vector.broadcast %252 : vector<1x1x8xf32> to vector<16x16x8xf32>
    %254 = arith.mulf %250, %253 : vector<16x16x8xf32>
    %255 = arith.addf %249, %254 : vector<16x16x8xf32>
    %c0_213 = arith.constant 0 : index
    %c11 = arith.constant 11 : index
    %c0_214 = arith.constant 0 : index
    %256 = vector.load %arg20[%c0_213, %c11, %c0_214] : memref<16x32x8xf32, #tpu.memory_space<vmem>>, vector<16x16x8xf32>
    %c8_215 = arith.constant 8 : index
    %c0_216 = arith.constant 0 : index
    %257 = vector.load %arg14[%c8_215, %c0_216] : memref<11x8xf32, #tpu.memory_space<vmem>>, vector<1x8xf32>
    %258 = vector.shape_cast %257 : vector<1x8xf32> to vector<1x1x8xf32>
    %259 = vector.broadcast %258 : vector<1x1x8xf32> to vector<16x16x8xf32>
    %260 = arith.mulf %256, %259 : vector<16x16x8xf32>
    %261 = arith.addf %255, %260 : vector<16x16x8xf32>
    %c0_217 = arith.constant 0 : index
    %c12 = arith.constant 12 : index
    %c0_218 = arith.constant 0 : index
    %262 = vector.load %arg20[%c0_217, %c12, %c0_218] : memref<16x32x8xf32, #tpu.memory_space<vmem>>, vector<16x16x8xf32>
    %c9_219 = arith.constant 9 : index
    %c0_220 = arith.constant 0 : index
    %263 = vector.load %arg14[%c9_219, %c0_220] : memref<11x8xf32, #tpu.memory_space<vmem>>, vector<1x8xf32>
    %264 = vector.shape_cast %263 : vector<1x8xf32> to vector<1x1x8xf32>
    %265 = vector.broadcast %264 : vector<1x1x8xf32> to vector<16x16x8xf32>
    %266 = arith.mulf %262, %265 : vector<16x16x8xf32>
    %267 = arith.addf %261, %266 : vector<16x16x8xf32>
    %c0_221 = arith.constant 0 : index
    %c13 = arith.constant 13 : index
    %c0_222 = arith.constant 0 : index
    %268 = vector.load %arg20[%c0_221, %c13, %c0_222] : memref<16x32x8xf32, #tpu.memory_space<vmem>>, vector<16x16x8xf32>
    %c10_223 = arith.constant 10 : index
    %c0_224 = arith.constant 0 : index
    %269 = vector.load %arg14[%c10_223, %c0_224] : memref<11x8xf32, #tpu.memory_space<vmem>>, vector<1x8xf32>
    %270 = vector.shape_cast %269 : vector<1x8xf32> to vector<1x1x8xf32>
    %271 = vector.broadcast %270 : vector<1x1x8xf32> to vector<16x16x8xf32>
    %272 = arith.mulf %268, %271 : vector<16x16x8xf32>
    %273 = arith.addf %267, %272 : vector<16x16x8xf32>
    %c0_225 = arith.constant 0 : index
    %c0_226 = arith.constant 0 : index
    %274 = vector.load %arg15[%c0_225, %c0_226] : memref<1x8xf32, #tpu.memory_space<vmem>>, vector<1x8xf32>
    %275 = vector.shape_cast %274 : vector<1x8xf32> to vector<1x1x8xf32>
    %276 = vector.broadcast %275 : vector<1x1x8xf32> to vector<16x16x8xf32>
    %277 = arith.addf %273, %276 : vector<16x16x8xf32>
    %cst_227 = arith.constant 0.000000e+00 : f32
    %278 = vector.broadcast %cst_227 : f32 to vector<16x16x8xf32>
    %279 = arith.maximumf %277, %278 : vector<16x16x8xf32>
    %280 = arith.addf %136, %279 : vector<16x16x8xf32>
    %281 = vector.shape_cast %280 : vector<16x16x8xf32> to vector<256x8xf32>
    %282 = arith.truncf %281 : vector<256x8xf32> to vector<256x8xbf16>
    %c0_228 = arith.constant 0 : index
    %c0_229 = arith.constant 0 : index
    %283 = vector.load %arg16[%c0_228, %c0_229] : memref<8x8xbf16, #tpu.memory_space<vmem>>, vector<8x8xbf16>
    %cst_230 = arith.constant dense<0.000000e+00> : vector<256x8xf32>
    %284 = tpu.matmul %282, %283, %cst_230 {dimension_numbers = #tpu.dot_dimension_numbers<[1], [0], [0], [1], [0, 0, 1, 1], [], []>} : vector<256x8xbf16>, vector<8x8xbf16>, vector<256x8xf32> -> vector<256x8xf32>
    %c0_231 = arith.constant 0 : index
    %c0_232 = arith.constant 0 : index
    %285 = vector.load %arg17[%c0_231, %c0_232] : memref<1x8xf32, #tpu.memory_space<vmem>>, vector<1x8xf32>
    %286 = vector.broadcast %285 : vector<1x8xf32> to vector<256x8xf32>
    %287 = arith.addf %284, %286 : vector<256x8xf32>
    %288 = vector.shape_cast %287 : vector<256x8xf32> to vector<1x16x16x8xf32>
    %c0_233 = arith.constant 0 : index
    %c0_234 = arith.constant 0 : index
    %c0_235 = arith.constant 0 : index
    %c0_236 = arith.constant 0 : index
    %289 = vector.load %arg18[%c0_233, %c0_234, %c0_235, %c0_236] : memref<1x16x16x8xf32, #tpu.memory_space<vmem>>, vector<1x16x16x8xf32>
    tpu.vector_store %arg18[%c0_233, %c0_234, %c0_235, %c0_236], %288 {strides = array<i32>} : memref<1x16x16x8xf32, #tpu.memory_space<vmem>>, vector<1x16x16x8xf32>,
    return
  }
  func.func @transform_0(%arg0: i32) -> (i32, i32, i32, i32) {
    %c0_i32 = arith.constant 0 : i32
    %c0_i32_0 = arith.constant 0 : i32
    %c0_i32_1 = arith.constant 0 : i32
    %c0_i32_2 = arith.constant 0 : i32
    return %arg0, %c0_i32, %c0_i32_0, %c0_i32_1 : i32, i32, i32, i32
  }
  func.func @transform_1(%arg0: i32) -> (i32, i32) {
    %c0_i32 = arith.constant 0 : i32
    %c0_i32_0 = arith.constant 0 : i32
    %c0_i32_1 = arith.constant 0 : i32
    return %c0_i32, %c0_i32_0 : i32, i32
  }
  func.func @transform_2(%arg0: i32) -> (i32, i32) {
    %c0_i32 = arith.constant 0 : i32
    %c0_i32_0 = arith.constant 0 : i32
    %c0_i32_1 = arith.constant 0 : i32
    return %c0_i32, %c0_i32_0 : i32, i32
  }
  func.func @transform_3(%arg0: i32) -> (i32, i32) {
    %c0_i32 = arith.constant 0 : i32
    %c0_i32_0 = arith.constant 0 : i32
    %c0_i32_1 = arith.constant 0 : i32
    return %c0_i32, %c0_i32_0 : i32, i32
  }
  func.func @transform_4(%arg0: i32) -> (i32, i32) {
    %c0_i32 = arith.constant 0 : i32
    %c0_i32_0 = arith.constant 0 : i32
    %c0_i32_1 = arith.constant 0 : i32
    return %c0_i32, %c0_i32_0 : i32, i32
  }
  func.func @transform_5(%arg0: i32) -> (i32, i32) {
    %c0_i32 = arith.constant 0 : i32
    %c0_i32_0 = arith.constant 0 : i32
    %c0_i32_1 = arith.constant 0 : i32
    return %c0_i32, %c0_i32_0 : i32, i32
  }
  func.func @transform_6(%arg0: i32) -> (i32, i32) {
    %c0_i32 = arith.constant 0 : i32
    %c0_i32_0 = arith.constant 0 : i32
    %c0_i32_1 = arith.constant 0 : i32
    return %c0_i32, %c0_i32_0 : i32, i32
  }
  func.func @transform_7(%arg0: i32) -> (i32, i32) {
    %c0_i32 = arith.constant 0 : i32
    %c0_i32_0 = arith.constant 0 : i32
    %c0_i32_1 = arith.constant 0 : i32
    return %c0_i32, %c0_i32_0 : i32, i32
  }
  func.func @transform_8(%arg0: i32) -> (i32, i32) {
    %c0_i32 = arith.constant 0 : i32
    %c0_i32_0 = arith.constant 0 : i32
    %c0_i32_1 = arith.constant 0 : i32
    return %c0_i32, %c0_i32_0 : i32, i32
  }
  func.func @transform_9(%arg0: i32) -> (i32, i32) {
    %c0_i32 = arith.constant 0 : i32
    %c0_i32_0 = arith.constant 0 : i32
    %c0_i32_1 = arith.constant 0 : i32
    return %c0_i32, %c0_i32_0 : i32, i32
  }
  func.func @transform_10(%arg0: i32) -> (i32, i32) {
    %c0_i32 = arith.constant 0 : i32
    %c0_i32_0 = arith.constant 0 : i32
    %c0_i32_1 = arith.constant 0 : i32
    return %c0_i32, %c0_i32_0 : i32, i32
  }
  func.func @transform_11(%arg0: i32) -> (i32, i32) {
    %c0_i32 = arith.constant 0 : i32
    %c0_i32_0 = arith.constant 0 : i32
    %c0_i32_1 = arith.constant 0 : i32
    return %c0_i32, %c0_i32_0 : i32, i32
  }
  func.func @transform_12(%arg0: i32) -> (i32, i32) {
    %c0_i32 = arith.constant 0 : i32
    %c0_i32_0 = arith.constant 0 : i32
    %c0_i32_1 = arith.constant 0 : i32
    return %c0_i32, %c0_i32_0 : i32, i32
  }
  func.func @transform_13(%arg0: i32) -> (i32, i32) {
    %c0_i32 = arith.constant 0 : i32
    %c0_i32_0 = arith.constant 0 : i32
    %c0_i32_1 = arith.constant 0 : i32
    return %c0_i32, %c0_i32_0 : i32, i32
  }
  func.func @transform_14(%arg0: i32) -> (i32, i32) {
    %c0_i32 = arith.constant 0 : i32
    %c0_i32_0 = arith.constant 0 : i32
    %c0_i32_1 = arith.constant 0 : i32
    return %c0_i32, %c0_i32_0 : i32, i32
  }
  func.func @transform_15(%arg0: i32) -> (i32, i32) {
    %c0_i32 = arith.constant 0 : i32
    %c0_i32_0 = arith.constant 0 : i32
    %c0_i32_1 = arith.constant 0 : i32
    return %c0_i32, %c0_i32_0 : i32, i32
  }
  func.func @transform_16(%arg0: i32) -> (i32, i32) {
    %c0_i32 = arith.constant 0 : i32
    %c0_i32_0 = arith.constant 0 : i32
    %c0_i32_1 = arith.constant 0 : i32
    return %c0_i32, %c0_i32_0 : i32, i32
  }
  func.func @transform_17(%arg0: i32) -> (i32, i32, i32, i32) {
    %c0_i32 = arith.constant 0 : i32
    %c0_i32_0 = arith.constant 0 : i32
    %c0_i32_1 = arith.constant 0 : i32
    %c0_i32_2 = arith.constant 0 : i32
    return %arg0, %c0_i32, %c0_i32_0, %c0_i32_1 : i32, i32, i32, i32
  }
}

</mosaic_0001>

<llo_original>
// kernel: tpu_custom_call.1
$region0: #{tpu_custom_call.1}
  #allocation0 [shape = 'u32[]', space=smem, size = 0x4, offset = 0x4, fixed_abs, tag = 'smem constant byte address 0x4 - core index']
  #allocation1 [shape = 'u32[144,128]{1,0:T(1,128)}', space=vmem, size = 0x12000, scoped, tag = 'internal scratch']
  #allocation2 [shape = 'f32[26,16,8]{2,1,0:T(8,128)}', space=vmem, size = 0x34000, scoped, tag = 'scratch operand']
  #allocation3 [shape = 'f32[16,32,8]{2,1,0:T(8,128)}', space=vmem, size = 0x40000, scoped, tag = 'scratch operand']
  %s0 = inlined_call_operand.vmem [shape: bf16[2,16,16,4], index: 0, kind: input, shape index: {}]
  %s1 = inlined_call_operand.vmem [shape: bf16[4,8], index: 1, kind: input, shape index: {}]
  %s2 = inlined_call_operand.vmem [shape: f32[1,8], index: 2, kind: input, shape index: {}]
  %s3 = inlined_call_operand.vmem [shape: f32[5,8], index: 3, kind: input, shape index: {}]
  %s4 = inlined_call_operand.vmem [shape: f32[1,8], index: 4, kind: input, shape index: {}]
  %s5 = inlined_call_operand.vmem [shape: f32[3,8], index: 5, kind: input, shape index: {}]
  %s6 = inlined_call_operand.vmem [shape: f32[1,8], index: 6, kind: input, shape index: {}]
  %s7 = inlined_call_operand.vmem [shape: f32[11,8], index: 7, kind: input, shape index: {}]
  %s8 = inlined_call_operand.vmem [shape: f32[1,8], index: 8, kind: input, shape index: {}]
  %s9 = inlined_call_operand.vmem [shape: f32[5,8], index: 9, kind: input, shape index: {}]
  %s10 = inlined_call_operand.vmem [shape: f32[1,8], index: 10, kind: input, shape index: {}]
  %s11 = inlined_call_operand.vmem [shape: f32[3,8], index: 11, kind: input, shape index: {}]
  %s12 = inlined_call_operand.vmem [shape: f32[1,8], index: 12, kind: input, shape index: {}]
  %s13 = inlined_call_operand.vmem [shape: f32[11,8], index: 13, kind: input, shape index: {}]
  %s14 = inlined_call_operand.vmem [shape: f32[1,8], index: 14, kind: input, shape index: {}]
  %s15 = inlined_call_operand.vmem [shape: bf16[8,8], index: 15, kind: input, shape index: {}]
  %s16 = inlined_call_operand.vmem [shape: f32[1,8], index: 16, kind: input, shape index: {}]
  %s17 = inlined_call_operand.vmem [shape: f32[2,16,16,8], index: 17, kind: output, shape index: {}]
  %s18 = sld [smem:[#allocation0]]
  $region101: #{tpu_custom_call.1} parent=0
    _
  %s20 = ssub.s32 1, %s18
  %s21 = scalar_select 0, %s20, %s18
  loop: start=0, step=1, limit=4
  $region2: #{tpu_custom_call.1} parent=0 // loop_pre_header
    _
  $region3: #{tpu_custom_call.1} parent=0 // loop_header
    %s23 = sphi 0, %s27
    %p24 = scmp.ge.s32.totalorder %s23, 4
    %s33 = sphi 0, %s35
    %s36 = sphi 0, %s33
    %s37 = sphi 0, %s36
    %s53 = sphi 0, %s37
    %s57 = sphi 0, %s57
    %s59 = sphi 0, %s57
    %s60 = sphi 0, %s59
    %s74 = sphi 0, %s60
    %s78 = sphi 0, %s78
    %s80 = sphi 0, %s78
    %s81 = sphi 0, %s80
    %s95 = sphi 0, %s81
    %s99 = sphi 0, %s99
    %s101 = sphi 0, %s99
    %s102 = sphi 0, %s101
    %s116 = sphi 0, %s102
    %s120 = sphi 0, %s120
    %s122 = sphi 0, %s120
    %s123 = sphi 0, %s122
    %s137 = sphi 0, %s123
    %s141 = sphi 0, %s141
    %s143 = sphi 0, %s141
    %s144 = sphi 0, %s143
    %s158 = sphi 0, %s144
    %s162 = sphi 0, %s162
    %s164 = sphi 0, %s162
    %s165 = sphi 0, %s164
    %s179 = sphi 0, %s165
    %s183 = sphi 0, %s183
    %s185 = sphi 0, %s183
    %s186 = sphi 0, %s185
    %s200 = sphi 0, %s186
    %s204 = sphi 0, %s204
    %s206 = sphi 0, %s204
    %s207 = sphi 0, %s206
    %s221 = sphi 0, %s207
    %s225 = sphi 0, %s225
    %s227 = sphi 0, %s225
    %s228 = sphi 0, %s227
    %s242 = sphi 0, %s228
    %s246 = sphi 0, %s246
    %s248 = sphi 0, %s246
    %s249 = sphi 0, %s248
    %s263 = sphi 0, %s249
    %s267 = sphi 0, %s267
    %s269 = sphi 0, %s267
    %s270 = sphi 0, %s269
    %s284 = sphi 0, %s270
    %s288 = sphi 0, %s288
    %s290 = sphi 0, %s288
    %s291 = sphi 0, %s290
    %s305 = sphi 0, %s291
    %s309 = sphi 0, %s309
    %s311 = sphi 0, %s309
    %s312 = sphi 0, %s311
    %s326 = sphi 0, %s312
    %s330 = sphi 0, %s330
    %s332 = sphi 0, %s330
    %s333 = sphi 0, %s332
    %s347 = sphi 0, %s333
    %s351 = sphi 0, %s351
    %s353 = sphi 0, %s351
    %s354 = sphi 0, %s353
    %s368 = sphi 0, %s354
    %s372 = sphi 0, %s372
    %s374 = sphi 0, %s372
    %s375 = sphi 0, %s374
    %s389 = sphi 0, %s375
    %s395 = sphi 0, %s397
    %s398 = sphi 0, %s395
    %s399 = sphi 0, %s398
    %s415 = sphi 0, %s399
  $region4: #{tpu_custom_call.1} parent=0 // loop_header_branch
    %26 = sbr.rel (%p24) target = $region8
  $region5: #{tpu_custom_call.1} parent=0 // loop_body
    %s28 = ssub.s32 %s23, 1
    %s29 = ssub.s32 %s23, 2
    %s30 = sadd.s32 %s23, 1
    %s31 = ssub.s32 %s23, %s30
    %p32 = scmp.eq.s32.totalorder %s31, 0
    %s34 = sadd.s32 %s33, 1
    %s35 = scalar_select %p32, %s33, %s34
    %p38 = pneg %p32
    %p39 = scmp.eq.s32.totalorder %s23, 1
    %p40 = por %p38, %p39
    %p41 = scmp.ne.s32.totalorder %s33, %s36
    %p42 = scmp.eq.s32.totalorder %s23, 0
    %p43 = por %p41, %p42
    %p44 = scmp.ne.s32.totalorder %s33, %s36
    %p45 = scmp.eq.s32.totalorder %s28, 1
    %p46 = por %p44, %p45
    %p47 = scmp.ne.s32.totalorder %s36, %s37
    %p48 = scmp.eq.s32.totalorder %s28, 0
    %p49 = por %p47, %p48
    %p50 = scmp.ne.s32.totalorder %s36, %s37
    %p51 = scmp.eq.s32.totalorder %s29, 1
    %p52 = por %p50, %p51
    %p54 = scmp.ne.s32.totalorder %s37, %s53
    %p55 = scmp.eq.s32.totalorder %s29, 0
    %p56 = por %p54, %p55
    %s58 = sadd.s32 %s57, 1
    %p61 = scmp.eq.s32.totalorder %s23, 1
    %p62 = scmp.ne.s32.totalorder %s57, %s59
    %p63 = scmp.eq.s32.totalorder %s23, 0
    %p64 = por %p62, %p63
    %p65 = scmp.ne.s32.totalorder %s57, %s59
    %p66 = scmp.eq.s32.totalorder %s28, 1
    %p67 = por %p65, %p66
    %p68 = scmp.ne.s32.totalorder %s59, %s60
    %p69 = scmp.eq.s32.totalorder %s28, 0
    %p70 = por %p68, %p69
    %p71 = scmp.ne.s32.totalorder %s59, %s60
    %p72 = scmp.eq.s32.totalorder %s29, 1
    %p73 = por %p71, %p72
    %p75 = scmp.ne.s32.totalorder %s60, %s74
    %p76 = scmp.eq.s32.totalorder %s29, 0
    %p77 = por %p75, %p76
    %s79 = sadd.s32 %s78, 1
    %p82 = scmp.eq.s32.totalorder %s23, 1
    %p83 = scmp.ne.s32.totalorder %s78, %s80
    %p84 = scmp.eq.s32.totalorder %s23, 0
    %p85 = por %p83, %p84
    %p86 = scmp.ne.s32.totalorder %s78, %s80
    %p87 = scmp.eq.s32.totalorder %s28, 1
    %p88 = por %p86, %p87
    %p89 = scmp.ne.s32.totalorder %s80, %s81
    %p90 = scmp.eq.s32.totalorder %s28, 0
    %p91 = por %p89, %p90
    %p92 = scmp.ne.s32.totalorder %s80, %s81
    %p93 = scmp.eq.s32.totalorder %s29, 1
    %p94 = por %p92, %p93
    %p96 = scmp.ne.s32.totalorder %s81, %s95
    %p97 = scmp.eq.s32.totalorder %s29, 0
    %p98 = por %p96, %p97
    %s100 = sadd.s32 %s99, 1
    %p103 = scmp.eq.s32.totalorder %s23, 1
    %p104 = scmp.ne.s32.totalorder %s99, %s101
    %p105 = scmp.eq.s32.totalorder %s23, 0
    %p106 = por %p104, %p105
    %p107 = scmp.ne.s32.totalorder %s99, %s101
    %p108 = scmp.eq.s32.totalorder %s28, 1
    %p109 = por %p107, %p108
    %p110 = scmp.ne.s32.totalorder %s101, %s102
    %p111 = scmp.eq.s32.totalorder %s28, 0
    %p112 = por %p110, %p111
    %p113 = scmp.ne.s32.totalorder %s101, %s102
    %p114 = scmp.eq.s32.totalorder %s29, 1
    %p115 = por %p113, %p114
    %p117 = scmp.ne.s32.totalorder %s102, %s116
    %p118 = scmp.eq.s32.totalorder %s29, 0
    %p119 = por %p117, %p118
    %s121 = sadd.s32 %s120, 1
    %p124 = scmp.eq.s32.totalorder %s23, 1
    %p125 = scmp.ne.s32.totalorder %s120, %s122
    %p126 = scmp.eq.s32.totalorder %s23, 0
    %p127 = por %p125, %p126
    %p128 = scmp.ne.s32.totalorder %s120, %s122
    %p129 = scmp.eq.s32.totalorder %s28, 1
    %p130 = por %p128, %p129
    %p131 = scmp.ne.s32.totalorder %s122, %s123
    %p132 = scmp.eq.s32.totalorder %s28, 0
    %p133 = por %p131, %p132
    %p134 = scmp.ne.s32.totalorder %s122, %s123
    %p135 = scmp.eq.s32.totalorder %s29, 1
    %p136 = por %p134, %p135
    %p138 = scmp.ne.s32.totalorder %s123, %s137
    %p139 = scmp.eq.s32.totalorder %s29, 0
    %p140 = por %p138, %p139
    %s142 = sadd.s32 %s141, 1
    %p145 = scmp.eq.s32.totalorder %s23, 1
    %p146 = scmp.ne.s32.totalorder %s141, %s143
    %p147 = scmp.eq.s32.totalorder %s23, 0
    %p148 = por %p146, %p147
    %p149 = scmp.ne.s32.totalorder %s141, %s143
    %p150 = scmp.eq.s32.totalorder %s28, 1
    %p151 = por %p149, %p150
    %p152 = scmp.ne.s32.totalorder %s143, %s144
    %p153 = scmp.eq.s32.totalorder %s28, 0
    %p154 = por %p152, %p153
    %p155 = scmp.ne.s32.totalorder %s143, %s144
    %p156 = scmp.eq.s32.totalorder %s29, 1
    %p157 = por %p155, %p156
    %p159 = scmp.ne.s32.totalorder %s144, %s158
    %p160 = scmp.eq.s32.totalorder %s29, 0
    %p161 = por %p159, %p160
    %s163 = sadd.s32 %s162, 1
    %p166 = scmp.eq.s32.totalorder %s23, 1
    %p167 = scmp.ne.s32.totalorder %s162, %s164
    %p168 = scmp.eq.s32.totalorder %s23, 0
    %p169 = por %p167, %p168
    %p170 = scmp.ne.s32.totalorder %s162, %s164
    %p171 = scmp.eq.s32.totalorder %s28, 1
    %p172 = por %p170, %p171
    %p173 = scmp.ne.s32.totalorder %s164, %s165
    %p174 = scmp.eq.s32.totalorder %s28, 0
    %p175 = por %p173, %p174
    %p176 = scmp.ne.s32.totalorder %s164, %s165
    %p177 = scmp.eq.s32.totalorder %s29, 1
    %p178 = por %p176, %p177
    %p180 = scmp.ne.s32.totalorder %s165, %s179
    %p181 = scmp.eq.s32.totalorder %s29, 0
    %p182 = por %p180, %p181
    %s184 = sadd.s32 %s183, 1
    %p187 = scmp.eq.s32.totalorder %s23, 1
    %p188 = scmp.ne.s32.totalorder %s183, %s185
    %p189 = scmp.eq.s32.totalorder %s23, 0
    %p190 = por %p188, %p189
    %p191 = scmp.ne.s32.totalorder %s183, %s185
    %p192 = scmp.eq.s32.totalorder %s28, 1
    %p193 = por %p191, %p192
    %p194 = scmp.ne.s32.totalorder %s185, %s186
    %p195 = scmp.eq.s32.totalorder %s28, 0
    %p196 = por %p194, %p195
    %p197 = scmp.ne.s32.totalorder %s185, %s186
    %p198 = scmp.eq.s32.totalorder %s29, 1
    %p199 = por %p197, %p198
    %p201 = scmp.ne.s32.totalorder %s186, %s200
    %p202 = scmp.eq.s32.totalorder %s29, 0
    %p203 = por %p201, %p202
    %s205 = sadd.s32 %s204, 1
    %p208 = scmp.eq.s32.totalorder %s23, 1
    %p209 = scmp.ne.s32.totalorder %s204, %s206
    %p210 = scmp.eq.s32.totalorder %s23, 0
    %p211 = por %p209, %p210
    %p212 = scmp.ne.s32.totalorder %s204, %s206
    %p213 = scmp.eq.s32.totalorder %s28, 1
    %p214 = por %p212, %p213
    %p215 = scmp.ne.s32.totalorder %s206, %s207
    %p216 = scmp.eq.s32.totalorder %s28, 0
    %p217 = por %p215, %p216
    %p218 = scmp.ne.s32.totalorder %s206, %s207
    %p219 = scmp.eq.s32.totalorder %s29, 1
    %p220 = por %p218, %p219
    %p222 = scmp.ne.s32.totalorder %s207, %s221
    %p223 = scmp.eq.s32.totalorder %s29, 0
    %p224 = por %p222, %p223
    %s226 = sadd.s32 %s225, 1
    %p229 = scmp.eq.s32.totalorder %s23, 1
    %p230 = scmp.ne.s32.totalorder %s225, %s227
    %p231 = scmp.eq.s32.totalorder %s23, 0
    %p232 = por %p230, %p231
    %p233 = scmp.ne.s32.totalorder %s225, %s227
    %p234 = scmp.eq.s32.totalorder %s28, 1
    %p235 = por %p233, %p234
    %p236 = scmp.ne.s32.totalorder %s227, %s228
    %p237 = scmp.eq.s32.totalorder %s28, 0
    %p238 = por %p236, %p237
    %p239 = scmp.ne.s32.totalorder %s227, %s228
    %p240 = scmp.eq.s32.totalorder %s29, 1
    %p241 = por %p239, %p240
    %p243 = scmp.ne.s32.totalorder %s228, %s242
    %p244 = scmp.eq.s32.totalorder %s29, 0
    %p245 = por %p243, %p244
    %s247 = sadd.s32 %s246, 1
    %p250 = scmp.eq.s32.totalorder %s23, 1
    %p251 = scmp.ne.s32.totalorder %s246, %s248
    %p252 = scmp.eq.s32.totalorder %s23, 0
    %p253 = por %p251, %p252
    %p254 = scmp.ne.s32.totalorder %s246, %s248
    %p255 = scmp.eq.s32.totalorder %s28, 1
    %p256 = por %p254, %p255
    %p257 = scmp.ne.s32.totalorder %s248, %s249
    %p258 = scmp.eq.s32.totalorder %s28, 0
    %p259 = por %p257, %p258
    %p260 = scmp.ne.s32.totalorder %s248, %s249
    %p261 = scmp.eq.s32.totalorder %s29, 1
    %p262 = por %p260, %p261
    %p264 = scmp.ne.s32.totalorder %s249, %s263
    %p265 = scmp.eq.s32.totalorder %s29, 0
    %p266 = por %p264, %p265
    %s268 = sadd.s32 %s267, 1
    %p271 = scmp.eq.s32.totalorder %s23, 1
    %p272 = scmp.ne.s32.totalorder %s267, %s269
    %p273 = scmp.eq.s32.totalorder %s23, 0
    %p274 = por %p272, %p273
    %p275 = scmp.ne.s32.totalorder %s267, %s269
    %p276 = scmp.eq.s32.totalorder %s28, 1
    %p277 = por %p275, %p276
    %p278 = scmp.ne.s32.totalorder %s269, %s270
    %p279 = scmp.eq.s32.totalorder %s28, 0
    %p280 = por %p278, %p279
    %p281 = scmp.ne.s32.totalorder %s269, %s270
    %p282 = scmp.eq.s32.totalorder %s29, 1
    %p283 = por %p281, %p282
    %p285 = scmp.ne.s32.totalorder %s270, %s284
    %p286 = scmp.eq.s32.totalorder %s29, 0
    %p287 = por %p285, %p286
    %s289 = sadd.s32 %s288, 1
    %p292 = scmp.eq.s32.totalorder %s23, 1
    %p293 = scmp.ne.s32.totalorder %s288, %s290
    %p294 = scmp.eq.s32.totalorder %s23, 0
    %p295 = por %p293, %p294
    %p296 = scmp.ne.s32.totalorder %s288, %s290
    %p297 = scmp.eq.s32.totalorder %s28, 1
    %p298 = por %p296, %p297
    %p299 = scmp.ne.s32.totalorder %s290, %s291
    %p300 = scmp.eq.s32.totalorder %s28, 0
    %p301 = por %p299, %p300
    %p302 = scmp.ne.s32.totalorder %s290, %s291
    %p303 = scmp.eq.s32.totalorder %s29, 1
    %p304 = por %p302, %p303
    %p306 = scmp.ne.s32.totalorder %s291, %s305
    %p307 = scmp.eq.s32.totalorder %s29, 0
    %p308 = por %p306, %p307
    %s310 = sadd.s32 %s309, 1
    %p313 = scmp.eq.s32.totalorder %s23, 1
    %p314 = scmp.ne.s32.totalorder %s309, %s311
    %p315 = scmp.eq.s32.totalorder %s23, 0
    %p316 = por %p314, %p315
    %p317 = scmp.ne.s32.totalorder %s309, %s311
    %p318 = scmp.eq.s32.totalorder %s28, 1
    %p319 = por %p317, %p318
    %p320 = scmp.ne.s32.totalorder %s311, %s312
    %p321 = scmp.eq.s32.totalorder %s28, 0
    %p322 = por %p320, %p321
    %p323 = scmp.ne.s32.totalorder %s311, %s312
    %p324 = scmp.eq.s32.totalorder %s29, 1
    %p325 = por %p323, %p324
    %p327 = scmp.ne.s32.totalorder %s312, %s326
    %p328 = scmp.eq.s32.totalorder %s29, 0
    %p329 = por %p327, %p328
    %s331 = sadd.s32 %s330, 1
    %p334 = scmp.eq.s32.totalorder %s23, 1
    %p335 = scmp.ne.s32.totalorder %s330, %s332
    %p336 = scmp.eq.s32.totalorder %s23, 0
    %p337 = por %p335, %p336
    %p338 = scmp.ne.s32.totalorder %s330, %s332
    %p339 = scmp.eq.s32.totalorder %s28, 1
    %p340 = por %p338, %p339
    %p341 = scmp.ne.s32.totalorder %s332, %s333
    %p342 = scmp.eq.s32.totalorder %s28, 0
    %p343 = por %p341, %p342
    %p344 = scmp.ne.s32.totalorder %s332, %s333
    %p345 = scmp.eq.s32.totalorder %s29, 1
    %p346 = por %p344, %p345
    %p348 = scmp.ne.s32.totalorder %s333, %s347
    %p349 = scmp.eq.s32.totalorder %s29, 0
    %p350 = por %p348, %p349
    %s352 = sadd.s32 %s351, 1
    %p355 = scmp.eq.s32.totalorder %s23, 1
    %p356 = scmp.ne.s32.totalorder %s351, %s353
    %p357 = scmp.eq.s32.totalorder %s23, 0
    %p358 = por %p356, %p357
    %p359 = scmp.ne.s32.totalorder %s351, %s353
    %p360 = scmp.eq.s32.totalorder %s28, 1
    %p361 = por %p359, %p360
    %p362 = scmp.ne.s32.totalorder %s353, %s354
    %p363 = scmp.eq.s32.totalorder %s28, 0
    %p364 = por %p362, %p363
    %p365 = scmp.ne.s32.totalorder %s353, %s354
    %p366 = scmp.eq.s32.totalorder %s29, 1
    %p367 = por %p365, %p366
    %p369 = scmp.ne.s32.totalorder %s354, %s368
    %p370 = scmp.eq.s32.totalorder %s29, 0
    %p371 = por %p369, %p370
    %s373 = sadd.s32 %s372, 1
    %p376 = scmp.eq.s32.totalorder %s23, 1
    %p377 = scmp.ne.s32.totalorder %s372, %s374
    %p378 = scmp.eq.s32.totalorder %s23, 0
    %p379 = por %p377, %p378
    %p380 = scmp.ne.s32.totalorder %s372, %s374
    %p381 = scmp.eq.s32.totalorder %s28, 1
    %p382 = por %p380, %p381
    %p383 = scmp.ne.s32.totalorder %s374, %s375
    %p384 = scmp.eq.s32.totalorder %s28, 0
    %p385 = por %p383, %p384
    %p386 = scmp.ne.s32.totalorder %s374, %s375
    %p387 = scmp.eq.s32.totalorder %s29, 1
    %p388 = por %p386, %p387
    %p390 = scmp.ne.s32.totalorder %s375, %s389
    %p391 = scmp.eq.s32.totalorder %s29, 0
    %p392 = por %p390, %p391
    %s393 = ssub.s32 %s23, %s30
    %p394 = scmp.eq.s32.totalorder %s393, 0
    %s396 = sadd.s32 %s395, 1
    %s397 = scalar_select %p394, %s395, %s396
    %p400 = pneg %p394
    %p401 = scmp.eq.s32.totalorder %s23, 1
    %p402 = por %p400, %p401
    %p403 = scmp.ne.s32.totalorder %s395, %s398
    %p404 = scmp.eq.s32.totalorder %s23, 0
    %p405 = por %p403, %p404
    %p406 = scmp.ne.s32.totalorder %s395, %s398
    %p407 = scmp.eq.s32.totalorder %s28, 1
    %p408 = por %p406, %p407
    %p409 = scmp.ne.s32.totalorder %s398, %s399
    %p410 = scmp.eq.s32.totalorder %s28, 0
    %p411 = por %p409, %p410
    %p412 = scmp.ne.s32.totalorder %s398, %s399
    %p413 = scmp.eq.s32.totalorder %s29, 1
    %p414 = por %p412, %p413
    %p416 = scmp.ne.s32.totalorder %s399, %s415
    %p417 = scmp.eq.s32.totalorder %s29, 0
    %p418 = por %p416, %p417
    %p419 = scmp.le.s32.totalorder 1, %s23
    %p420 = scmp.lt.s32.totalorder %s23, 3
    %p421 = pnand %p419, %p420
    %p422 = pneg %p421
    // Predicated region
    $region9: #{tpu_custom_call.1} parent=5 // pred_check
      _
    $region10: #{tpu_custom_call.1} parent=5 // pred_check_branch
      %424 = sbr.rel (%p421) target = $region12
    $region11: #{tpu_custom_call.1} parent=5 // pred_region
      %s425 = ssub.s32 %s23, 1
      // Predicated region
      $region13: #{tpu_custom_call.1} parent=11 // pred_check
        %p426 = pneg %p70
      $region14: #{tpu_custom_call.1} parent=11 // pred_check_branch
        %428 = sbr.rel (%p426) target = $region16
      $region15: #{tpu_custom_call.1} parent=11 // pred_region
        _
      $region16: #{tpu_custom_call.1} parent=11 // pred_fallthru
        _
      // Predicated region
      $region17: #{tpu_custom_call.1} parent=11 // pred_check
        %p429 = pneg %p91
      $region18: #{tpu_custom_call.1} parent=11 // pred_check_branch
        %431 = sbr.rel (%p429) target = $region20
      $region19: #{tpu_custom_call.1} parent=11 // pred_region
        _
      $region20: #{tpu_custom_call.1} parent=11 // pred_fallthru
        _
      // Predicated region
      $region21: #{tpu_custom_call.1} parent=11 // pred_check
        %p432 = pneg %p112
      $region22: #{tpu_custom_call.1} parent=11 // pred_check_branch
        %434 = sbr.rel (%p432) target = $region24
      $region23: #{tpu_custom_call.1} parent=11 // pred_region
        _
      $region24: #{tpu_custom_call.1} parent=11 // pred_fallthru
        _
      // Predicated region
      $region25: #{tpu_custom_call.1} parent=11 // pred_check
        %p435 = pneg %p133
      $region26: #{tpu_custom_call.1} parent=11 // pred_check_branch
        %437 = sbr.rel (%p435) target = $region28
      $region27: #{tpu_custom_call.1} parent=11 // pred_region
        _
      $region28: #{tpu_custom_call.1} parent=11 // pred_fallthru
        _
      // Predicated region
      $region29: #{tpu_custom_call.1} parent=11 // pred_check
        %p438 = pneg %p154
      $region30: #{tpu_custom_call.1} parent=11 // pred_check_branch
        %440 = sbr.rel (%p438) target = $region32
      $region31: #{tpu_custom_call.1} parent=11 // pred_region
        _
      $region32: #{tpu_custom_call.1} parent=11 // pred_fallthru
        _
      // Predicated region
      $region33: #{tpu_custom_call.1} parent=11 // pred_check
        %p441 = pneg %p175
      $region34: #{tpu_custom_call.1} parent=11 // pred_check_branch
        %443 = sbr.rel (%p441) target = $region36
      $region35: #{tpu_custom_call.1} parent=11 // pred_region
        _
      $region36: #{tpu_custom_call.1} parent=11 // pred_fallthru
        _
      // Predicated region
      $region37: #{tpu_custom_call.1} parent=11 // pred_check
        %p444 = pneg %p196
      $region38: #{tpu_custom_call.1} parent=11 // pred_check_branch
        %446 = sbr.rel (%p444) target = $region40
      $region39: #{tpu_custom_call.1} parent=11 // pred_region
        _
      $region40: #{tpu_custom_call.1} parent=11 // pred_fallthru
        _
      // Predicated region
      $region41: #{tpu_custom_call.1} parent=11 // pred_check
        %p447 = pneg %p217
      $region42: #{tpu_custom_call.1} parent=11 // pred_check_branch
        %449 = sbr.rel (%p447) target = $region44
      $region43: #{tpu_custom_call.1} parent=11 // pred_region
        _
      $region44: #{tpu_custom_call.1} parent=11 // pred_fallthru
        _
      // Predicated region
      $region45: #{tpu_custom_call.1} parent=11 // pred_check
        %p450 = pneg %p238
      $region46: #{tpu_custom_call.1} parent=11 // pred_check_branch
        %452 = sbr.rel (%p450) target = $region48
      $region47: #{tpu_custom_call.1} parent=11 // pred_region
        _
      $region48: #{tpu_custom_call.1} parent=11 // pred_fallthru
        _
      // Predicated region
      $region49: #{tpu_custom_call.1} parent=11 // pred_check
        %p453 = pneg %p259
      $region50: #{tpu_custom_call.1} parent=11 // pred_check_branch
        %455 = sbr.rel (%p453) target = $region52
      $region51: #{tpu_custom_call.1} parent=11 // pred_region
        _
      $region52: #{tpu_custom_call.1} parent=11 // pred_fallthru
        _
      // Predicated region
      $region53: #{tpu_custom_call.1} parent=11 // pred_check
        %p456 = pneg %p280
      $region54: #{tpu_custom_call.1} parent=11 // pred_check_branch
        %458 = sbr.rel (%p456) target = $region56
      $region55: #{tpu_custom_call.1} parent=11 // pred_region
        _
      $region56: #{tpu_custom_call.1} parent=11 // pred_fallthru
        _
      // Predicated region
      $region57: #{tpu_custom_call.1} parent=11 // pred_check
        %p459 = pneg %p301
      $region58: #{tpu_custom_call.1} parent=11 // pred_check_branch
        %461 = sbr.rel (%p459) target = $region60
      $region59: #{tpu_custom_call.1} parent=11 // pred_region
        _
      $region60: #{tpu_custom_call.1} parent=11 // pred_fallthru
        _
      // Predicated region
      $region61: #{tpu_custom_call.1} parent=11 // pred_check
        %p462 = pneg %p322
      $region62: #{tpu_custom_call.1} parent=11 // pred_check_branch
        %464 = sbr.rel (%p462) target = $region64
      $region63: #{tpu_custom_call.1} parent=11 // pred_region
        _
      $region64: #{tpu_custom_call.1} parent=11 // pred_fallthru
        _
      // Predicated region
      $region65: #{tpu_custom_call.1} parent=11 // pred_check
        %p465 = pneg %p343
      $region66: #{tpu_custom_call.1} parent=11 // pred_check_branch
        %467 = sbr.rel (%p465) target = $region68
      $region67: #{tpu_custom_call.1} parent=11 // pred_region
        _
      $region68: #{tpu_custom_call.1} parent=11 // pred_fallthru
        _
      // Predicated region
      $region69: #{tpu_custom_call.1} parent=11 // pred_check
        %p468 = pneg %p364
      $region70: #{tpu_custom_call.1} parent=11 // pred_check_branch
        %470 = sbr.rel (%p468) target = $region72
      $region71: #{tpu_custom_call.1} parent=11 // pred_region
        _
      $region72: #{tpu_custom_call.1} parent=11 // pred_fallthru
        _
      // Predicated region
      $region73: #{tpu_custom_call.1} parent=11 // pred_check
        %p471 = pneg %p385
      $region74: #{tpu_custom_call.1} parent=11 // pred_check_branch
        %473 = sbr.rel (%p471) target = $region76
      $region75: #{tpu_custom_call.1} parent=11 // pred_region
        _
      $region76: #{tpu_custom_call.1} parent=11 // pred_fallthru
        _
    $region12: #{tpu_custom_call.1} parent=5 // pred_fallthru
      _
    %p474 = scmp.lt.s32.totalorder %s23, 2
    // Predicated region
    $region77: #{tpu_custom_call.1} parent=5 // pred_check
      %p475 = pneg %p474
    $region78: #{tpu_custom_call.1} parent=5 // pred_check_branch
      %477 = sbr.rel (%p475) target = $region80
    $region79: #{tpu_custom_call.1} parent=5 // pred_region
      // Predicated region
      $region81: #{tpu_custom_call.1} parent=79 // pred_check
        %p478 = pneg %p43
      $region82: #{tpu_custom_call.1} parent=79 // pred_check_branch
        %480 = sbr.rel (%p478) target = $region84
      $region83: #{tpu_custom_call.1} parent=79 // pred_region
        %p481 = scmp.lt.s32.totalorder %s23, 1
        %s482 = scalar_select %p481, %s23, 1
        %s483 = smul.addr %s482, 32
        %s484 = smul.addr %s483, 4
        %s485 = scalar_lea.vmem %s0, %s484
      $region84: #{tpu_custom_call.1} parent=79 // pred_fallthru
        _
    $region80: #{tpu_custom_call.1} parent=5 // pred_fallthru
      _
    %p486 = scmp.le.s32.totalorder 1, %s23
    %p487 = scmp.lt.s32.totalorder %s23, 3
    %p488 = pnand %p486, %p487
    %p489 = pneg %p488
    // Predicated region
    $region85: #{tpu_custom_call.1} parent=5 // pred_check
      _
    $region86: #{tpu_custom_call.1} parent=5 // pred_check_branch
      %491 = sbr.rel (%p488) target = $region88
    $region87: #{tpu_custom_call.1} parent=5 // pred_region
      %s492 = ssub.s32 %s23, 1
      %p493 = scmp.lt.s32.totalorder %s28, 1
      %s494 = scalar_select %p493, %s28, 1
      %s495 = smul.addr %s494, 32
      %s496 = smul.addr %s495, 4
      %s497 = scalar_lea.vmem %s0, %s496
      %p498 = pneg %p49
      %p499 = pneg %p46
      %p500 = pneg %p70
      %p501 = pneg %p67
      %p502 = pneg %p91
      %p503 = pneg %p88
      %p504 = pneg %p112
      %p505 = pneg %p109
      %p506 = pneg %p133
      %p507 = pneg %p130
      %p508 = pneg %p154
      %p509 = pneg %p151
      %p510 = pneg %p175
      %p511 = pneg %p172
      %p512 = pneg %p196
      %p513 = pneg %p193
      %p514 = pneg %p217
      %p515 = pneg %p214
      %p516 = pneg %p238
      %p517 = pneg %p235
      %p518 = pneg %p259
      %p519 = pneg %p256
      %p520 = pneg %p280
      %p521 = pneg %p277
      %p522 = pneg %p301
      %p523 = pneg %p298
      %p524 = pneg %p322
      %p525 = pneg %p319
      %p526 = pneg %p343
      %p527 = pneg %p340
      %p528 = pneg %p364
      %p529 = pneg %p361
      %p530 = pneg %p385
      %p531 = pneg %p382
      %p532 = pneg %p411
      %p533 = pneg %p408
      %p534 = scmp.lt.s32.totalorder %s28, 1
      %s535 = scalar_select %p534, %s28, 1
      %s536 = smul.addr %s535, 32
      %s537 = smul.addr %s536, 8
      %s538 = scalar_lea.vmem %s17, %s537
      %p539 = scmp.lt.s32.totalorder %s28, 1
      %s540 = scalar_select %p539, %s28, 1
      %s541 = smul.addr %s540, 32
      %s542 = smul.addr %s541, 4
      %s543 = scalar_lea.vmem %s0, %s542
      %p544 = scmp.lt.s32.totalorder %s28, 1
      %s545 = scalar_select %p544, %s28, 1
      %s546 = smul.addr %s545, 32
      %s547 = smul.addr %s546, 8
      %s548 = scalar_lea.vmem %s17, %s547
      %vm550 = vcmask 64512
      %551 = vst.msk [vmem:[#allocation2] sm:$0xff] %vm550, 0.0
      %552 = vst.msk [vmem:[#allocation2 + $0x8] sm:$0xff] %vm550, 0.0
      %553 = vst.msk [vmem:[#allocation2 + $0x10] sm:$0xff] %vm550, 0.0
      %554 = vst.msk [vmem:[#allocation2 + $0x18] sm:$0xff] %vm550, 0.0
      %555 = vst.msk [vmem:[#allocation2 + $0x20] sm:$0xff] %vm550, 0.0
      %556 = vst.msk [vmem:[#allocation2 + $0x28] sm:$0xff] %vm550, 0.0
      %557 = vst.msk [vmem:[#allocation2 + $0x30] sm:$0xff] %vm550, 0.0
      %558 = vst.msk [vmem:[#allocation2 + $0x38] sm:$0xff] %vm550, 0.0
      %559 = vst.msk [vmem:[#allocation2 + $0x40] sm:$0xff] %vm550, 0.0
      %560 = vst.msk [vmem:[#allocation2 + $0x48] sm:$0xff] %vm550, 0.0
      %s561 = scalar_lea.vmem [#allocation2], 336
      %562 = vst.msk [vmem:[%s561] sm:$0xff] %vm550, 0.0
      %563 = vst.msk [vmem:[%s561 + $0x8] sm:$0xff] %vm550, 0.0
      %564 = vst.msk [vmem:[%s561 + $0x10] sm:$0xff] %vm550, 0.0
      %565 = vst.msk [vmem:[%s561 + $0x18] sm:$0xff] %vm550, 0.0
      %566 = vst.msk [vmem:[%s561 + $0x20] sm:$0xff] %vm550, 0.0
      %567 = vst.msk [vmem:[%s561 + $0x28] sm:$0xff] %vm550, 0.0
      %568 = vst.msk [vmem:[%s561 + $0x30] sm:$0xff] %vm550, 0.0
      %569 = vst.msk [vmem:[%s561 + $0x38] sm:$0xff] %vm550, 0.0
      %570 = vst.msk [vmem:[%s561 + $0x40] sm:$0xff] %vm550, 0.0
      %571 = vst.msk [vmem:[%s561 + $0x48] sm:$0xff] %vm550, 0.0
      %572 = vst.msk [vmem:[#allocation3] sm:$0xff] %vm550, 0.0
      %573 = vst.msk [vmem:[#allocation3 + $0x20] sm:$0xff] %vm550, 0.0
      %574 = vst.msk [vmem:[#allocation3 + $0x40] sm:$0xff] %vm550, 0.0
      %575 = vst.msk [vmem:[#allocation3 + $0x60] sm:$0xff] %vm550, 0.0
      %576 = vst.msk [vmem:[#allocation3 + $0x80] sm:$0xff] %vm550, 0.0
      %577 = vst.msk [vmem:[#allocation3 + $0xa0] sm:$0xff] %vm550, 0.0
      %578 = vst.msk [vmem:[#allocation3 + $0xc0] sm:$0xff] %vm550, 0.0
      %579 = vst.msk [vmem:[#allocation3 + $0xe0] sm:$0xff] %vm550, 0.0
      %580 = vst.msk [vmem:[#allocation3 + $0x100] sm:$0xff] %vm550, 0.0
      %581 = vst.msk [vmem:[#allocation3 + $0x120] sm:$0xff] %vm550, 0.0
      %582 = vst.msk [vmem:[#allocation3 + $0x140] sm:$0xff] %vm550, 0.0
      %583 = vst.msk [vmem:[#allocation3 + $0x160] sm:$0xff] %vm550, 0.0
      %584 = vst.msk [vmem:[#allocation3 + $0x180] sm:$0xff] %vm550, 0.0
      %585 = vst.msk [vmem:[#allocation3 + $0x1a0] sm:$0xff] %vm550, 0.0
      %586 = vst.msk [vmem:[#allocation3 + $0x1c0] sm:$0xff] %vm550, 0.0
      %587 = vst.msk [vmem:[#allocation3 + $0x1e0] sm:$0xff] %vm550, 0.0
      %588 = vst.msk [vmem:[#allocation3 + $0x18] sm:$0xff] %vm550, 0.0
      %589 = vst.msk [vmem:[#allocation3 + $0x38] sm:$0xff] %vm550, 0.0
      %590 = vst.msk [vmem:[#allocation3 + $0x58] sm:$0xff] %vm550, 0.0
      %591 = vst.msk [vmem:[#allocation3 + $0x78] sm:$0xff] %vm550, 0.0
      %592 = vst.msk [vmem:[#allocation3 + $0x98] sm:$0xff] %vm550, 0.0
      %593 = vst.msk [vmem:[#allocation3 + $0xb8] sm:$0xff] %vm550, 0.0
      %594 = vst.msk [vmem:[#allocation3 + $0xd8] sm:$0xff] %vm550, 0.0
      %595 = vst.msk [vmem:[#allocation3 + $0xf8] sm:$0xff] %vm550, 0.0
      %596 = vst.msk [vmem:[#allocation3 + $0x118] sm:$0xff] %vm550, 0.0
      %597 = vst.msk [vmem:[#allocation3 + $0x138] sm:$0xff] %vm550, 0.0
      %598 = vst.msk [vmem:[#allocation3 + $0x158] sm:$0xff] %vm550, 0.0
      %599 = vst.msk [vmem:[#allocation3 + $0x178] sm:$0xff] %vm550, 0.0
      %600 = vst.msk [vmem:[#allocation3 + $0x198] sm:$0xff] %vm550, 0.0
      %601 = vst.msk [vmem:[#allocation3 + $0x1b8] sm:$0xff] %vm550, 0.0
      %602 = vst.msk [vmem:[#allocation3 + $0x1d8] sm:$0xff] %vm550, 0.0
      %603 = vst.msk [vmem:[#allocation3 + $0x1f8] sm:$0xff] %vm550, 0.0
      %v604 = vld [vmem:[%s543] sm:$0xf]
      %v605 = vld [vmem:[%s543 + $0x4] sm:$0xf]
      %v606 = vld [vmem:[%s543 + $0x8] sm:$0xf]
      %v607 = vld [vmem:[%s543 + $0xc] sm:$0xf]
      %v608 = vld [vmem:[%s543 + $0x10] sm:$0xf]
      %v609 = vld [vmem:[%s543 + $0x14] sm:$0xf]
      %v610 = vld [vmem:[%s543 + $0x18] sm:$0xf]
      %v611 = vld [vmem:[%s543 + $0x1c] sm:$0xf]
      %v612 = vld [vmem:[%s543 + $0x20] sm:$0xf]
      %v613 = vld [vmem:[%s543 + $0x24] sm:$0xf]
      %v614 = vld [vmem:[%s543 + $0x28] sm:$0xf]
      %v615 = vld [vmem:[%s543 + $0x2c] sm:$0xf]
      %v616 = vld [vmem:[%s543 + $0x30] sm:$0xf]
      %v617 = vld [vmem:[%s543 + $0x34] sm:$0xf]
      %v618 = vld [vmem:[%s543 + $0x38] sm:$0xf]
      %v619 = vld [vmem:[%s543 + $0x3c] sm:$0xf]
      %v620 = vld [vmem:[%s543 + $0x40] sm:$0xf]
      %v621 = vld [vmem:[%s543 + $0x44] sm:$0xf]
      %v622 = vld [vmem:[%s543 + $0x48] sm:$0xf]
      %v623 = vld [vmem:[%s543 + $0x4c] sm:$0xf]
      %v624 = vld [vmem:[%s543 + $0x50] sm:$0xf]
      %v625 = vld [vmem:[%s543 + $0x54] sm:$0xf]
      %v626 = vld [vmem:[%s543 + $0x58] sm:$0xf]
      %v627 = vld [vmem:[%s543 + $0x5c] sm:$0xf]
      %v628 = vld [vmem:[%s543 + $0x60] sm:$0xf]
      %v629 = vld [vmem:[%s543 + $0x64] sm:$0xf]
      %v630 = vld [vmem:[%s543 + $0x68] sm:$0xf]
      %v631 = vld [vmem:[%s543 + $0x6c] sm:$0xf]
      %v632 = vld [vmem:[%s543 + $0x70] sm:$0xf]
      %v633 = vld [vmem:[%s543 + $0x74] sm:$0xf]
      %v634 = vld [vmem:[%s543 + $0x78] sm:$0xf]
      %v635 = vld [vmem:[%s543 + $0x7c] sm:$0xf]
      %v636 = vld [vmem:[%s1] sm:$0x3]
      %v637 = vld [vmem:[%s2] sm:$0x1]
      %v639 = vlaneseq
      %v640 = vshrl.u32 %v639, 7
      %v641 = vsub.s32 0, %v640
      %v642 = vrot.slane %v637, %v641
      %v676 = vunpack.c.l.b16 %v604
      %v677 = vunpack.c.l.b16 %v605
      %v678 = vunpack.c.l.b16 %v606
      %v679 = vunpack.c.l.b16 %v607
      %v680 = vunpack.c.l.b16 %v608
      %v681 = vunpack.c.l.b16 %v609
      %v682 = vunpack.c.l.b16 %v610
      %v683 = vunpack.c.l.b16 %v611
      %v684 = vunpack.c.l.b16 %v612
      %v685 = vunpack.c.l.b16 %v613
      %v686 = vunpack.c.l.b16 %v614
      %v687 = vunpack.c.l.b16 %v615
      %v688 = vunpack.c.l.b16 %v616
      %v689 = vunpack.c.l.b16 %v617
      %v690 = vunpack.c.l.b16 %v618
      %v691 = vunpack.c.l.b16 %v619
      %v692 = vunpack.c.l.b16 %v620
      %v693 = vunpack.c.l.b16 %v621
      %v694 = vunpack.c.l.b16 %v622
      %v695 = vunpack.c.l.b16 %v623
      %v696 = vunpack.c.l.b16 %v624
      %v697 = vunpack.c.l.b16 %v625
      %v698 = vunpack.c.l.b16 %v626
      %v699 = vunpack.c.l.b16 %v627
      %v700 = vunpack.c.l.b16 %v628
      %v701 = vunpack.c.l.b16 %v629
      %v702 = vunpack.c.l.b16 %v630
      %v703 = vunpack.c.l.b16 %v631
      %v704 = vunpack.c.l.b16 %v632
      %v705 = vunpack.c.l.b16 %v633
      %v706 = vunpack.c.l.b16 %v634
      %v707 = vunpack.c.l.b16 %v635
      %v708 = vpack.c.b16 %v677, %v676
      %v709 = vpack.c.b16 %v679, %v678
      %v710 = vpack.c.b16 %v681, %v680
      %v711 = vpack.c.b16 %v683, %v682
      %v712 = vpack.c.b16 %v685, %v684
      %v713 = vpack.c.b16 %v687, %v686
      %v714 = vpack.c.b16 %v689, %v688
      %v715 = vpack.c.b16 %v691, %v690
      %v716 = vpack.c.b16 %v693, %v692
      %v717 = vpack.c.b16 %v695, %v694
      %v718 = vpack.c.b16 %v697, %v696
      %v719 = vpack.c.b16 %v699, %v698
      %v720 = vpack.c.b16 %v701, %v700
      %v721 = vpack.c.b16 %v703, %v702
      %v722 = vpack.c.b16 %v705, %v704
      %v723 = vpack.c.b16 %v707, %v706
      %vm724 = vcmask 31744
      %v726 = vsel %vm724, %v708, 0
      %v729 = vsel %vm724, %v709, 0
      %v732 = vsel %vm724, %v710, 0
      %v735 = vsel %vm724, %v711, 0
      %v738 = vsel %vm724, %v712, 0
      %v741 = vsel %vm724, %v713, 0
      %v744 = vsel %vm724, %v714, 0
      %v747 = vsel %vm724, %v715, 0
      %v750 = vsel %vm724, %v716, 0
      %v753 = vsel %vm724, %v717, 0
      %v756 = vsel %vm724, %v718, 0
      %v759 = vsel %vm724, %v719, 0
      %v762 = vsel %vm724, %v720, 0
      %v765 = vsel %vm724, %v721, 0
      %v768 = vsel %vm724, %v722, 0
      %v771 = vsel %vm724, %v723, 0
      %vm773 = vcmask 1041408
      %v775 = vsel %vm773, %v636, 0
      %777 = vmatprep.subr.bf16.mxu0 0
      %778 = vmatpush1.bf16.msra.mxu0 %v775
      %779 = vmatprep.subr.bf16.mxu0 0
      %780 = vmatpush1.bf16.msra.mxu0 0
      %781 = vmatprep.subr.bf16.mxu0 0
      %782 = vmatpush1.bf16.msra.mxu0 0
      %783 = vmatprep.subr.bf16.mxu0 0
      %784 = vmatpush1.bf16.msra.mxu0 0
      %785 = vmatprep.subr.bf16.mxu0 0
      %786 = vmatpush1.bf16.msra.mxu0 0
      %787 = vmatprep.subr.bf16.mxu0 0
      %788 = vmatpush1.bf16.msra.mxu0 0
      %789 = vmatprep.subr.bf16.mxu0 0
      %790 = vmatpush1.bf16.msra.mxu0 0
      %791 = vmatprep.subr.bf16.mxu0 0
      %792 = vmatpush1.bf16.msra.mxu0 0
      %793 = vmatprep.subr.bf16.mxu0 0
      %794 = vmatpush1.bf16.msra.mxu0 0
      %795 = vmatprep.subr.bf16.mxu0 0
      %796 = vmatpush1.bf16.msra.mxu0 0
      %797 = vmatprep.subr.bf16.mxu0 0
      %798 = vmatpush1.bf16.msra.mxu0 0
      %799 = vmatprep.subr.bf16.mxu0 0
      %800 = vmatpush1.bf16.msra.mxu0 0
      %801 = vmatprep.subr.bf16.mxu0 0
      %802 = vmatpush1.bf16.msra.mxu0 0
      %803 = vmatprep.subr.bf16.mxu0 0
      %804 = vmatpush1.bf16.msra.mxu0 0
      %805 = vmatprep.subr.bf16.mxu0 0
      %806 = vmatpush1.bf16.msra.mxu0 0
      %807 = vmatprep.subr.bf16.mxu0 0
      %808 = vmatpush1.bf16.msra.mxu0 0
      %809 = vmatprep.mubr.bf16.mxu0 0
      %810 = vmatmul.mubr.bf16.gmra.mrb[0].mxu0 %v726
      %v811 = vpop.f32.mrb[0].mxu0
      %v812 = vadd.f32 %v642, %v811
      %v813 = vpop.f32.mrb[0].mxu0
      %v814 = vpop.f32.mrb[0].mxu0
      %v815 = vadd.f32 %v642, %v814
      %v816 = vpop.f32.mrb[0].mxu0
      %817 = vmatprep.mubr.bf16.mxu0 0
      %818 = vmatmul.mubr.bf16.gmra.mrb[0].mxu0 %v729
      %v819 = vpop.f32.mrb[0].mxu0
      %v820 = vadd.f32 %v642, %v819
      %v821 = vpop.f32.mrb[0].mxu0
      %v822 = vpop.f32.mrb[0].mxu0
      %v823 = vadd.f32 %v642, %v822
      %v824 = vpop.f32.mrb[0].mxu0
      %825 = vmatprep.mubr.bf16.mxu0 0
      %826 = vmatmul.mubr.bf16.gmra.mrb[0].mxu0 %v732
      %v827 = vpop.f32.mrb[0].mxu0
      %v828 = vadd.f32 %v642, %v827
      %v829 = vpop.f32.mrb[0].mxu0
      %v830 = vpop.f32.mrb[0].mxu0
      %v831 = vadd.f32 %v642, %v830
      %v832 = vpop.f32.mrb[0].mxu0
      %833 = vmatprep.mubr.bf16.mxu0 0
      %834 = vmatmul.mubr.bf16.gmra.mrb[0].mxu0 %v735
      %v835 = vpop.f32.mrb[0].mxu0
      %v836 = vadd.f32 %v642, %v835
      %v837 = vpop.f32.mrb[0].mxu0
      %v838 = vpop.f32.mrb[0].mxu0
      %v839 = vadd.f32 %v642, %v838
      %v840 = vpop.f32.mrb[0].mxu0
      %841 = vmatprep.mubr.bf16.mxu0 0
      %842 = vmatmul.mubr.bf16.gmra.mrb[0].mxu0 %v738
      %v843 = vpop.f32.mrb[0].mxu0
      %v844 = vadd.f32 %v642, %v843
      %v845 = vpop.f32.mrb[0].mxu0
      %v846 = vpop.f32.mrb[0].mxu0
      %v847 = vadd.f32 %v642, %v846
      %v848 = vpop.f32.mrb[0].mxu0
      %849 = vmatprep.mubr.bf16.mxu0 0
      %850 = vmatmul.mubr.bf16.gmra.mrb[0].mxu0 %v741
      %v851 = vpop.f32.mrb[0].mxu0
      %v852 = vadd.f32 %v642, %v851
      %v853 = vpop.f32.mrb[0].mxu0
      %v854 = vpop.f32.mrb[0].mxu0
      %v855 = vadd.f32 %v642, %v854
      %v856 = vpop.f32.mrb[0].mxu0
      %857 = vmatprep.mubr.bf16.mxu0 0
      %858 = vmatmul.mubr.bf16.gmra.mrb[0].mxu0 %v744
      %v859 = vpop.f32.mrb[0].mxu0
      %v860 = vadd.f32 %v642, %v859
      %v861 = vpop.f32.mrb[0].mxu0
      %v862 = vpop.f32.mrb[0].mxu0
      %v863 = vadd.f32 %v642, %v862
      %v864 = vpop.f32.mrb[0].mxu0
      %865 = vmatprep.mubr.bf16.mxu0 0
      %866 = vmatmul.mubr.bf16.gmra.mrb[0].mxu0 %v747
      %v867 = vpop.f32.mrb[0].mxu0
      %v868 = vadd.f32 %v642, %v867
      %v869 = vpop.f32.mrb[0].mxu0
      %v870 = vpop.f32.mrb[0].mxu0
      %v871 = vadd.f32 %v642, %v870
      %v872 = vpop.f32.mrb[0].mxu0
      %873 = vmatprep.mubr.bf16.mxu0 0
      %874 = vmatmul.mubr.bf16.gmra.mrb[0].mxu0 %v750
      %v875 = vpop.f32.mrb[0].mxu0
      %v876 = vadd.f32 %v642, %v875
      %v877 = vpop.f32.mrb[0].mxu0
      %v878 = vpop.f32.mrb[0].mxu0
      %v879 = vadd.f32 %v642, %v878
      %v880 = vpop.f32.mrb[0].mxu0
      %881 = vmatprep.mubr.bf16.mxu0 0
      %882 = vmatmul.mubr.bf16.gmra.mrb[0].mxu0 %v753
      %v883 = vpop.f32.mrb[0].mxu0
      %v884 = vadd.f32 %v642, %v883
      %v885 = vpop.f32.mrb[0].mxu0
      %v886 = vpop.f32.mrb[0].mxu0
      %v887 = vadd.f32 %v642, %v886
      %v888 = vpop.f32.mrb[0].mxu0
      %889 = vmatprep.mubr.bf16.mxu0 0
      %890 = vmatmul.mubr.bf16.gmra.mrb[0].mxu0 %v756
      %v891 = vpop.f32.mrb[0].mxu0
      %v892 = vadd.f32 %v642, %v891
      %v893 = vpop.f32.mrb[0].mxu0
      %v894 = vpop.f32.mrb[0].mxu0
      %v895 = vadd.f32 %v642, %v894
      %v896 = vpop.f32.mrb[0].mxu0
      %897 = vmatprep.mubr.bf16.mxu0 0
      %898 = vmatmul.mubr.bf16.gmra.mrb[0].mxu0 %v759
      %v899 = vpop.f32.mrb[0].mxu0
      %v900 = vadd.f32 %v642, %v899
      %v901 = vpop.f32.mrb[0].mxu0
      %v902 = vpop.f32.mrb[0].mxu0
      %v903 = vadd.f32 %v642, %v902
      %v904 = vpop.f32.mrb[0].mxu0
      %905 = vmatprep.mubr.bf16.mxu0 0
      %906 = vmatmul.mubr.bf16.gmra.mrb[0].mxu0 %v762
      %v907 = vpop.f32.mrb[0].mxu0
      %v908 = vadd.f32 %v642, %v907
      %v909 = vpop.f32.mrb[0].mxu0
      %v910 = vpop.f32.mrb[0].mxu0
      %v911 = vadd.f32 %v642, %v910
      %v912 = vpop.f32.mrb[0].mxu0
      %913 = vmatprep.mubr.bf16.mxu0 0
      %914 = vmatmul.mubr.bf16.gmra.mrb[0].mxu0 %v765
      %v915 = vpop.f32.mrb[0].mxu0
      %v916 = vadd.f32 %v642, %v915
      %v917 = vpop.f32.mrb[0].mxu0
      %v918 = vpop.f32.mrb[0].mxu0
      %v919 = vadd.f32 %v642, %v918
      %v920 = vpop.f32.mrb[0].mxu0
      %921 = vmatprep.mubr.bf16.mxu0 0
      %922 = vmatmul.mubr.bf16.gmra.mrb[0].mxu0 %v768
      %v923 = vpop.f32.mrb[0].mxu0
      %v924 = vadd.f32 %v642, %v923
      %v925 = vpop.f32.mrb[0].mxu0
      %v926 = vpop.f32.mrb[0].mxu0
      %v927 = vadd.f32 %v642, %v926
      %v928 = vpop.f32.mrb[0].mxu0
      %929 = vmatprep.mubr.bf16.mxu0 0
      %930 = vmatmul.mubr.bf16.gmra.mrb[0].mxu0 %v771
      %v931 = vpop.f32.mrb[0].mxu0
      %v932 = vadd.f32 %v642, %v931
      %v933 = vpop.f32.mrb[0].mxu0
      %v934 = vpop.f32.mrb[0].mxu0
      %v935 = vadd.f32 %v642, %v934
      %v936 = vpop.f32.mrb[0].mxu0
      %937 = vdwg.mxu0
      %s938 = scalar_lea.vmem [#allocation2], 80
      %939 = vst.msk [vmem:[%s938] sm:$0xff] %vm550, %v812
      %940 = vst.msk [vmem:[%s938 + $0x8] sm:$0xff] %vm550, %v815
      %941 = vst.msk [vmem:[%s938 + $0x10] sm:$0xff] %vm550, %v820
      %942 = vst.msk [vmem:[%s938 + $0x18] sm:$0xff] %vm550, %v823
      %943 = vst.msk [vmem:[%s938 + $0x20] sm:$0xff] %vm550, %v828
      %944 = vst.msk [vmem:[%s938 + $0x28] sm:$0xff] %vm550, %v831
      %945 = vst.msk [vmem:[%s938 + $0x30] sm:$0xff] %vm550, %v836
      %946 = vst.msk [vmem:[%s938 + $0x38] sm:$0xff] %vm550, %v839
      %947 = vst.msk [vmem:[%s938 + $0x40] sm:$0xff] %vm550, %v844
      %948 = vst.msk [vmem:[%s938 + $0x48] sm:$0xff] %vm550, %v847
      %949 = vst.msk [vmem:[%s938 + $0x50] sm:$0xff] %vm550, %v852
      %950 = vst.msk [vmem:[%s938 + $0x58] sm:$0xff] %vm550, %v855
      %951 = vst.msk [vmem:[%s938 + $0x60] sm:$0xff] %vm550, %v860
      %952 = vst.msk [vmem:[%s938 + $0x68] sm:$0xff] %vm550, %v863
      %953 = vst.msk [vmem:[%s938 + $0x70] sm:$0xff] %vm550, %v868
      %954 = vst.msk [vmem:[%s938 + $0x78] sm:$0xff] %vm550, %v871
      %955 = vst.msk [vmem:[%s938 + $0x80] sm:$0xff] %vm550, %v876
      %956 = vst.msk [vmem:[%s938 + $0x88] sm:$0xff] %vm550, %v879
      %957 = vst.msk [vmem:[%s938 + $0x90] sm:$0xff] %vm550, %v884
      %958 = vst.msk [vmem:[%s938 + $0x98] sm:$0xff] %vm550, %v887
      %959 = vst.msk [vmem:[%s938 + $0xa0] sm:$0xff] %vm550, %v892
      %960 = vst.msk [vmem:[%s938 + $0xa8] sm:$0xff] %vm550, %v895
      %961 = vst.msk [vmem:[%s938 + $0xb0] sm:$0xff] %vm550, %v900
      %962 = vst.msk [vmem:[%s938 + $0xb8] sm:$0xff] %vm550, %v903
      %963 = vst.msk [vmem:[%s938 + $0xc0] sm:$0xff] %vm550, %v908
      %964 = vst.msk [vmem:[%s938 + $0xc8] sm:$0xff] %vm550, %v911
      %965 = vst.msk [vmem:[%s938 + $0xd0] sm:$0xff] %vm550, %v916
      %966 = vst.msk [vmem:[%s938 + $0xd8] sm:$0xff] %vm550, %v919
      %967 = vst.msk [vmem:[%s938 + $0xe0] sm:$0xff] %vm550, %v924
      %968 = vst.msk [vmem:[%s938 + $0xe8] sm:$0xff] %vm550, %v927
      %969 = vst.msk [vmem:[%s938 + $0xf0] sm:$0xff] %vm550, %v932
      %970 = vst.msk [vmem:[%s938 + $0xf8] sm:$0xff] %vm550, %v935
      %s971 = scalar_lea.vmem [#allocation2], 48
      %v972 = vld [vmem:[%s971] sm:$0xff]
      %v973 = vld [vmem:[%s971 + $0x8] sm:$0xff]
      %v974 = vld [vmem:[%s971 + $0x10] sm:$0xff]
      %v975 = vld [vmem:[%s971 + $0x18] sm:$0xff]
      %v976 = vld [vmem:[%s971 + $0x20] sm:$0xff]
      %v977 = vld [vmem:[%s971 + $0x28] sm:$0xff]
      %v978 = vld [vmem:[%s971 + $0x30] sm:$0xff]
      %v979 = vld [vmem:[%s971 + $0x38] sm:$0xff]
      %v980 = vld [vmem:[%s971 + $0x40] sm:$0xff]
      %v981 = vld [vmem:[%s971 + $0x48] sm:$0xff]
      %v982 = vld [vmem:[%s971 + $0x50] sm:$0xff]
      %v983 = vld [vmem:[%s971 + $0x58] sm:$0xff]
      %v984 = vld [vmem:[%s971 + $0x60] sm:$0xff]
      %v985 = vld [vmem:[%s971 + $0x68] sm:$0xff]
      %v986 = vld [vmem:[%s971 + $0x70] sm:$0xff]
      %v987 = vld [vmem:[%s971 + $0x78] sm:$0xff]
      %v988 = vld [vmem:[%s971 + $0x80] sm:$0xff]
      %v989 = vld [vmem:[%s971 + $0x88] sm:$0xff]
      %v990 = vld [vmem:[%s971 + $0x90] sm:$0xff]
      %v991 = vld [vmem:[%s971 + $0x98] sm:$0xff]
      %v992 = vld [vmem:[%s971 + $0xa0] sm:$0xff]
      %v993 = vld [vmem:[%s971 + $0xa8] sm:$0xff]
      %v994 = vld [vmem:[%s971 + $0xb0] sm:$0xff]
      %v995 = vld [vmem:[%s971 + $0xb8] sm:$0xff]
      %v996 = vld [vmem:[%s971 + $0xc0] sm:$0xff]
      %v997 = vld [vmem:[%s971 + $0xc8] sm:$0xff]
      %v998 = vld [vmem:[%s971 + $0xd0] sm:$0xff]
      %v999 = vld [vmem:[%s971 + $0xd8] sm:$0xff]
      %v1000 = vld [vmem:[%s971 + $0xe0] sm:$0xff]
      %v1001 = vld [vmem:[%s971 + $0xe8] sm:$0xff]
      %v1002 = vld [vmem:[%s971 + $0xf0] sm:$0xff]
      %v1003 = vld [vmem:[%s971 + $0xf8] sm:$0xff]
      %v1004 = vld [vmem:[%s3] sm:$0x1]
      %v1005 = vlaneseq
      %v1006 = vshrl.u32 %v1005, 7
      %v1007 = vsub.s32 0, %v1006
      %v1008 = vrot.slane %v1004, %v1007
      %v1009 = vmul.f32 %v972, %v1008
      %v1010 = vmul.f32 %v973, %v1008
      %v1011 = vmul.f32 %v974, %v1008
      %v1012 = vmul.f32 %v975, %v1008
      %v1013 = vmul.f32 %v976, %v1008
      %v1014 = vmul.f32 %v977, %v1008
      %v1015 = vmul.f32 %v978, %v1008
      %v1016 = vmul.f32 %v979, %v1008
      %v1017 = vmul.f32 %v980, %v1008
      %v1018 = vmul.f32 %v981, %v1008
      %v1019 = vmul.f32 %v982, %v1008
      %v1020 = vmul.f32 %v983, %v1008
      %v1021 = vmul.f32 %v984, %v1008
      %v1022 = vmul.f32 %v985, %v1008
      %v1023 = vmul.f32 %v986, %v1008
      %v1024 = vmul.f32 %v987, %v1008
      %v1025 = vmul.f32 %v988, %v1008
      %v1026 = vmul.f32 %v989, %v1008
      %v1027 = vmul.f32 %v990, %v1008
      %v1028 = vmul.f32 %v991, %v1008
      %v1029 = vmul.f32 %v992, %v1008
      %v1030 = vmul.f32 %v993, %v1008
      %v1031 = vmul.f32 %v994, %v1008
      %v1032 = vmul.f32 %v995, %v1008
      %v1033 = vmul.f32 %v996, %v1008
      %v1034 = vmul.f32 %v997, %v1008
      %v1035 = vmul.f32 %v998, %v1008
      %v1036 = vmul.f32 %v999, %v1008
      %v1037 = vmul.f32 %v1000, %v1008
      %v1038 = vmul.f32 %v1001, %v1008
      %v1039 = vmul.f32 %v1002, %v1008
      %v1040 = vmul.f32 %v1003, %v1008
      %s1041 = scalar_lea.vmem [#allocation2], 64
      %v1042 = vld [vmem:[%s1041] sm:$0xff]
      %v1043 = vld [vmem:[%s1041 + $0x8] sm:$0xff]
      %v1044 = vld [vmem:[%s1041 + $0x10] sm:$0xff]
      %v1045 = vld [vmem:[%s1041 + $0x18] sm:$0xff]
      %v1046 = vld [vmem:[%s1041 + $0x20] sm:$0xff]
      %v1047 = vld [vmem:[%s1041 + $0x28] sm:$0xff]
      %v1048 = vld [vmem:[%s1041 + $0x30] sm:$0xff]
      %v1049 = vld [vmem:[%s1041 + $0x38] sm:$0xff]
      %v1050 = vld [vmem:[%s1041 + $0x40] sm:$0xff]
      %v1051 = vld [vmem:[%s1041 + $0x48] sm:$0xff]
      %v1052 = vld [vmem:[%s1041 + $0x50] sm:$0xff]
      %v1053 = vld [vmem:[%s1041 + $0x58] sm:$0xff]
      %v1054 = vld [vmem:[%s1041 + $0x60] sm:$0xff]
      %v1055 = vld [vmem:[%s1041 + $0x68] sm:$0xff]
      %v1056 = vld [vmem:[%s1041 + $0x70] sm:$0xff]
      %v1057 = vld [vmem:[%s1041 + $0x78] sm:$0xff]
      %v1058 = vld [vmem:[%s1041 + $0x80] sm:$0xff]
      %v1059 = vld [vmem:[%s1041 + $0x88] sm:$0xff]
      %v1060 = vld [vmem:[%s1041 + $0x90] sm:$0xff]
      %v1061 = vld [vmem:[%s1041 + $0x98] sm:$0xff]
      %v1062 = vld [vmem:[%s1041 + $0xa0] sm:$0xff]
      %v1063 = vld [vmem:[%s1041 + $0xa8] sm:$0xff]
      %v1064 = vld [vmem:[%s1041 + $0xb0] sm:$0xff]
      %v1065 = vld [vmem:[%s1041 + $0xb8] sm:$0xff]
      %v1066 = vld [vmem:[%s1041 + $0xc0] sm:$0xff]
      %v1067 = vld [vmem:[%s1041 + $0xc8] sm:$0xff]
      %v1068 = vld [vmem:[%s1041 + $0xd0] sm:$0xff]
      %v1069 = vld [vmem:[%s1041 + $0xd8] sm:$0xff]
      %v1070 = vld [vmem:[%s1041 + $0xe0] sm:$0xff]
      %v1071 = vld [vmem:[%s1041 + $0xe8] sm:$0xff]
      %v1072 = vld [vmem:[%s1041 + $0xf0] sm:$0xff]
      %v1073 = vld [vmem:[%s1041 + $0xf8] sm:$0xff]
      %v1074 = vld [vmem:[%s3 + $0x1] sm:$0x1]
      %v1075 = vlaneseq
      %v1076 = vshrl.u32 %v1075, 7
      %v1077 = vsub.s32 0, %v1076
      %v1078 = vrot.slane %v1074, %v1077
      %v1079 = vmul.f32 %v1042, %v1078
      %v1080 = vmul.f32 %v1043, %v1078
      %v1081 = vmul.f32 %v1044, %v1078
      %v1082 = vmul.f32 %v1045, %v1078
      %v1083 = vmul.f32 %v1046, %v1078
      %v1084 = vmul.f32 %v1047, %v1078
      %v1085 = vmul.f32 %v1048, %v1078
      %v1086 = vmul.f32 %v1049, %v1078
      %v1087 = vmul.f32 %v1050, %v1078
      %v1088 = vmul.f32 %v1051, %v1078
      %v1089 = vmul.f32 %v1052, %v1078
      %v1090 = vmul.f32 %v1053, %v1078
      %v1091 = vmul.f32 %v1054, %v1078
      %v1092 = vmul.f32 %v1055, %v1078
      %v1093 = vmul.f32 %v1056, %v1078
      %v1094 = vmul.f32 %v1057, %v1078
      %v1095 = vmul.f32 %v1058, %v1078
      %v1096 = vmul.f32 %v1059, %v1078
      %v1097 = vmul.f32 %v1060, %v1078
      %v1098 = vmul.f32 %v1061, %v1078
      %v1099 = vmul.f32 %v1062, %v1078
      %v1100 = vmul.f32 %v1063, %v1078
      %v1101 = vmul.f32 %v1064, %v1078
      %v1102 = vmul.f32 %v1065, %v1078
      %v1103 = vmul.f32 %v1066, %v1078
      %v1104 = vmul.f32 %v1067, %v1078
      %v1105 = vmul.f32 %v1068, %v1078
      %v1106 = vmul.f32 %v1069, %v1078
      %v1107 = vmul.f32 %v1070, %v1078
      %v1108 = vmul.f32 %v1071, %v1078
      %v1109 = vmul.f32 %v1072, %v1078
      %v1110 = vmul.f32 %v1073, %v1078
      %v1111 = vadd.f32 %v1009, %v1079
      %v1112 = vadd.f32 %v1010, %v1080
      %v1113 = vadd.f32 %v1011, %v1081
      %v1114 = vadd.f32 %v1012, %v1082
      %v1115 = vadd.f32 %v1013, %v1083
      %v1116 = vadd.f32 %v1014, %v1084
      %v1117 = vadd.f32 %v1015, %v1085
      %v1118 = vadd.f32 %v1016, %v1086
      %v1119 = vadd.f32 %v1017, %v1087
      %v1120 = vadd.f32 %v1018, %v1088
      %v1121 = vadd.f32 %v1019, %v1089
      %v1122 = vadd.f32 %v1020, %v1090
      %v1123 = vadd.f32 %v1021, %v1091
      %v1124 = vadd.f32 %v1022, %v1092
      %v1125 = vadd.f32 %v1023, %v1093
      %v1126 = vadd.f32 %v1024, %v1094
      %v1127 = vadd.f32 %v1025, %v1095
      %v1128 = vadd.f32 %v1026, %v1096
      %v1129 = vadd.f32 %v1027, %v1097
      %v1130 = vadd.f32 %v1028, %v1098
      %v1131 = vadd.f32 %v1029, %v1099
      %v1132 = vadd.f32 %v1030, %v1100
      %v1133 = vadd.f32 %v1031, %v1101
      %v1134 = vadd.f32 %v1032, %v1102
      %v1135 = vadd.f32 %v1033, %v1103
      %v1136 = vadd.f32 %v1034, %v1104
      %v1137 = vadd.f32 %v1035, %v1105
      %v1138 = vadd.f32 %v1036, %v1106
      %v1139 = vadd.f32 %v1037, %v1107
      %v1140 = vadd.f32 %v1038, %v1108
      %v1141 = vadd.f32 %v1039, %v1109
      %v1142 = vadd.f32 %v1040, %v1110
      %v1143 = vld [vmem:[%s938] sm:$0xff]
      %v1144 = vld [vmem:[%s938 + $0x8] sm:$0xff]
      %v1145 = vld [vmem:[%s938 + $0x10] sm:$0xff]
      %v1146 = vld [vmem:[%s938 + $0x18] sm:$0xff]
      %v1147 = vld [vmem:[%s938 + $0x20] sm:$0xff]
      %v1148 = vld [vmem:[%s938 + $0x28] sm:$0xff]
      %v1149 = vld [vmem:[%s938 + $0x30] sm:$0xff]
      %v1150 = vld [vmem:[%s938 + $0x38] sm:$0xff]
      %v1151 = vld [vmem:[%s938 + $0x40] sm:$0xff]
      %v1152 = vld [vmem:[%s938 + $0x48] sm:$0xff]
      %v1153 = vld [vmem:[%s938 + $0x50] sm:$0xff]
      %v1154 = vld [vmem:[%s938 + $0x58] sm:$0xff]
      %v1155 = vld [vmem:[%s938 + $0x60] sm:$0xff]
      %v1156 = vld [vmem:[%s938 + $0x68] sm:$0xff]
      %v1157 = vld [vmem:[%s938 + $0x70] sm:$0xff]
      %v1158 = vld [vmem:[%s938 + $0x78] sm:$0xff]
      %v1159 = vld [vmem:[%s938 + $0x80] sm:$0xff]
      %v1160 = vld [vmem:[%s938 + $0x88] sm:$0xff]
      %v1161 = vld [vmem:[%s938 + $0x90] sm:$0xff]
      %v1162 = vld [vmem:[%s938 + $0x98] sm:$0xff]
      %v1163 = vld [vmem:[%s938 + $0xa0] sm:$0xff]
      %v1164 = vld [vmem:[%s938 + $0xa8] sm:$0xff]
      %v1165 = vld [vmem:[%s938 + $0xb0] sm:$0xff]
      %v1166 = vld [vmem:[%s938 + $0xb8] sm:$0xff]
      %v1167 = vld [vmem:[%s938 + $0xc0] sm:$0xff]
      %v1168 = vld [vmem:[%s938 + $0xc8] sm:$0xff]
      %v1169 = vld [vmem:[%s938 + $0xd0] sm:$0xff]
      %v1170 = vld [vmem:[%s938 + $0xd8] sm:$0xff]
      %v1171 = vld [vmem:[%s938 + $0xe0] sm:$0xff]
      %v1172 = vld [vmem:[%s938 + $0xe8] sm:$0xff]
      %v1173 = vld [vmem:[%s938 + $0xf0] sm:$0xff]
      %v1174 = vld [vmem:[%s938 + $0xf8] sm:$0xff]
      %v1175 = vld [vmem:[%s3 + $0x2] sm:$0x1]
      %v1176 = vlaneseq
      %v1177 = vshrl.u32 %v1176, 7
      %v1178 = vsub.s32 0, %v1177
      %v1179 = vrot.slane %v1175, %v1178
      %v1180 = vmul.f32 %v1143, %v1179
      %v1181 = vmul.f32 %v1144, %v1179
      %v1182 = vmul.f32 %v1145, %v1179
      %v1183 = vmul.f32 %v1146, %v1179
      %v1184 = vmul.f32 %v1147, %v1179
      %v1185 = vmul.f32 %v1148, %v1179
      %v1186 = vmul.f32 %v1149, %v1179
      %v1187 = vmul.f32 %v1150, %v1179
      %v1188 = vmul.f32 %v1151, %v1179
      %v1189 = vmul.f32 %v1152, %v1179
      %v1190 = vmul.f32 %v1153, %v1179
      %v1191 = vmul.f32 %v1154, %v1179
      %v1192 = vmul.f32 %v1155, %v1179
      %v1193 = vmul.f32 %v1156, %v1179
      %v1194 = vmul.f32 %v1157, %v1179
      %v1195 = vmul.f32 %v1158, %v1179
      %v1196 = vmul.f32 %v1159, %v1179
      %v1197 = vmul.f32 %v1160, %v1179
      %v1198 = vmul.f32 %v1161, %v1179
      %v1199 = vmul.f32 %v1162, %v1179
      %v1200 = vmul.f32 %v1163, %v1179
      %v1201 = vmul.f32 %v1164, %v1179
      %v1202 = vmul.f32 %v1165, %v1179
      %v1203 = vmul.f32 %v1166, %v1179
      %v1204 = vmul.f32 %v1167, %v1179
      %v1205 = vmul.f32 %v1168, %v1179
      %v1206 = vmul.f32 %v1169, %v1179
      %v1207 = vmul.f32 %v1170, %v1179
      %v1208 = vmul.f32 %v1171, %v1179
      %v1209 = vmul.f32 %v1172, %v1179
      %v1210 = vmul.f32 %v1173, %v1179
      %v1211 = vmul.f32 %v1174, %v1179
      %v1212 = vadd.f32 %v1111, %v1180
      %v1213 = vadd.f32 %v1112, %v1181
      %v1214 = vadd.f32 %v1113, %v1182
      %v1215 = vadd.f32 %v1114, %v1183
      %v1216 = vadd.f32 %v1115, %v1184
      %v1217 = vadd.f32 %v1116, %v1185
      %v1218 = vadd.f32 %v1117, %v1186
      %v1219 = vadd.f32 %v1118, %v1187
      %v1220 = vadd.f32 %v1119, %v1188
      %v1221 = vadd.f32 %v1120, %v1189
      %v1222 = vadd.f32 %v1121, %v1190
      %v1223 = vadd.f32 %v1122, %v1191
      %v1224 = vadd.f32 %v1123, %v1192
      %v1225 = vadd.f32 %v1124, %v1193
      %v1226 = vadd.f32 %v1125, %v1194
      %v1227 = vadd.f32 %v1126, %v1195
      %v1228 = vadd.f32 %v1127, %v1196
      %v1229 = vadd.f32 %v1128, %v1197
      %v1230 = vadd.f32 %v1129, %v1198
      %v1231 = vadd.f32 %v1130, %v1199
      %v1232 = vadd.f32 %v1131, %v1200
      %v1233 = vadd.f32 %v1132, %v1201
      %v1234 = vadd.f32 %v1133, %v1202
      %v1235 = vadd.f32 %v1134, %v1203
      %v1236 = vadd.f32 %v1135, %v1204
      %v1237 = vadd.f32 %v1136, %v1205
      %v1238 = vadd.f32 %v1137, %v1206
      %v1239 = vadd.f32 %v1138, %v1207
      %v1240 = vadd.f32 %v1139, %v1208
      %v1241 = vadd.f32 %v1140, %v1209
      %v1242 = vadd.f32 %v1141, %v1210
      %v1243 = vadd.f32 %v1142, %v1211
      %s1244 = scalar_lea.vmem [#allocation2], 96
      %v1245 = vld [vmem:[%s1244] sm:$0xff]
      %v1246 = vld [vmem:[%s1244 + $0x8] sm:$0xff]
      %v1247 = vld [vmem:[%s1244 + $0x10] sm:$0xff]
      %v1248 = vld [vmem:[%s1244 + $0x18] sm:$0xff]
      %v1249 = vld [vmem:[%s1244 + $0x20] sm:$0xff]
      %v1250 = vld [vmem:[%s1244 + $0x28] sm:$0xff]
      %v1251 = vld [vmem:[%s1244 + $0x30] sm:$0xff]
      %v1252 = vld [vmem:[%s1244 + $0x38] sm:$0xff]
      %v1253 = vld [vmem:[%s1244 + $0x40] sm:$0xff]
      %v1254 = vld [vmem:[%s1244 + $0x48] sm:$0xff]
      %v1255 = vld [vmem:[%s1244 + $0x50] sm:$0xff]
      %v1256 = vld [vmem:[%s1244 + $0x58] sm:$0xff]
      %v1257 = vld [vmem:[%s1244 + $0x60] sm:$0xff]
      %v1258 = vld [vmem:[%s1244 + $0x68] sm:$0xff]
      %v1259 = vld [vmem:[%s1244 + $0x70] sm:$0xff]
      %v1260 = vld [vmem:[%s1244 + $0x78] sm:$0xff]
      %v1261 = vld [vmem:[%s1244 + $0x80] sm:$0xff]
      %v1262 = vld [vmem:[%s1244 + $0x88] sm:$0xff]
      %v1263 = vld [vmem:[%s1244 + $0x90] sm:$0xff]
      %v1264 = vld [vmem:[%s1244 + $0x98] sm:$0xff]
      %v1265 = vld [vmem:[%s1244 + $0xa0] sm:$0xff]
      %v1266 = vld [vmem:[%s1244 + $0xa8] sm:$0xff]
      %v1267 = vld [vmem:[%s1244 + $0xb0] sm:$0xff]
      %v1268 = vld [vmem:[%s1244 + $0xb8] sm:$0xff]
      %v1269 = vld [vmem:[%s1244 + $0xc0] sm:$0xff]
      %v1270 = vld [vmem:[%s1244 + $0xc8] sm:$0xff]
      %v1271 = vld [vmem:[%s1244 + $0xd0] sm:$0xff]
      %v1272 = vld [vmem:[%s1244 + $0xd8] sm:$0xff]
      %v1273 = vld [vmem:[%s1244 + $0xe0] sm:$0xff]
      %v1274 = vld [vmem:[%s1244 + $0xe8] sm:$0xff]
      %v1275 = vld [vmem:[%s1244 + $0xf0] sm:$0xff]
      %v1276 = vld [vmem:[%s1244 + $0xf8] sm:$0xff]
      %v1277 = vld [vmem:[%s3 + $0x3] sm:$0x1]
      %v1278 = vlaneseq
      %v1279 = vshrl.u32 %v1278, 7
      %v1280 = vsub.s32 0, %v1279
      %v1281 = vrot.slane %v1277, %v1280
      %v1282 = vmul.f32 %v1245, %v1281
      %v1283 = vmul.f32 %v1246, %v1281
      %v1284 = vmul.f32 %v1247, %v1281
      %v1285 = vmul.f32 %v1248, %v1281
      %v1286 = vmul.f32 %v1249, %v1281
      %v1287 = vmul.f32 %v1250, %v1281
      %v1288 = vmul.f32 %v1251, %v1281
      %v1289 = vmul.f32 %v1252, %v1281
      %v1290 = vmul.f32 %v1253, %v1281
      %v1291 = vmul.f32 %v1254, %v1281
      %v1292 = vmul.f32 %v1255, %v1281
      %v1293 = vmul.f32 %v1256, %v1281
      %v1294 = vmul.f32 %v1257, %v1281
      %v1295 = vmul.f32 %v1258, %v1281
      %v1296 = vmul.f32 %v1259, %v1281
      %v1297 = vmul.f32 %v1260, %v1281
      %v1298 = vmul.f32 %v1261, %v1281
      %v1299 = vmul.f32 %v1262, %v1281
      %v1300 = vmul.f32 %v1263, %v1281
      %v1301 = vmul.f32 %v1264, %v1281
      %v1302 = vmul.f32 %v1265, %v1281
      %v1303 = vmul.f32 %v1266, %v1281
      %v1304 = vmul.f32 %v1267, %v1281
      %v1305 = vmul.f32 %v1268, %v1281
      %v1306 = vmul.f32 %v1269, %v1281
      %v1307 = vmul.f32 %v1270, %v1281
      %v1308 = vmul.f32 %v1271, %v1281
      %v1309 = vmul.f32 %v1272, %v1281
      %v1310 = vmul.f32 %v1273, %v1281
      %v1311 = vmul.f32 %v1274, %v1281
      %v1312 = vmul.f32 %v1275, %v1281
      %v1313 = vmul.f32 %v1276, %v1281
      %v1314 = vadd.f32 %v1212, %v1282
      %v1315 = vadd.f32 %v1213, %v1283
      %v1316 = vadd.f32 %v1214, %v1284
      %v1317 = vadd.f32 %v1215, %v1285
      %v1318 = vadd.f32 %v1216, %v1286
      %v1319 = vadd.f32 %v1217, %v1287
      %v1320 = vadd.f32 %v1218, %v1288
      %v1321 = vadd.f32 %v1219, %v1289
      %v1322 = vadd.f32 %v1220, %v1290
      %v1323 = vadd.f32 %v1221, %v1291
      %v1324 = vadd.f32 %v1222, %v1292
      %v1325 = vadd.f32 %v1223, %v1293
      %v1326 = vadd.f32 %v1224, %v1294
      %v1327 = vadd.f32 %v1225, %v1295
      %v1328 = vadd.f32 %v1226, %v1296
      %v1329 = vadd.f32 %v1227, %v1297
      %v1330 = vadd.f32 %v1228, %v1298
      %v1331 = vadd.f32 %v1229, %v1299
      %v1332 = vadd.f32 %v1230, %v1300
      %v1333 = vadd.f32 %v1231, %v1301
      %v1334 = vadd.f32 %v1232, %v1302
      %v1335 = vadd.f32 %v1233, %v1303
      %v1336 = vadd.f32 %v1234, %v1304
      %v1337 = vadd.f32 %v1235, %v1305
      %v1338 = vadd.f32 %v1236, %v1306
      %v1339 = vadd.f32 %v1237, %v1307
      %v1340 = vadd.f32 %v1238, %v1308
      %v1341 = vadd.f32 %v1239, %v1309
      %v1342 = vadd.f32 %v1240, %v1310
      %v1343 = vadd.f32 %v1241, %v1311
      %v1344 = vadd.f32 %v1242, %v1312
      %v1345 = vadd.f32 %v1243, %v1313
      %s1346 = scalar_lea.vmem [#allocation2], 112
      %v1347 = vld [vmem:[%s1346] sm:$0xff]
      %v1348 = vld [vmem:[%s1346 + $0x8] sm:$0xff]
      %v1349 = vld [vmem:[%s1346 + $0x10] sm:$0xff]
      %v1350 = vld [vmem:[%s1346 + $0x18] sm:$0xff]
      %v1351 = vld [vmem:[%s1346 + $0x20] sm:$0xff]
      %v1352 = vld [vmem:[%s1346 + $0x28] sm:$0xff]
      %v1353 = vld [vmem:[%s1346 + $0x30] sm:$0xff]
      %v1354 = vld [vmem:[%s1346 + $0x38] sm:$0xff]
      %v1355 = vld [vmem:[%s1346 + $0x40] sm:$0xff]
      %v1356 = vld [vmem:[%s1346 + $0x48] sm:$0xff]
      %v1357 = vld [vmem:[%s1346 + $0x50] sm:$0xff]
      %v1358 = vld [vmem:[%s1346 + $0x58] sm:$0xff]
      %v1359 = vld [vmem:[%s1346 + $0x60] sm:$0xff]
      %v1360 = vld [vmem:[%s1346 + $0x68] sm:$0xff]
      %v1361 = vld [vmem:[%s1346 + $0x70] sm:$0xff]
      %v1362 = vld [vmem:[%s1346 + $0x78] sm:$0xff]
      %v1363 = vld [vmem:[%s1346 + $0x80] sm:$0xff]
      %v1364 = vld [vmem:[%s1346 + $0x88] sm:$0xff]
      %v1365 = vld [vmem:[%s1346 + $0x90] sm:$0xff]
      %v1366 = vld [vmem:[%s1346 + $0x98] sm:$0xff]
      %v1367 = vld [vmem:[%s1346 + $0xa0] sm:$0xff]
      %v1368 = vld [vmem:[%s1346 + $0xa8] sm:$0xff]
      %v1369 = vld [vmem:[%s1346 + $0xb0] sm:$0xff]
      %v1370 = vld [vmem:[%s1346 + $0xb8] sm:$0xff]
      %v1371 = vld [vmem:[%s1346 + $0xc0] sm:$0xff]
      %v1372 = vld [vmem:[%s1346 + $0xc8] sm:$0xff]
      %v1373 = vld [vmem:[%s1346 + $0xd0] sm:$0xff]
      %v1374 = vld [vmem:[%s1346 + $0xd8] sm:$0xff]
      %v1375 = vld [vmem:[%s1346 + $0xe0] sm:$0xff]
      %v1376 = vld [vmem:[%s1346 + $0xe8] sm:$0xff]
      %v1377 = vld [vmem:[%s1346 + $0xf0] sm:$0xff]
      %v1378 = vld [vmem:[%s1346 + $0xf8] sm:$0xff]
      %v1379 = vld [vmem:[%s3 + $0x4] sm:$0x1]
      %v1380 = vlaneseq
      %v1381 = vshrl.u32 %v1380, 7
      %v1382 = vsub.s32 0, %v1381
      %v1383 = vrot.slane %v1379, %v1382
      %v1384 = vmul.f32 %v1347, %v1383
      %v1385 = vmul.f32 %v1348, %v1383
      %v1386 = vmul.f32 %v1349, %v1383
      %v1387 = vmul.f32 %v1350, %v1383
      %v1388 = vmul.f32 %v1351, %v1383
      %v1389 = vmul.f32 %v1352, %v1383
      %v1390 = vmul.f32 %v1353, %v1383
      %v1391 = vmul.f32 %v1354, %v1383
      %v1392 = vmul.f32 %v1355, %v1383
      %v1393 = vmul.f32 %v1356, %v1383
      %v1394 = vmul.f32 %v1357, %v1383
      %v1395 = vmul.f32 %v1358, %v1383
      %v1396 = vmul.f32 %v1359, %v1383
      %v1397 = vmul.f32 %v1360, %v1383
      %v1398 = vmul.f32 %v1361, %v1383
      %v1399 = vmul.f32 %v1362, %v1383
      %v1400 = vmul.f32 %v1363, %v1383
      %v1401 = vmul.f32 %v1364, %v1383
      %v1402 = vmul.f32 %v1365, %v1383
      %v1403 = vmul.f32 %v1366, %v1383
      %v1404 = vmul.f32 %v1367, %v1383
      %v1405 = vmul.f32 %v1368, %v1383
      %v1406 = vmul.f32 %v1369, %v1383
      %v1407 = vmul.f32 %v1370, %v1383
      %v1408 = vmul.f32 %v1371, %v1383
      %v1409 = vmul.f32 %v1372, %v1383
      %v1410 = vmul.f32 %v1373, %v1383
      %v1411 = vmul.f32 %v1374, %v1383
      %v1412 = vmul.f32 %v1375, %v1383
      %v1413 = vmul.f32 %v1376, %v1383
      %v1414 = vmul.f32 %v1377, %v1383
      %v1415 = vmul.f32 %v1378, %v1383
      %v1416 = vadd.f32 %v1314, %v1384
      %v1417 = vadd.f32 %v1315, %v1385
      %v1418 = vadd.f32 %v1316, %v1386
      %v1419 = vadd.f32 %v1317, %v1387
      %v1420 = vadd.f32 %v1318, %v1388
      %v1421 = vadd.f32 %v1319, %v1389
      %v1422 = vadd.f32 %v1320, %v1390
      %v1423 = vadd.f32 %v1321, %v1391
      %v1424 = vadd.f32 %v1322, %v1392
      %v1425 = vadd.f32 %v1323, %v1393
      %v1426 = vadd.f32 %v1324, %v1394
      %v1427 = vadd.f32 %v1325, %v1395
      %v1428 = vadd.f32 %v1326, %v1396
      %v1429 = vadd.f32 %v1327, %v1397
      %v1430 = vadd.f32 %v1328, %v1398
      %v1431 = vadd.f32 %v1329, %v1399
      %v1432 = vadd.f32 %v1330, %v1400
      %v1433 = vadd.f32 %v1331, %v1401
      %v1434 = vadd.f32 %v1332, %v1402
      %v1435 = vadd.f32 %v1333, %v1403
      %v1436 = vadd.f32 %v1334, %v1404
      %v1437 = vadd.f32 %v1335, %v1405
      %v1438 = vadd.f32 %v1336, %v1406
      %v1439 = vadd.f32 %v1337, %v1407
      %v1440 = vadd.f32 %v1338, %v1408
      %v1441 = vadd.f32 %v1339, %v1409
      %v1442 = vadd.f32 %v1340, %v1410
      %v1443 = vadd.f32 %v1341, %v1411
      %v1444 = vadd.f32 %v1342, %v1412
      %v1445 = vadd.f32 %v1343, %v1413
      %v1446 = vadd.f32 %v1344, %v1414
      %v1447 = vadd.f32 %v1345, %v1415
      %v1448 = vld [vmem:[%s4] sm:$0x1]
      %v1450 = vlaneseq
      %v1451 = vshrl.u32 %v1450, 7
      %v1452 = vsub.s32 0, %v1451
      %v1453 = vrot.slane %v1448, %v1452
      %v1455 = vadd.f32 %v1416, %v1453
      %v1456 = vadd.f32 %v1417, %v1453
      %v1457 = vadd.f32 %v1418, %v1453
      %v1458 = vadd.f32 %v1419, %v1453
      %v1459 = vadd.f32 %v1420, %v1453
      %v1460 = vadd.f32 %v1421, %v1453
      %v1461 = vadd.f32 %v1422, %v1453
      %v1462 = vadd.f32 %v1423, %v1453
      %v1463 = vadd.f32 %v1424, %v1453
      %v1464 = vadd.f32 %v1425, %v1453
      %v1465 = vadd.f32 %v1426, %v1453
      %v1466 = vadd.f32 %v1427, %v1453
      %v1467 = vadd.f32 %v1428, %v1453
      %v1468 = vadd.f32 %v1429, %v1453
      %v1469 = vadd.f32 %v1430, %v1453
      %v1470 = vadd.f32 %v1431, %v1453
      %v1471 = vadd.f32 %v1432, %v1453
      %v1472 = vadd.f32 %v1433, %v1453
      %v1473 = vadd.f32 %v1434, %v1453
      %v1474 = vadd.f32 %v1435, %v1453
      %v1475 = vadd.f32 %v1436, %v1453
      %v1476 = vadd.f32 %v1437, %v1453
      %v1477 = vadd.f32 %v1438, %v1453
      %v1478 = vadd.f32 %v1439, %v1453
      %v1479 = vadd.f32 %v1440, %v1453
      %v1480 = vadd.f32 %v1441, %v1453
      %v1481 = vadd.f32 %v1442, %v1453
      %v1482 = vadd.f32 %v1443, %v1453
      %v1483 = vadd.f32 %v1444, %v1453
      %v1484 = vadd.f32 %v1445, %v1453
      %v1485 = vadd.f32 %v1446, %v1453
      %v1486 = vadd.f32 %v1447, %v1453
      %v1487 = vmax.f32 %v1455, 0.0
      %v1488 = vmax.f32 %v1456, 0.0
      %v1489 = vmax.f32 %v1457, 0.0
      %v1490 = vmax.f32 %v1458, 0.0
      %v1491 = vmax.f32 %v1459, 0.0
      %v1492 = vmax.f32 %v1460, 0.0
      %v1493 = vmax.f32 %v1461, 0.0
      %v1494 = vmax.f32 %v1462, 0.0
      %v1495 = vmax.f32 %v1463, 0.0
      %v1496 = vmax.f32 %v1464, 0.0
      %v1497 = vmax.f32 %v1465, 0.0
      %v1498 = vmax.f32 %v1466, 0.0
      %v1499 = vmax.f32 %v1467, 0.0
      %v1500 = vmax.f32 %v1468, 0.0
      %v1501 = vmax.f32 %v1469, 0.0
      %v1502 = vmax.f32 %v1470, 0.0
      %v1503 = vmax.f32 %v1471, 0.0
      %v1504 = vmax.f32 %v1472, 0.0
      %v1505 = vmax.f32 %v1473, 0.0
      %v1506 = vmax.f32 %v1474, 0.0
      %v1507 = vmax.f32 %v1475, 0.0
      %v1508 = vmax.f32 %v1476, 0.0
      %v1509 = vmax.f32 %v1477, 0.0
      %v1510 = vmax.f32 %v1478, 0.0
      %v1511 = vmax.f32 %v1479, 0.0
      %v1512 = vmax.f32 %v1480, 0.0
      %v1513 = vmax.f32 %v1481, 0.0
      %v1514 = vmax.f32 %v1482, 0.0
      %v1515 = vmax.f32 %v1483, 0.0
      %v1516 = vmax.f32 %v1484, 0.0
      %v1517 = vmax.f32 %v1485, 0.0
      %v1518 = vmax.f32 %v1486, 0.0
      %1519 = vst.msk [vmem:[#allocation3 + $0x8] sm:$0xff] %vm550, %v1487
      %1520 = vst.msk [vmem:[#allocation3 + $0x10] sm:$0xff] %vm550, %v1488
      %1521 = vst.msk [vmem:[#allocation3 + $0x28] sm:$0xff] %vm550, %v1489
      %1522 = vst.msk [vmem:[#allocation3 + $0x30] sm:$0xff] %vm550, %v1490
      %1523 = vst.msk [vmem:[#allocation3 + $0x48] sm:$0xff] %vm550, %v1491
      %1524 = vst.msk [vmem:[#allocation3 + $0x50] sm:$0xff] %vm550, %v1492
      %1525 = vst.msk [vmem:[#allocation3 + $0x68] sm:$0xff] %vm550, %v1493
      %1526 = vst.msk [vmem:[#allocation3 + $0x70] sm:$0xff] %vm550, %v1494
      %1527 = vst.msk [vmem:[#allocation3 + $0x88] sm:$0xff] %vm550, %v1495
      %1528 = vst.msk [vmem:[#allocation3 + $0x90] sm:$0xff] %vm550, %v1496
      %1529 = vst.msk [vmem:[#allocation3 + $0xa8] sm:$0xff] %vm550, %v1497
      %1530 = vst.msk [vmem:[#allocation3 + $0xb0] sm:$0xff] %vm550, %v1498
      %1531 = vst.msk [vmem:[#allocation3 + $0xc8] sm:$0xff] %vm550, %v1499
      %1532 = vst.msk [vmem:[#allocation3 + $0xd0] sm:$0xff] %vm550, %v1500
      %1533 = vst.msk [vmem:[#allocation3 + $0xe8] sm:$0xff] %vm550, %v1501
      %1534 = vst.msk [vmem:[#allocation3 + $0xf0] sm:$0xff] %vm550, %v1502
      %1535 = vst.msk [vmem:[#allocation3 + $0x108] sm:$0xff] %vm550, %v1503
      %1536 = vst.msk [vmem:[#allocation3 + $0x110] sm:$0xff] %vm550, %v1504
      %1537 = vst.msk [vmem:[#allocation3 + $0x128] sm:$0xff] %vm550, %v1505
      %1538 = vst.msk [vmem:[#allocation3 + $0x130] sm:$0xff] %vm550, %v1506
      %1539 = vst.msk [vmem:[#allocation3 + $0x148] sm:$0xff] %vm550, %v1507
      %1540 = vst.msk [vmem:[#allocation3 + $0x150] sm:$0xff] %vm550, %v1508
      %1541 = vst.msk [vmem:[#allocation3 + $0x168] sm:$0xff] %vm550, %v1509
      %1542 = vst.msk [vmem:[#allocation3 + $0x170] sm:$0xff] %vm550, %v1510
      %1543 = vst.msk [vmem:[#allocation3 + $0x188] sm:$0xff] %vm550, %v1511
      %1544 = vst.msk [vmem:[#allocation3 + $0x190] sm:$0xff] %vm550, %v1512
      %1545 = vst.msk [vmem:[#allocation3 + $0x1a8] sm:$0xff] %vm550, %v1513
      %1546 = vst.msk [vmem:[#allocation3 + $0x1b0] sm:$0xff] %vm550, %v1514
      %1547 = vst.msk [vmem:[#allocation3 + $0x1c8] sm:$0xff] %vm550, %v1515
      %1548 = vst.msk [vmem:[#allocation3 + $0x1d0] sm:$0xff] %vm550, %v1516
      %1549 = vst.msk [vmem:[#allocation3 + $0x1e8] sm:$0xff] %vm550, %v1517
      %1550 = vst.msk [vmem:[#allocation3 + $0x1f0] sm:$0xff] %vm550, %v1518
      %v1551 = vld [vmem:[#allocation3 + $0x6] sm:$0xff]
      %v1552 = vld [vmem:[#allocation3 + $0xe] sm:$0xff]
      %v1553 = vld [vmem:[#allocation3 + $0x26] sm:$0xff]
      %v1554 = vld [vmem:[#allocation3 + $0x2e] sm:$0xff]
      %v1555 = vld [vmem:[#allocation3 + $0x46] sm:$0xff]
      %v1556 = vld [vmem:[#allocation3 + $0x4e] sm:$0xff]
      %v1557 = vld [vmem:[#allocation3 + $0x66] sm:$0xff]
      %v1558 = vld [vmem:[#allocation3 + $0x6e] sm:$0xff]
      %v1559 = vld [vmem:[#allocation3 + $0x86] sm:$0xff]
      %v1560 = vld [vmem:[#allocation3 + $0x8e] sm:$0xff]
      %v1561 = vld [vmem:[#allocation3 + $0xa6] sm:$0xff]
      %v1562 = vld [vmem:[#allocation3 + $0xae] sm:$0xff]
      %v1563 = vld [vmem:[#allocation3 + $0xc6] sm:$0xff]
      %v1564 = vld [vmem:[#allocation3 + $0xce] sm:$0xff]
      %v1565 = vld [vmem:[#allocation3 + $0xe6] sm:$0xff]
      %v1566 = vld [vmem:[#allocation3 + $0xee] sm:$0xff]
      %v1567 = vld [vmem:[#allocation3 + $0x106] sm:$0xff]
      %v1568 = vld [vmem:[#allocation3 + $0x10e] sm:$0xff]
      %v1569 = vld [vmem:[#allocation3 + $0x126] sm:$0xff]
      %v1570 = vld [vmem:[#allocation3 + $0x12e] sm:$0xff]
      %v1571 = vld [vmem:[#allocation3 + $0x146] sm:$0xff]
      %v1572 = vld [vmem:[#allocation3 + $0x14e] sm:$0xff]
      %v1573 = vld [vmem:[#allocation3 + $0x166] sm:$0xff]
      %v1574 = vld [vmem:[#allocation3 + $0x16e] sm:$0xff]
      %v1575 = vld [vmem:[#allocation3 + $0x186] sm:$0xff]
      %v1576 = vld [vmem:[#allocation3 + $0x18e] sm:$0xff]
      %v1577 = vld [vmem:[#allocation3 + $0x1a6] sm:$0xff]
      %v1578 = vld [vmem:[#allocation3 + $0x1ae] sm:$0xff]
      %v1579 = vld [vmem:[#allocation3 + $0x1c6] sm:$0xff]
      %v1580 = vld [vmem:[#allocation3 + $0x1ce] sm:$0xff]
      %v1581 = vld [vmem:[#allocation3 + $0x1e6] sm:$0xff]
      %v1582 = vld [vmem:[#allocation3 + $0x1ee] sm:$0xff]
      %v1583 = vld [vmem:[%s9] sm:$0x1]
      %v1584 = vlaneseq
      %v1585 = vshrl.u32 %v1584, 7
      %v1586 = vsub.s32 0, %v1585
      %v1587 = vrot.slane %v1583, %v1586
      %v1588 = vmul.f32 %v1551, %v1587
      %v1589 = vmul.f32 %v1552, %v1587
      %v1590 = vmul.f32 %v1553, %v1587
      %v1591 = vmul.f32 %v1554, %v1587
      %v1592 = vmul.f32 %v1555, %v1587
      %v1593 = vmul.f32 %v1556, %v1587
      %v1594 = vmul.f32 %v1557, %v1587
      %v1595 = vmul.f32 %v1558, %v1587
      %v1596 = vmul.f32 %v1559, %v1587
      %v1597 = vmul.f32 %v1560, %v1587
      %v1598 = vmul.f32 %v1561, %v1587
      %v1599 = vmul.f32 %v1562, %v1587
      %v1600 = vmul.f32 %v1563, %v1587
      %v1601 = vmul.f32 %v1564, %v1587
      %v1602 = vmul.f32 %v1565, %v1587
      %v1603 = vmul.f32 %v1566, %v1587
      %v1604 = vmul.f32 %v1567, %v1587
      %v1605 = vmul.f32 %v1568, %v1587
      %v1606 = vmul.f32 %v1569, %v1587
      %v1607 = vmul.f32 %v1570, %v1587
      %v1608 = vmul.f32 %v1571, %v1587
      %v1609 = vmul.f32 %v1572, %v1587
      %v1610 = vmul.f32 %v1573, %v1587
      %v1611 = vmul.f32 %v1574, %v1587
      %v1612 = vmul.f32 %v1575, %v1587
      %v1613 = vmul.f32 %v1576, %v1587
      %v1614 = vmul.f32 %v1577, %v1587
      %v1615 = vmul.f32 %v1578, %v1587
      %v1616 = vmul.f32 %v1579, %v1587
      %v1617 = vmul.f32 %v1580, %v1587
      %v1618 = vmul.f32 %v1581, %v1587
      %v1619 = vmul.f32 %v1582, %v1587
      %v1620 = vld [vmem:[#allocation3 + $0x7] sm:$0xff]
      %v1621 = vld [vmem:[#allocation3 + $0xf] sm:$0xff]
      %v1622 = vld [vmem:[#allocation3 + $0x27] sm:$0xff]
      %v1623 = vld [vmem:[#allocation3 + $0x2f] sm:$0xff]
      %v1624 = vld [vmem:[#allocation3 + $0x47] sm:$0xff]
      %v1625 = vld [vmem:[#allocation3 + $0x4f] sm:$0xff]
      %v1626 = vld [vmem:[#allocation3 + $0x67] sm:$0xff]
      %v1627 = vld [vmem:[#allocation3 + $0x6f] sm:$0xff]
      %v1628 = vld [vmem:[#allocation3 + $0x87] sm:$0xff]
      %v1629 = vld [vmem:[#allocation3 + $0x8f] sm:$0xff]
      %v1630 = vld [vmem:[#allocation3 + $0xa7] sm:$0xff]
      %v1631 = vld [vmem:[#allocation3 + $0xaf] sm:$0xff]
      %v1632 = vld [vmem:[#allocation3 + $0xc7] sm:$0xff]
      %v1633 = vld [vmem:[#allocation3 + $0xcf] sm:$0xff]
      %v1634 = vld [vmem:[#allocation3 + $0xe7] sm:$0xff]
      %v1635 = vld [vmem:[#allocation3 + $0xef] sm:$0xff]
      %v1636 = vld [vmem:[#allocation3 + $0x107] sm:$0xff]
      %v1637 = vld [vmem:[#allocation3 + $0x10f] sm:$0xff]
      %v1638 = vld [vmem:[#allocation3 + $0x127] sm:$0xff]
      %v1639 = vld [vmem:[#allocation3 + $0x12f] sm:$0xff]
      %v1640 = vld [vmem:[#allocation3 + $0x147] sm:$0xff]
      %v1641 = vld [vmem:[#allocation3 + $0x14f] sm:$0xff]
      %v1642 = vld [vmem:[#allocation3 + $0x167] sm:$0xff]
      %v1643 = vld [vmem:[#allocation3 + $0x16f] sm:$0xff]
      %v1644 = vld [vmem:[#allocation3 + $0x187] sm:$0xff]
      %v1645 = vld [vmem:[#allocation3 + $0x18f] sm:$0xff]
      %v1646 = vld [vmem:[#allocation3 + $0x1a7] sm:$0xff]
      %v1647 = vld [vmem:[#allocation3 + $0x1af] sm:$0xff]
      %v1648 = vld [vmem:[#allocation3 + $0x1c7] sm:$0xff]
      %v1649 = vld [vmem:[#allocation3 + $0x1cf] sm:$0xff]
      %v1650 = vld [vmem:[#allocation3 + $0x1e7] sm:$0xff]
      %v1651 = vld [vmem:[#allocation3 + $0x1ef] sm:$0xff]
      %v1652 = vld [vmem:[%s9 + $0x1] sm:$0x1]
      %v1653 = vlaneseq
      %v1654 = vshrl.u32 %v1653, 7
      %v1655 = vsub.s32 0, %v1654
      %v1656 = vrot.slane %v1652, %v1655
      %v1657 = vmul.f32 %v1620, %v1656
      %v1658 = vmul.f32 %v1621, %v1656
      %v1659 = vmul.f32 %v1622, %v1656
      %v1660 = vmul.f32 %v1623, %v1656
      %v1661 = vmul.f32 %v1624, %v1656
      %v1662 = vmul.f32 %v1625, %v1656
      %v1663 = vmul.f32 %v1626, %v1656
      %v1664 = vmul.f32 %v1627, %v1656
      %v1665 = vmul.f32 %v1628, %v1656
      %v1666 = vmul.f32 %v1629, %v1656
      %v1667 = vmul.f32 %v1630, %v1656
      %v1668 = vmul.f32 %v1631, %v1656
      %v1669 = vmul.f32 %v1632, %v1656
      %v1670 = vmul.f32 %v1633, %v1656
      %v1671 = vmul.f32 %v1634, %v1656
      %v1672 = vmul.f32 %v1635, %v1656
      %v1673 = vmul.f32 %v1636, %v1656
      %v1674 = vmul.f32 %v1637, %v1656
      %v1675 = vmul.f32 %v1638, %v1656
      %v1676 = vmul.f32 %v1639, %v1656
      %v1677 = vmul.f32 %v1640, %v1656
      %v1678 = vmul.f32 %v1641, %v1656
      %v1679 = vmul.f32 %v1642, %v1656
      %v1680 = vmul.f32 %v1643, %v1656
      %v1681 = vmul.f32 %v1644, %v1656
      %v1682 = vmul.f32 %v1645, %v1656
      %v1683 = vmul.f32 %v1646, %v1656
      %v1684 = vmul.f32 %v1647, %v1656
      %v1685 = vmul.f32 %v1648, %v1656
      %v1686 = vmul.f32 %v1649, %v1656
      %v1687 = vmul.f32 %v1650, %v1656
      %v1688 = vmul.f32 %v1651, %v1656
      %v1689 = vadd.f32 %v1588, %v1657
      %v1690 = vadd.f32 %v1589, %v1658
      %v1691 = vadd.f32 %v1590, %v1659
      %v1692 = vadd.f32 %v1591, %v1660
      %v1693 = vadd.f32 %v1592, %v1661
      %v1694 = vadd.f32 %v1593, %v1662
      %v1695 = vadd.f32 %v1594, %v1663
      %v1696 = vadd.f32 %v1595, %v1664
      %v1697 = vadd.f32 %v1596, %v1665
      %v1698 = vadd.f32 %v1597, %v1666
      %v1699 = vadd.f32 %v1598, %v1667
      %v1700 = vadd.f32 %v1599, %v1668
      %v1701 = vadd.f32 %v1600, %v1669
      %v1702 = vadd.f32 %v1601, %v1670
      %v1703 = vadd.f32 %v1602, %v1671
      %v1704 = vadd.f32 %v1603, %v1672
      %v1705 = vadd.f32 %v1604, %v1673
      %v1706 = vadd.f32 %v1605, %v1674
      %v1707 = vadd.f32 %v1606, %v1675
      %v1708 = vadd.f32 %v1607, %v1676
      %v1709 = vadd.f32 %v1608, %v1677
      %v1710 = vadd.f32 %v1609, %v1678
      %v1711 = vadd.f32 %v1610, %v1679
      %v1712 = vadd.f32 %v1611, %v1680
      %v1713 = vadd.f32 %v1612, %v1681
      %v1714 = vadd.f32 %v1613, %v1682
      %v1715 = vadd.f32 %v1614, %v1683
      %v1716 = vadd.f32 %v1615, %v1684
      %v1717 = vadd.f32 %v1616, %v1685
      %v1718 = vadd.f32 %v1617, %v1686
      %v1719 = vadd.f32 %v1618, %v1687
      %v1720 = vadd.f32 %v1619, %v1688
      %v1721 = vld [vmem:[#allocation3 + $0x8] sm:$0xff]
      %v1722 = vld [vmem:[#allocation3 + $0x10] sm:$0xff]
      %v1723 = vld [vmem:[#allocation3 + $0x28] sm:$0xff]
      %v1724 = vld [vmem:[#allocation3 + $0x30] sm:$0xff]
      %v1725 = vld [vmem:[#allocation3 + $0x48] sm:$0xff]
      %v1726 = vld [vmem:[#allocation3 + $0x50] sm:$0xff]
      %v1727 = vld [vmem:[#allocation3 + $0x68] sm:$0xff]
      %v1728 = vld [vmem:[#allocation3 + $0x70] sm:$0xff]
      %v1729 = vld [vmem:[#allocation3 + $0x88] sm:$0xff]
      %v1730 = vld [vmem:[#allocation3 + $0x90] sm:$0xff]
      %v1731 = vld [vmem:[#allocation3 + $0xa8] sm:$0xff]
      %v1732 = vld [vmem:[#allocation3 + $0xb0] sm:$0xff]
      %v1733 = vld [vmem:[#allocation3 + $0xc8] sm:$0xff]
      %v1734 = vld [vmem:[#allocation3 + $0xd0] sm:$0xff]
      %v1735 = vld [vmem:[#allocation3 + $0xe8] sm:$0xff]
      %v1736 = vld [vmem:[#allocation3 + $0xf0] sm:$0xff]
      %v1737 = vld [vmem:[#allocation3 + $0x108] sm:$0xff]
      %v1738 = vld [vmem:[#allocation3 + $0x110] sm:$0xff]
      %v1739 = vld [vmem:[#allocation3 + $0x128] sm:$0xff]
      %v1740 = vld [vmem:[#allocation3 + $0x130] sm:$0xff]
      %v1741 = vld [vmem:[#allocation3 + $0x148] sm:$0xff]
      %v1742 = vld [vmem:[#allocation3 + $0x150] sm:$0xff]
      %v1743 = vld [vmem:[#allocation3 + $0x168] sm:$0xff]
      %v1744 = vld [vmem:[#allocation3 + $0x170] sm:$0xff]
      %v1745 = vld [vmem:[#allocation3 + $0x188] sm:$0xff]
      %v1746 = vld [vmem:[#allocation3 + $0x190] sm:$0xff]
      %v1747 = vld [vmem:[#allocation3 + $0x1a8] sm:$0xff]
      %v1748 = vld [vmem:[#allocation3 + $0x1b0] sm:$0xff]
      %v1749 = vld [vmem:[#allocation3 + $0x1c8] sm:$0xff]
      %v1750 = vld [vmem:[#allocation3 + $0x1d0] sm:$0xff]
      %v1751 = vld [vmem:[#allocation3 + $0x1e8] sm:$0xff]
      %v1752 = vld [vmem:[#allocation3 + $0x1f0] sm:$0xff]
      %v1753 = vld [vmem:[%s9 + $0x2] sm:$0x1]
      %v1754 = vlaneseq
      %v1755 = vshrl.u32 %v1754, 7
      %v1756 = vsub.s32 0, %v1755
      %v1757 = vrot.slane %v1753, %v1756
      %v1758 = vmul.f32 %v1721, %v1757
      %v1759 = vmul.f32 %v1722, %v1757
      %v1760 = vmul.f32 %v1723, %v1757
      %v1761 = vmul.f32 %v1724, %v1757
      %v1762 = vmul.f32 %v1725, %v1757
      %v1763 = vmul.f32 %v1726, %v1757
      %v1764 = vmul.f32 %v1727, %v1757
      %v1765 = vmul.f32 %v1728, %v1757
      %v1766 = vmul.f32 %v1729, %v1757
      %v1767 = vmul.f32 %v1730, %v1757
      %v1768 = vmul.f32 %v1731, %v1757
      %v1769 = vmul.f32 %v1732, %v1757
      %v1770 = vmul.f32 %v1733, %v1757
      %v1771 = vmul.f32 %v1734, %v1757
      %v1772 = vmul.f32 %v1735, %v1757
      %v1773 = vmul.f32 %v1736, %v1757
      %v1774 = vmul.f32 %v1737, %v1757
      %v1775 = vmul.f32 %v1738, %v1757
      %v1776 = vmul.f32 %v1739, %v1757
      %v1777 = vmul.f32 %v1740, %v1757
      %v1778 = vmul.f32 %v1741, %v1757
      %v1779 = vmul.f32 %v1742, %v1757
      %v1780 = vmul.f32 %v1743, %v1757
      %v1781 = vmul.f32 %v1744, %v1757
      %v1782 = vmul.f32 %v1745, %v1757
      %v1783 = vmul.f32 %v1746, %v1757
      %v1784 = vmul.f32 %v1747, %v1757
      %v1785 = vmul.f32 %v1748, %v1757
      %v1786 = vmul.f32 %v1749, %v1757
      %v1787 = vmul.f32 %v1750, %v1757
      %v1788 = vmul.f32 %v1751, %v1757
      %v1789 = vmul.f32 %v1752, %v1757
      %v1790 = vadd.f32 %v1689, %v1758
      %v1791 = vadd.f32 %v1690, %v1759
      %v1792 = vadd.f32 %v1691, %v1760
      %v1793 = vadd.f32 %v1692, %v1761
      %v1794 = vadd.f32 %v1693, %v1762
      %v1795 = vadd.f32 %v1694, %v1763
      %v1796 = vadd.f32 %v1695, %v1764
      %v1797 = vadd.f32 %v1696, %v1765
      %v1798 = vadd.f32 %v1697, %v1766
      %v1799 = vadd.f32 %v1698, %v1767
      %v1800 = vadd.f32 %v1699, %v1768
      %v1801 = vadd.f32 %v1700, %v1769
      %v1802 = vadd.f32 %v1701, %v1770
      %v1803 = vadd.f32 %v1702, %v1771
      %v1804 = vadd.f32 %v1703, %v1772
      %v1805 = vadd.f32 %v1704, %v1773
      %v1806 = vadd.f32 %v1705, %v1774
      %v1807 = vadd.f32 %v1706, %v1775
      %v1808 = vadd.f32 %v1707, %v1776
      %v1809 = vadd.f32 %v1708, %v1777
      %v1810 = vadd.f32 %v1709, %v1778
      %v1811 = vadd.f32 %v1710, %v1779
      %v1812 = vadd.f32 %v1711, %v1780
      %v1813 = vadd.f32 %v1712, %v1781
      %v1814 = vadd.f32 %v1713, %v1782
      %v1815 = vadd.f32 %v1714, %v1783
      %v1816 = vadd.f32 %v1715, %v1784
      %v1817 = vadd.f32 %v1716, %v1785
      %v1818 = vadd.f32 %v1717, %v1786
      %v1819 = vadd.f32 %v1718, %v1787
      %v1820 = vadd.f32 %v1719, %v1788
      %v1821 = vadd.f32 %v1720, %v1789
      %v1822 = vld [vmem:[#allocation3 + $0x9] sm:$0xff]
      %v1823 = vld [vmem:[#allocation3 + $0x11] sm:$0xff]
      %v1824 = vld [vmem:[#allocation3 + $0x29] sm:$0xff]
      %v1825 = vld [vmem:[#allocation3 + $0x31] sm:$0xff]
      %v1826 = vld [vmem:[#allocation3 + $0x49] sm:$0xff]
      %v1827 = vld [vmem:[#allocation3 + $0x51] sm:$0xff]
      %v1828 = vld [vmem:[#allocation3 + $0x69] sm:$0xff]
      %v1829 = vld [vmem:[#allocation3 + $0x71] sm:$0xff]
      %v1830 = vld [vmem:[#allocation3 + $0x89] sm:$0xff]
      %v1831 = vld [vmem:[#allocation3 + $0x91] sm:$0xff]
      %v1832 = vld [vmem:[#allocation3 + $0xa9] sm:$0xff]
      %v1833 = vld [vmem:[#allocation3 + $0xb1] sm:$0xff]
      %v1834 = vld [vmem:[#allocation3 + $0xc9] sm:$0xff]
      %v1835 = vld [vmem:[#allocation3 + $0xd1] sm:$0xff]
      %v1836 = vld [vmem:[#allocation3 + $0xe9] sm:$0xff]
      %v1837 = vld [vmem:[#allocation3 + $0xf1] sm:$0xff]
      %v1838 = vld [vmem:[#allocation3 + $0x109] sm:$0xff]
      %v1839 = vld [vmem:[#allocation3 + $0x111] sm:$0xff]
      %v1840 = vld [vmem:[#allocation3 + $0x129] sm:$0xff]
      %v1841 = vld [vmem:[#allocation3 + $0x131] sm:$0xff]
      %v1842 = vld [vmem:[#allocation3 + $0x149] sm:$0xff]
      %v1843 = vld [vmem:[#allocation3 + $0x151] sm:$0xff]
      %v1844 = vld [vmem:[#allocation3 + $0x169] sm:$0xff]
      %v1845 = vld [vmem:[#allocation3 + $0x171] sm:$0xff]
      %v1846 = vld [vmem:[#allocation3 + $0x189] sm:$0xff]
      %v1847 = vld [vmem:[#allocation3 + $0x191] sm:$0xff]
      %v1848 = vld [vmem:[#allocation3 + $0x1a9] sm:$0xff]
      %v1849 = vld [vmem:[#allocation3 + $0x1b1] sm:$0xff]
      %v1850 = vld [vmem:[#allocation3 + $0x1c9] sm:$0xff]
      %v1851 = vld [vmem:[#allocation3 + $0x1d1] sm:$0xff]
      %v1852 = vld [vmem:[#allocation3 + $0x1e9] sm:$0xff]
      %v1853 = vld [vmem:[#allocation3 + $0x1f1] sm:$0xff]
      %v1854 = vld [vmem:[%s9 + $0x3] sm:$0x1]
      %v1855 = vlaneseq
      %v1856 = vshrl.u32 %v1855, 7
      %v1857 = vsub.s32 0, %v1856
      %v1858 = vrot.slane %v1854, %v1857
      %v1859 = vmul.f32 %v1822, %v1858
      %v1860 = vmul.f32 %v1823, %v1858
      %v1861 = vmul.f32 %v1824, %v1858
      %v1862 = vmul.f32 %v1825, %v1858
      %v1863 = vmul.f32 %v1826, %v1858
      %v1864 = vmul.f32 %v1827, %v1858
      %v1865 = vmul.f32 %v1828, %v1858
      %v1866 = vmul.f32 %v1829, %v1858
      %v1867 = vmul.f32 %v1830, %v1858
      %v1868 = vmul.f32 %v1831, %v1858
      %v1869 = vmul.f32 %v1832, %v1858
      %v1870 = vmul.f32 %v1833, %v1858
      %v1871 = vmul.f32 %v1834, %v1858
      %v1872 = vmul.f32 %v1835, %v1858
      %v1873 = vmul.f32 %v1836, %v1858
      %v1874 = vmul.f32 %v1837, %v1858
      %v1875 = vmul.f32 %v1838, %v1858
      %v1876 = vmul.f32 %v1839, %v1858
      %v1877 = vmul.f32 %v1840, %v1858
      %v1878 = vmul.f32 %v1841, %v1858
      %v1879 = vmul.f32 %v1842, %v1858
      %v1880 = vmul.f32 %v1843, %v1858
      %v1881 = vmul.f32 %v1844, %v1858
      %v1882 = vmul.f32 %v1845, %v1858
      %v1883 = vmul.f32 %v1846, %v1858
      %v1884 = vmul.f32 %v1847, %v1858
      %v1885 = vmul.f32 %v1848, %v1858
      %v1886 = vmul.f32 %v1849, %v1858
      %v1887 = vmul.f32 %v1850, %v1858
      %v1888 = vmul.f32 %v1851, %v1858
      %v1889 = vmul.f32 %v1852, %v1858
      %v1890 = vmul.f32 %v1853, %v1858
      %v1891 = vadd.f32 %v1790, %v1859
      %v1892 = vadd.f32 %v1791, %v1860
      %v1893 = vadd.f32 %v1792, %v1861
      %v1894 = vadd.f32 %v1793, %v1862
      %v1895 = vadd.f32 %v1794, %v1863
      %v1896 = vadd.f32 %v1795, %v1864
      %v1897 = vadd.f32 %v1796, %v1865
      %v1898 = vadd.f32 %v1797, %v1866
      %v1899 = vadd.f32 %v1798, %v1867
      %v1900 = vadd.f32 %v1799, %v1868
      %v1901 = vadd.f32 %v1800, %v1869
      %v1902 = vadd.f32 %v1801, %v1870
      %v1903 = vadd.f32 %v1802, %v1871
      %v1904 = vadd.f32 %v1803, %v1872
      %v1905 = vadd.f32 %v1804, %v1873
      %v1906 = vadd.f32 %v1805, %v1874
      %v1907 = vadd.f32 %v1806, %v1875
      %v1908 = vadd.f32 %v1807, %v1876
      %v1909 = vadd.f32 %v1808, %v1877
      %v1910 = vadd.f32 %v1809, %v1878
      %v1911 = vadd.f32 %v1810, %v1879
      %v1912 = vadd.f32 %v1811, %v1880
      %v1913 = vadd.f32 %v1812, %v1881
      %v1914 = vadd.f32 %v1813, %v1882
      %v1915 = vadd.f32 %v1814, %v1883
      %v1916 = vadd.f32 %v1815, %v1884
      %v1917 = vadd.f32 %v1816, %v1885
      %v1918 = vadd.f32 %v1817, %v1886
      %v1919 = vadd.f32 %v1818, %v1887
      %v1920 = vadd.f32 %v1819, %v1888
      %v1921 = vadd.f32 %v1820, %v1889
      %v1922 = vadd.f32 %v1821, %v1890
      %v1923 = vld [vmem:[#allocation3 + $0xa] sm:$0xff]
      %v1924 = vld [vmem:[#allocation3 + $0x12] sm:$0xff]
      %v1925 = vld [vmem:[#allocation3 + $0x2a] sm:$0xff]
      %v1926 = vld [vmem:[#allocation3 + $0x32] sm:$0xff]
      %v1927 = vld [vmem:[#allocation3 + $0x4a] sm:$0xff]
      %v1928 = vld [vmem:[#allocation3 + $0x52] sm:$0xff]
      %v1929 = vld [vmem:[#allocation3 + $0x6a] sm:$0xff]
      %v1930 = vld [vmem:[#allocation3 + $0x72] sm:$0xff]
      %v1931 = vld [vmem:[#allocation3 + $0x8a] sm:$0xff]
      %v1932 = vld [vmem:[#allocation3 + $0x92] sm:$0xff]
      %v1933 = vld [vmem:[#allocation3 + $0xaa] sm:$0xff]
      %v1934 = vld [vmem:[#allocation3 + $0xb2] sm:$0xff]
      %v1935 = vld [vmem:[#allocation3 + $0xca] sm:$0xff]
      %v1936 = vld [vmem:[#allocation3 + $0xd2] sm:$0xff]
      %v1937 = vld [vmem:[#allocation3 + $0xea] sm:$0xff]
      %v1938 = vld [vmem:[#allocation3 + $0xf2] sm:$0xff]
      %v1939 = vld [vmem:[#allocation3 + $0x10a] sm:$0xff]
      %v1940 = vld [vmem:[#allocation3 + $0x112] sm:$0xff]
      %v1941 = vld [vmem:[#allocation3 + $0x12a] sm:$0xff]
      %v1942 = vld [vmem:[#allocation3 + $0x132] sm:$0xff]
      %v1943 = vld [vmem:[#allocation3 + $0x14a] sm:$0xff]
      %v1944 = vld [vmem:[#allocation3 + $0x152] sm:$0xff]
      %v1945 = vld [vmem:[#allocation3 + $0x16a] sm:$0xff]
      %v1946 = vld [vmem:[#allocation3 + $0x172] sm:$0xff]
      %v1947 = vld [vmem:[#allocation3 + $0x18a] sm:$0xff]
      %v1948 = vld [vmem:[#allocation3 + $0x192] sm:$0xff]
      %v1949 = vld [vmem:[#allocation3 + $0x1aa] sm:$0xff]
      %v1950 = vld [vmem:[#allocation3 + $0x1b2] sm:$0xff]
      %v1951 = vld [vmem:[#allocation3 + $0x1ca] sm:$0xff]
      %v1952 = vld [vmem:[#allocation3 + $0x1d2] sm:$0xff]
      %v1953 = vld [vmem:[#allocation3 + $0x1ea] sm:$0xff]
      %v1954 = vld [vmem:[#allocation3 + $0x1f2] sm:$0xff]
      %v1955 = vld [vmem:[%s9 + $0x4] sm:$0x1]
      %v1956 = vlaneseq
      %v1957 = vshrl.u32 %v1956, 7
      %v1958 = vsub.s32 0, %v1957
      %v1959 = vrot.slane %v1955, %v1958
      %v1960 = vmul.f32 %v1923, %v1959
      %v1961 = vmul.f32 %v1924, %v1959
      %v1962 = vmul.f32 %v1925, %v1959
      %v1963 = vmul.f32 %v1926, %v1959
      %v1964 = vmul.f32 %v1927, %v1959
      %v1965 = vmul.f32 %v1928, %v1959
      %v1966 = vmul.f32 %v1929, %v1959
      %v1967 = vmul.f32 %v1930, %v1959
      %v1968 = vmul.f32 %v1931, %v1959
      %v1969 = vmul.f32 %v1932, %v1959
      %v1970 = vmul.f32 %v1933, %v1959
      %v1971 = vmul.f32 %v1934, %v1959
      %v1972 = vmul.f32 %v1935, %v1959
      %v1973 = vmul.f32 %v1936, %v1959
      %v1974 = vmul.f32 %v1937, %v1959
      %v1975 = vmul.f32 %v1938, %v1959
      %v1976 = vmul.f32 %v1939, %v1959
      %v1977 = vmul.f32 %v1940, %v1959
      %v1978 = vmul.f32 %v1941, %v1959
      %v1979 = vmul.f32 %v1942, %v1959
      %v1980 = vmul.f32 %v1943, %v1959
      %v1981 = vmul.f32 %v1944, %v1959
      %v1982 = vmul.f32 %v1945, %v1959
      %v1983 = vmul.f32 %v1946, %v1959
      %v1984 = vmul.f32 %v1947, %v1959
      %v1985 = vmul.f32 %v1948, %v1959
      %v1986 = vmul.f32 %v1949, %v1959
      %v1987 = vmul.f32 %v1950, %v1959
      %v1988 = vmul.f32 %v1951, %v1959
      %v1989 = vmul.f32 %v1952, %v1959
      %v1990 = vmul.f32 %v1953, %v1959
      %v1991 = vmul.f32 %v1954, %v1959
      %v1992 = vadd.f32 %v1891, %v1960
      %v1993 = vadd.f32 %v1892, %v1961
      %v1994 = vadd.f32 %v1893, %v1962
      %v1995 = vadd.f32 %v1894, %v1963
      %v1996 = vadd.f32 %v1895, %v1964
      %v1997 = vadd.f32 %v1896, %v1965
      %v1998 = vadd.f32 %v1897, %v1966
      %v1999 = vadd.f32 %v1898, %v1967
      %v2000 = vadd.f32 %v1899, %v1968
      %v2001 = vadd.f32 %v1900, %v1969
      %v2002 = vadd.f32 %v1901, %v1970
      %v2003 = vadd.f32 %v1902, %v1971
      %v2004 = vadd.f32 %v1903, %v1972
      %v2005 = vadd.f32 %v1904, %v1973
      %v2006 = vadd.f32 %v1905, %v1974
      %v2007 = vadd.f32 %v1906, %v1975
      %v2008 = vadd.f32 %v1907, %v1976
      %v2009 = vadd.f32 %v1908, %v1977
      %v2010 = vadd.f32 %v1909, %v1978
      %v2011 = vadd.f32 %v1910, %v1979
      %v2012 = vadd.f32 %v1911, %v1980
      %v2013 = vadd.f32 %v1912, %v1981
      %v2014 = vadd.f32 %v1913, %v1982
      %v2015 = vadd.f32 %v1914, %v1983
      %v2016 = vadd.f32 %v1915, %v1984
      %v2017 = vadd.f32 %v1916, %v1985
      %v2018 = vadd.f32 %v1917, %v1986
      %v2019 = vadd.f32 %v1918, %v1987
      %v2020 = vadd.f32 %v1919, %v1988
      %v2021 = vadd.f32 %v1920, %v1989
      %v2022 = vadd.f32 %v1921, %v1990
      %v2023 = vadd.f32 %v1922, %v1991
      %v2024 = vld [vmem:[%s10] sm:$0x1]
      %v2026 = vlaneseq
      %v2027 = vshrl.u32 %v2026, 7
      %v2028 = vsub.s32 0, %v2027
      %v2029 = vrot.slane %v2024, %v2028
      %v2031 = vadd.f32 %v1992, %v2029
      %v2032 = vadd.f32 %v1993, %v2029
      %v2033 = vadd.f32 %v1994, %v2029
      %v2034 = vadd.f32 %v1995, %v2029
      %v2035 = vadd.f32 %v1996, %v2029
      %v2036 = vadd.f32 %v1997, %v2029
      %v2037 = vadd.f32 %v1998, %v2029
      %v2038 = vadd.f32 %v1999, %v2029
      %v2039 = vadd.f32 %v2000, %v2029
      %v2040 = vadd.f32 %v2001, %v2029
      %v2041 = vadd.f32 %v2002, %v2029
      %v2042 = vadd.f32 %v2003, %v2029
      %v2043 = vadd.f32 %v2004, %v2029
      %v2044 = vadd.f32 %v2005, %v2029
      %v2045 = vadd.f32 %v2006, %v2029
      %v2046 = vadd.f32 %v2007, %v2029
      %v2047 = vadd.f32 %v2008, %v2029
      %v2048 = vadd.f32 %v2009, %v2029
      %v2049 = vadd.f32 %v2010, %v2029
      %v2050 = vadd.f32 %v2011, %v2029
      %v2051 = vadd.f32 %v2012, %v2029
      %v2052 = vadd.f32 %v2013, %v2029
      %v2053 = vadd.f32 %v2014, %v2029
      %v2054 = vadd.f32 %v2015, %v2029
      %v2055 = vadd.f32 %v2016, %v2029
      %v2056 = vadd.f32 %v2017, %v2029
      %v2057 = vadd.f32 %v2018, %v2029
      %v2058 = vadd.f32 %v2019, %v2029
      %v2059 = vadd.f32 %v2020, %v2029
      %v2060 = vadd.f32 %v2021, %v2029
      %v2061 = vadd.f32 %v2022, %v2029
      %v2062 = vadd.f32 %v2023, %v2029
      %v2063 = vmax.f32 %v2031, 0.0
      %v2064 = vmax.f32 %v2032, 0.0
      %v2065 = vmax.f32 %v2033, 0.0
      %v2066 = vmax.f32 %v2034, 0.0
      %v2067 = vmax.f32 %v2035, 0.0
      %v2068 = vmax.f32 %v2036, 0.0
      %v2069 = vmax.f32 %v2037, 0.0
      %v2070 = vmax.f32 %v2038, 0.0
      %v2071 = vmax.f32 %v2039, 0.0
      %v2072 = vmax.f32 %v2040, 0.0
      %v2073 = vmax.f32 %v2041, 0.0
      %v2074 = vmax.f32 %v2042, 0.0
      %v2075 = vmax.f32 %v2043, 0.0
      %v2076 = vmax.f32 %v2044, 0.0
      %v2077 = vmax.f32 %v2045, 0.0
      %v2078 = vmax.f32 %v2046, 0.0
      %v2079 = vmax.f32 %v2047, 0.0
      %v2080 = vmax.f32 %v2048, 0.0
      %v2081 = vmax.f32 %v2049, 0.0
      %v2082 = vmax.f32 %v2050, 0.0
      %v2083 = vmax.f32 %v2051, 0.0
      %v2084 = vmax.f32 %v2052, 0.0
      %v2085 = vmax.f32 %v2053, 0.0
      %v2086 = vmax.f32 %v2054, 0.0
      %v2087 = vmax.f32 %v2055, 0.0
      %v2088 = vmax.f32 %v2056, 0.0
      %v2089 = vmax.f32 %v2057, 0.0
      %v2090 = vmax.f32 %v2058, 0.0
      %v2091 = vmax.f32 %v2059, 0.0
      %v2092 = vmax.f32 %v2060, 0.0
      %v2093 = vmax.f32 %v2061, 0.0
      %v2094 = vmax.f32 %v2062, 0.0
      %v2095 = vld [vmem:[%s1041] sm:$0xff]
      %v2096 = vld [vmem:[%s1041 + $0x8] sm:$0xff]
      %v2097 = vld [vmem:[%s1041 + $0x10] sm:$0xff]
      %v2098 = vld [vmem:[%s1041 + $0x18] sm:$0xff]
      %v2099 = vld [vmem:[%s1041 + $0x20] sm:$0xff]
      %v2100 = vld [vmem:[%s1041 + $0x28] sm:$0xff]
      %v2101 = vld [vmem:[%s1041 + $0x30] sm:$0xff]
      %v2102 = vld [vmem:[%s1041 + $0x38] sm:$0xff]
      %v2103 = vld [vmem:[%s1041 + $0x40] sm:$0xff]
      %v2104 = vld [vmem:[%s1041 + $0x48] sm:$0xff]
      %v2105 = vld [vmem:[%s1041 + $0x50] sm:$0xff]
      %v2106 = vld [vmem:[%s1041 + $0x58] sm:$0xff]
      %v2107 = vld [vmem:[%s1041 + $0x60] sm:$0xff]
      %v2108 = vld [vmem:[%s1041 + $0x68] sm:$0xff]
      %v2109 = vld [vmem:[%s1041 + $0x70] sm:$0xff]
      %v2110 = vld [vmem:[%s1041 + $0x78] sm:$0xff]
      %v2111 = vld [vmem:[%s1041 + $0x80] sm:$0xff]
      %v2112 = vld [vmem:[%s1041 + $0x88] sm:$0xff]
      %v2113 = vld [vmem:[%s1041 + $0x90] sm:$0xff]
      %v2114 = vld [vmem:[%s1041 + $0x98] sm:$0xff]
      %v2115 = vld [vmem:[%s1041 + $0xa0] sm:$0xff]
      %v2116 = vld [vmem:[%s1041 + $0xa8] sm:$0xff]
      %v2117 = vld [vmem:[%s1041 + $0xb0] sm:$0xff]
      %v2118 = vld [vmem:[%s1041 + $0xb8] sm:$0xff]
      %v2119 = vld [vmem:[%s1041 + $0xc0] sm:$0xff]
      %v2120 = vld [vmem:[%s1041 + $0xc8] sm:$0xff]
      %v2121 = vld [vmem:[%s1041 + $0xd0] sm:$0xff]
      %v2122 = vld [vmem:[%s1041 + $0xd8] sm:$0xff]
      %v2123 = vld [vmem:[%s1041 + $0xe0] sm:$0xff]
      %v2124 = vld [vmem:[%s1041 + $0xe8] sm:$0xff]
      %v2125 = vld [vmem:[%s1041 + $0xf0] sm:$0xff]
      %v2126 = vld [vmem:[%s1041 + $0xf8] sm:$0xff]
      %v2127 = vld [vmem:[%s5] sm:$0x1]
      %v2128 = vlaneseq
      %v2129 = vshrl.u32 %v2128, 7
      %v2130 = vsub.s32 0, %v2129
      %v2131 = vrot.slane %v2127, %v2130
      %v2132 = vmul.f32 %v2095, %v2131
      %v2133 = vmul.f32 %v2096, %v2131
      %v2134 = vmul.f32 %v2097, %v2131
      %v2135 = vmul.f32 %v2098, %v2131
      %v2136 = vmul.f32 %v2099, %v2131
      %v2137 = vmul.f32 %v2100, %v2131
      %v2138 = vmul.f32 %v2101, %v2131
      %v2139 = vmul.f32 %v2102, %v2131
      %v2140 = vmul.f32 %v2103, %v2131
      %v2141 = vmul.f32 %v2104, %v2131
      %v2142 = vmul.f32 %v2105, %v2131
      %v2143 = vmul.f32 %v2106, %v2131
      %v2144 = vmul.f32 %v2107, %v2131
      %v2145 = vmul.f32 %v2108, %v2131
      %v2146 = vmul.f32 %v2109, %v2131
      %v2147 = vmul.f32 %v2110, %v2131
      %v2148 = vmul.f32 %v2111, %v2131
      %v2149 = vmul.f32 %v2112, %v2131
      %v2150 = vmul.f32 %v2113, %v2131
      %v2151 = vmul.f32 %v2114, %v2131
      %v2152 = vmul.f32 %v2115, %v2131
      %v2153 = vmul.f32 %v2116, %v2131
      %v2154 = vmul.f32 %v2117, %v2131
      %v2155 = vmul.f32 %v2118, %v2131
      %v2156 = vmul.f32 %v2119, %v2131
      %v2157 = vmul.f32 %v2120, %v2131
      %v2158 = vmul.f32 %v2121, %v2131
      %v2159 = vmul.f32 %v2122, %v2131
      %v2160 = vmul.f32 %v2123, %v2131
      %v2161 = vmul.f32 %v2124, %v2131
      %v2162 = vmul.f32 %v2125, %v2131
      %v2163 = vmul.f32 %v2126, %v2131
      %v2164 = vld [vmem:[%s938] sm:$0xff]
      %v2165 = vld [vmem:[%s938 + $0x8] sm:$0xff]
      %v2166 = vld [vmem:[%s938 + $0x10] sm:$0xff]
      %v2167 = vld [vmem:[%s938 + $0x18] sm:$0xff]
      %v2168 = vld [vmem:[%s938 + $0x20] sm:$0xff]
      %v2169 = vld [vmem:[%s938 + $0x28] sm:$0xff]
      %v2170 = vld [vmem:[%s938 + $0x30] sm:$0xff]
      %v2171 = vld [vmem:[%s938 + $0x38] sm:$0xff]
      %v2172 = vld [vmem:[%s938 + $0x40] sm:$0xff]
      %v2173 = vld [vmem:[%s938 + $0x48] sm:$0xff]
      %v2174 = vld [vmem:[%s938 + $0x50] sm:$0xff]
      %v2175 = vld [vmem:[%s938 + $0x58] sm:$0xff]
      %v2176 = vld [vmem:[%s938 + $0x60] sm:$0xff]
      %v2177 = vld [vmem:[%s938 + $0x68] sm:$0xff]
      %v2178 = vld [vmem:[%s938 + $0x70] sm:$0xff]
      %v2179 = vld [vmem:[%s938 + $0x78] sm:$0xff]
      %v2180 = vld [vmem:[%s938 + $0x80] sm:$0xff]
      %v2181 = vld [vmem:[%s938 + $0x88] sm:$0xff]
      %v2182 = vld [vmem:[%s938 + $0x90] sm:$0xff]
      %v2183 = vld [vmem:[%s938 + $0x98] sm:$0xff]
      %v2184 = vld [vmem:[%s938 + $0xa0] sm:$0xff]
      %v2185 = vld [vmem:[%s938 + $0xa8] sm:$0xff]
      %v2186 = vld [vmem:[%s938 + $0xb0] sm:$0xff]
      %v2187 = vld [vmem:[%s938 + $0xb8] sm:$0xff]
      %v2188 = vld [vmem:[%s938 + $0xc0] sm:$0xff]
      %v2189 = vld [vmem:[%s938 + $0xc8] sm:$0xff]
      %v2190 = vld [vmem:[%s938 + $0xd0] sm:$0xff]
      %v2191 = vld [vmem:[%s938 + $0xd8] sm:$0xff]
      %v2192 = vld [vmem:[%s938 + $0xe0] sm:$0xff]
      %v2193 = vld [vmem:[%s938 + $0xe8] sm:$0xff]
      %v2194 = vld [vmem:[%s938 + $0xf0] sm:$0xff]
      %v2195 = vld [vmem:[%s938 + $0xf8] sm:$0xff]
      %v2196 = vld [vmem:[%s5 + $0x1] sm:$0x1]
      %v2197 = vlaneseq
      %v2198 = vshrl.u32 %v2197, 7
      %v2199 = vsub.s32 0, %v2198
      %v2200 = vrot.slane %v2196, %v2199
      %v2201 = vmul.f32 %v2164, %v2200
      %v2202 = vmul.f32 %v2165, %v2200
      %v2203 = vmul.f32 %v2166, %v2200
      %v2204 = vmul.f32 %v2167, %v2200
      %v2205 = vmul.f32 %v2168, %v2200
      %v2206 = vmul.f32 %v2169, %v2200
      %v2207 = vmul.f32 %v2170, %v2200
      %v2208 = vmul.f32 %v2171, %v2200
      %v2209 = vmul.f32 %v2172, %v2200
      %v2210 = vmul.f32 %v2173, %v2200
      %v2211 = vmul.f32 %v2174, %v2200
      %v2212 = vmul.f32 %v2175, %v2200
      %v2213 = vmul.f32 %v2176, %v2200
      %v2214 = vmul.f32 %v2177, %v2200
      %v2215 = vmul.f32 %v2178, %v2200
      %v2216 = vmul.f32 %v2179, %v2200
      %v2217 = vmul.f32 %v2180, %v2200
      %v2218 = vmul.f32 %v2181, %v2200
      %v2219 = vmul.f32 %v2182, %v2200
      %v2220 = vmul.f32 %v2183, %v2200
      %v2221 = vmul.f32 %v2184, %v2200
      %v2222 = vmul.f32 %v2185, %v2200
      %v2223 = vmul.f32 %v2186, %v2200
      %v2224 = vmul.f32 %v2187, %v2200
      %v2225 = vmul.f32 %v2188, %v2200
      %v2226 = vmul.f32 %v2189, %v2200
      %v2227 = vmul.f32 %v2190, %v2200
      %v2228 = vmul.f32 %v2191, %v2200
      %v2229 = vmul.f32 %v2192, %v2200
      %v2230 = vmul.f32 %v2193, %v2200
      %v2231 = vmul.f32 %v2194, %v2200
      %v2232 = vmul.f32 %v2195, %v2200
      %v2233 = vadd.f32 %v2132, %v2201
      %v2234 = vadd.f32 %v2133, %v2202
      %v2235 = vadd.f32 %v2134, %v2203
      %v2236 = vadd.f32 %v2135, %v2204
      %v2237 = vadd.f32 %v2136, %v2205
      %v2238 = vadd.f32 %v2137, %v2206
      %v2239 = vadd.f32 %v2138, %v2207
      %v2240 = vadd.f32 %v2139, %v2208
      %v2241 = vadd.f32 %v2140, %v2209
      %v2242 = vadd.f32 %v2141, %v2210
      %v2243 = vadd.f32 %v2142, %v2211
      %v2244 = vadd.f32 %v2143, %v2212
      %v2245 = vadd.f32 %v2144, %v2213
      %v2246 = vadd.f32 %v2145, %v2214
      %v2247 = vadd.f32 %v2146, %v2215
      %v2248 = vadd.f32 %v2147, %v2216
      %v2249 = vadd.f32 %v2148, %v2217
      %v2250 = vadd.f32 %v2149, %v2218
      %v2251 = vadd.f32 %v2150, %v2219
      %v2252 = vadd.f32 %v2151, %v2220
      %v2253 = vadd.f32 %v2152, %v2221
      %v2254 = vadd.f32 %v2153, %v2222
      %v2255 = vadd.f32 %v2154, %v2223
      %v2256 = vadd.f32 %v2155, %v2224
      %v2257 = vadd.f32 %v2156, %v2225
      %v2258 = vadd.f32 %v2157, %v2226
      %v2259 = vadd.f32 %v2158, %v2227
      %v2260 = vadd.f32 %v2159, %v2228
      %v2261 = vadd.f32 %v2160, %v2229
      %v2262 = vadd.f32 %v2161, %v2230
      %v2263 = vadd.f32 %v2162, %v2231
      %v2264 = vadd.f32 %v2163, %v2232
      %v2265 = vld [vmem:[%s1244] sm:$0xff]
      %v2266 = vld [vmem:[%s1244 + $0x8] sm:$0xff]
      %v2267 = vld [vmem:[%s1244 + $0x10] sm:$0xff]
      %v2268 = vld [vmem:[%s1244 + $0x18] sm:$0xff]
      %v2269 = vld [vmem:[%s1244 + $0x20] sm:$0xff]
      %v2270 = vld [vmem:[%s1244 + $0x28] sm:$0xff]
      %v2271 = vld [vmem:[%s1244 + $0x30] sm:$0xff]
      %v2272 = vld [vmem:[%s1244 + $0x38] sm:$0xff]
      %v2273 = vld [vmem:[%s1244 + $0x40] sm:$0xff]
      %v2274 = vld [vmem:[%s1244 + $0x48] sm:$0xff]
      %v2275 = vld [vmem:[%s1244 + $0x50] sm:$0xff]
      %v2276 = vld [vmem:[%s1244 + $0x58] sm:$0xff]
      %v2277 = vld [vmem:[%s1244 + $0x60] sm:$0xff]
      %v2278 = vld [vmem:[%s1244 + $0x68] sm:$0xff]
      %v2279 = vld [vmem:[%s1244 + $0x70] sm:$0xff]
      %v2280 = vld [vmem:[%s1244 + $0x78] sm:$0xff]
      %v2281 = vld [vmem:[%s1244 + $0x80] sm:$0xff]
      %v2282 = vld [vmem:[%s1244 + $0x88] sm:$0xff]
      %v2283 = vld [vmem:[%s1244 + $0x90] sm:$0xff]
      %v2284 = vld [vmem:[%s1244 + $0x98] sm:$0xff]
      %v2285 = vld [vmem:[%s1244 + $0xa0] sm:$0xff]
      %v2286 = vld [vmem:[%s1244 + $0xa8] sm:$0xff]
      %v2287 = vld [vmem:[%s1244 + $0xb0] sm:$0xff]
      %v2288 = vld [vmem:[%s1244 + $0xb8] sm:$0xff]
      %v2289 = vld [vmem:[%s1244 + $0xc0] sm:$0xff]
      %v2290 = vld [vmem:[%s1244 + $0xc8] sm:$0xff]
      %v2291 = vld [vmem:[%s1244 + $0xd0] sm:$0xff]
      %v2292 = vld [vmem:[%s1244 + $0xd8] sm:$0xff]
      %v2293 = vld [vmem:[%s1244 + $0xe0] sm:$0xff]
      %v2294 = vld [vmem:[%s1244 + $0xe8] sm:$0xff]
      %v2295 = vld [vmem:[%s1244 + $0xf0] sm:$0xff]
      %v2296 = vld [vmem:[%s1244 + $0xf8] sm:$0xff]
      %v2297 = vld [vmem:[%s5 + $0x2] sm:$0x1]
      %v2298 = vlaneseq
      %v2299 = vshrl.u32 %v2298, 7
      %v2300 = vsub.s32 0, %v2299
      %v2301 = vrot.slane %v2297, %v2300
      %v2302 = vmul.f32 %v2265, %v2301
      %v2303 = vmul.f32 %v2266, %v2301
      %v2304 = vmul.f32 %v2267, %v2301
      %v2305 = vmul.f32 %v2268, %v2301
      %v2306 = vmul.f32 %v2269, %v2301
      %v2307 = vmul.f32 %v2270, %v2301
      %v2308 = vmul.f32 %v2271, %v2301
      %v2309 = vmul.f32 %v2272, %v2301
      %v2310 = vmul.f32 %v2273, %v2301
      %v2311 = vmul.f32 %v2274, %v2301
      %v2312 = vmul.f32 %v2275, %v2301
      %v2313 = vmul.f32 %v2276, %v2301
      %v2314 = vmul.f32 %v2277, %v2301
      %v2315 = vmul.f32 %v2278, %v2301
      %v2316 = vmul.f32 %v2279, %v2301
      %v2317 = vmul.f32 %v2280, %v2301
      %v2318 = vmul.f32 %v2281, %v2301
      %v2319 = vmul.f32 %v2282, %v2301
      %v2320 = vmul.f32 %v2283, %v2301
      %v2321 = vmul.f32 %v2284, %v2301
      %v2322 = vmul.f32 %v2285, %v2301
      %v2323 = vmul.f32 %v2286, %v2301
      %v2324 = vmul.f32 %v2287, %v2301
      %v2325 = vmul.f32 %v2288, %v2301
      %v2326 = vmul.f32 %v2289, %v2301
      %v2327 = vmul.f32 %v2290, %v2301
      %v2328 = vmul.f32 %v2291, %v2301
      %v2329 = vmul.f32 %v2292, %v2301
      %v2330 = vmul.f32 %v2293, %v2301
      %v2331 = vmul.f32 %v2294, %v2301
      %v2332 = vmul.f32 %v2295, %v2301
      %v2333 = vmul.f32 %v2296, %v2301
      %v2334 = vadd.f32 %v2233, %v2302
      %v2335 = vadd.f32 %v2234, %v2303
      %v2336 = vadd.f32 %v2235, %v2304
      %v2337 = vadd.f32 %v2236, %v2305
      %v2338 = vadd.f32 %v2237, %v2306
      %v2339 = vadd.f32 %v2238, %v2307
      %v2340 = vadd.f32 %v2239, %v2308
      %v2341 = vadd.f32 %v2240, %v2309
      %v2342 = vadd.f32 %v2241, %v2310
      %v2343 = vadd.f32 %v2242, %v2311
      %v2344 = vadd.f32 %v2243, %v2312
      %v2345 = vadd.f32 %v2244, %v2313
      %v2346 = vadd.f32 %v2245, %v2314
      %v2347 = vadd.f32 %v2246, %v2315
      %v2348 = vadd.f32 %v2247, %v2316
      %v2349 = vadd.f32 %v2248, %v2317
      %v2350 = vadd.f32 %v2249, %v2318
      %v2351 = vadd.f32 %v2250, %v2319
      %v2352 = vadd.f32 %v2251, %v2320
      %v2353 = vadd.f32 %v2252, %v2321
      %v2354 = vadd.f32 %v2253, %v2322
      %v2355 = vadd.f32 %v2254, %v2323
      %v2356 = vadd.f32 %v2255, %v2324
      %v2357 = vadd.f32 %v2256, %v2325
      %v2358 = vadd.f32 %v2257, %v2326
      %v2359 = vadd.f32 %v2258, %v2327
      %v2360 = vadd.f32 %v2259, %v2328
      %v2361 = vadd.f32 %v2260, %v2329
      %v2362 = vadd.f32 %v2261, %v2330
      %v2363 = vadd.f32 %v2262, %v2331
      %v2364 = vadd.f32 %v2263, %v2332
      %v2365 = vadd.f32 %v2264, %v2333
      %v2366 = vld [vmem:[%s6] sm:$0x1]
      %v2368 = vlaneseq
      %v2369 = vshrl.u32 %v2368, 7
      %v2370 = vsub.s32 0, %v2369
      %v2371 = vrot.slane %v2366, %v2370
      %v2373 = vadd.f32 %v2334, %v2371
      %v2374 = vadd.f32 %v2335, %v2371
      %v2375 = vadd.f32 %v2336, %v2371
      %v2376 = vadd.f32 %v2337, %v2371
      %v2377 = vadd.f32 %v2338, %v2371
      %v2378 = vadd.f32 %v2339, %v2371
      %v2379 = vadd.f32 %v2340, %v2371
      %v2380 = vadd.f32 %v2341, %v2371
      %v2381 = vadd.f32 %v2342, %v2371
      %v2382 = vadd.f32 %v2343, %v2371
      %v2383 = vadd.f32 %v2344, %v2371
      %v2384 = vadd.f32 %v2345, %v2371
      %v2385 = vadd.f32 %v2346, %v2371
      %v2386 = vadd.f32 %v2347, %v2371
      %v2387 = vadd.f32 %v2348, %v2371
      %v2388 = vadd.f32 %v2349, %v2371
      %v2389 = vadd.f32 %v2350, %v2371
      %v2390 = vadd.f32 %v2351, %v2371
      %v2391 = vadd.f32 %v2352, %v2371
      %v2392 = vadd.f32 %v2353, %v2371
      %v2393 = vadd.f32 %v2354, %v2371
      %v2394 = vadd.f32 %v2355, %v2371
      %v2395 = vadd.f32 %v2356, %v2371
      %v2396 = vadd.f32 %v2357, %v2371
      %v2397 = vadd.f32 %v2358, %v2371
      %v2398 = vadd.f32 %v2359, %v2371
      %v2399 = vadd.f32 %v2360, %v2371
      %v2400 = vadd.f32 %v2361, %v2371
      %v2401 = vadd.f32 %v2362, %v2371
      %v2402 = vadd.f32 %v2363, %v2371
      %v2403 = vadd.f32 %v2364, %v2371
      %v2404 = vadd.f32 %v2365, %v2371
      %v2405 = vmax.f32 %v2373, 0.0
      %v2406 = vmax.f32 %v2374, 0.0
      %v2407 = vmax.f32 %v2375, 0.0
      %v2408 = vmax.f32 %v2376, 0.0
      %v2409 = vmax.f32 %v2377, 0.0
      %v2410 = vmax.f32 %v2378, 0.0
      %v2411 = vmax.f32 %v2379, 0.0
      %v2412 = vmax.f32 %v2380, 0.0
      %v2413 = vmax.f32 %v2381, 0.0
      %v2414 = vmax.f32 %v2382, 0.0
      %v2415 = vmax.f32 %v2383, 0.0
      %v2416 = vmax.f32 %v2384, 0.0
      %v2417 = vmax.f32 %v2385, 0.0
      %v2418 = vmax.f32 %v2386, 0.0
      %v2419 = vmax.f32 %v2387, 0.0
      %v2420 = vmax.f32 %v2388, 0.0
      %v2421 = vmax.f32 %v2389, 0.0
      %v2422 = vmax.f32 %v2390, 0.0
      %v2423 = vmax.f32 %v2391, 0.0
      %v2424 = vmax.f32 %v2392, 0.0
      %v2425 = vmax.f32 %v2393, 0.0
      %v2426 = vmax.f32 %v2394, 0.0
      %v2427 = vmax.f32 %v2395, 0.0
      %v2428 = vmax.f32 %v2396, 0.0
      %v2429 = vmax.f32 %v2397, 0.0
      %v2430 = vmax.f32 %v2398, 0.0
      %v2431 = vmax.f32 %v2399, 0.0
      %v2432 = vmax.f32 %v2400, 0.0
      %v2433 = vmax.f32 %v2401, 0.0
      %v2434 = vmax.f32 %v2402, 0.0
      %v2435 = vmax.f32 %v2403, 0.0
      %v2436 = vmax.f32 %v2404, 0.0
      %2437 = vst.msk [vmem:[#allocation3 + $0x8] sm:$0xff] %vm550, %v2405
      %2438 = vst.msk [vmem:[#allocation3 + $0x10] sm:$0xff] %vm550, %v2406
      %2439 = vst.msk [vmem:[#allocation3 + $0x28] sm:$0xff] %vm550, %v2407
      %2440 = vst.msk [vmem:[#allocation3 + $0x30] sm:$0xff] %vm550, %v2408
      %2441 = vst.msk [vmem:[#allocation3 + $0x48] sm:$0xff] %vm550, %v2409
      %2442 = vst.msk [vmem:[#allocation3 + $0x50] sm:$0xff] %vm550, %v2410
      %2443 = vst.msk [vmem:[#allocation3 + $0x68] sm:$0xff] %vm550, %v2411
      %2444 = vst.msk [vmem:[#allocation3 + $0x70] sm:$0xff] %vm550, %v2412
      %2445 = vst.msk [vmem:[#allocation3 + $0x88] sm:$0xff] %vm550, %v2413
      %2446 = vst.msk [vmem:[#allocation3 + $0x90] sm:$0xff] %vm550, %v2414
      %2447 = vst.msk [vmem:[#allocation3 + $0xa8] sm:$0xff] %vm550, %v2415
      %2448 = vst.msk [vmem:[#allocation3 + $0xb0] sm:$0xff] %vm550, %v2416
      %2449 = vst.msk [vmem:[#allocation3 + $0xc8] sm:$0xff] %vm550, %v2417
      %2450 = vst.msk [vmem:[#allocation3 + $0xd0] sm:$0xff] %vm550, %v2418
      %2451 = vst.msk [vmem:[#allocation3 + $0xe8] sm:$0xff] %vm550, %v2419
      %2452 = vst.msk [vmem:[#allocation3 + $0xf0] sm:$0xff] %vm550, %v2420
      %2453 = vst.msk [vmem:[#allocation3 + $0x108] sm:$0xff] %vm550, %v2421
      %2454 = vst.msk [vmem:[#allocation3 + $0x110] sm:$0xff] %vm550, %v2422
      %2455 = vst.msk [vmem:[#allocation3 + $0x128] sm:$0xff] %vm550, %v2423
      %2456 = vst.msk [vmem:[#allocation3 + $0x130] sm:$0xff] %vm550, %v2424
      %2457 = vst.msk [vmem:[#allocation3 + $0x148] sm:$0xff] %vm550, %v2425
      %2458 = vst.msk [vmem:[#allocation3 + $0x150] sm:$0xff] %vm550, %v2426
      %2459 = vst.msk [vmem:[#allocation3 + $0x168] sm:$0xff] %vm550, %v2427
      %2460 = vst.msk [vmem:[#allocation3 + $0x170] sm:$0xff] %vm550, %v2428
      %2461 = vst.msk [vmem:[#allocation3 + $0x188] sm:$0xff] %vm550, %v2429
      %2462 = vst.msk [vmem:[#allocation3 + $0x190] sm:$0xff] %vm550, %v2430
      %2463 = vst.msk [vmem:[#allocation3 + $0x1a8] sm:$0xff] %vm550, %v2431
      %2464 = vst.msk [vmem:[#allocation3 + $0x1b0] sm:$0xff] %vm550, %v2432
      %2465 = vst.msk [vmem:[#allocation3 + $0x1c8] sm:$0xff] %vm550, %v2433
      %2466 = vst.msk [vmem:[#allocation3 + $0x1d0] sm:$0xff] %vm550, %v2434
      %2467 = vst.msk [vmem:[#allocation3 + $0x1e8] sm:$0xff] %vm550, %v2435
      %2468 = vst.msk [vmem:[#allocation3 + $0x1f0] sm:$0xff] %vm550, %v2436
      %v2469 = vld [vmem:[#allocation3 + $0x7] sm:$0xff]
      %v2470 = vld [vmem:[#allocation3 + $0xf] sm:$0xff]
      %v2471 = vld [vmem:[#allocation3 + $0x27] sm:$0xff]
      %v2472 = vld [vmem:[#allocation3 + $0x2f] sm:$0xff]
      %v2473 = vld [vmem:[#allocation3 + $0x47] sm:$0xff]
      %v2474 = vld [vmem:[#allocation3 + $0x4f] sm:$0xff]
      %v2475 = vld [vmem:[#allocation3 + $0x67] sm:$0xff]
      %v2476 = vld [vmem:[#allocation3 + $0x6f] sm:$0xff]
      %v2477 = vld [vmem:[#allocation3 + $0x87] sm:$0xff]
      %v2478 = vld [vmem:[#allocation3 + $0x8f] sm:$0xff]
      %v2479 = vld [vmem:[#allocation3 + $0xa7] sm:$0xff]
      %v2480 = vld [vmem:[#allocation3 + $0xaf] sm:$0xff]
      %v2481 = vld [vmem:[#allocation3 + $0xc7] sm:$0xff]
      %v2482 = vld [vmem:[#allocation3 + $0xcf] sm:$0xff]
      %v2483 = vld [vmem:[#allocation3 + $0xe7] sm:$0xff]
      %v2484 = vld [vmem:[#allocation3 + $0xef] sm:$0xff]
      %v2485 = vld [vmem:[#allocation3 + $0x107] sm:$0xff]
      %v2486 = vld [vmem:[#allocation3 + $0x10f] sm:$0xff]
      %v2487 = vld [vmem:[#allocation3 + $0x127] sm:$0xff]
      %v2488 = vld [vmem:[#allocation3 + $0x12f] sm:$0xff]
      %v2489 = vld [vmem:[#allocation3 + $0x147] sm:$0xff]
      %v2490 = vld [vmem:[#allocation3 + $0x14f] sm:$0xff]
      %v2491 = vld [vmem:[#allocation3 + $0x167] sm:$0xff]
      %v2492 = vld [vmem:[#allocation3 + $0x16f] sm:$0xff]
      %v2493 = vld [vmem:[#allocation3 + $0x187] sm:$0xff]
      %v2494 = vld [vmem:[#allocation3 + $0x18f] sm:$0xff]
      %v2495 = vld [vmem:[#allocation3 + $0x1a7] sm:$0xff]
      %v2496 = vld [vmem:[#allocation3 + $0x1af] sm:$0xff]
      %v2497 = vld [vmem:[#allocation3 + $0x1c7] sm:$0xff]
      %v2498 = vld [vmem:[#allocation3 + $0x1cf] sm:$0xff]
      %v2499 = vld [vmem:[#allocation3 + $0x1e7] sm:$0xff]
      %v2500 = vld [vmem:[#allocation3 + $0x1ef] sm:$0xff]
      %v2501 = vld [vmem:[%s11] sm:$0x1]
      %v2502 = vlaneseq
      %v2503 = vshrl.u32 %v2502, 7
      %v2504 = vsub.s32 0, %v2503
      %v2505 = vrot.slane %v2501, %v2504
      %v2506 = vmul.f32 %v2469, %v2505
      %v2507 = vmul.f32 %v2470, %v2505
      %v2508 = vmul.f32 %v2471, %v2505
      %v2509 = vmul.f32 %v2472, %v2505
      %v2510 = vmul.f32 %v2473, %v2505
      %v2511 = vmul.f32 %v2474, %v2505
      %v2512 = vmul.f32 %v2475, %v2505
      %v2513 = vmul.f32 %v2476, %v2505
      %v2514 = vmul.f32 %v2477, %v2505
      %v2515 = vmul.f32 %v2478, %v2505
      %v2516 = vmul.f32 %v2479, %v2505
      %v2517 = vmul.f32 %v2480, %v2505
      %v2518 = vmul.f32 %v2481, %v2505
      %v2519 = vmul.f32 %v2482, %v2505
      %v2520 = vmul.f32 %v2483, %v2505
      %v2521 = vmul.f32 %v2484, %v2505
      %v2522 = vmul.f32 %v2485, %v2505
      %v2523 = vmul.f32 %v2486, %v2505
      %v2524 = vmul.f32 %v2487, %v2505
      %v2525 = vmul.f32 %v2488, %v2505
      %v2526 = vmul.f32 %v2489, %v2505
      %v2527 = vmul.f32 %v2490, %v2505
      %v2528 = vmul.f32 %v2491, %v2505
      %v2529 = vmul.f32 %v2492, %v2505
      %v2530 = vmul.f32 %v2493, %v2505
      %v2531 = vmul.f32 %v2494, %v2505
      %v2532 = vmul.f32 %v2495, %v2505
      %v2533 = vmul.f32 %v2496, %v2505
      %v2534 = vmul.f32 %v2497, %v2505
      %v2535 = vmul.f32 %v2498, %v2505
      %v2536 = vmul.f32 %v2499, %v2505
      %v2537 = vmul.f32 %v2500, %v2505
      %v2538 = vld [vmem:[#allocation3 + $0x8] sm:$0xff]
      %v2539 = vld [vmem:[#allocation3 + $0x10] sm:$0xff]
      %v2540 = vld [vmem:[#allocation3 + $0x28] sm:$0xff]
      %v2541 = vld [vmem:[#allocation3 + $0x30] sm:$0xff]
      %v2542 = vld [vmem:[#allocation3 + $0x48] sm:$0xff]
      %v2543 = vld [vmem:[#allocation3 + $0x50] sm:$0xff]
      %v2544 = vld [vmem:[#allocation3 + $0x68] sm:$0xff]
      %v2545 = vld [vmem:[#allocation3 + $0x70] sm:$0xff]
      %v2546 = vld [vmem:[#allocation3 + $0x88] sm:$0xff]
      %v2547 = vld [vmem:[#allocation3 + $0x90] sm:$0xff]
      %v2548 = vld [vmem:[#allocation3 + $0xa8] sm:$0xff]
      %v2549 = vld [vmem:[#allocation3 + $0xb0] sm:$0xff]
      %v2550 = vld [vmem:[#allocation3 + $0xc8] sm:$0xff]
      %v2551 = vld [vmem:[#allocation3 + $0xd0] sm:$0xff]
      %v2552 = vld [vmem:[#allocation3 + $0xe8] sm:$0xff]
      %v2553 = vld [vmem:[#allocation3 + $0xf0] sm:$0xff]
      %v2554 = vld [vmem:[#allocation3 + $0x108] sm:$0xff]
      %v2555 = vld [vmem:[#allocation3 + $0x110] sm:$0xff]
      %v2556 = vld [vmem:[#allocation3 + $0x128] sm:$0xff]
      %v2557 = vld [vmem:[#allocation3 + $0x130] sm:$0xff]
      %v2558 = vld [vmem:[#allocation3 + $0x148] sm:$0xff]
      %v2559 = vld [vmem:[#allocation3 + $0x150] sm:$0xff]
      %v2560 = vld [vmem:[#allocation3 + $0x168] sm:$0xff]
      %v2561 = vld [vmem:[#allocation3 + $0x170] sm:$0xff]
      %v2562 = vld [vmem:[#allocation3 + $0x188] sm:$0xff]
      %v2563 = vld [vmem:[#allocation3 + $0x190] sm:$0xff]
      %v2564 = vld [vmem:[#allocation3 + $0x1a8] sm:$0xff]
      %v2565 = vld [vmem:[#allocation3 + $0x1b0] sm:$0xff]
      %v2566 = vld [vmem:[#allocation3 + $0x1c8] sm:$0xff]
      %v2567 = vld [vmem:[#allocation3 + $0x1d0] sm:$0xff]
      %v2568 = vld [vmem:[#allocation3 + $0x1e8] sm:$0xff]
      %v2569 = vld [vmem:[#allocation3 + $0x1f0] sm:$0xff]
      %v2570 = vld [vmem:[%s11 + $0x1] sm:$0x1]
      %v2571 = vlaneseq
      %v2572 = vshrl.u32 %v2571, 7
      %v2573 = vsub.s32 0, %v2572
      %v2574 = vrot.slane %v2570, %v2573
      %v2575 = vmul.f32 %v2538, %v2574
      %v2576 = vmul.f32 %v2539, %v2574
      %v2577 = vmul.f32 %v2540, %v2574
      %v2578 = vmul.f32 %v2541, %v2574
      %v2579 = vmul.f32 %v2542, %v2574
      %v2580 = vmul.f32 %v2543, %v2574
      %v2581 = vmul.f32 %v2544, %v2574
      %v2582 = vmul.f32 %v2545, %v2574
      %v2583 = vmul.f32 %v2546, %v2574
      %v2584 = vmul.f32 %v2547, %v2574
      %v2585 = vmul.f32 %v2548, %v2574
      %v2586 = vmul.f32 %v2549, %v2574
      %v2587 = vmul.f32 %v2550, %v2574
      %v2588 = vmul.f32 %v2551, %v2574
      %v2589 = vmul.f32 %v2552, %v2574
      %v2590 = vmul.f32 %v2553, %v2574
      %v2591 = vmul.f32 %v2554, %v2574
      %v2592 = vmul.f32 %v2555, %v2574
      %v2593 = vmul.f32 %v2556, %v2574
      %v2594 = vmul.f32 %v2557, %v2574
      %v2595 = vmul.f32 %v2558, %v2574
      %v2596 = vmul.f32 %v2559, %v2574
      %v2597 = vmul.f32 %v2560, %v2574
      %v2598 = vmul.f32 %v2561, %v2574
      %v2599 = vmul.f32 %v2562, %v2574
      %v2600 = vmul.f32 %v2563, %v2574
      %v2601 = vmul.f32 %v2564, %v2574
      %v2602 = vmul.f32 %v2565, %v2574
      %v2603 = vmul.f32 %v2566, %v2574
      %v2604 = vmul.f32 %v2567, %v2574
      %v2605 = vmul.f32 %v2568, %v2574
      %v2606 = vmul.f32 %v2569, %v2574
      %v2607 = vadd.f32 %v2506, %v2575
      %v2608 = vadd.f32 %v2507, %v2576
      %v2609 = vadd.f32 %v2508, %v2577
      %v2610 = vadd.f32 %v2509, %v2578
      %v2611 = vadd.f32 %v2510, %v2579
      %v2612 = vadd.f32 %v2511, %v2580
      %v2613 = vadd.f32 %v2512, %v2581
      %v2614 = vadd.f32 %v2513, %v2582
      %v2615 = vadd.f32 %v2514, %v2583
      %v2616 = vadd.f32 %v2515, %v2584
      %v2617 = vadd.f32 %v2516, %v2585
      %v2618 = vadd.f32 %v2517, %v2586
      %v2619 = vadd.f32 %v2518, %v2587
      %v2620 = vadd.f32 %v2519, %v2588
      %v2621 = vadd.f32 %v2520, %v2589
      %v2622 = vadd.f32 %v2521, %v2590
      %v2623 = vadd.f32 %v2522, %v2591
      %v2624 = vadd.f32 %v2523, %v2592
      %v2625 = vadd.f32 %v2524, %v2593
      %v2626 = vadd.f32 %v2525, %v2594
      %v2627 = vadd.f32 %v2526, %v2595
      %v2628 = vadd.f32 %v2527, %v2596
      %v2629 = vadd.f32 %v2528, %v2597
      %v2630 = vadd.f32 %v2529, %v2598
      %v2631 = vadd.f32 %v2530, %v2599
      %v2632 = vadd.f32 %v2531, %v2600
      %v2633 = vadd.f32 %v2532, %v2601
      %v2634 = vadd.f32 %v2533, %v2602
      %v2635 = vadd.f32 %v2534, %v2603
      %v2636 = vadd.f32 %v2535, %v2604
      %v2637 = vadd.f32 %v2536, %v2605
      %v2638 = vadd.f32 %v2537, %v2606
      %v2639 = vld [vmem:[#allocation3 + $0x9] sm:$0xff]
      %v2640 = vld [vmem:[#allocation3 + $0x11] sm:$0xff]
      %v2641 = vld [vmem:[#allocation3 + $0x29] sm:$0xff]
      %v2642 = vld [vmem:[#allocation3 + $0x31] sm:$0xff]
      %v2643 = vld [vmem:[#allocation3 + $0x49] sm:$0xff]
      %v2644 = vld [vmem:[#allocation3 + $0x51] sm:$0xff]
      %v2645 = vld [vmem:[#allocation3 + $0x69] sm:$0xff]
      %v2646 = vld [vmem:[#allocation3 + $0x71] sm:$0xff]
      %v2647 = vld [vmem:[#allocation3 + $0x89] sm:$0xff]
      %v2648 = vld [vmem:[#allocation3 + $0x91] sm:$0xff]
      %v2649 = vld [vmem:[#allocation3 + $0xa9] sm:$0xff]
      %v2650 = vld [vmem:[#allocation3 + $0xb1] sm:$0xff]
      %v2651 = vld [vmem:[#allocation3 + $0xc9] sm:$0xff]
      %v2652 = vld [vmem:[#allocation3 + $0xd1] sm:$0xff]
      %v2653 = vld [vmem:[#allocation3 + $0xe9] sm:$0xff]
      %v2654 = vld [vmem:[#allocation3 + $0xf1] sm:$0xff]
      %v2655 = vld [vmem:[#allocation3 + $0x109] sm:$0xff]
      %v2656 = vld [vmem:[#allocation3 + $0x111] sm:$0xff]
      %v2657 = vld [vmem:[#allocation3 + $0x129] sm:$0xff]
      %v2658 = vld [vmem:[#allocation3 + $0x131] sm:$0xff]
      %v2659 = vld [vmem:[#allocation3 + $0x149] sm:$0xff]
      %v2660 = vld [vmem:[#allocation3 + $0x151] sm:$0xff]
      %v2661 = vld [vmem:[#allocation3 + $0x169] sm:$0xff]
      %v2662 = vld [vmem:[#allocation3 + $0x171] sm:$0xff]
      %v2663 = vld [vmem:[#allocation3 + $0x189] sm:$0xff]
      %v2664 = vld [vmem:[#allocation3 + $0x191] sm:$0xff]
      %v2665 = vld [vmem:[#allocation3 + $0x1a9] sm:$0xff]
      %v2666 = vld [vmem:[#allocation3 + $0x1b1] sm:$0xff]
      %v2667 = vld [vmem:[#allocation3 + $0x1c9] sm:$0xff]
      %v2668 = vld [vmem:[#allocation3 + $0x1d1] sm:$0xff]
      %v2669 = vld [vmem:[#allocation3 + $0x1e9] sm:$0xff]
      %v2670 = vld [vmem:[#allocation3 + $0x1f1] sm:$0xff]
      %v2671 = vld [vmem:[%s11 + $0x2] sm:$0x1]
      %v2672 = vlaneseq
      %v2673 = vshrl.u32 %v2672, 7
      %v2674 = vsub.s32 0, %v2673
      %v2675 = vrot.slane %v2671, %v2674
      %v2676 = vmul.f32 %v2639, %v2675
      %v2677 = vmul.f32 %v2640, %v2675
      %v2678 = vmul.f32 %v2641, %v2675
      %v2679 = vmul.f32 %v2642, %v2675
      %v2680 = vmul.f32 %v2643, %v2675
      %v2681 = vmul.f32 %v2644, %v2675
      %v2682 = vmul.f32 %v2645, %v2675
      %v2683 = vmul.f32 %v2646, %v2675
      %v2684 = vmul.f32 %v2647, %v2675
      %v2685 = vmul.f32 %v2648, %v2675
      %v2686 = vmul.f32 %v2649, %v2675
      %v2687 = vmul.f32 %v2650, %v2675
      %v2688 = vmul.f32 %v2651, %v2675
      %v2689 = vmul.f32 %v2652, %v2675
      %v2690 = vmul.f32 %v2653, %v2675
      %v2691 = vmul.f32 %v2654, %v2675
      %v2692 = vmul.f32 %v2655, %v2675
      %v2693 = vmul.f32 %v2656, %v2675
      %v2694 = vmul.f32 %v2657, %v2675
      %v2695 = vmul.f32 %v2658, %v2675
      %v2696 = vmul.f32 %v2659, %v2675
      %v2697 = vmul.f32 %v2660, %v2675
      %v2698 = vmul.f32 %v2661, %v2675
      %v2699 = vmul.f32 %v2662, %v2675
      %v2700 = vmul.f32 %v2663, %v2675
      %v2701 = vmul.f32 %v2664, %v2675
      %v2702 = vmul.f32 %v2665, %v2675
      %v2703 = vmul.f32 %v2666, %v2675
      %v2704 = vmul.f32 %v2667, %v2675
      %v2705 = vmul.f32 %v2668, %v2675
      %v2706 = vmul.f32 %v2669, %v2675
      %v2707 = vmul.f32 %v2670, %v2675
      %v2708 = vadd.f32 %v2607, %v2676
      %v2709 = vadd.f32 %v2608, %v2677
      %v2710 = vadd.f32 %v2609, %v2678
      %v2711 = vadd.f32 %v2610, %v2679
      %v2712 = vadd.f32 %v2611, %v2680
      %v2713 = vadd.f32 %v2612, %v2681
      %v2714 = vadd.f32 %v2613, %v2682
      %v2715 = vadd.f32 %v2614, %v2683
      %v2716 = vadd.f32 %v2615, %v2684
      %v2717 = vadd.f32 %v2616, %v2685
      %v2718 = vadd.f32 %v2617, %v2686
      %v2719 = vadd.f32 %v2618, %v2687
      %v2720 = vadd.f32 %v2619, %v2688
      %v2721 = vadd.f32 %v2620, %v2689
      %v2722 = vadd.f32 %v2621, %v2690
      %v2723 = vadd.f32 %v2622, %v2691
      %v2724 = vadd.f32 %v2623, %v2692
      %v2725 = vadd.f32 %v2624, %v2693
      %v2726 = vadd.f32 %v2625, %v2694
      %v2727 = vadd.f32 %v2626, %v2695
      %v2728 = vadd.f32 %v2627, %v2696
      %v2729 = vadd.f32 %v2628, %v2697
      %v2730 = vadd.f32 %v2629, %v2698
      %v2731 = vadd.f32 %v2630, %v2699
      %v2732 = vadd.f32 %v2631, %v2700
      %v2733 = vadd.f32 %v2632, %v2701
      %v2734 = vadd.f32 %v2633, %v2702
      %v2735 = vadd.f32 %v2634, %v2703
      %v2736 = vadd.f32 %v2635, %v2704
      %v2737 = vadd.f32 %v2636, %v2705
      %v2738 = vadd.f32 %v2637, %v2706
      %v2739 = vadd.f32 %v2638, %v2707
      %v2740 = vld [vmem:[%s12] sm:$0x1]
      %v2742 = vlaneseq
      %v2743 = vshrl.u32 %v2742, 7
      %v2744 = vsub.s32 0, %v2743
      %v2745 = vrot.slane %v2740, %v2744
      %v2747 = vadd.f32 %v2708, %v2745
      %v2748 = vadd.f32 %v2709, %v2745
      %v2749 = vadd.f32 %v2710, %v2745
      %v2750 = vadd.f32 %v2711, %v2745
      %v2751 = vadd.f32 %v2712, %v2745
      %v2752 = vadd.f32 %v2713, %v2745
      %v2753 = vadd.f32 %v2714, %v2745
      %v2754 = vadd.f32 %v2715, %v2745
      %v2755 = vadd.f32 %v2716, %v2745
      %v2756 = vadd.f32 %v2717, %v2745
      %v2757 = vadd.f32 %v2718, %v2745
      %v2758 = vadd.f32 %v2719, %v2745
      %v2759 = vadd.f32 %v2720, %v2745
      %v2760 = vadd.f32 %v2721, %v2745
      %v2761 = vadd.f32 %v2722, %v2745
      %v2762 = vadd.f32 %v2723, %v2745
      %v2763 = vadd.f32 %v2724, %v2745
      %v2764 = vadd.f32 %v2725, %v2745
      %v2765 = vadd.f32 %v2726, %v2745
      %v2766 = vadd.f32 %v2727, %v2745
      %v2767 = vadd.f32 %v2728, %v2745
      %v2768 = vadd.f32 %v2729, %v2745
      %v2769 = vadd.f32 %v2730, %v2745
      %v2770 = vadd.f32 %v2731, %v2745
      %v2771 = vadd.f32 %v2732, %v2745
      %v2772 = vadd.f32 %v2733, %v2745
      %v2773 = vadd.f32 %v2734, %v2745
      %v2774 = vadd.f32 %v2735, %v2745
      %v2775 = vadd.f32 %v2736, %v2745
      %v2776 = vadd.f32 %v2737, %v2745
      %v2777 = vadd.f32 %v2738, %v2745
      %v2778 = vadd.f32 %v2739, %v2745
      %v2779 = vmax.f32 %v2747, 0.0
      %v2780 = vmax.f32 %v2748, 0.0
      %v2781 = vmax.f32 %v2749, 0.0
      %v2782 = vmax.f32 %v2750, 0.0
      %v2783 = vmax.f32 %v2751, 0.0
      %v2784 = vmax.f32 %v2752, 0.0
      %v2785 = vmax.f32 %v2753, 0.0
      %v2786 = vmax.f32 %v2754, 0.0
      %v2787 = vmax.f32 %v2755, 0.0
      %v2788 = vmax.f32 %v2756, 0.0
      %v2789 = vmax.f32 %v2757, 0.0
      %v2790 = vmax.f32 %v2758, 0.0
      %v2791 = vmax.f32 %v2759, 0.0
      %v2792 = vmax.f32 %v2760, 0.0
      %v2793 = vmax.f32 %v2761, 0.0
      %v2794 = vmax.f32 %v2762, 0.0
      %v2795 = vmax.f32 %v2763, 0.0
      %v2796 = vmax.f32 %v2764, 0.0
      %v2797 = vmax.f32 %v2765, 0.0
      %v2798 = vmax.f32 %v2766, 0.0
      %v2799 = vmax.f32 %v2767, 0.0
      %v2800 = vmax.f32 %v2768, 0.0
      %v2801 = vmax.f32 %v2769, 0.0
      %v2802 = vmax.f32 %v2770, 0.0
      %v2803 = vmax.f32 %v2771, 0.0
      %v2804 = vmax.f32 %v2772, 0.0
      %v2805 = vmax.f32 %v2773, 0.0
      %v2806 = vmax.f32 %v2774, 0.0
      %v2807 = vmax.f32 %v2775, 0.0
      %v2808 = vmax.f32 %v2776, 0.0
      %v2809 = vmax.f32 %v2777, 0.0
      %v2810 = vmax.f32 %v2778, 0.0
      %v2811 = vadd.f32 %v2063, %v2779
      %v2812 = vadd.f32 %v2064, %v2780
      %v2813 = vadd.f32 %v2065, %v2781
      %v2814 = vadd.f32 %v2066, %v2782
      %v2815 = vadd.f32 %v2067, %v2783
      %v2816 = vadd.f32 %v2068, %v2784
      %v2817 = vadd.f32 %v2069, %v2785
      %v2818 = vadd.f32 %v2070, %v2786
      %v2819 = vadd.f32 %v2071, %v2787
      %v2820 = vadd.f32 %v2072, %v2788
      %v2821 = vadd.f32 %v2073, %v2789
      %v2822 = vadd.f32 %v2074, %v2790
      %v2823 = vadd.f32 %v2075, %v2791
      %v2824 = vadd.f32 %v2076, %v2792
      %v2825 = vadd.f32 %v2077, %v2793
      %v2826 = vadd.f32 %v2078, %v2794
      %v2827 = vadd.f32 %v2079, %v2795
      %v2828 = vadd.f32 %v2080, %v2796
      %v2829 = vadd.f32 %v2081, %v2797
      %v2830 = vadd.f32 %v2082, %v2798
      %v2831 = vadd.f32 %v2083, %v2799
      %v2832 = vadd.f32 %v2084, %v2800
      %v2833 = vadd.f32 %v2085, %v2801
      %v2834 = vadd.f32 %v2086, %v2802
      %v2835 = vadd.f32 %v2087, %v2803
      %v2836 = vadd.f32 %v2088, %v2804
      %v2837 = vadd.f32 %v2089, %v2805
      %v2838 = vadd.f32 %v2090, %v2806
      %v2839 = vadd.f32 %v2091, %v2807
      %v2840 = vadd.f32 %v2092, %v2808
      %v2841 = vadd.f32 %v2093, %v2809
      %v2842 = vadd.f32 %v2094, %v2810
      %v2843 = vld [vmem:[#allocation2] sm:$0xff]
      %v2844 = vld [vmem:[#allocation2 + $0x8] sm:$0xff]
      %v2845 = vld [vmem:[#allocation2 + $0x10] sm:$0xff]
      %v2846 = vld [vmem:[#allocation2 + $0x18] sm:$0xff]
      %v2847 = vld [vmem:[#allocation2 + $0x20] sm:$0xff]
      %v2848 = vld [vmem:[#allocation2 + $0x28] sm:$0xff]
      %v2849 = vld [vmem:[#allocation2 + $0x30] sm:$0xff]
      %v2850 = vld [vmem:[#allocation2 + $0x38] sm:$0xff]
      %v2851 = vld [vmem:[#allocation2 + $0x40] sm:$0xff]
      %v2852 = vld [vmem:[#allocation2 + $0x48] sm:$0xff]
      %v2853 = vld [vmem:[#allocation2 + $0x50] sm:$0xff]
      %v2854 = vld [vmem:[#allocation2 + $0x58] sm:$0xff]
      %v2855 = vld [vmem:[#allocation2 + $0x60] sm:$0xff]
      %v2856 = vld [vmem:[#allocation2 + $0x68] sm:$0xff]
      %v2857 = vld [vmem:[#allocation2 + $0x70] sm:$0xff]
      %v2858 = vld [vmem:[#allocation2 + $0x78] sm:$0xff]
      %v2859 = vld [vmem:[#allocation2 + $0x80] sm:$0xff]
      %v2860 = vld [vmem:[#allocation2 + $0x88] sm:$0xff]
      %v2861 = vld [vmem:[#allocation2 + $0x90] sm:$0xff]
      %v2862 = vld [vmem:[#allocation2 + $0x98] sm:$0xff]
      %v2863 = vld [vmem:[#allocation2 + $0xa0] sm:$0xff]
      %v2864 = vld [vmem:[#allocation2 + $0xa8] sm:$0xff]
      %v2865 = vld [vmem:[#allocation2 + $0xb0] sm:$0xff]
      %v2866 = vld [vmem:[#allocation2 + $0xb8] sm:$0xff]
      %v2867 = vld [vmem:[#allocation2 + $0xc0] sm:$0xff]
      %v2868 = vld [vmem:[#allocation2 + $0xc8] sm:$0xff]
      %v2869 = vld [vmem:[#allocation2 + $0xd0] sm:$0xff]
      %v2870 = vld [vmem:[#allocation2 + $0xd8] sm:$0xff]
      %v2871 = vld [vmem:[#allocation2 + $0xe0] sm:$0xff]
      %v2872 = vld [vmem:[#allocation2 + $0xe8] sm:$0xff]
      %v2873 = vld [vmem:[#allocation2 + $0xf0] sm:$0xff]
      %v2874 = vld [vmem:[#allocation2 + $0xf8] sm:$0xff]
      %v2875 = vld [vmem:[%s7] sm:$0x1]
      %v2876 = vlaneseq
      %v2877 = vshrl.u32 %v2876, 7
      %v2878 = vsub.s32 0, %v2877
      %v2879 = vrot.slane %v2875, %v2878
      %v2880 = vmul.f32 %v2843, %v2879
      %v2881 = vmul.f32 %v2844, %v2879
      %v2882 = vmul.f32 %v2845, %v2879
      %v2883 = vmul.f32 %v2846, %v2879
      %v2884 = vmul.f32 %v2847, %v2879
      %v2885 = vmul.f32 %v2848, %v2879
      %v2886 = vmul.f32 %v2849, %v2879
      %v2887 = vmul.f32 %v2850, %v2879
      %v2888 = vmul.f32 %v2851, %v2879
      %v2889 = vmul.f32 %v2852, %v2879
      %v2890 = vmul.f32 %v2853, %v2879
      %v2891 = vmul.f32 %v2854, %v2879
      %v2892 = vmul.f32 %v2855, %v2879
      %v2893 = vmul.f32 %v2856, %v2879
      %v2894 = vmul.f32 %v2857, %v2879
      %v2895 = vmul.f32 %v2858, %v2879
      %v2896 = vmul.f32 %v2859, %v2879
      %v2897 = vmul.f32 %v2860, %v2879
      %v2898 = vmul.f32 %v2861, %v2879
      %v2899 = vmul.f32 %v2862, %v2879
      %v2900 = vmul.f32 %v2863, %v2879
      %v2901 = vmul.f32 %v2864, %v2879
      %v2902 = vmul.f32 %v2865, %v2879
      %v2903 = vmul.f32 %v2866, %v2879
      %v2904 = vmul.f32 %v2867, %v2879
      %v2905 = vmul.f32 %v2868, %v2879
      %v2906 = vmul.f32 %v2869, %v2879
      %v2907 = vmul.f32 %v2870, %v2879
      %v2908 = vmul.f32 %v2871, %v2879
      %v2909 = vmul.f32 %v2872, %v2879
      %v2910 = vmul.f32 %v2873, %v2879
      %v2911 = vmul.f32 %v2874, %v2879
      %s2912 = scalar_lea.vmem [#allocation2], 16
      %v2913 = vld [vmem:[%s2912] sm:$0xff]
      %v2914 = vld [vmem:[%s2912 + $0x8] sm:$0xff]
      %v2915 = vld [vmem:[%s2912 + $0x10] sm:$0xff]
      %v2916 = vld [vmem:[%s2912 + $0x18] sm:$0xff]
      %v2917 = vld [vmem:[%s2912 + $0x20] sm:$0xff]
      %v2918 = vld [vmem:[%s2912 + $0x28] sm:$0xff]
      %v2919 = vld [vmem:[%s2912 + $0x30] sm:$0xff]
      %v2920 = vld [vmem:[%s2912 + $0x38] sm:$0xff]
      %v2921 = vld [vmem:[%s2912 + $0x40] sm:$0xff]
      %v2922 = vld [vmem:[%s2912 + $0x48] sm:$0xff]
      %v2923 = vld [vmem:[%s2912 + $0x50] sm:$0xff]
      %v2924 = vld [vmem:[%s2912 + $0x58] sm:$0xff]
      %v2925 = vld [vmem:[%s2912 + $0x60] sm:$0xff]
      %v2926 = vld [vmem:[%s2912 + $0x68] sm:$0xff]
      %v2927 = vld [vmem:[%s2912 + $0x70] sm:$0xff]
      %v2928 = vld [vmem:[%s2912 + $0x78] sm:$0xff]
      %v2929 = vld [vmem:[%s2912 + $0x80] sm:$0xff]
      %v2930 = vld [vmem:[%s2912 + $0x88] sm:$0xff]
      %v2931 = vld [vmem:[%s2912 + $0x90] sm:$0xff]
      %v2932 = vld [vmem:[%s2912 + $0x98] sm:$0xff]
      %v2933 = vld [vmem:[%s2912 + $0xa0] sm:$0xff]
      %v2934 = vld [vmem:[%s2912 + $0xa8] sm:$0xff]
      %v2935 = vld [vmem:[%s2912 + $0xb0] sm:$0xff]
      %v2936 = vld [vmem:[%s2912 + $0xb8] sm:$0xff]
      %v2937 = vld [vmem:[%s2912 + $0xc0] sm:$0xff]
      %v2938 = vld [vmem:[%s2912 + $0xc8] sm:$0xff]
      %v2939 = vld [vmem:[%s2912 + $0xd0] sm:$0xff]
      %v2940 = vld [vmem:[%s2912 + $0xd8] sm:$0xff]
      %v2941 = vld [vmem:[%s2912 + $0xe0] sm:$0xff]
      %v2942 = vld [vmem:[%s2912 + $0xe8] sm:$0xff]
      %v2943 = vld [vmem:[%s2912 + $0xf0] sm:$0xff]
      %v2944 = vld [vmem:[%s2912 + $0xf8] sm:$0xff]
      %v2945 = vld [vmem:[%s7 + $0x1] sm:$0x1]
      %v2946 = vlaneseq
      %v2947 = vshrl.u32 %v2946, 7
      %v2948 = vsub.s32 0, %v2947
      %v2949 = vrot.slane %v2945, %v2948
      %v2950 = vmul.f32 %v2913, %v2949
      %v2951 = vmul.f32 %v2914, %v2949
      %v2952 = vmul.f32 %v2915, %v2949
      %v2953 = vmul.f32 %v2916, %v2949
      %v2954 = vmul.f32 %v2917, %v2949
      %v2955 = vmul.f32 %v2918, %v2949
      %v2956 = vmul.f32 %v2919, %v2949
      %v2957 = vmul.f32 %v2920, %v2949
      %v2958 = vmul.f32 %v2921, %v2949
      %v2959 = vmul.f32 %v2922, %v2949
      %v2960 = vmul.f32 %v2923, %v2949
      %v2961 = vmul.f32 %v2924, %v2949
      %v2962 = vmul.f32 %v2925, %v2949
      %v2963 = vmul.f32 %v2926, %v2949
      %v2964 = vmul.f32 %v2927, %v2949
      %v2965 = vmul.f32 %v2928, %v2949
      %v2966 = vmul.f32 %v2929, %v2949
      %v2967 = vmul.f32 %v2930, %v2949
      %v2968 = vmul.f32 %v2931, %v2949
      %v2969 = vmul.f32 %v2932, %v2949
      %v2970 = vmul.f32 %v2933, %v2949
      %v2971 = vmul.f32 %v2934, %v2949
      %v2972 = vmul.f32 %v2935, %v2949
      %v2973 = vmul.f32 %v2936, %v2949
      %v2974 = vmul.f32 %v2937, %v2949
      %v2975 = vmul.f32 %v2938, %v2949
      %v2976 = vmul.f32 %v2939, %v2949
      %v2977 = vmul.f32 %v2940, %v2949
      %v2978 = vmul.f32 %v2941, %v2949
      %v2979 = vmul.f32 %v2942, %v2949
      %v2980 = vmul.f32 %v2943, %v2949
      %v2981 = vmul.f32 %v2944, %v2949
      %v2982 = vadd.f32 %v2880, %v2950
      %v2983 = vadd.f32 %v2881, %v2951
      %v2984 = vadd.f32 %v2882, %v2952
      %v2985 = vadd.f32 %v2883, %v2953
      %v2986 = vadd.f32 %v2884, %v2954
      %v2987 = vadd.f32 %v2885, %v2955
      %v2988 = vadd.f32 %v2886, %v2956
      %v2989 = vadd.f32 %v2887, %v2957
      %v2990 = vadd.f32 %v2888, %v2958
      %v2991 = vadd.f32 %v2889, %v2959
      %v2992 = vadd.f32 %v2890, %v2960
      %v2993 = vadd.f32 %v2891, %v2961
      %v2994 = vadd.f32 %v2892, %v2962
      %v2995 = vadd.f32 %v2893, %v2963
      %v2996 = vadd.f32 %v2894, %v2964
      %v2997 = vadd.f32 %v2895, %v2965
      %v2998 = vadd.f32 %v2896, %v2966
      %v2999 = vadd.f32 %v2897, %v2967
      %v3000 = vadd.f32 %v2898, %v2968
      %v3001 = vadd.f32 %v2899, %v2969
      %v3002 = vadd.f32 %v2900, %v2970
      %v3003 = vadd.f32 %v2901, %v2971
      %v3004 = vadd.f32 %v2902, %v2972
      %v3005 = vadd.f32 %v2903, %v2973
      %v3006 = vadd.f32 %v2904, %v2974
      %v3007 = vadd.f32 %v2905, %v2975
      %v3008 = vadd.f32 %v2906, %v2976
      %v3009 = vadd.f32 %v2907, %v2977
      %v3010 = vadd.f32 %v2908, %v2978
      %v3011 = vadd.f32 %v2909, %v2979
      %v3012 = vadd.f32 %v2910, %v2980
      %v3013 = vadd.f32 %v2911, %v2981
      %s3014 = scalar_lea.vmem [#allocation2], 32
      %v3015 = vld [vmem:[%s3014] sm:$0xff]
      %v3016 = vld [vmem:[%s3014 + $0x8] sm:$0xff]
      %v3017 = vld [vmem:[%s3014 + $0x10] sm:$0xff]
      %v3018 = vld [vmem:[%s3014 + $0x18] sm:$0xff]
      %v3019 = vld [vmem:[%s3014 + $0x20] sm:$0xff]
      %v3020 = vld [vmem:[%s3014 + $0x28] sm:$0xff]
      %v3021 = vld [vmem:[%s3014 + $0x30] sm:$0xff]
      %v3022 = vld [vmem:[%s3014 + $0x38] sm:$0xff]
      %v3023 = vld [vmem:[%s3014 + $0x40] sm:$0xff]
      %v3024 = vld [vmem:[%s3014 + $0x48] sm:$0xff]
      %v3025 = vld [vmem:[%s3014 + $0x50] sm:$0xff]
      %v3026 = vld [vmem:[%s3014 + $0x58] sm:$0xff]
      %v3027 = vld [vmem:[%s3014 + $0x60] sm:$0xff]
      %v3028 = vld [vmem:[%s3014 + $0x68] sm:$0xff]
      %v3029 = vld [vmem:[%s3014 + $0x70] sm:$0xff]
      %v3030 = vld [vmem:[%s3014 + $0x78] sm:$0xff]
      %v3031 = vld [vmem:[%s3014 + $0x80] sm:$0xff]
      %v3032 = vld [vmem:[%s3014 + $0x88] sm:$0xff]
      %v3033 = vld [vmem:[%s3014 + $0x90] sm:$0xff]
      %v3034 = vld [vmem:[%s3014 + $0x98] sm:$0xff]
      %v3035 = vld [vmem:[%s3014 + $0xa0] sm:$0xff]
      %v3036 = vld [vmem:[%s3014 + $0xa8] sm:$0xff]
      %v3037 = vld [vmem:[%s3014 + $0xb0] sm:$0xff]
      %v3038 = vld [vmem:[%s3014 + $0xb8] sm:$0xff]
      %v3039 = vld [vmem:[%s3014 + $0xc0] sm:$0xff]
      %v3040 = vld [vmem:[%s3014 + $0xc8] sm:$0xff]
      %v3041 = vld [vmem:[%s3014 + $0xd0] sm:$0xff]
      %v3042 = vld [vmem:[%s3014 + $0xd8] sm:$0xff]
      %v3043 = vld [vmem:[%s3014 + $0xe0] sm:$0xff]
      %v3044 = vld [vmem:[%s3014 + $0xe8] sm:$0xff]
      %v3045 = vld [vmem:[%s3014 + $0xf0] sm:$0xff]
      %v3046 = vld [vmem:[%s3014 + $0xf8] sm:$0xff]
      %v3047 = vld [vmem:[%s7 + $0x2] sm:$0x1]
      %v3048 = vlaneseq
      %v3049 = vshrl.u32 %v3048, 7
      %v3050 = vsub.s32 0, %v3049
      %v3051 = vrot.slane %v3047, %v3050
      %v3052 = vmul.f32 %v3015, %v3051
      %v3053 = vmul.f32 %v3016, %v3051
      %v3054 = vmul.f32 %v3017, %v3051
      %v3055 = vmul.f32 %v3018, %v3051
      %v3056 = vmul.f32 %v3019, %v3051
      %v3057 = vmul.f32 %v3020, %v3051
      %v3058 = vmul.f32 %v3021, %v3051
      %v3059 = vmul.f32 %v3022, %v3051
      %v3060 = vmul.f32 %v3023, %v3051
      %v3061 = vmul.f32 %v3024, %v3051
      %v3062 = vmul.f32 %v3025, %v3051
      %v3063 = vmul.f32 %v3026, %v3051
      %v3064 = vmul.f32 %v3027, %v3051
      %v3065 = vmul.f32 %v3028, %v3051
      %v3066 = vmul.f32 %v3029, %v3051
      %v3067 = vmul.f32 %v3030, %v3051
      %v3068 = vmul.f32 %v3031, %v3051
      %v3069 = vmul.f32 %v3032, %v3051
      %v3070 = vmul.f32 %v3033, %v3051
      %v3071 = vmul.f32 %v3034, %v3051
      %v3072 = vmul.f32 %v3035, %v3051
      %v3073 = vmul.f32 %v3036, %v3051
      %v3074 = vmul.f32 %v3037, %v3051
      %v3075 = vmul.f32 %v3038, %v3051
      %v3076 = vmul.f32 %v3039, %v3051
      %v3077 = vmul.f32 %v3040, %v3051
      %v3078 = vmul.f32 %v3041, %v3051
      %v3079 = vmul.f32 %v3042, %v3051
      %v3080 = vmul.f32 %v3043, %v3051
      %v3081 = vmul.f32 %v3044, %v3051
      %v3082 = vmul.f32 %v3045, %v3051
      %v3083 = vmul.f32 %v3046, %v3051
      %v3084 = vadd.f32 %v2982, %v3052
      %v3085 = vadd.f32 %v2983, %v3053
      %v3086 = vadd.f32 %v2984, %v3054
      %v3087 = vadd.f32 %v2985, %v3055
      %v3088 = vadd.f32 %v2986, %v3056
      %v3089 = vadd.f32 %v2987, %v3057
      %v3090 = vadd.f32 %v2988, %v3058
      %v3091 = vadd.f32 %v2989, %v3059
      %v3092 = vadd.f32 %v2990, %v3060
      %v3093 = vadd.f32 %v2991, %v3061
      %v3094 = vadd.f32 %v2992, %v3062
      %v3095 = vadd.f32 %v2993, %v3063
      %v3096 = vadd.f32 %v2994, %v3064
      %v3097 = vadd.f32 %v2995, %v3065
      %v3098 = vadd.f32 %v2996, %v3066
      %v3099 = vadd.f32 %v2997, %v3067
      %v3100 = vadd.f32 %v2998, %v3068
      %v3101 = vadd.f32 %v2999, %v3069
      %v3102 = vadd.f32 %v3000, %v3070
      %v3103 = vadd.f32 %v3001, %v3071
      %v3104 = vadd.f32 %v3002, %v3072
      %v3105 = vadd.f32 %v3003, %v3073
      %v3106 = vadd.f32 %v3004, %v3074
      %v3107 = vadd.f32 %v3005, %v3075
      %v3108 = vadd.f32 %v3006, %v3076
      %v3109 = vadd.f32 %v3007, %v3077
      %v3110 = vadd.f32 %v3008, %v3078
      %v3111 = vadd.f32 %v3009, %v3079
      %v3112 = vadd.f32 %v3010, %v3080
      %v3113 = vadd.f32 %v3011, %v3081
      %v3114 = vadd.f32 %v3012, %v3082
      %v3115 = vadd.f32 %v3013, %v3083
      %v3116 = vld [vmem:[%s971] sm:$0xff]
      %v3117 = vld [vmem:[%s971 + $0x8] sm:$0xff]
      %v3118 = vld [vmem:[%s971 + $0x10] sm:$0xff]
      %v3119 = vld [vmem:[%s971 + $0x18] sm:$0xff]
      %v3120 = vld [vmem:[%s971 + $0x20] sm:$0xff]
      %v3121 = vld [vmem:[%s971 + $0x28] sm:$0xff]
      %v3122 = vld [vmem:[%s971 + $0x30] sm:$0xff]
      %v3123 = vld [vmem:[%s971 + $0x38] sm:$0xff]
      %v3124 = vld [vmem:[%s971 + $0x40] sm:$0xff]
      %v3125 = vld [vmem:[%s971 + $0x48] sm:$0xff]
      %v3126 = vld [vmem:[%s971 + $0x50] sm:$0xff]
      %v3127 = vld [vmem:[%s971 + $0x58] sm:$0xff]
      %v3128 = vld [vmem:[%s971 + $0x60] sm:$0xff]
      %v3129 = vld [vmem:[%s971 + $0x68] sm:$0xff]
      %v3130 = vld [vmem:[%s971 + $0x70] sm:$0xff]
      %v3131 = vld [vmem:[%s971 + $0x78] sm:$0xff]
      %v3132 = vld [vmem:[%s971 + $0x80] sm:$0xff]
      %v3133 = vld [vmem:[%s971 + $0x88] sm:$0xff]
      %v3134 = vld [vmem:[%s971 + $0x90] sm:$0xff]
      %v3135 = vld [vmem:[%s971 + $0x98] sm:$0xff]
      %v3136 = vld [vmem:[%s971 + $0xa0] sm:$0xff]
      %v3137 = vld [vmem:[%s971 + $0xa8] sm:$0xff]
      %v3138 = vld [vmem:[%s971 + $0xb0] sm:$0xff]
      %v3139 = vld [vmem:[%s971 + $0xb8] sm:$0xff]
      %v3140 = vld [vmem:[%s971 + $0xc0] sm:$0xff]
      %v3141 = vld [vmem:[%s971 + $0xc8] sm:$0xff]
      %v3142 = vld [vmem:[%s971 + $0xd0] sm:$0xff]
      %v3143 = vld [vmem:[%s971 + $0xd8] sm:$0xff]
      %v3144 = vld [vmem:[%s971 + $0xe0] sm:$0xff]
      %v3145 = vld [vmem:[%s971 + $0xe8] sm:$0xff]
      %v3146 = vld [vmem:[%s971 + $0xf0] sm:$0xff]
      %v3147 = vld [vmem:[%s971 + $0xf8] sm:$0xff]
      %v3148 = vld [vmem:[%s7 + $0x3] sm:$0x1]
      %v3149 = vlaneseq
      %v3150 = vshrl.u32 %v3149, 7
      %v3151 = vsub.s32 0, %v3150
      %v3152 = vrot.slane %v3148, %v3151
      %v3153 = vmul.f32 %v3116, %v3152
      %v3154 = vmul.f32 %v3117, %v3152
      %v3155 = vmul.f32 %v3118, %v3152
      %v3156 = vmul.f32 %v3119, %v3152
      %v3157 = vmul.f32 %v3120, %v3152
      %v3158 = vmul.f32 %v3121, %v3152
      %v3159 = vmul.f32 %v3122, %v3152
      %v3160 = vmul.f32 %v3123, %v3152
      %v3161 = vmul.f32 %v3124, %v3152
      %v3162 = vmul.f32 %v3125, %v3152
      %v3163 = vmul.f32 %v3126, %v3152
      %v3164 = vmul.f32 %v3127, %v3152
      %v3165 = vmul.f32 %v3128, %v3152
      %v3166 = vmul.f32 %v3129, %v3152
      %v3167 = vmul.f32 %v3130, %v3152
      %v3168 = vmul.f32 %v3131, %v3152
      %v3169 = vmul.f32 %v3132, %v3152
      %v3170 = vmul.f32 %v3133, %v3152
      %v3171 = vmul.f32 %v3134, %v3152
      %v3172 = vmul.f32 %v3135, %v3152
      %v3173 = vmul.f32 %v3136, %v3152
      %v3174 = vmul.f32 %v3137, %v3152
      %v3175 = vmul.f32 %v3138, %v3152
      %v3176 = vmul.f32 %v3139, %v3152
      %v3177 = vmul.f32 %v3140, %v3152
      %v3178 = vmul.f32 %v3141, %v3152
      %v3179 = vmul.f32 %v3142, %v3152
      %v3180 = vmul.f32 %v3143, %v3152
      %v3181 = vmul.f32 %v3144, %v3152
      %v3182 = vmul.f32 %v3145, %v3152
      %v3183 = vmul.f32 %v3146, %v3152
      %v3184 = vmul.f32 %v3147, %v3152
      %v3185 = vadd.f32 %v3084, %v3153
      %v3186 = vadd.f32 %v3085, %v3154
      %v3187 = vadd.f32 %v3086, %v3155
      %v3188 = vadd.f32 %v3087, %v3156
      %v3189 = vadd.f32 %v3088, %v3157
      %v3190 = vadd.f32 %v3089, %v3158
      %v3191 = vadd.f32 %v3090, %v3159
      %v3192 = vadd.f32 %v3091, %v3160
      %v3193 = vadd.f32 %v3092, %v3161
      %v3194 = vadd.f32 %v3093, %v3162
      %v3195 = vadd.f32 %v3094, %v3163
      %v3196 = vadd.f32 %v3095, %v3164
      %v3197 = vadd.f32 %v3096, %v3165
      %v3198 = vadd.f32 %v3097, %v3166
      %v3199 = vadd.f32 %v3098, %v3167
      %v3200 = vadd.f32 %v3099, %v3168
      %v3201 = vadd.f32 %v3100, %v3169
      %v3202 = vadd.f32 %v3101, %v3170
      %v3203 = vadd.f32 %v3102, %v3171
      %v3204 = vadd.f32 %v3103, %v3172
      %v3205 = vadd.f32 %v3104, %v3173
      %v3206 = vadd.f32 %v3105, %v3174
      %v3207 = vadd.f32 %v3106, %v3175
      %v3208 = vadd.f32 %v3107, %v3176
      %v3209 = vadd.f32 %v3108, %v3177
      %v3210 = vadd.f32 %v3109, %v3178
      %v3211 = vadd.f32 %v3110, %v3179
      %v3212 = vadd.f32 %v3111, %v3180
      %v3213 = vadd.f32 %v3112, %v3181
      %v3214 = vadd.f32 %v3113, %v3182
      %v3215 = vadd.f32 %v3114, %v3183
      %v3216 = vadd.f32 %v3115, %v3184
      %v3217 = vld [vmem:[%s1041] sm:$0xff]
      %v3218 = vld [vmem:[%s1041 + $0x8] sm:$0xff]
      %v3219 = vld [vmem:[%s1041 + $0x10] sm:$0xff]
      %v3220 = vld [vmem:[%s1041 + $0x18] sm:$0xff]
      %v3221 = vld [vmem:[%s1041 + $0x20] sm:$0xff]
      %v3222 = vld [vmem:[%s1041 + $0x28] sm:$0xff]
      %v3223 = vld [vmem:[%s1041 + $0x30] sm:$0xff]
      %v3224 = vld [vmem:[%s1041 + $0x38] sm:$0xff]
      %v3225 = vld [vmem:[%s1041 + $0x40] sm:$0xff]
      %v3226 = vld [vmem:[%s1041 + $0x48] sm:$0xff]
      %v3227 = vld [vmem:[%s1041 + $0x50] sm:$0xff]
      %v3228 = vld [vmem:[%s1041 + $0x58] sm:$0xff]
      %v3229 = vld [vmem:[%s1041 + $0x60] sm:$0xff]
      %v3230 = vld [vmem:[%s1041 + $0x68] sm:$0xff]
      %v3231 = vld [vmem:[%s1041 + $0x70] sm:$0xff]
      %v3232 = vld [vmem:[%s1041 + $0x78] sm:$0xff]
      %v3233 = vld [vmem:[%s1041 + $0x80] sm:$0xff]
      %v3234 = vld [vmem:[%s1041 + $0x88] sm:$0xff]
      %v3235 = vld [vmem:[%s1041 + $0x90] sm:$0xff]
      %v3236 = vld [vmem:[%s1041 + $0x98] sm:$0xff]
      %v3237 = vld [vmem:[%s1041 + $0xa0] sm:$0xff]
      %v3238 = vld [vmem:[%s1041 + $0xa8] sm:$0xff]
      %v3239 = vld [vmem:[%s1041 + $0xb0] sm:$0xff]
      %v3240 = vld [vmem:[%s1041 + $0xb8] sm:$0xff]
      %v3241 = vld [vmem:[%s1041 + $0xc0] sm:$0xff]
      %v3242 = vld [vmem:[%s1041 + $0xc8] sm:$0xff]
      %v3243 = vld [vmem:[%s1041 + $0xd0] sm:$0xff]
      %v3244 = vld [vmem:[%s1041 + $0xd8] sm:$0xff]
      %v3245 = vld [vmem:[%s1041 + $0xe0] sm:$0xff]
      %v3246 = vld [vmem:[%s1041 + $0xe8] sm:$0xff]
      %v3247 = vld [vmem:[%s1041 + $0xf0] sm:$0xff]
      %v3248 = vld [vmem:[%s1041 + $0xf8] sm:$0xff]
      %v3249 = vld [vmem:[%s7 + $0x4] sm:$0x1]
      %v3250 = vlaneseq
      %v3251 = vshrl.u32 %v3250, 7
      %v3252 = vsub.s32 0, %v3251
      %v3253 = vrot.slane %v3249, %v3252
      %v3254 = vmul.f32 %v3217, %v3253
      %v3255 = vmul.f32 %v3218, %v3253
      %v3256 = vmul.f32 %v3219, %v3253
      %v3257 = vmul.f32 %v3220, %v3253
      %v3258 = vmul.f32 %v3221, %v3253
      %v3259 = vmul.f32 %v3222, %v3253
      %v3260 = vmul.f32 %v3223, %v3253
      %v3261 = vmul.f32 %v3224, %v3253
      %v3262 = vmul.f32 %v3225, %v3253
      %v3263 = vmul.f32 %v3226, %v3253
      %v3264 = vmul.f32 %v3227, %v3253
      %v3265 = vmul.f32 %v3228, %v3253
      %v3266 = vmul.f32 %v3229, %v3253
      %v3267 = vmul.f32 %v3230, %v3253
      %v3268 = vmul.f32 %v3231, %v3253
      %v3269 = vmul.f32 %v3232, %v3253
      %v3270 = vmul.f32 %v3233, %v3253
      %v3271 = vmul.f32 %v3234, %v3253
      %v3272 = vmul.f32 %v3235, %v3253
      %v3273 = vmul.f32 %v3236, %v3253
      %v3274 = vmul.f32 %v3237, %v3253
      %v3275 = vmul.f32 %v3238, %v3253
      %v3276 = vmul.f32 %v3239, %v3253
      %v3277 = vmul.f32 %v3240, %v3253
      %v3278 = vmul.f32 %v3241, %v3253
      %v3279 = vmul.f32 %v3242, %v3253
      %v3280 = vmul.f32 %v3243, %v3253
      %v3281 = vmul.f32 %v3244, %v3253
      %v3282 = vmul.f32 %v3245, %v3253
      %v3283 = vmul.f32 %v3246, %v3253
      %v3284 = vmul.f32 %v3247, %v3253
      %v3285 = vmul.f32 %v3248, %v3253
      %v3286 = vadd.f32 %v3185, %v3254
      %v3287 = vadd.f32 %v3186, %v3255
      %v3288 = vadd.f32 %v3187, %v3256
      %v3289 = vadd.f32 %v3188, %v3257
      %v3290 = vadd.f32 %v3189, %v3258
      %v3291 = vadd.f32 %v3190, %v3259
      %v3292 = vadd.f32 %v3191, %v3260
      %v3293 = vadd.f32 %v3192, %v3261
      %v3294 = vadd.f32 %v3193, %v3262
      %v3295 = vadd.f32 %v3194, %v3263
      %v3296 = vadd.f32 %v3195, %v3264
      %v3297 = vadd.f32 %v3196, %v3265
      %v3298 = vadd.f32 %v3197, %v3266
      %v3299 = vadd.f32 %v3198, %v3267
      %v3300 = vadd.f32 %v3199, %v3268
      %v3301 = vadd.f32 %v3200, %v3269
      %v3302 = vadd.f32 %v3201, %v3270
      %v3303 = vadd.f32 %v3202, %v3271
      %v3304 = vadd.f32 %v3203, %v3272
      %v3305 = vadd.f32 %v3204, %v3273
      %v3306 = vadd.f32 %v3205, %v3274
      %v3307 = vadd.f32 %v3206, %v3275
      %v3308 = vadd.f32 %v3207, %v3276
      %v3309 = vadd.f32 %v3208, %v3277
      %v3310 = vadd.f32 %v3209, %v3278
      %v3311 = vadd.f32 %v3210, %v3279
      %v3312 = vadd.f32 %v3211, %v3280
      %v3313 = vadd.f32 %v3212, %v3281
      %v3314 = vadd.f32 %v3213, %v3282
      %v3315 = vadd.f32 %v3214, %v3283
      %v3316 = vadd.f32 %v3215, %v3284
      %v3317 = vadd.f32 %v3216, %v3285
      %v3318 = vld [vmem:[%s938] sm:$0xff]
      %v3319 = vld [vmem:[%s938 + $0x8] sm:$0xff]
      %v3320 = vld [vmem:[%s938 + $0x10] sm:$0xff]
      %v3321 = vld [vmem:[%s938 + $0x18] sm:$0xff]
      %v3322 = vld [vmem:[%s938 + $0x20] sm:$0xff]
      %v3323 = vld [vmem:[%s938 + $0x28] sm:$0xff]
      %v3324 = vld [vmem:[%s938 + $0x30] sm:$0xff]
      %v3325 = vld [vmem:[%s938 + $0x38] sm:$0xff]
      %v3326 = vld [vmem:[%s938 + $0x40] sm:$0xff]
      %v3327 = vld [vmem:[%s938 + $0x48] sm:$0xff]
      %v3328 = vld [vmem:[%s938 + $0x50] sm:$0xff]
      %v3329 = vld [vmem:[%s938 + $0x58] sm:$0xff]
      %v3330 = vld [vmem:[%s938 + $0x60] sm:$0xff]
      %v3331 = vld [vmem:[%s938 + $0x68] sm:$0xff]
      %v3332 = vld [vmem:[%s938 + $0x70] sm:$0xff]
      %v3333 = vld [vmem:[%s938 + $0x78] sm:$0xff]
      %v3334 = vld [vmem:[%s938 + $0x80] sm:$0xff]
      %v3335 = vld [vmem:[%s938 + $0x88] sm:$0xff]
      %v3336 = vld [vmem:[%s938 + $0x90] sm:$0xff]
      %v3337 = vld [vmem:[%s938 + $0x98] sm:$0xff]
      %v3338 = vld [vmem:[%s938 + $0xa0] sm:$0xff]
      %v3339 = vld [vmem:[%s938 + $0xa8] sm:$0xff]
      %v3340 = vld [vmem:[%s938 + $0xb0] sm:$0xff]
      %v3341 = vld [vmem:[%s938 + $0xb8] sm:$0xff]
      %v3342 = vld [vmem:[%s938 + $0xc0] sm:$0xff]
      %v3343 = vld [vmem:[%s938 + $0xc8] sm:$0xff]
      %v3344 = vld [vmem:[%s938 + $0xd0] sm:$0xff]
      %v3345 = vld [vmem:[%s938 + $0xd8] sm:$0xff]
      %v3346 = vld [vmem:[%s938 + $0xe0] sm:$0xff]
      %v3347 = vld [vmem:[%s938 + $0xe8] sm:$0xff]
      %v3348 = vld [vmem:[%s938 + $0xf0] sm:$0xff]
      %v3349 = vld [vmem:[%s938 + $0xf8] sm:$0xff]
      %v3350 = vld [vmem:[%s7 + $0x5] sm:$0x1]
      %v3351 = vlaneseq
      %v3352 = vshrl.u32 %v3351, 7
      %v3353 = vsub.s32 0, %v3352
      %v3354 = vrot.slane %v3350, %v3353
      %v3355 = vmul.f32 %v3318, %v3354
      %v3356 = vmul.f32 %v3319, %v3354
      %v3357 = vmul.f32 %v3320, %v3354
      %v3358 = vmul.f32 %v3321, %v3354
      %v3359 = vmul.f32 %v3322, %v3354
      %v3360 = vmul.f32 %v3323, %v3354
      %v3361 = vmul.f32 %v3324, %v3354
      %v3362 = vmul.f32 %v3325, %v3354
      %v3363 = vmul.f32 %v3326, %v3354
      %v3364 = vmul.f32 %v3327, %v3354
      %v3365 = vmul.f32 %v3328, %v3354
      %v3366 = vmul.f32 %v3329, %v3354
      %v3367 = vmul.f32 %v3330, %v3354
      %v3368 = vmul.f32 %v3331, %v3354
      %v3369 = vmul.f32 %v3332, %v3354
      %v3370 = vmul.f32 %v3333, %v3354
      %v3371 = vmul.f32 %v3334, %v3354
      %v3372 = vmul.f32 %v3335, %v3354
      %v3373 = vmul.f32 %v3336, %v3354
      %v3374 = vmul.f32 %v3337, %v3354
      %v3375 = vmul.f32 %v3338, %v3354
      %v3376 = vmul.f32 %v3339, %v3354
      %v3377 = vmul.f32 %v3340, %v3354
      %v3378 = vmul.f32 %v3341, %v3354
      %v3379 = vmul.f32 %v3342, %v3354
      %v3380 = vmul.f32 %v3343, %v3354
      %v3381 = vmul.f32 %v3344, %v3354
      %v3382 = vmul.f32 %v3345, %v3354
      %v3383 = vmul.f32 %v3346, %v3354
      %v3384 = vmul.f32 %v3347, %v3354
      %v3385 = vmul.f32 %v3348, %v3354
      %v3386 = vmul.f32 %v3349, %v3354
      %v3387 = vadd.f32 %v3286, %v3355
      %v3388 = vadd.f32 %v3287, %v3356
      %v3389 = vadd.f32 %v3288, %v3357
      %v3390 = vadd.f32 %v3289, %v3358
      %v3391 = vadd.f32 %v3290, %v3359
      %v3392 = vadd.f32 %v3291, %v3360
      %v3393 = vadd.f32 %v3292, %v3361
      %v3394 = vadd.f32 %v3293, %v3362
      %v3395 = vadd.f32 %v3294, %v3363
      %v3396 = vadd.f32 %v3295, %v3364
      %v3397 = vadd.f32 %v3296, %v3365
      %v3398 = vadd.f32 %v3297, %v3366
      %v3399 = vadd.f32 %v3298, %v3367
      %v3400 = vadd.f32 %v3299, %v3368
      %v3401 = vadd.f32 %v3300, %v3369
      %v3402 = vadd.f32 %v3301, %v3370
      %v3403 = vadd.f32 %v3302, %v3371
      %v3404 = vadd.f32 %v3303, %v3372
      %v3405 = vadd.f32 %v3304, %v3373
      %v3406 = vadd.f32 %v3305, %v3374
      %v3407 = vadd.f32 %v3306, %v3375
      %v3408 = vadd.f32 %v3307, %v3376
      %v3409 = vadd.f32 %v3308, %v3377
      %v3410 = vadd.f32 %v3309, %v3378
      %v3411 = vadd.f32 %v3310, %v3379
      %v3412 = vadd.f32 %v3311, %v3380
      %v3413 = vadd.f32 %v3312, %v3381
      %v3414 = vadd.f32 %v3313, %v3382
      %v3415 = vadd.f32 %v3314, %v3383
      %v3416 = vadd.f32 %v3315, %v3384
      %v3417 = vadd.f32 %v3316, %v3385
      %v3418 = vadd.f32 %v3317, %v3386
      %v3419 = vld [vmem:[%s1244] sm:$0xff]
      %v3420 = vld [vmem:[%s1244 + $0x8] sm:$0xff]
      %v3421 = vld [vmem:[%s1244 + $0x10] sm:$0xff]
      %v3422 = vld [vmem:[%s1244 + $0x18] sm:$0xff]
      %v3423 = vld [vmem:[%s1244 + $0x20] sm:$0xff]
      %v3424 = vld [vmem:[%s1244 + $0x28] sm:$0xff]
      %v3425 = vld [vmem:[%s1244 + $0x30] sm:$0xff]
      %v3426 = vld [vmem:[%s1244 + $0x38] sm:$0xff]
      %v3427 = vld [vmem:[%s1244 + $0x40] sm:$0xff]
      %v3428 = vld [vmem:[%s1244 + $0x48] sm:$0xff]
      %v3429 = vld [vmem:[%s1244 + $0x50] sm:$0xff]
      %v3430 = vld [vmem:[%s1244 + $0x58] sm:$0xff]
      %v3431 = vld [vmem:[%s1244 + $0x60] sm:$0xff]
      %v3432 = vld [vmem:[%s1244 + $0x68] sm:$0xff]
      %v3433 = vld [vmem:[%s1244 + $0x70] sm:$0xff]
      %v3434 = vld [vmem:[%s1244 + $0x78] sm:$0xff]
      %v3435 = vld [vmem:[%s1244 + $0x80] sm:$0xff]
      %v3436 = vld [vmem:[%s1244 + $0x88] sm:$0xff]
      %v3437 = vld [vmem:[%s1244 + $0x90] sm:$0xff]
      %v3438 = vld [vmem:[%s1244 + $0x98] sm:$0xff]
      %v3439 = vld [vmem:[%s1244 + $0xa0] sm:$0xff]
      %v3440 = vld [vmem:[%s1244 + $0xa8] sm:$0xff]
      %v3441 = vld [vmem:[%s1244 + $0xb0] sm:$0xff]
      %v3442 = vld [vmem:[%s1244 + $0xb8] sm:$0xff]
      %v3443 = vld [vmem:[%s1244 + $0xc0] sm:$0xff]
      %v3444 = vld [vmem:[%s1244 + $0xc8] sm:$0xff]
      %v3445 = vld [vmem:[%s1244 + $0xd0] sm:$0xff]
      %v3446 = vld [vmem:[%s1244 + $0xd8] sm:$0xff]
      %v3447 = vld [vmem:[%s1244 + $0xe0] sm:$0xff]
      %v3448 = vld [vmem:[%s1244 + $0xe8] sm:$0xff]
      %v3449 = vld [vmem:[%s1244 + $0xf0] sm:$0xff]
      %v3450 = vld [vmem:[%s1244 + $0xf8] sm:$0xff]
      %v3451 = vld [vmem:[%s7 + $0x6] sm:$0x1]
      %v3452 = vlaneseq
      %v3453 = vshrl.u32 %v3452, 7
      %v3454 = vsub.s32 0, %v3453
      %v3455 = vrot.slane %v3451, %v3454
      %v3456 = vmul.f32 %v3419, %v3455
      %v3457 = vmul.f32 %v3420, %v3455
      %v3458 = vmul.f32 %v3421, %v3455
      %v3459 = vmul.f32 %v3422, %v3455
      %v3460 = vmul.f32 %v3423, %v3455
      %v3461 = vmul.f32 %v3424, %v3455
      %v3462 = vmul.f32 %v3425, %v3455
      %v3463 = vmul.f32 %v3426, %v3455
      %v3464 = vmul.f32 %v3427, %v3455
      %v3465 = vmul.f32 %v3428, %v3455
      %v3466 = vmul.f32 %v3429, %v3455
      %v3467 = vmul.f32 %v3430, %v3455
      %v3468 = vmul.f32 %v3431, %v3455
      %v3469 = vmul.f32 %v3432, %v3455
      %v3470 = vmul.f32 %v3433, %v3455
      %v3471 = vmul.f32 %v3434, %v3455
      %v3472 = vmul.f32 %v3435, %v3455
      %v3473 = vmul.f32 %v3436, %v3455
      %v3474 = vmul.f32 %v3437, %v3455
      %v3475 = vmul.f32 %v3438, %v3455
      %v3476 = vmul.f32 %v3439, %v3455
      %v3477 = vmul.f32 %v3440, %v3455
      %v3478 = vmul.f32 %v3441, %v3455
      %v3479 = vmul.f32 %v3442, %v3455
      %v3480 = vmul.f32 %v3443, %v3455
      %v3481 = vmul.f32 %v3444, %v3455
      %v3482 = vmul.f32 %v3445, %v3455
      %v3483 = vmul.f32 %v3446, %v3455
      %v3484 = vmul.f32 %v3447, %v3455
      %v3485 = vmul.f32 %v3448, %v3455
      %v3486 = vmul.f32 %v3449, %v3455
      %v3487 = vmul.f32 %v3450, %v3455
      %v3488 = vadd.f32 %v3387, %v3456
      %v3489 = vadd.f32 %v3388, %v3457
      %v3490 = vadd.f32 %v3389, %v3458
      %v3491 = vadd.f32 %v3390, %v3459
      %v3492 = vadd.f32 %v3391, %v3460
      %v3493 = vadd.f32 %v3392, %v3461
      %v3494 = vadd.f32 %v3393, %v3462
      %v3495 = vadd.f32 %v3394, %v3463
      %v3496 = vadd.f32 %v3395, %v3464
      %v3497 = vadd.f32 %v3396, %v3465
      %v3498 = vadd.f32 %v3397, %v3466
      %v3499 = vadd.f32 %v3398, %v3467
      %v3500 = vadd.f32 %v3399, %v3468
      %v3501 = vadd.f32 %v3400, %v3469
      %v3502 = vadd.f32 %v3401, %v3470
      %v3503 = vadd.f32 %v3402, %v3471
      %v3504 = vadd.f32 %v3403, %v3472
      %v3505 = vadd.f32 %v3404, %v3473
      %v3506 = vadd.f32 %v3405, %v3474
      %v3507 = vadd.f32 %v3406, %v3475
      %v3508 = vadd.f32 %v3407, %v3476
      %v3509 = vadd.f32 %v3408, %v3477
      %v3510 = vadd.f32 %v3409, %v3478
      %v3511 = vadd.f32 %v3410, %v3479
      %v3512 = vadd.f32 %v3411, %v3480
      %v3513 = vadd.f32 %v3412, %v3481
      %v3514 = vadd.f32 %v3413, %v3482
      %v3515 = vadd.f32 %v3414, %v3483
      %v3516 = vadd.f32 %v3415, %v3484
      %v3517 = vadd.f32 %v3416, %v3485
      %v3518 = vadd.f32 %v3417, %v3486
      %v3519 = vadd.f32 %v3418, %v3487
      %v3520 = vld [vmem:[%s1346] sm:$0xff]
      %v3521 = vld [vmem:[%s1346 + $0x8] sm:$0xff]
      %v3522 = vld [vmem:[%s1346 + $0x10] sm:$0xff]
      %v3523 = vld [vmem:[%s1346 + $0x18] sm:$0xff]
      %v3524 = vld [vmem:[%s1346 + $0x20] sm:$0xff]
      %v3525 = vld [vmem:[%s1346 + $0x28] sm:$0xff]
      %v3526 = vld [vmem:[%s1346 + $0x30] sm:$0xff]
      %v3527 = vld [vmem:[%s1346 + $0x38] sm:$0xff]
      %v3528 = vld [vmem:[%s1346 + $0x40] sm:$0xff]
      %v3529 = vld [vmem:[%s1346 + $0x48] sm:$0xff]
      %v3530 = vld [vmem:[%s1346 + $0x50] sm:$0xff]
      %v3531 = vld [vmem:[%s1346 + $0x58] sm:$0xff]
      %v3532 = vld [vmem:[%s1346 + $0x60] sm:$0xff]
      %v3533 = vld [vmem:[%s1346 + $0x68] sm:$0xff]
      %v3534 = vld [vmem:[%s1346 + $0x70] sm:$0xff]
      %v3535 = vld [vmem:[%s1346 + $0x78] sm:$0xff]
      %v3536 = vld [vmem:[%s1346 + $0x80] sm:$0xff]
      %v3537 = vld [vmem:[%s1346 + $0x88] sm:$0xff]
      %v3538 = vld [vmem:[%s1346 + $0x90] sm:$0xff]
      %v3539 = vld [vmem:[%s1346 + $0x98] sm:$0xff]
      %v3540 = vld [vmem:[%s1346 + $0xa0] sm:$0xff]
      %v3541 = vld [vmem:[%s1346 + $0xa8] sm:$0xff]
      %v3542 = vld [vmem:[%s1346 + $0xb0] sm:$0xff]
      %v3543 = vld [vmem:[%s1346 + $0xb8] sm:$0xff]
      %v3544 = vld [vmem:[%s1346 + $0xc0] sm:$0xff]
      %v3545 = vld [vmem:[%s1346 + $0xc8] sm:$0xff]
      %v3546 = vld [vmem:[%s1346 + $0xd0] sm:$0xff]
      %v3547 = vld [vmem:[%s1346 + $0xd8] sm:$0xff]
      %v3548 = vld [vmem:[%s1346 + $0xe0] sm:$0xff]
      %v3549 = vld [vmem:[%s1346 + $0xe8] sm:$0xff]
      %v3550 = vld [vmem:[%s1346 + $0xf0] sm:$0xff]
      %v3551 = vld [vmem:[%s1346 + $0xf8] sm:$0xff]
      %v3552 = vld [vmem:[%s7 + $0x7] sm:$0x1]
      %v3553 = vlaneseq
      %v3554 = vshrl.u32 %v3553, 7
      %v3555 = vsub.s32 0, %v3554
      %v3556 = vrot.slane %v3552, %v3555
      %v3557 = vmul.f32 %v3520, %v3556
      %v3558 = vmul.f32 %v3521, %v3556
      %v3559 = vmul.f32 %v3522, %v3556
      %v3560 = vmul.f32 %v3523, %v3556
      %v3561 = vmul.f32 %v3524, %v3556
      %v3562 = vmul.f32 %v3525, %v3556
      %v3563 = vmul.f32 %v3526, %v3556
      %v3564 = vmul.f32 %v3527, %v3556
      %v3565 = vmul.f32 %v3528, %v3556
      %v3566 = vmul.f32 %v3529, %v3556
      %v3567 = vmul.f32 %v3530, %v3556
      %v3568 = vmul.f32 %v3531, %v3556
      %v3569 = vmul.f32 %v3532, %v3556
      %v3570 = vmul.f32 %v3533, %v3556
      %v3571 = vmul.f32 %v3534, %v3556
      %v3572 = vmul.f32 %v3535, %v3556
      %v3573 = vmul.f32 %v3536, %v3556
      %v3574 = vmul.f32 %v3537, %v3556
      %v3575 = vmul.f32 %v3538, %v3556
      %v3576 = vmul.f32 %v3539, %v3556
      %v3577 = vmul.f32 %v3540, %v3556
      %v3578 = vmul.f32 %v3541, %v3556
      %v3579 = vmul.f32 %v3542, %v3556
      %v3580 = vmul.f32 %v3543, %v3556
      %v3581 = vmul.f32 %v3544, %v3556
      %v3582 = vmul.f32 %v3545, %v3556
      %v3583 = vmul.f32 %v3546, %v3556
      %v3584 = vmul.f32 %v3547, %v3556
      %v3585 = vmul.f32 %v3548, %v3556
      %v3586 = vmul.f32 %v3549, %v3556
      %v3587 = vmul.f32 %v3550, %v3556
      %v3588 = vmul.f32 %v3551, %v3556
      %v3589 = vadd.f32 %v3488, %v3557
      %v3590 = vadd.f32 %v3489, %v3558
      %v3591 = vadd.f32 %v3490, %v3559
      %v3592 = vadd.f32 %v3491, %v3560
      %v3593 = vadd.f32 %v3492, %v3561
      %v3594 = vadd.f32 %v3493, %v3562
      %v3595 = vadd.f32 %v3494, %v3563
      %v3596 = vadd.f32 %v3495, %v3564
      %v3597 = vadd.f32 %v3496, %v3565
      %v3598 = vadd.f32 %v3497, %v3566
      %v3599 = vadd.f32 %v3498, %v3567
      %v3600 = vadd.f32 %v3499, %v3568
      %v3601 = vadd.f32 %v3500, %v3569
      %v3602 = vadd.f32 %v3501, %v3570
      %v3603 = vadd.f32 %v3502, %v3571
      %v3604 = vadd.f32 %v3503, %v3572
      %v3605 = vadd.f32 %v3504, %v3573
      %v3606 = vadd.f32 %v3505, %v3574
      %v3607 = vadd.f32 %v3506, %v3575
      %v3608 = vadd.f32 %v3507, %v3576
      %v3609 = vadd.f32 %v3508, %v3577
      %v3610 = vadd.f32 %v3509, %v3578
      %v3611 = vadd.f32 %v3510, %v3579
      %v3612 = vadd.f32 %v3511, %v3580
      %v3613 = vadd.f32 %v3512, %v3581
      %v3614 = vadd.f32 %v3513, %v3582
      %v3615 = vadd.f32 %v3514, %v3583
      %v3616 = vadd.f32 %v3515, %v3584
      %v3617 = vadd.f32 %v3516, %v3585
      %v3618 = vadd.f32 %v3517, %v3586
      %v3619 = vadd.f32 %v3518, %v3587
      %v3620 = vadd.f32 %v3519, %v3588
      %s3621 = scalar_lea.vmem [#allocation2], 128
      %v3622 = vld [vmem:[%s3621] sm:$0xff]
      %v3623 = vld [vmem:[%s3621 + $0x8] sm:$0xff]
      %v3624 = vld [vmem:[%s3621 + $0x10] sm:$0xff]
      %v3625 = vld [vmem:[%s3621 + $0x18] sm:$0xff]
      %v3626 = vld [vmem:[%s3621 + $0x20] sm:$0xff]
      %v3627 = vld [vmem:[%s3621 + $0x28] sm:$0xff]
      %v3628 = vld [vmem:[%s3621 + $0x30] sm:$0xff]
      %v3629 = vld [vmem:[%s3621 + $0x38] sm:$0xff]
      %v3630 = vld [vmem:[%s3621 + $0x40] sm:$0xff]
      %v3631 = vld [vmem:[%s3621 + $0x48] sm:$0xff]
      %v3632 = vld [vmem:[%s3621 + $0x50] sm:$0xff]
      %v3633 = vld [vmem:[%s3621 + $0x58] sm:$0xff]
      %v3634 = vld [vmem:[%s3621 + $0x60] sm:$0xff]
      %v3635 = vld [vmem:[%s3621 + $0x68] sm:$0xff]
      %v3636 = vld [vmem:[%s3621 + $0x70] sm:$0xff]
      %v3637 = vld [vmem:[%s3621 + $0x78] sm:$0xff]
      %v3638 = vld [vmem:[%s3621 + $0x80] sm:$0xff]
      %v3639 = vld [vmem:[%s3621 + $0x88] sm:$0xff]
      %v3640 = vld [vmem:[%s3621 + $0x90] sm:$0xff]
      %v3641 = vld [vmem:[%s3621 + $0x98] sm:$0xff]
      %v3642 = vld [vmem:[%s3621 + $0xa0] sm:$0xff]
      %v3643 = vld [vmem:[%s3621 + $0xa8] sm:$0xff]
      %v3644 = vld [vmem:[%s3621 + $0xb0] sm:$0xff]
      %v3645 = vld [vmem:[%s3621 + $0xb8] sm:$0xff]
      %v3646 = vld [vmem:[%s3621 + $0xc0] sm:$0xff]
      %v3647 = vld [vmem:[%s3621 + $0xc8] sm:$0xff]
      %v3648 = vld [vmem:[%s3621 + $0xd0] sm:$0xff]
      %v3649 = vld [vmem:[%s3621 + $0xd8] sm:$0xff]
      %v3650 = vld [vmem:[%s3621 + $0xe0] sm:$0xff]
      %v3651 = vld [vmem:[%s3621 + $0xe8] sm:$0xff]
      %v3652 = vld [vmem:[%s3621 + $0xf0] sm:$0xff]
      %v3653 = vld [vmem:[%s3621 + $0xf8] sm:$0xff]
      %v3654 = vld [vmem:[%s7 + $0x8] sm:$0x1]
      %v3655 = vlaneseq
      %v3656 = vshrl.u32 %v3655, 7
      %v3657 = vsub.s32 0, %v3656
      %v3658 = vrot.slane %v3654, %v3657
      %v3659 = vmul.f32 %v3622, %v3658
      %v3660 = vmul.f32 %v3623, %v3658
      %v3661 = vmul.f32 %v3624, %v3658
      %v3662 = vmul.f32 %v3625, %v3658
      %v3663 = vmul.f32 %v3626, %v3658
      %v3664 = vmul.f32 %v3627, %v3658
      %v3665 = vmul.f32 %v3628, %v3658
      %v3666 = vmul.f32 %v3629, %v3658
      %v3667 = vmul.f32 %v3630, %v3658
      %v3668 = vmul.f32 %v3631, %v3658
      %v3669 = vmul.f32 %v3632, %v3658
      %v3670 = vmul.f32 %v3633, %v3658
      %v3671 = vmul.f32 %v3634, %v3658
      %v3672 = vmul.f32 %v3635, %v3658
      %v3673 = vmul.f32 %v3636, %v3658
      %v3674 = vmul.f32 %v3637, %v3658
      %v3675 = vmul.f32 %v3638, %v3658
      %v3676 = vmul.f32 %v3639, %v3658
      %v3677 = vmul.f32 %v3640, %v3658
      %v3678 = vmul.f32 %v3641, %v3658
      %v3679 = vmul.f32 %v3642, %v3658
      %v3680 = vmul.f32 %v3643, %v3658
      %v3681 = vmul.f32 %v3644, %v3658
      %v3682 = vmul.f32 %v3645, %v3658
      %v3683 = vmul.f32 %v3646, %v3658
      %v3684 = vmul.f32 %v3647, %v3658
      %v3685 = vmul.f32 %v3648, %v3658
      %v3686 = vmul.f32 %v3649, %v3658
      %v3687 = vmul.f32 %v3650, %v3658
      %v3688 = vmul.f32 %v3651, %v3658
      %v3689 = vmul.f32 %v3652, %v3658
      %v3690 = vmul.f32 %v3653, %v3658
      %v3691 = vadd.f32 %v3589, %v3659
      %v3692 = vadd.f32 %v3590, %v3660
      %v3693 = vadd.f32 %v3591, %v3661
      %v3694 = vadd.f32 %v3592, %v3662
      %v3695 = vadd.f32 %v3593, %v3663
      %v3696 = vadd.f32 %v3594, %v3664
      %v3697 = vadd.f32 %v3595, %v3665
      %v3698 = vadd.f32 %v3596, %v3666
      %v3699 = vadd.f32 %v3597, %v3667
      %v3700 = vadd.f32 %v3598, %v3668
      %v3701 = vadd.f32 %v3599, %v3669
      %v3702 = vadd.f32 %v3600, %v3670
      %v3703 = vadd.f32 %v3601, %v3671
      %v3704 = vadd.f32 %v3602, %v3672
      %v3705 = vadd.f32 %v3603, %v3673
      %v3706 = vadd.f32 %v3604, %v3674
      %v3707 = vadd.f32 %v3605, %v3675
      %v3708 = vadd.f32 %v3606, %v3676
      %v3709 = vadd.f32 %v3607, %v3677
      %v3710 = vadd.f32 %v3608, %v3678
      %v3711 = vadd.f32 %v3609, %v3679
      %v3712 = vadd.f32 %v3610, %v3680
      %v3713 = vadd.f32 %v3611, %v3681
      %v3714 = vadd.f32 %v3612, %v3682
      %v3715 = vadd.f32 %v3613, %v3683
      %v3716 = vadd.f32 %v3614, %v3684
      %v3717 = vadd.f32 %v3615, %v3685
      %v3718 = vadd.f32 %v3616, %v3686
      %v3719 = vadd.f32 %v3617, %v3687
      %v3720 = vadd.f32 %v3618, %v3688
      %v3721 = vadd.f32 %v3619, %v3689
      %v3722 = vadd.f32 %v3620, %v3690
      %s3723 = scalar_lea.vmem [#allocation2], 144
      %v3724 = vld [vmem:[%s3723] sm:$0xff]
      %v3725 = vld [vmem:[%s3723 + $0x8] sm:$0xff]
      %v3726 = vld [vmem:[%s3723 + $0x10] sm:$0xff]
      %v3727 = vld [vmem:[%s3723 + $0x18] sm:$0xff]
      %v3728 = vld [vmem:[%s3723 + $0x20] sm:$0xff]
      %v3729 = vld [vmem:[%s3723 + $0x28] sm:$0xff]
      %v3730 = vld [vmem:[%s3723 + $0x30] sm:$0xff]
      %v3731 = vld [vmem:[%s3723 + $0x38] sm:$0xff]
      %v3732 = vld [vmem:[%s3723 + $0x40] sm:$0xff]
      %v3733 = vld [vmem:[%s3723 + $0x48] sm:$0xff]
      %v3734 = vld [vmem:[%s3723 + $0x50] sm:$0xff]
      %v3735 = vld [vmem:[%s3723 + $0x58] sm:$0xff]
      %v3736 = vld [vmem:[%s3723 + $0x60] sm:$0xff]
      %v3737 = vld [vmem:[%s3723 + $0x68] sm:$0xff]
      %v3738 = vld [vmem:[%s3723 + $0x70] sm:$0xff]
      %v3739 = vld [vmem:[%s3723 + $0x78] sm:$0xff]
      %v3740 = vld [vmem:[%s3723 + $0x80] sm:$0xff]
      %v3741 = vld [vmem:[%s3723 + $0x88] sm:$0xff]
      %v3742 = vld [vmem:[%s3723 + $0x90] sm:$0xff]
      %v3743 = vld [vmem:[%s3723 + $0x98] sm:$0xff]
      %v3744 = vld [vmem:[%s3723 + $0xa0] sm:$0xff]
      %v3745 = vld [vmem:[%s3723 + $0xa8] sm:$0xff]
      %v3746 = vld [vmem:[%s3723 + $0xb0] sm:$0xff]
      %v3747 = vld [vmem:[%s3723 + $0xb8] sm:$0xff]
      %v3748 = vld [vmem:[%s3723 + $0xc0] sm:$0xff]
      %v3749 = vld [vmem:[%s3723 + $0xc8] sm:$0xff]
      %v3750 = vld [vmem:[%s3723 + $0xd0] sm:$0xff]
      %v3751 = vld [vmem:[%s3723 + $0xd8] sm:$0xff]
      %v3752 = vld [vmem:[%s3723 + $0xe0] sm:$0xff]
      %v3753 = vld [vmem:[%s3723 + $0xe8] sm:$0xff]
      %v3754 = vld [vmem:[%s3723 + $0xf0] sm:$0xff]
      %v3755 = vld [vmem:[%s3723 + $0xf8] sm:$0xff]
      %v3756 = vld [vmem:[%s7 + $0x9] sm:$0x1]
      %v3757 = vlaneseq
      %v3758 = vshrl.u32 %v3757, 7
      %v3759 = vsub.s32 0, %v3758
      %v3760 = vrot.slane %v3756, %v3759
      %v3761 = vmul.f32 %v3724, %v3760
      %v3762 = vmul.f32 %v3725, %v3760
      %v3763 = vmul.f32 %v3726, %v3760
      %v3764 = vmul.f32 %v3727, %v3760
      %v3765 = vmul.f32 %v3728, %v3760
      %v3766 = vmul.f32 %v3729, %v3760
      %v3767 = vmul.f32 %v3730, %v3760
      %v3768 = vmul.f32 %v3731, %v3760
      %v3769 = vmul.f32 %v3732, %v3760
      %v3770 = vmul.f32 %v3733, %v3760
      %v3771 = vmul.f32 %v3734, %v3760
      %v3772 = vmul.f32 %v3735, %v3760
      %v3773 = vmul.f32 %v3736, %v3760
      %v3774 = vmul.f32 %v3737, %v3760
      %v3775 = vmul.f32 %v3738, %v3760
      %v3776 = vmul.f32 %v3739, %v3760
      %v3777 = vmul.f32 %v3740, %v3760
      %v3778 = vmul.f32 %v3741, %v3760
      %v3779 = vmul.f32 %v3742, %v3760
      %v3780 = vmul.f32 %v3743, %v3760
      %v3781 = vmul.f32 %v3744, %v3760
      %v3782 = vmul.f32 %v3745, %v3760
      %v3783 = vmul.f32 %v3746, %v3760
      %v3784 = vmul.f32 %v3747, %v3760
      %v3785 = vmul.f32 %v3748, %v3760
      %v3786 = vmul.f32 %v3749, %v3760
      %v3787 = vmul.f32 %v3750, %v3760
      %v3788 = vmul.f32 %v3751, %v3760
      %v3789 = vmul.f32 %v3752, %v3760
      %v3790 = vmul.f32 %v3753, %v3760
      %v3791 = vmul.f32 %v3754, %v3760
      %v3792 = vmul.f32 %v3755, %v3760
      %v3793 = vadd.f32 %v3691, %v3761
      %v3794 = vadd.f32 %v3692, %v3762
      %v3795 = vadd.f32 %v3693, %v3763
      %v3796 = vadd.f32 %v3694, %v3764
      %v3797 = vadd.f32 %v3695, %v3765
      %v3798 = vadd.f32 %v3696, %v3766
      %v3799 = vadd.f32 %v3697, %v3767
      %v3800 = vadd.f32 %v3698, %v3768
      %v3801 = vadd.f32 %v3699, %v3769
      %v3802 = vadd.f32 %v3700, %v3770
      %v3803 = vadd.f32 %v3701, %v3771
      %v3804 = vadd.f32 %v3702, %v3772
      %v3805 = vadd.f32 %v3703, %v3773
      %v3806 = vadd.f32 %v3704, %v3774
      %v3807 = vadd.f32 %v3705, %v3775
      %v3808 = vadd.f32 %v3706, %v3776
      %v3809 = vadd.f32 %v3707, %v3777
      %v3810 = vadd.f32 %v3708, %v3778
      %v3811 = vadd.f32 %v3709, %v3779
      %v3812 = vadd.f32 %v3710, %v3780
      %v3813 = vadd.f32 %v3711, %v3781
      %v3814 = vadd.f32 %v3712, %v3782
      %v3815 = vadd.f32 %v3713, %v3783
      %v3816 = vadd.f32 %v3714, %v3784
      %v3817 = vadd.f32 %v3715, %v3785
      %v3818 = vadd.f32 %v3716, %v3786
      %v3819 = vadd.f32 %v3717, %v3787
      %v3820 = vadd.f32 %v3718, %v3788
      %v3821 = vadd.f32 %v3719, %v3789
      %v3822 = vadd.f32 %v3720, %v3790
      %v3823 = vadd.f32 %v3721, %v3791
      %v3824 = vadd.f32 %v3722, %v3792
      %s3825 = scalar_lea.vmem [#allocation2], 160
      %v3826 = vld [vmem:[%s3825] sm:$0xff]
      %v3827 = vld [vmem:[%s3825 + $0x8] sm:$0xff]
      %v3828 = vld [vmem:[%s3825 + $0x10] sm:$0xff]
      %v3829 = vld [vmem:[%s3825 + $0x18] sm:$0xff]
      %v3830 = vld [vmem:[%s3825 + $0x20] sm:$0xff]
      %v3831 = vld [vmem:[%s3825 + $0x28] sm:$0xff]
      %v3832 = vld [vmem:[%s3825 + $0x30] sm:$0xff]
      %v3833 = vld [vmem:[%s3825 + $0x38] sm:$0xff]
      %v3834 = vld [vmem:[%s3825 + $0x40] sm:$0xff]
      %v3835 = vld [vmem:[%s3825 + $0x48] sm:$0xff]
      %v3836 = vld [vmem:[%s3825 + $0x50] sm:$0xff]
      %v3837 = vld [vmem:[%s3825 + $0x58] sm:$0xff]
      %v3838 = vld [vmem:[%s3825 + $0x60] sm:$0xff]
      %v3839 = vld [vmem:[%s3825 + $0x68] sm:$0xff]
      %v3840 = vld [vmem:[%s3825 + $0x70] sm:$0xff]
      %v3841 = vld [vmem:[%s3825 + $0x78] sm:$0xff]
      %v3842 = vld [vmem:[%s3825 + $0x80] sm:$0xff]
      %v3843 = vld [vmem:[%s3825 + $0x88] sm:$0xff]
      %v3844 = vld [vmem:[%s3825 + $0x90] sm:$0xff]
      %v3845 = vld [vmem:[%s3825 + $0x98] sm:$0xff]
      %v3846 = vld [vmem:[%s3825 + $0xa0] sm:$0xff]
      %v3847 = vld [vmem:[%s3825 + $0xa8] sm:$0xff]
      %v3848 = vld [vmem:[%s3825 + $0xb0] sm:$0xff]
      %v3849 = vld [vmem:[%s3825 + $0xb8] sm:$0xff]
      %v3850 = vld [vmem:[%s3825 + $0xc0] sm:$0xff]
      %v3851 = vld [vmem:[%s3825 + $0xc8] sm:$0xff]
      %v3852 = vld [vmem:[%s3825 + $0xd0] sm:$0xff]
      %v3853 = vld [vmem:[%s3825 + $0xd8] sm:$0xff]
      %v3854 = vld [vmem:[%s3825 + $0xe0] sm:$0xff]
      %v3855 = vld [vmem:[%s3825 + $0xe8] sm:$0xff]
      %v3856 = vld [vmem:[%s3825 + $0xf0] sm:$0xff]
      %v3857 = vld [vmem:[%s3825 + $0xf8] sm:$0xff]
      %v3858 = vld [vmem:[%s7 + $0xa] sm:$0x1]
      %v3859 = vlaneseq
      %v3860 = vshrl.u32 %v3859, 7
      %v3861 = vsub.s32 0, %v3860
      %v3862 = vrot.slane %v3858, %v3861
      %v3863 = vmul.f32 %v3826, %v3862
      %v3864 = vmul.f32 %v3827, %v3862
      %v3865 = vmul.f32 %v3828, %v3862
      %v3866 = vmul.f32 %v3829, %v3862
      %v3867 = vmul.f32 %v3830, %v3862
      %v3868 = vmul.f32 %v3831, %v3862
      %v3869 = vmul.f32 %v3832, %v3862
      %v3870 = vmul.f32 %v3833, %v3862
      %v3871 = vmul.f32 %v3834, %v3862
      %v3872 = vmul.f32 %v3835, %v3862
      %v3873 = vmul.f32 %v3836, %v3862
      %v3874 = vmul.f32 %v3837, %v3862
      %v3875 = vmul.f32 %v3838, %v3862
      %v3876 = vmul.f32 %v3839, %v3862
      %v3877 = vmul.f32 %v3840, %v3862
      %v3878 = vmul.f32 %v3841, %v3862
      %v3879 = vmul.f32 %v3842, %v3862
      %v3880 = vmul.f32 %v3843, %v3862
      %v3881 = vmul.f32 %v3844, %v3862
      %v3882 = vmul.f32 %v3845, %v3862
      %v3883 = vmul.f32 %v3846, %v3862
      %v3884 = vmul.f32 %v3847, %v3862
      %v3885 = vmul.f32 %v3848, %v3862
      %v3886 = vmul.f32 %v3849, %v3862
      %v3887 = vmul.f32 %v3850, %v3862
      %v3888 = vmul.f32 %v3851, %v3862
      %v3889 = vmul.f32 %v3852, %v3862
      %v3890 = vmul.f32 %v3853, %v3862
      %v3891 = vmul.f32 %v3854, %v3862
      %v3892 = vmul.f32 %v3855, %v3862
      %v3893 = vmul.f32 %v3856, %v3862
      %v3894 = vmul.f32 %v3857, %v3862
      %v3895 = vadd.f32 %v3793, %v3863
      %v3896 = vadd.f32 %v3794, %v3864
      %v3897 = vadd.f32 %v3795, %v3865
      %v3898 = vadd.f32 %v3796, %v3866
      %v3899 = vadd.f32 %v3797, %v3867
      %v3900 = vadd.f32 %v3798, %v3868
      %v3901 = vadd.f32 %v3799, %v3869
      %v3902 = vadd.f32 %v3800, %v3870
      %v3903 = vadd.f32 %v3801, %v3871
      %v3904 = vadd.f32 %v3802, %v3872
      %v3905 = vadd.f32 %v3803, %v3873
      %v3906 = vadd.f32 %v3804, %v3874
      %v3907 = vadd.f32 %v3805, %v3875
      %v3908 = vadd.f32 %v3806, %v3876
      %v3909 = vadd.f32 %v3807, %v3877
      %v3910 = vadd.f32 %v3808, %v3878
      %v3911 = vadd.f32 %v3809, %v3879
      %v3912 = vadd.f32 %v3810, %v3880
      %v3913 = vadd.f32 %v3811, %v3881
      %v3914 = vadd.f32 %v3812, %v3882
      %v3915 = vadd.f32 %v3813, %v3883
      %v3916 = vadd.f32 %v3814, %v3884
      %v3917 = vadd.f32 %v3815, %v3885
      %v3918 = vadd.f32 %v3816, %v3886
      %v3919 = vadd.f32 %v3817, %v3887
      %v3920 = vadd.f32 %v3818, %v3888
      %v3921 = vadd.f32 %v3819, %v3889
      %v3922 = vadd.f32 %v3820, %v3890
      %v3923 = vadd.f32 %v3821, %v3891
      %v3924 = vadd.f32 %v3822, %v3892
      %v3925 = vadd.f32 %v3823, %v3893
      %v3926 = vadd.f32 %v3824, %v3894
      %v3927 = vld [vmem:[%s8] sm:$0x1]
      %v3929 = vlaneseq
      %v3930 = vshrl.u32 %v3929, 7
      %v3931 = vsub.s32 0, %v3930
      %v3932 = vrot.slane %v3927, %v3931
      %v3934 = vadd.f32 %v3895, %v3932
      %v3935 = vadd.f32 %v3896, %v3932
      %v3936 = vadd.f32 %v3897, %v3932
      %v3937 = vadd.f32 %v3898, %v3932
      %v3938 = vadd.f32 %v3899, %v3932
      %v3939 = vadd.f32 %v3900, %v3932
      %v3940 = vadd.f32 %v3901, %v3932
      %v3941 = vadd.f32 %v3902, %v3932
      %v3942 = vadd.f32 %v3903, %v3932
      %v3943 = vadd.f32 %v3904, %v3932
      %v3944 = vadd.f32 %v3905, %v3932
      %v3945 = vadd.f32 %v3906, %v3932
      %v3946 = vadd.f32 %v3907, %v3932
      %v3947 = vadd.f32 %v3908, %v3932
      %v3948 = vadd.f32 %v3909, %v3932
      %v3949 = vadd.f32 %v3910, %v3932
      %v3950 = vadd.f32 %v3911, %v3932
      %v3951 = vadd.f32 %v3912, %v3932
      %v3952 = vadd.f32 %v3913, %v3932
      %v3953 = vadd.f32 %v3914, %v3932
      %v3954 = vadd.f32 %v3915, %v3932
      %v3955 = vadd.f32 %v3916, %v3932
      %v3956 = vadd.f32 %v3917, %v3932
      %v3957 = vadd.f32 %v3918, %v3932
      %v3958 = vadd.f32 %v3919, %v3932
      %v3959 = vadd.f32 %v3920, %v3932
      %v3960 = vadd.f32 %v3921, %v3932
      %v3961 = vadd.f32 %v3922, %v3932
      %v3962 = vadd.f32 %v3923, %v3932
      %v3963 = vadd.f32 %v3924, %v3932
      %v3964 = vadd.f32 %v3925, %v3932
      %v3965 = vadd.f32 %v3926, %v3932
      %v3966 = vmax.f32 %v3934, 0.0
      %v3967 = vmax.f32 %v3935, 0.0
      %v3968 = vmax.f32 %v3936, 0.0
      %v3969 = vmax.f32 %v3937, 0.0
      %v3970 = vmax.f32 %v3938, 0.0
      %v3971 = vmax.f32 %v3939, 0.0
      %v3972 = vmax.f32 %v3940, 0.0
      %v3973 = vmax.f32 %v3941, 0.0
      %v3974 = vmax.f32 %v3942, 0.0
      %v3975 = vmax.f32 %v3943, 0.0
      %v3976 = vmax.f32 %v3944, 0.0
      %v3977 = vmax.f32 %v3945, 0.0
      %v3978 = vmax.f32 %v3946, 0.0
      %v3979 = vmax.f32 %v3947, 0.0
      %v3980 = vmax.f32 %v3948, 0.0
      %v3981 = vmax.f32 %v3949, 0.0
      %v3982 = vmax.f32 %v3950, 0.0
      %v3983 = vmax.f32 %v3951, 0.0
      %v3984 = vmax.f32 %v3952, 0.0
      %v3985 = vmax.f32 %v3953, 0.0
      %v3986 = vmax.f32 %v3954, 0.0
      %v3987 = vmax.f32 %v3955, 0.0
      %v3988 = vmax.f32 %v3956, 0.0
      %v3989 = vmax.f32 %v3957, 0.0
      %v3990 = vmax.f32 %v3958, 0.0
      %v3991 = vmax.f32 %v3959, 0.0
      %v3992 = vmax.f32 %v3960, 0.0
      %v3993 = vmax.f32 %v3961, 0.0
      %v3994 = vmax.f32 %v3962, 0.0
      %v3995 = vmax.f32 %v3963, 0.0
      %v3996 = vmax.f32 %v3964, 0.0
      %v3997 = vmax.f32 %v3965, 0.0
      %3998 = vst.msk [vmem:[#allocation3 + $0x8] sm:$0xff] %vm550, %v3966
      %3999 = vst.msk [vmem:[#allocation3 + $0x10] sm:$0xff] %vm550, %v3967
      %4000 = vst.msk [vmem:[#allocation3 + $0x28] sm:$0xff] %vm550, %v3968
      %4001 = vst.msk [vmem:[#allocation3 + $0x30] sm:$0xff] %vm550, %v3969
      %4002 = vst.msk [vmem:[#allocation3 + $0x48] sm:$0xff] %vm550, %v3970
      %4003 = vst.msk [vmem:[#allocation3 + $0x50] sm:$0xff] %vm550, %v3971
      %4004 = vst.msk [vmem:[#allocation3 + $0x68] sm:$0xff] %vm550, %v3972
      %4005 = vst.msk [vmem:[#allocation3 + $0x70] sm:$0xff] %vm550, %v3973
      %4006 = vst.msk [vmem:[#allocation3 + $0x88] sm:$0xff] %vm550, %v3974
      %4007 = vst.msk [vmem:[#allocation3 + $0x90] sm:$0xff] %vm550, %v3975
      %4008 = vst.msk [vmem:[#allocation3 + $0xa8] sm:$0xff] %vm550, %v3976
      %4009 = vst.msk [vmem:[#allocation3 + $0xb0] sm:$0xff] %vm550, %v3977
      %4010 = vst.msk [vmem:[#allocation3 + $0xc8] sm:$0xff] %vm550, %v3978
      %4011 = vst.msk [vmem:[#allocation3 + $0xd0] sm:$0xff] %vm550, %v3979
      %4012 = vst.msk [vmem:[#allocation3 + $0xe8] sm:$0xff] %vm550, %v3980
      %4013 = vst.msk [vmem:[#allocation3 + $0xf0] sm:$0xff] %vm550, %v3981
      %4014 = vst.msk [vmem:[#allocation3 + $0x108] sm:$0xff] %vm550, %v3982
      %4015 = vst.msk [vmem:[#allocation3 + $0x110] sm:$0xff] %vm550, %v3983
      %4016 = vst.msk [vmem:[#allocation3 + $0x128] sm:$0xff] %vm550, %v3984
      %4017 = vst.msk [vmem:[#allocation3 + $0x130] sm:$0xff] %vm550, %v3985
      %4018 = vst.msk [vmem:[#allocation3 + $0x148] sm:$0xff] %vm550, %v3986
      %4019 = vst.msk [vmem:[#allocation3 + $0x150] sm:$0xff] %vm550, %v3987
      %4020 = vst.msk [vmem:[#allocation3 + $0x168] sm:$0xff] %vm550, %v3988
      %4021 = vst.msk [vmem:[#allocation3 + $0x170] sm:$0xff] %vm550, %v3989
      %4022 = vst.msk [vmem:[#allocation3 + $0x188] sm:$0xff] %vm550, %v3990
      %4023 = vst.msk [vmem:[#allocation3 + $0x190] sm:$0xff] %vm550, %v3991
      %4024 = vst.msk [vmem:[#allocation3 + $0x1a8] sm:$0xff] %vm550, %v3992
      %4025 = vst.msk [vmem:[#allocation3 + $0x1b0] sm:$0xff] %vm550, %v3993
      %4026 = vst.msk [vmem:[#allocation3 + $0x1c8] sm:$0xff] %vm550, %v3994
      %4027 = vst.msk [vmem:[#allocation3 + $0x1d0] sm:$0xff] %vm550, %v3995
      %4028 = vst.msk [vmem:[#allocation3 + $0x1e8] sm:$0xff] %vm550, %v3996
      %4029 = vst.msk [vmem:[#allocation3 + $0x1f0] sm:$0xff] %vm550, %v3997
      %v4030 = vld [vmem:[#allocation3 + $0x3] sm:$0xff]
      %v4031 = vld [vmem:[#allocation3 + $0xb] sm:$0xff]
      %v4032 = vld [vmem:[#allocation3 + $0x23] sm:$0xff]
      %v4033 = vld [vmem:[#allocation3 + $0x2b] sm:$0xff]
      %v4034 = vld [vmem:[#allocation3 + $0x43] sm:$0xff]
      %v4035 = vld [vmem:[#allocation3 + $0x4b] sm:$0xff]
      %v4036 = vld [vmem:[#allocation3 + $0x63] sm:$0xff]
      %v4037 = vld [vmem:[#allocation3 + $0x6b] sm:$0xff]
      %v4038 = vld [vmem:[#allocation3 + $0x83] sm:$0xff]
      %v4039 = vld [vmem:[#allocation3 + $0x8b] sm:$0xff]
      %v4040 = vld [vmem:[#allocation3 + $0xa3] sm:$0xff]
      %v4041 = vld [vmem:[#allocation3 + $0xab] sm:$0xff]
      %v4042 = vld [vmem:[#allocation3 + $0xc3] sm:$0xff]
      %v4043 = vld [vmem:[#allocation3 + $0xcb] sm:$0xff]
      %v4044 = vld [vmem:[#allocation3 + $0xe3] sm:$0xff]
      %v4045 = vld [vmem:[#allocation3 + $0xeb] sm:$0xff]
      %v4046 = vld [vmem:[#allocation3 + $0x103] sm:$0xff]
      %v4047 = vld [vmem:[#allocation3 + $0x10b] sm:$0xff]
      %v4048 = vld [vmem:[#allocation3 + $0x123] sm:$0xff]
      %v4049 = vld [vmem:[#allocation3 + $0x12b] sm:$0xff]
      %v4050 = vld [vmem:[#allocation3 + $0x143] sm:$0xff]
      %v4051 = vld [vmem:[#allocation3 + $0x14b] sm:$0xff]
      %v4052 = vld [vmem:[#allocation3 + $0x163] sm:$0xff]
      %v4053 = vld [vmem:[#allocation3 + $0x16b] sm:$0xff]
      %v4054 = vld [vmem:[#allocation3 + $0x183] sm:$0xff]
      %v4055 = vld [vmem:[#allocation3 + $0x18b] sm:$0xff]
      %v4056 = vld [vmem:[#allocation3 + $0x1a3] sm:$0xff]
      %v4057 = vld [vmem:[#allocation3 + $0x1ab] sm:$0xff]
      %v4058 = vld [vmem:[#allocation3 + $0x1c3] sm:$0xff]
      %v4059 = vld [vmem:[#allocation3 + $0x1cb] sm:$0xff]
      %v4060 = vld [vmem:[#allocation3 + $0x1e3] sm:$0xff]
      %v4061 = vld [vmem:[#allocation3 + $0x1eb] sm:$0xff]
      %v4062 = vld [vmem:[%s13] sm:$0x1]
      %v4063 = vlaneseq
      %v4064 = vshrl.u32 %v4063, 7
      %v4065 = vsub.s32 0, %v4064
      %v4066 = vrot.slane %v4062, %v4065
      %v4067 = vmul.f32 %v4030, %v4066
      %v4068 = vmul.f32 %v4031, %v4066
      %v4069 = vmul.f32 %v4032, %v4066
      %v4070 = vmul.f32 %v4033, %v4066
      %v4071 = vmul.f32 %v4034, %v4066
      %v4072 = vmul.f32 %v4035, %v4066
      %v4073 = vmul.f32 %v4036, %v4066
      %v4074 = vmul.f32 %v4037, %v4066
      %v4075 = vmul.f32 %v4038, %v4066
      %v4076 = vmul.f32 %v4039, %v4066
      %v4077 = vmul.f32 %v4040, %v4066
      %v4078 = vmul.f32 %v4041, %v4066
      %v4079 = vmul.f32 %v4042, %v4066
      %v4080 = vmul.f32 %v4043, %v4066
      %v4081 = vmul.f32 %v4044, %v4066
      %v4082 = vmul.f32 %v4045, %v4066
      %v4083 = vmul.f32 %v4046, %v4066
      %v4084 = vmul.f32 %v4047, %v4066
      %v4085 = vmul.f32 %v4048, %v4066
      %v4086 = vmul.f32 %v4049, %v4066
      %v4087 = vmul.f32 %v4050, %v4066
      %v4088 = vmul.f32 %v4051, %v4066
      %v4089 = vmul.f32 %v4052, %v4066
      %v4090 = vmul.f32 %v4053, %v4066
      %v4091 = vmul.f32 %v4054, %v4066
      %v4092 = vmul.f32 %v4055, %v4066
      %v4093 = vmul.f32 %v4056, %v4066
      %v4094 = vmul.f32 %v4057, %v4066
      %v4095 = vmul.f32 %v4058, %v4066
      %v4096 = vmul.f32 %v4059, %v4066
      %v4097 = vmul.f32 %v4060, %v4066
      %v4098 = vmul.f32 %v4061, %v4066
      %v4099 = vld [vmem:[#allocation3 + $0x4] sm:$0xff]
      %v4100 = vld [vmem:[#allocation3 + $0xc] sm:$0xff]
      %v4101 = vld [vmem:[#allocation3 + $0x24] sm:$0xff]
      %v4102 = vld [vmem:[#allocation3 + $0x2c] sm:$0xff]
      %v4103 = vld [vmem:[#allocation3 + $0x44] sm:$0xff]
      %v4104 = vld [vmem:[#allocation3 + $0x4c] sm:$0xff]
      %v4105 = vld [vmem:[#allocation3 + $0x64] sm:$0xff]
      %v4106 = vld [vmem:[#allocation3 + $0x6c] sm:$0xff]
      %v4107 = vld [vmem:[#allocation3 + $0x84] sm:$0xff]
      %v4108 = vld [vmem:[#allocation3 + $0x8c] sm:$0xff]
      %v4109 = vld [vmem:[#allocation3 + $0xa4] sm:$0xff]
      %v4110 = vld [vmem:[#allocation3 + $0xac] sm:$0xff]
      %v4111 = vld [vmem:[#allocation3 + $0xc4] sm:$0xff]
      %v4112 = vld [vmem:[#allocation3 + $0xcc] sm:$0xff]
      %v4113 = vld [vmem:[#allocation3 + $0xe4] sm:$0xff]
      %v4114 = vld [vmem:[#allocation3 + $0xec] sm:$0xff]
      %v4115 = vld [vmem:[#allocation3 + $0x104] sm:$0xff]
      %v4116 = vld [vmem:[#allocation3 + $0x10c] sm:$0xff]
      %v4117 = vld [vmem:[#allocation3 + $0x124] sm:$0xff]
      %v4118 = vld [vmem:[#allocation3 + $0x12c] sm:$0xff]
      %v4119 = vld [vmem:[#allocation3 + $0x144] sm:$0xff]
      %v4120 = vld [vmem:[#allocation3 + $0x14c] sm:$0xff]
      %v4121 = vld [vmem:[#allocation3 + $0x164] sm:$0xff]
      %v4122 = vld [vmem:[#allocation3 + $0x16c] sm:$0xff]
      %v4123 = vld [vmem:[#allocation3 + $0x184] sm:$0xff]
      %v4124 = vld [vmem:[#allocation3 + $0x18c] sm:$0xff]
      %v4125 = vld [vmem:[#allocation3 + $0x1a4] sm:$0xff]
      %v4126 = vld [vmem:[#allocation3 + $0x1ac] sm:$0xff]
      %v4127 = vld [vmem:[#allocation3 + $0x1c4] sm:$0xff]
      %v4128 = vld [vmem:[#allocation3 + $0x1cc] sm:$0xff]
      %v4129 = vld [vmem:[#allocation3 + $0x1e4] sm:$0xff]
      %v4130 = vld [vmem:[#allocation3 + $0x1ec] sm:$0xff]
      %v4131 = vld [vmem:[%s13 + $0x1] sm:$0x1]
      %v4132 = vlaneseq
      %v4133 = vshrl.u32 %v4132, 7
      %v4134 = vsub.s32 0, %v4133
      %v4135 = vrot.slane %v4131, %v4134
      %v4136 = vmul.f32 %v4099, %v4135
      %v4137 = vmul.f32 %v4100, %v4135
      %v4138 = vmul.f32 %v4101, %v4135
      %v4139 = vmul.f32 %v4102, %v4135
      %v4140 = vmul.f32 %v4103, %v4135
      %v4141 = vmul.f32 %v4104, %v4135
      %v4142 = vmul.f32 %v4105, %v4135
      %v4143 = vmul.f32 %v4106, %v4135
      %v4144 = vmul.f32 %v4107, %v4135
      %v4145 = vmul.f32 %v4108, %v4135
      %v4146 = vmul.f32 %v4109, %v4135
      %v4147 = vmul.f32 %v4110, %v4135
      %v4148 = vmul.f32 %v4111, %v4135
      %v4149 = vmul.f32 %v4112, %v4135
      %v4150 = vmul.f32 %v4113, %v4135
      %v4151 = vmul.f32 %v4114, %v4135
      %v4152 = vmul.f32 %v4115, %v4135
      %v4153 = vmul.f32 %v4116, %v4135
      %v4154 = vmul.f32 %v4117, %v4135
      %v4155 = vmul.f32 %v4118, %v4135
      %v4156 = vmul.f32 %v4119, %v4135
      %v4157 = vmul.f32 %v4120, %v4135
      %v4158 = vmul.f32 %v4121, %v4135
      %v4159 = vmul.f32 %v4122, %v4135
      %v4160 = vmul.f32 %v4123, %v4135
      %v4161 = vmul.f32 %v4124, %v4135
      %v4162 = vmul.f32 %v4125, %v4135
      %v4163 = vmul.f32 %v4126, %v4135
      %v4164 = vmul.f32 %v4127, %v4135
      %v4165 = vmul.f32 %v4128, %v4135
      %v4166 = vmul.f32 %v4129, %v4135
      %v4167 = vmul.f32 %v4130, %v4135
      %v4168 = vadd.f32 %v4067, %v4136
      %v4169 = vadd.f32 %v4068, %v4137
      %v4170 = vadd.f32 %v4069, %v4138
      %v4171 = vadd.f32 %v4070, %v4139
      %v4172 = vadd.f32 %v4071, %v4140
      %v4173 = vadd.f32 %v4072, %v4141
      %v4174 = vadd.f32 %v4073, %v4142
      %v4175 = vadd.f32 %v4074, %v4143
      %v4176 = vadd.f32 %v4075, %v4144
      %v4177 = vadd.f32 %v4076, %v4145
      %v4178 = vadd.f32 %v4077, %v4146
      %v4179 = vadd.f32 %v4078, %v4147
      %v4180 = vadd.f32 %v4079, %v4148
      %v4181 = vadd.f32 %v4080, %v4149
      %v4182 = vadd.f32 %v4081, %v4150
      %v4183 = vadd.f32 %v4082, %v4151
      %v4184 = vadd.f32 %v4083, %v4152
      %v4185 = vadd.f32 %v4084, %v4153
      %v4186 = vadd.f32 %v4085, %v4154
      %v4187 = vadd.f32 %v4086, %v4155
      %v4188 = vadd.f32 %v4087, %v4156
      %v4189 = vadd.f32 %v4088, %v4157
      %v4190 = vadd.f32 %v4089, %v4158
      %v4191 = vadd.f32 %v4090, %v4159
      %v4192 = vadd.f32 %v4091, %v4160
      %v4193 = vadd.f32 %v4092, %v4161
      %v4194 = vadd.f32 %v4093, %v4162
      %v4195 = vadd.f32 %v4094, %v4163
      %v4196 = vadd.f32 %v4095, %v4164
      %v4197 = vadd.f32 %v4096, %v4165
      %v4198 = vadd.f32 %v4097, %v4166
      %v4199 = vadd.f32 %v4098, %v4167
      %v4200 = vld [vmem:[#allocation3 + $0x5] sm:$0xff]
      %v4201 = vld [vmem:[#allocation3 + $0xd] sm:$0xff]
      %v4202 = vld [vmem:[#allocation3 + $0x25] sm:$0xff]
      %v4203 = vld [vmem:[#allocation3 + $0x2d] sm:$0xff]
      %v4204 = vld [vmem:[#allocation3 + $0x45] sm:$0xff]
      %v4205 = vld [vmem:[#allocation3 + $0x4d] sm:$0xff]
      %v4206 = vld [vmem:[#allocation3 + $0x65] sm:$0xff]
      %v4207 = vld [vmem:[#allocation3 + $0x6d] sm:$0xff]
      %v4208 = vld [vmem:[#allocation3 + $0x85] sm:$0xff]
      %v4209 = vld [vmem:[#allocation3 + $0x8d] sm:$0xff]
      %v4210 = vld [vmem:[#allocation3 + $0xa5] sm:$0xff]
      %v4211 = vld [vmem:[#allocation3 + $0xad] sm:$0xff]
      %v4212 = vld [vmem:[#allocation3 + $0xc5] sm:$0xff]
      %v4213 = vld [vmem:[#allocation3 + $0xcd] sm:$0xff]
      %v4214 = vld [vmem:[#allocation3 + $0xe5] sm:$0xff]
      %v4215 = vld [vmem:[#allocation3 + $0xed] sm:$0xff]
      %v4216 = vld [vmem:[#allocation3 + $0x105] sm:$0xff]
      %v4217 = vld [vmem:[#allocation3 + $0x10d] sm:$0xff]
      %v4218 = vld [vmem:[#allocation3 + $0x125] sm:$0xff]
      %v4219 = vld [vmem:[#allocation3 + $0x12d] sm:$0xff]
      %v4220 = vld [vmem:[#allocation3 + $0x145] sm:$0xff]
      %v4221 = vld [vmem:[#allocation3 + $0x14d] sm:$0xff]
      %v4222 = vld [vmem:[#allocation3 + $0x165] sm:$0xff]
      %v4223 = vld [vmem:[#allocation3 + $0x16d] sm:$0xff]
      %v4224 = vld [vmem:[#allocation3 + $0x185] sm:$0xff]
      %v4225 = vld [vmem:[#allocation3 + $0x18d] sm:$0xff]
      %v4226 = vld [vmem:[#allocation3 + $0x1a5] sm:$0xff]
      %v4227 = vld [vmem:[#allocation3 + $0x1ad] sm:$0xff]
      %v4228 = vld [vmem:[#allocation3 + $0x1c5] sm:$0xff]
      %v4229 = vld [vmem:[#allocation3 + $0x1cd] sm:$0xff]
      %v4230 = vld [vmem:[#allocation3 + $0x1e5] sm:$0xff]
      %v4231 = vld [vmem:[#allocation3 + $0x1ed] sm:$0xff]
      %v4232 = vld [vmem:[%s13 + $0x2] sm:$0x1]
      %v4233 = vlaneseq
      %v4234 = vshrl.u32 %v4233, 7
      %v4235 = vsub.s32 0, %v4234
      %v4236 = vrot.slane %v4232, %v4235
      %v4237 = vmul.f32 %v4200, %v4236
      %v4238 = vmul.f32 %v4201, %v4236
      %v4239 = vmul.f32 %v4202, %v4236
      %v4240 = vmul.f32 %v4203, %v4236
      %v4241 = vmul.f32 %v4204, %v4236
      %v4242 = vmul.f32 %v4205, %v4236
      %v4243 = vmul.f32 %v4206, %v4236
      %v4244 = vmul.f32 %v4207, %v4236
      %v4245 = vmul.f32 %v4208, %v4236
      %v4246 = vmul.f32 %v4209, %v4236
      %v4247 = vmul.f32 %v4210, %v4236
      %v4248 = vmul.f32 %v4211, %v4236
      %v4249 = vmul.f32 %v4212, %v4236
      %v4250 = vmul.f32 %v4213, %v4236
      %v4251 = vmul.f32 %v4214, %v4236
      %v4252 = vmul.f32 %v4215, %v4236
      %v4253 = vmul.f32 %v4216, %v4236
      %v4254 = vmul.f32 %v4217, %v4236
      %v4255 = vmul.f32 %v4218, %v4236
      %v4256 = vmul.f32 %v4219, %v4236
      %v4257 = vmul.f32 %v4220, %v4236
      %v4258 = vmul.f32 %v4221, %v4236
      %v4259 = vmul.f32 %v4222, %v4236
      %v4260 = vmul.f32 %v4223, %v4236
      %v4261 = vmul.f32 %v4224, %v4236
      %v4262 = vmul.f32 %v4225, %v4236
      %v4263 = vmul.f32 %v4226, %v4236
      %v4264 = vmul.f32 %v4227, %v4236
      %v4265 = vmul.f32 %v4228, %v4236
      %v4266 = vmul.f32 %v4229, %v4236
      %v4267 = vmul.f32 %v4230, %v4236
      %v4268 = vmul.f32 %v4231, %v4236
      %v4269 = vadd.f32 %v4168, %v4237
      %v4270 = vadd.f32 %v4169, %v4238
      %v4271 = vadd.f32 %v4170, %v4239
      %v4272 = vadd.f32 %v4171, %v4240
      %v4273 = vadd.f32 %v4172, %v4241
      %v4274 = vadd.f32 %v4173, %v4242
      %v4275 = vadd.f32 %v4174, %v4243
      %v4276 = vadd.f32 %v4175, %v4244
      %v4277 = vadd.f32 %v4176, %v4245
      %v4278 = vadd.f32 %v4177, %v4246
      %v4279 = vadd.f32 %v4178, %v4247
      %v4280 = vadd.f32 %v4179, %v4248
      %v4281 = vadd.f32 %v4180, %v4249
      %v4282 = vadd.f32 %v4181, %v4250
      %v4283 = vadd.f32 %v4182, %v4251
      %v4284 = vadd.f32 %v4183, %v4252
      %v4285 = vadd.f32 %v4184, %v4253
      %v4286 = vadd.f32 %v4185, %v4254
      %v4287 = vadd.f32 %v4186, %v4255
      %v4288 = vadd.f32 %v4187, %v4256
      %v4289 = vadd.f32 %v4188, %v4257
      %v4290 = vadd.f32 %v4189, %v4258
      %v4291 = vadd.f32 %v4190, %v4259
      %v4292 = vadd.f32 %v4191, %v4260
      %v4293 = vadd.f32 %v4192, %v4261
      %v4294 = vadd.f32 %v4193, %v4262
      %v4295 = vadd.f32 %v4194, %v4263
      %v4296 = vadd.f32 %v4195, %v4264
      %v4297 = vadd.f32 %v4196, %v4265
      %v4298 = vadd.f32 %v4197, %v4266
      %v4299 = vadd.f32 %v4198, %v4267
      %v4300 = vadd.f32 %v4199, %v4268
      %v4301 = vld [vmem:[#allocation3 + $0x6] sm:$0xff]
      %v4302 = vld [vmem:[#allocation3 + $0xe] sm:$0xff]
      %v4303 = vld [vmem:[#allocation3 + $0x26] sm:$0xff]
      %v4304 = vld [vmem:[#allocation3 + $0x2e] sm:$0xff]
      %v4305 = vld [vmem:[#allocation3 + $0x46] sm:$0xff]
      %v4306 = vld [vmem:[#allocation3 + $0x4e] sm:$0xff]
      %v4307 = vld [vmem:[#allocation3 + $0x66] sm:$0xff]
      %v4308 = vld [vmem:[#allocation3 + $0x6e] sm:$0xff]
      %v4309 = vld [vmem:[#allocation3 + $0x86] sm:$0xff]
      %v4310 = vld [vmem:[#allocation3 + $0x8e] sm:$0xff]
      %v4311 = vld [vmem:[#allocation3 + $0xa6] sm:$0xff]
      %v4312 = vld [vmem:[#allocation3 + $0xae] sm:$0xff]
      %v4313 = vld [vmem:[#allocation3 + $0xc6] sm:$0xff]
      %v4314 = vld [vmem:[#allocation3 + $0xce] sm:$0xff]
      %v4315 = vld [vmem:[#allocation3 + $0xe6] sm:$0xff]
      %v4316 = vld [vmem:[#allocation3 + $0xee] sm:$0xff]
      %v4317 = vld [vmem:[#allocation3 + $0x106] sm:$0xff]
      %v4318 = vld [vmem:[#allocation3 + $0x10e] sm:$0xff]
      %v4319 = vld [vmem:[#allocation3 + $0x126] sm:$0xff]
      %v4320 = vld [vmem:[#allocation3 + $0x12e] sm:$0xff]
      %v4321 = vld [vmem:[#allocation3 + $0x146] sm:$0xff]
      %v4322 = vld [vmem:[#allocation3 + $0x14e] sm:$0xff]
      %v4323 = vld [vmem:[#allocation3 + $0x166] sm:$0xff]
      %v4324 = vld [vmem:[#allocation3 + $0x16e] sm:$0xff]
      %v4325 = vld [vmem:[#allocation3 + $0x186] sm:$0xff]
      %v4326 = vld [vmem:[#allocation3 + $0x18e] sm:$0xff]
      %v4327 = vld [vmem:[#allocation3 + $0x1a6] sm:$0xff]
      %v4328 = vld [vmem:[#allocation3 + $0x1ae] sm:$0xff]
      %v4329 = vld [vmem:[#allocation3 + $0x1c6] sm:$0xff]
      %v4330 = vld [vmem:[#allocation3 + $0x1ce] sm:$0xff]
      %v4331 = vld [vmem:[#allocation3 + $0x1e6] sm:$0xff]
      %v4332 = vld [vmem:[#allocation3 + $0x1ee] sm:$0xff]
      %v4333 = vld [vmem:[%s13 + $0x3] sm:$0x1]
      %v4334 = vlaneseq
      %v4335 = vshrl.u32 %v4334, 7
      %v4336 = vsub.s32 0, %v4335
      %v4337 = vrot.slane %v4333, %v4336
      %v4338 = vmul.f32 %v4301, %v4337
      %v4339 = vmul.f32 %v4302, %v4337
      %v4340 = vmul.f32 %v4303, %v4337
      %v4341 = vmul.f32 %v4304, %v4337
      %v4342 = vmul.f32 %v4305, %v4337
      %v4343 = vmul.f32 %v4306, %v4337
      %v4344 = vmul.f32 %v4307, %v4337
      %v4345 = vmul.f32 %v4308, %v4337
      %v4346 = vmul.f32 %v4309, %v4337
      %v4347 = vmul.f32 %v4310, %v4337
      %v4348 = vmul.f32 %v4311, %v4337
      %v4349 = vmul.f32 %v4312, %v4337
      %v4350 = vmul.f32 %v4313, %v4337
      %v4351 = vmul.f32 %v4314, %v4337
      %v4352 = vmul.f32 %v4315, %v4337
      %v4353 = vmul.f32 %v4316, %v4337
      %v4354 = vmul.f32 %v4317, %v4337
      %v4355 = vmul.f32 %v4318, %v4337
      %v4356 = vmul.f32 %v4319, %v4337
      %v4357 = vmul.f32 %v4320, %v4337
      %v4358 = vmul.f32 %v4321, %v4337
      %v4359 = vmul.f32 %v4322, %v4337
      %v4360 = vmul.f32 %v4323, %v4337
      %v4361 = vmul.f32 %v4324, %v4337
      %v4362 = vmul.f32 %v4325, %v4337
      %v4363 = vmul.f32 %v4326, %v4337
      %v4364 = vmul.f32 %v4327, %v4337
      %v4365 = vmul.f32 %v4328, %v4337
      %v4366 = vmul.f32 %v4329, %v4337
      %v4367 = vmul.f32 %v4330, %v4337
      %v4368 = vmul.f32 %v4331, %v4337
      %v4369 = vmul.f32 %v4332, %v4337
      %v4370 = vadd.f32 %v4269, %v4338
      %v4371 = vadd.f32 %v4270, %v4339
      %v4372 = vadd.f32 %v4271, %v4340
      %v4373 = vadd.f32 %v4272, %v4341
      %v4374 = vadd.f32 %v4273, %v4342
      %v4375 = vadd.f32 %v4274, %v4343
      %v4376 = vadd.f32 %v4275, %v4344
      %v4377 = vadd.f32 %v4276, %v4345
      %v4378 = vadd.f32 %v4277, %v4346
      %v4379 = vadd.f32 %v4278, %v4347
      %v4380 = vadd.f32 %v4279, %v4348
      %v4381 = vadd.f32 %v4280, %v4349
      %v4382 = vadd.f32 %v4281, %v4350
      %v4383 = vadd.f32 %v4282, %v4351
      %v4384 = vadd.f32 %v4283, %v4352
      %v4385 = vadd.f32 %v4284, %v4353
      %v4386 = vadd.f32 %v4285, %v4354
      %v4387 = vadd.f32 %v4286, %v4355
      %v4388 = vadd.f32 %v4287, %v4356
      %v4389 = vadd.f32 %v4288, %v4357
      %v4390 = vadd.f32 %v4289, %v4358
      %v4391 = vadd.f32 %v4290, %v4359
      %v4392 = vadd.f32 %v4291, %v4360
      %v4393 = vadd.f32 %v4292, %v4361
      %v4394 = vadd.f32 %v4293, %v4362
      %v4395 = vadd.f32 %v4294, %v4363
      %v4396 = vadd.f32 %v4295, %v4364
      %v4397 = vadd.f32 %v4296, %v4365
      %v4398 = vadd.f32 %v4297, %v4366
      %v4399 = vadd.f32 %v4298, %v4367
      %v4400 = vadd.f32 %v4299, %v4368
      %v4401 = vadd.f32 %v4300, %v4369
      %v4402 = vld [vmem:[#allocation3 + $0x7] sm:$0xff]
      %v4403 = vld [vmem:[#allocation3 + $0xf] sm:$0xff]
      %v4404 = vld [vmem:[#allocation3 + $0x27] sm:$0xff]
      %v4405 = vld [vmem:[#allocation3 + $0x2f] sm:$0xff]
      %v4406 = vld [vmem:[#allocation3 + $0x47] sm:$0xff]
      %v4407 = vld [vmem:[#allocation3 + $0x4f] sm:$0xff]
      %v4408 = vld [vmem:[#allocation3 + $0x67] sm:$0xff]
      %v4409 = vld [vmem:[#allocation3 + $0x6f] sm:$0xff]
      %v4410 = vld [vmem:[#allocation3 + $0x87] sm:$0xff]
      %v4411 = vld [vmem:[#allocation3 + $0x8f] sm:$0xff]
      %v4412 = vld [vmem:[#allocation3 + $0xa7] sm:$0xff]
      %v4413 = vld [vmem:[#allocation3 + $0xaf] sm:$0xff]
      %v4414 = vld [vmem:[#allocation3 + $0xc7] sm:$0xff]
      %v4415 = vld [vmem:[#allocation3 + $0xcf] sm:$0xff]
      %v4416 = vld [vmem:[#allocation3 + $0xe7] sm:$0xff]
      %v4417 = vld [vmem:[#allocation3 + $0xef] sm:$0xff]
      %v4418 = vld [vmem:[#allocation3 + $0x107] sm:$0xff]
      %v4419 = vld [vmem:[#allocation3 + $0x10f] sm:$0xff]
      %v4420 = vld [vmem:[#allocation3 + $0x127] sm:$0xff]
      %v4421 = vld [vmem:[#allocation3 + $0x12f] sm:$0xff]
      %v4422 = vld [vmem:[#allocation3 + $0x147] sm:$0xff]
      %v4423 = vld [vmem:[#allocation3 + $0x14f] sm:$0xff]
      %v4424 = vld [vmem:[#allocation3 + $0x167] sm:$0xff]
      %v4425 = vld [vmem:[#allocation3 + $0x16f] sm:$0xff]
      %v4426 = vld [vmem:[#allocation3 + $0x187] sm:$0xff]
      %v4427 = vld [vmem:[#allocation3 + $0x18f] sm:$0xff]
      %v4428 = vld [vmem:[#allocation3 + $0x1a7] sm:$0xff]
      %v4429 = vld [vmem:[#allocation3 + $0x1af] sm:$0xff]
      %v4430 = vld [vmem:[#allocation3 + $0x1c7] sm:$0xff]
      %v4431 = vld [vmem:[#allocation3 + $0x1cf] sm:$0xff]
      %v4432 = vld [vmem:[#allocation3 + $0x1e7] sm:$0xff]
      %v4433 = vld [vmem:[#allocation3 + $0x1ef] sm:$0xff]
      %v4434 = vld [vmem:[%s13 + $0x4] sm:$0x1]
      %v4435 = vlaneseq
      %v4436 = vshrl.u32 %v4435, 7
      %v4437 = vsub.s32 0, %v4436
      %v4438 = vrot.slane %v4434, %v4437
      %v4439 = vmul.f32 %v4402, %v4438
      %v4440 = vmul.f32 %v4403, %v4438
      %v4441 = vmul.f32 %v4404, %v4438
      %v4442 = vmul.f32 %v4405, %v4438
      %v4443 = vmul.f32 %v4406, %v4438
      %v4444 = vmul.f32 %v4407, %v4438
      %v4445 = vmul.f32 %v4408, %v4438
      %v4446 = vmul.f32 %v4409, %v4438
      %v4447 = vmul.f32 %v4410, %v4438
      %v4448 = vmul.f32 %v4411, %v4438
      %v4449 = vmul.f32 %v4412, %v4438
      %v4450 = vmul.f32 %v4413, %v4438
      %v4451 = vmul.f32 %v4414, %v4438
      %v4452 = vmul.f32 %v4415, %v4438
      %v4453 = vmul.f32 %v4416, %v4438
      %v4454 = vmul.f32 %v4417, %v4438
      %v4455 = vmul.f32 %v4418, %v4438
      %v4456 = vmul.f32 %v4419, %v4438
      %v4457 = vmul.f32 %v4420, %v4438
      %v4458 = vmul.f32 %v4421, %v4438
      %v4459 = vmul.f32 %v4422, %v4438
      %v4460 = vmul.f32 %v4423, %v4438
      %v4461 = vmul.f32 %v4424, %v4438
      %v4462 = vmul.f32 %v4425, %v4438
      %v4463 = vmul.f32 %v4426, %v4438
      %v4464 = vmul.f32 %v4427, %v4438
      %v4465 = vmul.f32 %v4428, %v4438
      %v4466 = vmul.f32 %v4429, %v4438
      %v4467 = vmul.f32 %v4430, %v4438
      %v4468 = vmul.f32 %v4431, %v4438
      %v4469 = vmul.f32 %v4432, %v4438
      %v4470 = vmul.f32 %v4433, %v4438
      %v4471 = vadd.f32 %v4370, %v4439
      %v4472 = vadd.f32 %v4371, %v4440
      %v4473 = vadd.f32 %v4372, %v4441
      %v4474 = vadd.f32 %v4373, %v4442
      %v4475 = vadd.f32 %v4374, %v4443
      %v4476 = vadd.f32 %v4375, %v4444
      %v4477 = vadd.f32 %v4376, %v4445
      %v4478 = vadd.f32 %v4377, %v4446
      %v4479 = vadd.f32 %v4378, %v4447
      %v4480 = vadd.f32 %v4379, %v4448
      %v4481 = vadd.f32 %v4380, %v4449
      %v4482 = vadd.f32 %v4381, %v4450
      %v4483 = vadd.f32 %v4382, %v4451
      %v4484 = vadd.f32 %v4383, %v4452
      %v4485 = vadd.f32 %v4384, %v4453
      %v4486 = vadd.f32 %v4385, %v4454
      %v4487 = vadd.f32 %v4386, %v4455
      %v4488 = vadd.f32 %v4387, %v4456
      %v4489 = vadd.f32 %v4388, %v4457
      %v4490 = vadd.f32 %v4389, %v4458
      %v4491 = vadd.f32 %v4390, %v4459
      %v4492 = vadd.f32 %v4391, %v4460
      %v4493 = vadd.f32 %v4392, %v4461
      %v4494 = vadd.f32 %v4393, %v4462
      %v4495 = vadd.f32 %v4394, %v4463
      %v4496 = vadd.f32 %v4395, %v4464
      %v4497 = vadd.f32 %v4396, %v4465
      %v4498 = vadd.f32 %v4397, %v4466
      %v4499 = vadd.f32 %v4398, %v4467
      %v4500 = vadd.f32 %v4399, %v4468
      %v4501 = vadd.f32 %v4400, %v4469
      %v4502 = vadd.f32 %v4401, %v4470
      %v4503 = vld [vmem:[#allocation3 + $0x8] sm:$0xff]
      %v4504 = vld [vmem:[#allocation3 + $0x10] sm:$0xff]
      %v4505 = vld [vmem:[#allocation3 + $0x28] sm:$0xff]
      %v4506 = vld [vmem:[#allocation3 + $0x30] sm:$0xff]
      %v4507 = vld [vmem:[#allocation3 + $0x48] sm:$0xff]
      %v4508 = vld [vmem:[#allocation3 + $0x50] sm:$0xff]
      %v4509 = vld [vmem:[#allocation3 + $0x68] sm:$0xff]
      %v4510 = vld [vmem:[#allocation3 + $0x70] sm:$0xff]
      %v4511 = vld [vmem:[#allocation3 + $0x88] sm:$0xff]
      %v4512 = vld [vmem:[#allocation3 + $0x90] sm:$0xff]
      %v4513 = vld [vmem:[#allocation3 + $0xa8] sm:$0xff]
      %v4514 = vld [vmem:[#allocation3 + $0xb0] sm:$0xff]
      %v4515 = vld [vmem:[#allocation3 + $0xc8] sm:$0xff]
      %v4516 = vld [vmem:[#allocation3 + $0xd0] sm:$0xff]
      %v4517 = vld [vmem:[#allocation3 + $0xe8] sm:$0xff]
      %v4518 = vld [vmem:[#allocation3 + $0xf0] sm:$0xff]
      %v4519 = vld [vmem:[#allocation3 + $0x108] sm:$0xff]
      %v4520 = vld [vmem:[#allocation3 + $0x110] sm:$0xff]
      %v4521 = vld [vmem:[#allocation3 + $0x128] sm:$0xff]
      %v4522 = vld [vmem:[#allocation3 + $0x130] sm:$0xff]
      %v4523 = vld [vmem:[#allocation3 + $0x148] sm:$0xff]
      %v4524 = vld [vmem:[#allocation3 + $0x150] sm:$0xff]
      %v4525 = vld [vmem:[#allocation3 + $0x168] sm:$0xff]
      %v4526 = vld [vmem:[#allocation3 + $0x170] sm:$0xff]
      %v4527 = vld [vmem:[#allocation3 + $0x188] sm:$0xff]
      %v4528 = vld [vmem:[#allocation3 + $0x190] sm:$0xff]
      %v4529 = vld [vmem:[#allocation3 + $0x1a8] sm:$0xff]
      %v4530 = vld [vmem:[#allocation3 + $0x1b0] sm:$0xff]
      %v4531 = vld [vmem:[#allocation3 + $0x1c8] sm:$0xff]
      %v4532 = vld [vmem:[#allocation3 + $0x1d0] sm:$0xff]
      %v4533 = vld [vmem:[#allocation3 + $0x1e8] sm:$0xff]
      %v4534 = vld [vmem:[#allocation3 + $0x1f0] sm:$0xff]
      %v4535 = vld [vmem:[%s13 + $0x5] sm:$0x1]
      %v4536 = vlaneseq
      %v4537 = vshrl.u32 %v4536, 7
      %v4538 = vsub.s32 0, %v4537
      %v4539 = vrot.slane %v4535, %v4538
      %v4540 = vmul.f32 %v4503, %v4539
      %v4541 = vmul.f32 %v4504, %v4539
      %v4542 = vmul.f32 %v4505, %v4539
      %v4543 = vmul.f32 %v4506, %v4539
      %v4544 = vmul.f32 %v4507, %v4539
      %v4545 = vmul.f32 %v4508, %v4539
      %v4546 = vmul.f32 %v4509, %v4539
      %v4547 = vmul.f32 %v4510, %v4539
      %v4548 = vmul.f32 %v4511, %v4539
      %v4549 = vmul.f32 %v4512, %v4539
      %v4550 = vmul.f32 %v4513, %v4539
      %v4551 = vmul.f32 %v4514, %v4539
      %v4552 = vmul.f32 %v4515, %v4539
      %v4553 = vmul.f32 %v4516, %v4539
      %v4554 = vmul.f32 %v4517, %v4539
      %v4555 = vmul.f32 %v4518, %v4539
      %v4556 = vmul.f32 %v4519, %v4539
      %v4557 = vmul.f32 %v4520, %v4539
      %v4558 = vmul.f32 %v4521, %v4539
      %v4559 = vmul.f32 %v4522, %v4539
      %v4560 = vmul.f32 %v4523, %v4539
      %v4561 = vmul.f32 %v4524, %v4539
      %v4562 = vmul.f32 %v4525, %v4539
      %v4563 = vmul.f32 %v4526, %v4539
      %v4564 = vmul.f32 %v4527, %v4539
      %v4565 = vmul.f32 %v4528, %v4539
      %v4566 = vmul.f32 %v4529, %v4539
      %v4567 = vmul.f32 %v4530, %v4539
      %v4568 = vmul.f32 %v4531, %v4539
      %v4569 = vmul.f32 %v4532, %v4539
      %v4570 = vmul.f32 %v4533, %v4539
      %v4571 = vmul.f32 %v4534, %v4539
      %v4572 = vadd.f32 %v4471, %v4540
      %v4573 = vadd.f32 %v4472, %v4541
      %v4574 = vadd.f32 %v4473, %v4542
      %v4575 = vadd.f32 %v4474, %v4543
      %v4576 = vadd.f32 %v4475, %v4544
      %v4577 = vadd.f32 %v4476, %v4545
      %v4578 = vadd.f32 %v4477, %v4546
      %v4579 = vadd.f32 %v4478, %v4547
      %v4580 = vadd.f32 %v4479, %v4548
      %v4581 = vadd.f32 %v4480, %v4549
      %v4582 = vadd.f32 %v4481, %v4550
      %v4583 = vadd.f32 %v4482, %v4551
      %v4584 = vadd.f32 %v4483, %v4552
      %v4585 = vadd.f32 %v4484, %v4553
      %v4586 = vadd.f32 %v4485, %v4554
      %v4587 = vadd.f32 %v4486, %v4555
      %v4588 = vadd.f32 %v4487, %v4556
      %v4589 = vadd.f32 %v4488, %v4557
      %v4590 = vadd.f32 %v4489, %v4558
      %v4591 = vadd.f32 %v4490, %v4559
      %v4592 = vadd.f32 %v4491, %v4560
      %v4593 = vadd.f32 %v4492, %v4561
      %v4594 = vadd.f32 %v4493, %v4562
      %v4595 = vadd.f32 %v4494, %v4563
      %v4596 = vadd.f32 %v4495, %v4564
      %v4597 = vadd.f32 %v4496, %v4565
      %v4598 = vadd.f32 %v4497, %v4566
      %v4599 = vadd.f32 %v4498, %v4567
      %v4600 = vadd.f32 %v4499, %v4568
      %v4601 = vadd.f32 %v4500, %v4569
      %v4602 = vadd.f32 %v4501, %v4570
      %v4603 = vadd.f32 %v4502, %v4571
      %v4604 = vld [vmem:[#allocation3 + $0x9] sm:$0xff]
      %v4605 = vld [vmem:[#allocation3 + $0x11] sm:$0xff]
      %v4606 = vld [vmem:[#allocation3 + $0x29] sm:$0xff]
      %v4607 = vld [vmem:[#allocation3 + $0x31] sm:$0xff]
      %v4608 = vld [vmem:[#allocation3 + $0x49] sm:$0xff]
      %v4609 = vld [vmem:[#allocation3 + $0x51] sm:$0xff]
      %v4610 = vld [vmem:[#allocation3 + $0x69] sm:$0xff]
      %v4611 = vld [vmem:[#allocation3 + $0x71] sm:$0xff]
      %v4612 = vld [vmem:[#allocation3 + $0x89] sm:$0xff]
      %v4613 = vld [vmem:[#allocation3 + $0x91] sm:$0xff]
      %v4614 = vld [vmem:[#allocation3 + $0xa9] sm:$0xff]
      %v4615 = vld [vmem:[#allocation3 + $0xb1] sm:$0xff]
      %v4616 = vld [vmem:[#allocation3 + $0xc9] sm:$0xff]
      %v4617 = vld [vmem:[#allocation3 + $0xd1] sm:$0xff]
      %v4618 = vld [vmem:[#allocation3 + $0xe9] sm:$0xff]
      %v4619 = vld [vmem:[#allocation3 + $0xf1] sm:$0xff]
      %v4620 = vld [vmem:[#allocation3 + $0x109] sm:$0xff]
      %v4621 = vld [vmem:[#allocation3 + $0x111] sm:$0xff]
      %v4622 = vld [vmem:[#allocation3 + $0x129] sm:$0xff]
      %v4623 = vld [vmem:[#allocation3 + $0x131] sm:$0xff]
      %v4624 = vld [vmem:[#allocation3 + $0x149] sm:$0xff]
      %v4625 = vld [vmem:[#allocation3 + $0x151] sm:$0xff]
      %v4626 = vld [vmem:[#allocation3 + $0x169] sm:$0xff]
      %v4627 = vld [vmem:[#allocation3 + $0x171] sm:$0xff]
      %v4628 = vld [vmem:[#allocation3 + $0x189] sm:$0xff]
      %v4629 = vld [vmem:[#allocation3 + $0x191] sm:$0xff]
      %v4630 = vld [vmem:[#allocation3 + $0x1a9] sm:$0xff]
      %v4631 = vld [vmem:[#allocation3 + $0x1b1] sm:$0xff]
      %v4632 = vld [vmem:[#allocation3 + $0x1c9] sm:$0xff]
      %v4633 = vld [vmem:[#allocation3 + $0x1d1] sm:$0xff]
      %v4634 = vld [vmem:[#allocation3 + $0x1e9] sm:$0xff]
      %v4635 = vld [vmem:[#allocation3 + $0x1f1] sm:$0xff]
      %v4636 = vld [vmem:[%s13 + $0x6] sm:$0x1]
      %v4637 = vlaneseq
      %v4638 = vshrl.u32 %v4637, 7
      %v4639 = vsub.s32 0, %v4638
      %v4640 = vrot.slane %v4636, %v4639
      %v4641 = vmul.f32 %v4604, %v4640
      %v4642 = vmul.f32 %v4605, %v4640
      %v4643 = vmul.f32 %v4606, %v4640
      %v4644 = vmul.f32 %v4607, %v4640
      %v4645 = vmul.f32 %v4608, %v4640
      %v4646 = vmul.f32 %v4609, %v4640
      %v4647 = vmul.f32 %v4610, %v4640
      %v4648 = vmul.f32 %v4611, %v4640
      %v4649 = vmul.f32 %v4612, %v4640
      %v4650 = vmul.f32 %v4613, %v4640
      %v4651 = vmul.f32 %v4614, %v4640
      %v4652 = vmul.f32 %v4615, %v4640
      %v4653 = vmul.f32 %v4616, %v4640
      %v4654 = vmul.f32 %v4617, %v4640
      %v4655 = vmul.f32 %v4618, %v4640
      %v4656 = vmul.f32 %v4619, %v4640
      %v4657 = vmul.f32 %v4620, %v4640
      %v4658 = vmul.f32 %v4621, %v4640
      %v4659 = vmul.f32 %v4622, %v4640
      %v4660 = vmul.f32 %v4623, %v4640
      %v4661 = vmul.f32 %v4624, %v4640
      %v4662 = vmul.f32 %v4625, %v4640
      %v4663 = vmul.f32 %v4626, %v4640
      %v4664 = vmul.f32 %v4627, %v4640
      %v4665 = vmul.f32 %v4628, %v4640
      %v4666 = vmul.f32 %v4629, %v4640
      %v4667 = vmul.f32 %v4630, %v4640
      %v4668 = vmul.f32 %v4631, %v4640
      %v4669 = vmul.f32 %v4632, %v4640
      %v4670 = vmul.f32 %v4633, %v4640
      %v4671 = vmul.f32 %v4634, %v4640
      %v4672 = vmul.f32 %v4635, %v4640
      %v4673 = vadd.f32 %v4572, %v4641
      %v4674 = vadd.f32 %v4573, %v4642
      %v4675 = vadd.f32 %v4574, %v4643
      %v4676 = vadd.f32 %v4575, %v4644
      %v4677 = vadd.f32 %v4576, %v4645
      %v4678 = vadd.f32 %v4577, %v4646
      %v4679 = vadd.f32 %v4578, %v4647
      %v4680 = vadd.f32 %v4579, %v4648
      %v4681 = vadd.f32 %v4580, %v4649
      %v4682 = vadd.f32 %v4581, %v4650
      %v4683 = vadd.f32 %v4582, %v4651
      %v4684 = vadd.f32 %v4583, %v4652
      %v4685 = vadd.f32 %v4584, %v4653
      %v4686 = vadd.f32 %v4585, %v4654
      %v4687 = vadd.f32 %v4586, %v4655
      %v4688 = vadd.f32 %v4587, %v4656
      %v4689 = vadd.f32 %v4588, %v4657
      %v4690 = vadd.f32 %v4589, %v4658
      %v4691 = vadd.f32 %v4590, %v4659
      %v4692 = vadd.f32 %v4591, %v4660
      %v4693 = vadd.f32 %v4592, %v4661
      %v4694 = vadd.f32 %v4593, %v4662
      %v4695 = vadd.f32 %v4594, %v4663
      %v4696 = vadd.f32 %v4595, %v4664
      %v4697 = vadd.f32 %v4596, %v4665
      %v4698 = vadd.f32 %v4597, %v4666
      %v4699 = vadd.f32 %v4598, %v4667
      %v4700 = vadd.f32 %v4599, %v4668
      %v4701 = vadd.f32 %v4600, %v4669
      %v4702 = vadd.f32 %v4601, %v4670
      %v4703 = vadd.f32 %v4602, %v4671
      %v4704 = vadd.f32 %v4603, %v4672
      %v4705 = vld [vmem:[#allocation3 + $0xa] sm:$0xff]
      %v4706 = vld [vmem:[#allocation3 + $0x12] sm:$0xff]
      %v4707 = vld [vmem:[#allocation3 + $0x2a] sm:$0xff]
      %v4708 = vld [vmem:[#allocation3 + $0x32] sm:$0xff]
      %v4709 = vld [vmem:[#allocation3 + $0x4a] sm:$0xff]
      %v4710 = vld [vmem:[#allocation3 + $0x52] sm:$0xff]
      %v4711 = vld [vmem:[#allocation3 + $0x6a] sm:$0xff]
      %v4712 = vld [vmem:[#allocation3 + $0x72] sm:$0xff]
      %v4713 = vld [vmem:[#allocation3 + $0x8a] sm:$0xff]
      %v4714 = vld [vmem:[#allocation3 + $0x92] sm:$0xff]
      %v4715 = vld [vmem:[#allocation3 + $0xaa] sm:$0xff]
      %v4716 = vld [vmem:[#allocation3 + $0xb2] sm:$0xff]
      %v4717 = vld [vmem:[#allocation3 + $0xca] sm:$0xff]
      %v4718 = vld [vmem:[#allocation3 + $0xd2] sm:$0xff]
      %v4719 = vld [vmem:[#allocation3 + $0xea] sm:$0xff]
      %v4720 = vld [vmem:[#allocation3 + $0xf2] sm:$0xff]
      %v4721 = vld [vmem:[#allocation3 + $0x10a] sm:$0xff]
      %v4722 = vld [vmem:[#allocation3 + $0x112] sm:$0xff]
      %v4723 = vld [vmem:[#allocation3 + $0x12a] sm:$0xff]
      %v4724 = vld [vmem:[#allocation3 + $0x132] sm:$0xff]
      %v4725 = vld [vmem:[#allocation3 + $0x14a] sm:$0xff]
      %v4726 = vld [vmem:[#allocation3 + $0x152] sm:$0xff]
      %v4727 = vld [vmem:[#allocation3 + $0x16a] sm:$0xff]
      %v4728 = vld [vmem:[#allocation3 + $0x172] sm:$0xff]
      %v4729 = vld [vmem:[#allocation3 + $0x18a] sm:$0xff]
      %v4730 = vld [vmem:[#allocation3 + $0x192] sm:$0xff]
      %v4731 = vld [vmem:[#allocation3 + $0x1aa] sm:$0xff]
      %v4732 = vld [vmem:[#allocation3 + $0x1b2] sm:$0xff]
      %v4733 = vld [vmem:[#allocation3 + $0x1ca] sm:$0xff]
      %v4734 = vld [vmem:[#allocation3 + $0x1d2] sm:$0xff]
      %v4735 = vld [vmem:[#allocation3 + $0x1ea] sm:$0xff]
      %v4736 = vld [vmem:[#allocation3 + $0x1f2] sm:$0xff]
      %v4737 = vld [vmem:[%s13 + $0x7] sm:$0x1]
      %v4738 = vlaneseq
      %v4739 = vshrl.u32 %v4738, 7
      %v4740 = vsub.s32 0, %v4739
      %v4741 = vrot.slane %v4737, %v4740
      %v4742 = vmul.f32 %v4705, %v4741
      %v4743 = vmul.f32 %v4706, %v4741
      %v4744 = vmul.f32 %v4707, %v4741
      %v4745 = vmul.f32 %v4708, %v4741
      %v4746 = vmul.f32 %v4709, %v4741
      %v4747 = vmul.f32 %v4710, %v4741
      %v4748 = vmul.f32 %v4711, %v4741
      %v4749 = vmul.f32 %v4712, %v4741
      %v4750 = vmul.f32 %v4713, %v4741
      %v4751 = vmul.f32 %v4714, %v4741
      %v4752 = vmul.f32 %v4715, %v4741
      %v4753 = vmul.f32 %v4716, %v4741
      %v4754 = vmul.f32 %v4717, %v4741
      %v4755 = vmul.f32 %v4718, %v4741
      %v4756 = vmul.f32 %v4719, %v4741
      %v4757 = vmul.f32 %v4720, %v4741
      %v4758 = vmul.f32 %v4721, %v4741
      %v4759 = vmul.f32 %v4722, %v4741
      %v4760 = vmul.f32 %v4723, %v4741
      %v4761 = vmul.f32 %v4724, %v4741
      %v4762 = vmul.f32 %v4725, %v4741
      %v4763 = vmul.f32 %v4726, %v4741
      %v4764 = vmul.f32 %v4727, %v4741
      %v4765 = vmul.f32 %v4728, %v4741
      %v4766 = vmul.f32 %v4729, %v4741
      %v4767 = vmul.f32 %v4730, %v4741
      %v4768 = vmul.f32 %v4731, %v4741
      %v4769 = vmul.f32 %v4732, %v4741
      %v4770 = vmul.f32 %v4733, %v4741
      %v4771 = vmul.f32 %v4734, %v4741
      %v4772 = vmul.f32 %v4735, %v4741
      %v4773 = vmul.f32 %v4736, %v4741
      %v4774 = vadd.f32 %v4673, %v4742
      %v4775 = vadd.f32 %v4674, %v4743
      %v4776 = vadd.f32 %v4675, %v4744
      %v4777 = vadd.f32 %v4676, %v4745
      %v4778 = vadd.f32 %v4677, %v4746
      %v4779 = vadd.f32 %v4678, %v4747
      %v4780 = vadd.f32 %v4679, %v4748
      %v4781 = vadd.f32 %v4680, %v4749
      %v4782 = vadd.f32 %v4681, %v4750
      %v4783 = vadd.f32 %v4682, %v4751
      %v4784 = vadd.f32 %v4683, %v4752
      %v4785 = vadd.f32 %v4684, %v4753
      %v4786 = vadd.f32 %v4685, %v4754
      %v4787 = vadd.f32 %v4686, %v4755
      %v4788 = vadd.f32 %v4687, %v4756
      %v4789 = vadd.f32 %v4688, %v4757
      %v4790 = vadd.f32 %v4689, %v4758
      %v4791 = vadd.f32 %v4690, %v4759
      %v4792 = vadd.f32 %v4691, %v4760
      %v4793 = vadd.f32 %v4692, %v4761
      %v4794 = vadd.f32 %v4693, %v4762
      %v4795 = vadd.f32 %v4694, %v4763
      %v4796 = vadd.f32 %v4695, %v4764
      %v4797 = vadd.f32 %v4696, %v4765
      %v4798 = vadd.f32 %v4697, %v4766
      %v4799 = vadd.f32 %v4698, %v4767
      %v4800 = vadd.f32 %v4699, %v4768
      %v4801 = vadd.f32 %v4700, %v4769
      %v4802 = vadd.f32 %v4701, %v4770
      %v4803 = vadd.f32 %v4702, %v4771
      %v4804 = vadd.f32 %v4703, %v4772
      %v4805 = vadd.f32 %v4704, %v4773
      %v4806 = vld [vmem:[#allocation3 + $0x13] sm:$0xff]
      %v4807 = vld [vmem:[#allocation3 + $0x33] sm:$0xff]
      %v4808 = vld [vmem:[#allocation3 + $0x53] sm:$0xff]
      %v4809 = vld [vmem:[#allocation3 + $0x73] sm:$0xff]
      %v4810 = vld [vmem:[#allocation3 + $0x93] sm:$0xff]
      %v4811 = vld [vmem:[#allocation3 + $0xb3] sm:$0xff]
      %v4812 = vld [vmem:[#allocation3 + $0xd3] sm:$0xff]
      %v4813 = vld [vmem:[#allocation3 + $0xf3] sm:$0xff]
      %v4814 = vld [vmem:[#allocation3 + $0x113] sm:$0xff]
      %v4815 = vld [vmem:[#allocation3 + $0x133] sm:$0xff]
      %v4816 = vld [vmem:[#allocation3 + $0x153] sm:$0xff]
      %v4817 = vld [vmem:[#allocation3 + $0x173] sm:$0xff]
      %v4818 = vld [vmem:[#allocation3 + $0x193] sm:$0xff]
      %v4819 = vld [vmem:[#allocation3 + $0x1b3] sm:$0xff]
      %v4820 = vld [vmem:[#allocation3 + $0x1d3] sm:$0xff]
      %v4821 = vld [vmem:[#allocation3 + $0x1f3] sm:$0xff]
      %v4822 = vld [vmem:[%s13 + $0x8] sm:$0x1]
      %v4823 = vlaneseq
      %v4824 = vshrl.u32 %v4823, 7
      %v4825 = vsub.s32 0, %v4824
      %v4826 = vrot.slane %v4822, %v4825
      %v4827 = vmul.f32 %v4031, %v4826
      %v4828 = vmul.f32 %v4806, %v4826
      %v4829 = vmul.f32 %v4033, %v4826
      %v4830 = vmul.f32 %v4807, %v4826
      %v4831 = vmul.f32 %v4035, %v4826
      %v4832 = vmul.f32 %v4808, %v4826
      %v4833 = vmul.f32 %v4037, %v4826
      %v4834 = vmul.f32 %v4809, %v4826
      %v4835 = vmul.f32 %v4039, %v4826
      %v4836 = vmul.f32 %v4810, %v4826
      %v4837 = vmul.f32 %v4041, %v4826
      %v4838 = vmul.f32 %v4811, %v4826
      %v4839 = vmul.f32 %v4043, %v4826
      %v4840 = vmul.f32 %v4812, %v4826
      %v4841 = vmul.f32 %v4045, %v4826
      %v4842 = vmul.f32 %v4813, %v4826
      %v4843 = vmul.f32 %v4047, %v4826
      %v4844 = vmul.f32 %v4814, %v4826
      %v4845 = vmul.f32 %v4049, %v4826
      %v4846 = vmul.f32 %v4815, %v4826
      %v4847 = vmul.f32 %v4051, %v4826
      %v4848 = vmul.f32 %v4816, %v4826
      %v4849 = vmul.f32 %v4053, %v4826
      %v4850 = vmul.f32 %v4817, %v4826
      %v4851 = vmul.f32 %v4055, %v4826
      %v4852 = vmul.f32 %v4818, %v4826
      %v4853 = vmul.f32 %v4057, %v4826
      %v4854 = vmul.f32 %v4819, %v4826
      %v4855 = vmul.f32 %v4059, %v4826
      %v4856 = vmul.f32 %v4820, %v4826
      %v4857 = vmul.f32 %v4061, %v4826
      %v4858 = vmul.f32 %v4821, %v4826
      %v4859 = vadd.f32 %v4774, %v4827
      %v4860 = vadd.f32 %v4775, %v4828
      %v4861 = vadd.f32 %v4776, %v4829
      %v4862 = vadd.f32 %v4777, %v4830
      %v4863 = vadd.f32 %v4778, %v4831
      %v4864 = vadd.f32 %v4779, %v4832
      %v4865 = vadd.f32 %v4780, %v4833
      %v4866 = vadd.f32 %v4781, %v4834
      %v4867 = vadd.f32 %v4782, %v4835
      %v4868 = vadd.f32 %v4783, %v4836
      %v4869 = vadd.f32 %v4784, %v4837
      %v4870 = vadd.f32 %v4785, %v4838
      %v4871 = vadd.f32 %v4786, %v4839
      %v4872 = vadd.f32 %v4787, %v4840
      %v4873 = vadd.f32 %v4788, %v4841
      %v4874 = vadd.f32 %v4789, %v4842
      %v4875 = vadd.f32 %v4790, %v4843
      %v4876 = vadd.f32 %v4791, %v4844
      %v4877 = vadd.f32 %v4792, %v4845
      %v4878 = vadd.f32 %v4793, %v4846
      %v4879 = vadd.f32 %v4794, %v4847
      %v4880 = vadd.f32 %v4795, %v4848
      %v4881 = vadd.f32 %v4796, %v4849
      %v4882 = vadd.f32 %v4797, %v4850
      %v4883 = vadd.f32 %v4798, %v4851
      %v4884 = vadd.f32 %v4799, %v4852
      %v4885 = vadd.f32 %v4800, %v4853
      %v4886 = vadd.f32 %v4801, %v4854
      %v4887 = vadd.f32 %v4802, %v4855
      %v4888 = vadd.f32 %v4803, %v4856
      %v4889 = vadd.f32 %v4804, %v4857
      %v4890 = vadd.f32 %v4805, %v4858
      %v4891 = vld [vmem:[#allocation3 + $0x14] sm:$0xff]
      %v4892 = vld [vmem:[#allocation3 + $0x34] sm:$0xff]
      %v4893 = vld [vmem:[#allocation3 + $0x54] sm:$0xff]
      %v4894 = vld [vmem:[#allocation3 + $0x74] sm:$0xff]
      %v4895 = vld [vmem:[#allocation3 + $0x94] sm:$0xff]
      %v4896 = vld [vmem:[#allocation3 + $0xb4] sm:$0xff]
      %v4897 = vld [vmem:[#allocation3 + $0xd4] sm:$0xff]
      %v4898 = vld [vmem:[#allocation3 + $0xf4] sm:$0xff]
      %v4899 = vld [vmem:[#allocation3 + $0x114] sm:$0xff]
      %v4900 = vld [vmem:[#allocation3 + $0x134] sm:$0xff]
      %v4901 = vld [vmem:[#allocation3 + $0x154] sm:$0xff]
      %v4902 = vld [vmem:[#allocation3 + $0x174] sm:$0xff]
      %v4903 = vld [vmem:[#allocation3 + $0x194] sm:$0xff]
      %v4904 = vld [vmem:[#allocation3 + $0x1b4] sm:$0xff]
      %v4905 = vld [vmem:[#allocation3 + $0x1d4] sm:$0xff]
      %v4906 = vld [vmem:[#allocation3 + $0x1f4] sm:$0xff]
      %v4907 = vld [vmem:[%s13 + $0x9] sm:$0x1]
      %v4908 = vlaneseq
      %v4909 = vshrl.u32 %v4908, 7
      %v4910 = vsub.s32 0, %v4909
      %v4911 = vrot.slane %v4907, %v4910
      %v4912 = vmul.f32 %v4100, %v4911
      %v4913 = vmul.f32 %v4891, %v4911
      %v4914 = vmul.f32 %v4102, %v4911
      %v4915 = vmul.f32 %v4892, %v4911
      %v4916 = vmul.f32 %v4104, %v4911
      %v4917 = vmul.f32 %v4893, %v4911
      %v4918 = vmul.f32 %v4106, %v4911
      %v4919 = vmul.f32 %v4894, %v4911
      %v4920 = vmul.f32 %v4108, %v4911
      %v4921 = vmul.f32 %v4895, %v4911
      %v4922 = vmul.f32 %v4110, %v4911
      %v4923 = vmul.f32 %v4896, %v4911
      %v4924 = vmul.f32 %v4112, %v4911
      %v4925 = vmul.f32 %v4897, %v4911
      %v4926 = vmul.f32 %v4114, %v4911
      %v4927 = vmul.f32 %v4898, %v4911
      %v4928 = vmul.f32 %v4116, %v4911
      %v4929 = vmul.f32 %v4899, %v4911
      %v4930 = vmul.f32 %v4118, %v4911
      %v4931 = vmul.f32 %v4900, %v4911
      %v4932 = vmul.f32 %v4120, %v4911
      %v4933 = vmul.f32 %v4901, %v4911
      %v4934 = vmul.f32 %v4122, %v4911
      %v4935 = vmul.f32 %v4902, %v4911
      %v4936 = vmul.f32 %v4124, %v4911
      %v4937 = vmul.f32 %v4903, %v4911
      %v4938 = vmul.f32 %v4126, %v4911
      %v4939 = vmul.f32 %v4904, %v4911
      %v4940 = vmul.f32 %v4128, %v4911
      %v4941 = vmul.f32 %v4905, %v4911
      %v4942 = vmul.f32 %v4130, %v4911
      %v4943 = vmul.f32 %v4906, %v4911
      %v4944 = vadd.f32 %v4859, %v4912
      %v4945 = vadd.f32 %v4860, %v4913
      %v4946 = vadd.f32 %v4861, %v4914
      %v4947 = vadd.f32 %v4862, %v4915
      %v4948 = vadd.f32 %v4863, %v4916
      %v4949 = vadd.f32 %v4864, %v4917
      %v4950 = vadd.f32 %v4865, %v4918
      %v4951 = vadd.f32 %v4866, %v4919
      %v4952 = vadd.f32 %v4867, %v4920
      %v4953 = vadd.f32 %v4868, %v4921
      %v4954 = vadd.f32 %v4869, %v4922
      %v4955 = vadd.f32 %v4870, %v4923
      %v4956 = vadd.f32 %v4871, %v4924
      %v4957 = vadd.f32 %v4872, %v4925
      %v4958 = vadd.f32 %v4873, %v4926
      %v4959 = vadd.f32 %v4874, %v4927
      %v4960 = vadd.f32 %v4875, %v4928
      %v4961 = vadd.f32 %v4876, %v4929
      %v4962 = vadd.f32 %v4877, %v4930
      %v4963 = vadd.f32 %v4878, %v4931
      %v4964 = vadd.f32 %v4879, %v4932
      %v4965 = vadd.f32 %v4880, %v4933
      %v4966 = vadd.f32 %v4881, %v4934
      %v4967 = vadd.f32 %v4882, %v4935
      %v4968 = vadd.f32 %v4883, %v4936
      %v4969 = vadd.f32 %v4884, %v4937
      %v4970 = vadd.f32 %v4885, %v4938
      %v4971 = vadd.f32 %v4886, %v4939
      %v4972 = vadd.f32 %v4887, %v4940
      %v4973 = vadd.f32 %v4888, %v4941
      %v4974 = vadd.f32 %v4889, %v4942
      %v4975 = vadd.f32 %v4890, %v4943
      %v4976 = vld [vmem:[#allocation3 + $0x15] sm:$0xff]
      %v4977 = vld [vmem:[#allocation3 + $0x35] sm:$0xff]
      %v4978 = vld [vmem:[#allocation3 + $0x55] sm:$0xff]
      %v4979 = vld [vmem:[#allocation3 + $0x75] sm:$0xff]
      %v4980 = vld [vmem:[#allocation3 + $0x95] sm:$0xff]
      %v4981 = vld [vmem:[#allocation3 + $0xb5] sm:$0xff]
      %v4982 = vld [vmem:[#allocation3 + $0xd5] sm:$0xff]
      %v4983 = vld [vmem:[#allocation3 + $0xf5] sm:$0xff]
      %v4984 = vld [vmem:[#allocation3 + $0x115] sm:$0xff]
      %v4985 = vld [vmem:[#allocation3 + $0x135] sm:$0xff]
      %v4986 = vld [vmem:[#allocation3 + $0x155] sm:$0xff]
      %v4987 = vld [vmem:[#allocation3 + $0x175] sm:$0xff]
      %v4988 = vld [vmem:[#allocation3 + $0x195] sm:$0xff]
      %v4989 = vld [vmem:[#allocation3 + $0x1b5] sm:$0xff]
      %v4990 = vld [vmem:[#allocation3 + $0x1d5] sm:$0xff]
      %v4991 = vld [vmem:[#allocation3 + $0x1f5] sm:$0xff]
      %v4992 = vld [vmem:[%s13 + $0xa] sm:$0x1]
      %v4993 = vlaneseq
      %v4994 = vshrl.u32 %v4993, 7
      %v4995 = vsub.s32 0, %v4994
      %v4996 = vrot.slane %v4992, %v4995
      %v4997 = vmul.f32 %v4201, %v4996
      %v4998 = vmul.f32 %v4976, %v4996
      %v4999 = vmul.f32 %v4203, %v4996
      %v5000 = vmul.f32 %v4977, %v4996
      %v5001 = vmul.f32 %v4205, %v4996
      %v5002 = vmul.f32 %v4978, %v4996
      %v5003 = vmul.f32 %v4207, %v4996
      %v5004 = vmul.f32 %v4979, %v4996
      %v5005 = vmul.f32 %v4209, %v4996
      %v5006 = vmul.f32 %v4980, %v4996
      %v5007 = vmul.f32 %v4211, %v4996
      %v5008 = vmul.f32 %v4981, %v4996
      %v5009 = vmul.f32 %v4213, %v4996
      %v5010 = vmul.f32 %v4982, %v4996
      %v5011 = vmul.f32 %v4215, %v4996
      %v5012 = vmul.f32 %v4983, %v4996
      %v5013 = vmul.f32 %v4217, %v4996
      %v5014 = vmul.f32 %v4984, %v4996
      %v5015 = vmul.f32 %v4219, %v4996
      %v5016 = vmul.f32 %v4985, %v4996
      %v5017 = vmul.f32 %v4221, %v4996
      %v5018 = vmul.f32 %v4986, %v4996
      %v5019 = vmul.f32 %v4223, %v4996
      %v5020 = vmul.f32 %v4987, %v4996
      %v5021 = vmul.f32 %v4225, %v4996
      %v5022 = vmul.f32 %v4988, %v4996
      %v5023 = vmul.f32 %v4227, %v4996
      %v5024 = vmul.f32 %v4989, %v4996
      %v5025 = vmul.f32 %v4229, %v4996
      %v5026 = vmul.f32 %v4990, %v4996
      %v5027 = vmul.f32 %v4231, %v4996
      %v5028 = vmul.f32 %v4991, %v4996
      %v5029 = vadd.f32 %v4944, %v4997
      %v5030 = vadd.f32 %v4945, %v4998
      %v5031 = vadd.f32 %v4946, %v4999
      %v5032 = vadd.f32 %v4947, %v5000
      %v5033 = vadd.f32 %v4948, %v5001
      %v5034 = vadd.f32 %v4949, %v5002
      %v5035 = vadd.f32 %v4950, %v5003
      %v5036 = vadd.f32 %v4951, %v5004
      %v5037 = vadd.f32 %v4952, %v5005
      %v5038 = vadd.f32 %v4953, %v5006
      %v5039 = vadd.f32 %v4954, %v5007
      %v5040 = vadd.f32 %v4955, %v5008
      %v5041 = vadd.f32 %v4956, %v5009
      %v5042 = vadd.f32 %v4957, %v5010
      %v5043 = vadd.f32 %v4958, %v5011
      %v5044 = vadd.f32 %v4959, %v5012
      %v5045 = vadd.f32 %v4960, %v5013
      %v5046 = vadd.f32 %v4961, %v5014
      %v5047 = vadd.f32 %v4962, %v5015
      %v5048 = vadd.f32 %v4963, %v5016
      %v5049 = vadd.f32 %v4964, %v5017
      %v5050 = vadd.f32 %v4965, %v5018
      %v5051 = vadd.f32 %v4966, %v5019
      %v5052 = vadd.f32 %v4967, %v5020
      %v5053 = vadd.f32 %v4968, %v5021
      %v5054 = vadd.f32 %v4969, %v5022
      %v5055 = vadd.f32 %v4970, %v5023
      %v5056 = vadd.f32 %v4971, %v5024
      %v5057 = vadd.f32 %v4972, %v5025
      %v5058 = vadd.f32 %v4973, %v5026
      %v5059 = vadd.f32 %v4974, %v5027
      %v5060 = vadd.f32 %v4975, %v5028
      %v5061 = vld [vmem:[%s14] sm:$0x1]
      %v5063 = vlaneseq
      %v5064 = vshrl.u32 %v5063, 7
      %v5065 = vsub.s32 0, %v5064
      %v5066 = vrot.slane %v5061, %v5065
      %v5068 = vadd.f32 %v5029, %v5066
      %v5069 = vadd.f32 %v5030, %v5066
      %v5070 = vadd.f32 %v5031, %v5066
      %v5071 = vadd.f32 %v5032, %v5066
      %v5072 = vadd.f32 %v5033, %v5066
      %v5073 = vadd.f32 %v5034, %v5066
      %v5074 = vadd.f32 %v5035, %v5066
      %v5075 = vadd.f32 %v5036, %v5066
      %v5076 = vadd.f32 %v5037, %v5066
      %v5077 = vadd.f32 %v5038, %v5066
      %v5078 = vadd.f32 %v5039, %v5066
      %v5079 = vadd.f32 %v5040, %v5066
      %v5080 = vadd.f32 %v5041, %v5066
      %v5081 = vadd.f32 %v5042, %v5066
      %v5082 = vadd.f32 %v5043, %v5066
      %v5083 = vadd.f32 %v5044, %v5066
      %v5084 = vadd.f32 %v5045, %v5066
      %v5085 = vadd.f32 %v5046, %v5066
      %v5086 = vadd.f32 %v5047, %v5066
      %v5087 = vadd.f32 %v5048, %v5066
      %v5088 = vadd.f32 %v5049, %v5066
      %v5089 = vadd.f32 %v5050, %v5066
      %v5090 = vadd.f32 %v5051, %v5066
      %v5091 = vadd.f32 %v5052, %v5066
      %v5092 = vadd.f32 %v5053, %v5066
      %v5093 = vadd.f32 %v5054, %v5066
      %v5094 = vadd.f32 %v5055, %v5066
      %v5095 = vadd.f32 %v5056, %v5066
      %v5096 = vadd.f32 %v5057, %v5066
      %v5097 = vadd.f32 %v5058, %v5066
      %v5098 = vadd.f32 %v5059, %v5066
      %v5099 = vadd.f32 %v5060, %v5066
      %v5100 = vmax.f32 %v5068, 0.0
      %v5101 = vmax.f32 %v5069, 0.0
      %v5102 = vmax.f32 %v5070, 0.0
      %v5103 = vmax.f32 %v5071, 0.0
      %v5104 = vmax.f32 %v5072, 0.0
      %v5105 = vmax.f32 %v5073, 0.0
      %v5106 = vmax.f32 %v5074, 0.0
      %v5107 = vmax.f32 %v5075, 0.0
      %v5108 = vmax.f32 %v5076, 0.0
      %v5109 = vmax.f32 %v5077, 0.0
      %v5110 = vmax.f32 %v5078, 0.0
      %v5111 = vmax.f32 %v5079, 0.0
      %v5112 = vmax.f32 %v5080, 0.0
      %v5113 = vmax.f32 %v5081, 0.0
      %v5114 = vmax.f32 %v5082, 0.0
      %v5115 = vmax.f32 %v5083, 0.0
      %v5116 = vmax.f32 %v5084, 0.0
      %v5117 = vmax.f32 %v5085, 0.0
      %v5118 = vmax.f32 %v5086, 0.0
      %v5119 = vmax.f32 %v5087, 0.0
      %v5120 = vmax.f32 %v5088, 0.0
      %v5121 = vmax.f32 %v5089, 0.0
      %v5122 = vmax.f32 %v5090, 0.0
      %v5123 = vmax.f32 %v5091, 0.0
      %v5124 = vmax.f32 %v5092, 0.0
      %v5125 = vmax.f32 %v5093, 0.0
      %v5126 = vmax.f32 %v5094, 0.0
      %v5127 = vmax.f32 %v5095, 0.0
      %v5128 = vmax.f32 %v5096, 0.0
      %v5129 = vmax.f32 %v5097, 0.0
      %v5130 = vmax.f32 %v5098, 0.0
      %v5131 = vmax.f32 %v5099, 0.0
      %v5132 = vadd.f32 %v2811, %v5100
      %v5133 = vadd.f32 %v2812, %v5101
      %v5134 = vadd.f32 %v2813, %v5102
      %v5135 = vadd.f32 %v2814, %v5103
      %v5136 = vadd.f32 %v2815, %v5104
      %v5137 = vadd.f32 %v2816, %v5105
      %v5138 = vadd.f32 %v2817, %v5106
      %v5139 = vadd.f32 %v2818, %v5107
      %v5140 = vadd.f32 %v2819, %v5108
      %v5141 = vadd.f32 %v2820, %v5109
      %v5142 = vadd.f32 %v2821, %v5110
      %v5143 = vadd.f32 %v2822, %v5111
      %v5144 = vadd.f32 %v2823, %v5112
      %v5145 = vadd.f32 %v2824, %v5113
      %v5146 = vadd.f32 %v2825, %v5114
      %v5147 = vadd.f32 %v2826, %v5115
      %v5148 = vadd.f32 %v2827, %v5116
      %v5149 = vadd.f32 %v2828, %v5117
      %v5150 = vadd.f32 %v2829, %v5118
      %v5151 = vadd.f32 %v2830, %v5119
      %v5152 = vadd.f32 %v2831, %v5120
      %v5153 = vadd.f32 %v2832, %v5121
      %v5154 = vadd.f32 %v2833, %v5122
      %v5155 = vadd.f32 %v2834, %v5123
      %v5156 = vadd.f32 %v2835, %v5124
      %v5157 = vadd.f32 %v2836, %v5125
      %v5158 = vadd.f32 %v2837, %v5126
      %v5159 = vadd.f32 %v2838, %v5127
      %v5160 = vadd.f32 %v2839, %v5128
      %v5161 = vadd.f32 %v2840, %v5129
      %v5162 = vadd.f32 %v2841, %v5130
      %v5163 = vadd.f32 %v2842, %v5131
      %v5164 = vpack.c.bf16 %v5133, %v5132
      %v5165 = vpack.c.bf16 %v5135, %v5134
      %v5166 = vpack.c.bf16 %v5137, %v5136
      %v5167 = vpack.c.bf16 %v5139, %v5138
      %v5168 = vpack.c.bf16 %v5141, %v5140
      %v5169 = vpack.c.bf16 %v5143, %v5142
      %v5170 = vpack.c.bf16 %v5145, %v5144
      %v5171 = vpack.c.bf16 %v5147, %v5146
      %v5172 = vpack.c.bf16 %v5149, %v5148
      %v5173 = vpack.c.bf16 %v5151, %v5150
      %v5174 = vpack.c.bf16 %v5153, %v5152
      %v5175 = vpack.c.bf16 %v5155, %v5154
      %v5176 = vpack.c.bf16 %v5157, %v5156
      %v5177 = vpack.c.bf16 %v5159, %v5158
      %v5178 = vpack.c.bf16 %v5161, %v5160
      %v5179 = vpack.c.bf16 %v5163, %v5162
      %v5180 = vld [vmem:[%s15] sm:$0xf]
      %v5181 = vld [vmem:[%s16] sm:$0x1]
      %v5183 = vlaneseq
      %v5184 = vshrl.u32 %v5183, 7
      %v5185 = vsub.s32 0, %v5184
      %v5186 = vrot.slane %v5181, %v5185
      %v5189 = vsel %vm550, %v5164, 0
      %v5192 = vsel %vm550, %v5165, 0
      %v5195 = vsel %vm550, %v5166, 0
      %v5198 = vsel %vm550, %v5167, 0
      %v5201 = vsel %vm550, %v5168, 0
      %v5204 = vsel %vm550, %v5169, 0
      %v5207 = vsel %vm550, %v5170, 0
      %v5210 = vsel %vm550, %v5171, 0
      %v5213 = vsel %vm550, %v5172, 0
      %v5216 = vsel %vm550, %v5173, 0
      %v5219 = vsel %vm550, %v5174, 0
      %v5222 = vsel %vm550, %v5175, 0
      %v5225 = vsel %vm550, %v5176, 0
      %v5228 = vsel %vm550, %v5177, 0
      %v5231 = vsel %vm550, %v5178, 0
      %v5234 = vsel %vm550, %v5179, 0
      %vm5236 = vcmask 1043456
      %v5238 = vsel %vm5236, %v5180, 0
      %5240 = vmatprep.subr.bf16.mxu0 0
      %5241 = vmatpush1.bf16.msra.mxu0 %v5238
      %5242 = vmatprep.subr.bf16.mxu0 0
      %5243 = vmatpush1.bf16.msra.mxu0 0
      %5244 = vmatprep.subr.bf16.mxu0 0
      %5245 = vmatpush1.bf16.msra.mxu0 0
      %5246 = vmatprep.subr.bf16.mxu0 0
      %5247 = vmatpush1.bf16.msra.mxu0 0
      %5248 = vmatprep.subr.bf16.mxu0 0
      %5249 = vmatpush1.bf16.msra.mxu0 0
      %5250 = vmatprep.subr.bf16.mxu0 0
      %5251 = vmatpush1.bf16.msra.mxu0 0
      %5252 = vmatprep.subr.bf16.mxu0 0
      %5253 = vmatpush1.bf16.msra.mxu0 0
      %5254 = vmatprep.subr.bf16.mxu0 0
      %5255 = vmatpush1.bf16.msra.mxu0 0
      %5256 = vmatprep.subr.bf16.mxu0 0
      %5257 = vmatpush1.bf16.msra.mxu0 0
      %5258 = vmatprep.subr.bf16.mxu0 0
      %5259 = vmatpush1.bf16.msra.mxu0 0
      %5260 = vmatprep.subr.bf16.mxu0 0
      %5261 = vmatpush1.bf16.msra.mxu0 0
      %5262 = vmatprep.subr.bf16.mxu0 0
      %5263 = vmatpush1.bf16.msra.mxu0 0
      %5264 = vmatprep.subr.bf16.mxu0 0
      %5265 = vmatpush1.bf16.msra.mxu0 0
      %5266 = vmatprep.subr.bf16.mxu0 0
      %5267 = vmatpush1.bf16.msra.mxu0 0
      %5268 = vmatprep.subr.bf16.mxu0 0
      %5269 = vmatpush1.bf16.msra.mxu0 0
      %5270 = vmatprep.subr.bf16.mxu0 0
      %5271 = vmatpush1.bf16.msra.mxu0 0
      %5272 = vmatprep.mubr.bf16.mxu0 0
      %5273 = vmatmul.mubr.bf16.gmra.mrb[0].mxu0 %v5189
      %v5274 = vpop.f32.mrb[0].mxu0
      %v5275 = vadd.f32 %v5186, %v5274
      %v5276 = vpop.f32.mrb[0].mxu0
      %v5277 = vpop.f32.mrb[0].mxu0
      %v5278 = vadd.f32 %v5186, %v5277
      %v5279 = vpop.f32.mrb[0].mxu0
      %5280 = vmatprep.mubr.bf16.mxu0 0
      %5281 = vmatmul.mubr.bf16.gmra.mrb[0].mxu0 %v5192
      %v5282 = vpop.f32.mrb[0].mxu0
      %v5283 = vadd.f32 %v5186, %v5282
      %v5284 = vpop.f32.mrb[0].mxu0
      %v5285 = vpop.f32.mrb[0].mxu0
      %v5286 = vadd.f32 %v5186, %v5285
      %v5287 = vpop.f32.mrb[0].mxu0
      %5288 = vmatprep.mubr.bf16.mxu0 0
      %5289 = vmatmul.mubr.bf16.gmra.mrb[0].mxu0 %v5195
      %v5290 = vpop.f32.mrb[0].mxu0
      %v5291 = vadd.f32 %v5186, %v5290
      %v5292 = vpop.f32.mrb[0].mxu0
      %v5293 = vpop.f32.mrb[0].mxu0
      %v5294 = vadd.f32 %v5186, %v5293
      %v5295 = vpop.f32.mrb[0].mxu0
      %5296 = vmatprep.mubr.bf16.mxu0 0
      %5297 = vmatmul.mubr.bf16.gmra.mrb[0].mxu0 %v5198
      %v5298 = vpop.f32.mrb[0].mxu0
      %v5299 = vadd.f32 %v5186, %v5298
      %v5300 = vpop.f32.mrb[0].mxu0
      %v5301 = vpop.f32.mrb[0].mxu0
      %v5302 = vadd.f32 %v5186, %v5301
      %v5303 = vpop.f32.mrb[0].mxu0
      %5304 = vmatprep.mubr.bf16.mxu0 0
      %5305 = vmatmul.mubr.bf16.gmra.mrb[0].mxu0 %v5201
      %v5306 = vpop.f32.mrb[0].mxu0
      %v5307 = vadd.f32 %v5186, %v5306
      %v5308 = vpop.f32.mrb[0].mxu0
      %v5309 = vpop.f32.mrb[0].mxu0
      %v5310 = vadd.f32 %v5186, %v5309
      %v5311 = vpop.f32.mrb[0].mxu0
      %5312 = vmatprep.mubr.bf16.mxu0 0
      %5313 = vmatmul.mubr.bf16.gmra.mrb[0].mxu0 %v5204
      %v5314 = vpop.f32.mrb[0].mxu0
      %v5315 = vadd.f32 %v5186, %v5314
      %v5316 = vpop.f32.mrb[0].mxu0
      %v5317 = vpop.f32.mrb[0].mxu0
      %v5318 = vadd.f32 %v5186, %v5317
      %v5319 = vpop.f32.mrb[0].mxu0
      %5320 = vmatprep.mubr.bf16.mxu0 0
      %5321 = vmatmul.mubr.bf16.gmra.mrb[0].mxu0 %v5207
      %v5322 = vpop.f32.mrb[0].mxu0
      %v5323 = vadd.f32 %v5186, %v5322
      %v5324 = vpop.f32.mrb[0].mxu0
      %v5325 = vpop.f32.mrb[0].mxu0
      %v5326 = vadd.f32 %v5186, %v5325
      %v5327 = vpop.f32.mrb[0].mxu0
      %5328 = vmatprep.mubr.bf16.mxu0 0
      %5329 = vmatmul.mubr.bf16.gmra.mrb[0].mxu0 %v5210
      %v5330 = vpop.f32.mrb[0].mxu0
      %v5331 = vadd.f32 %v5186, %v5330
      %v5332 = vpop.f32.mrb[0].mxu0
      %v5333 = vpop.f32.mrb[0].mxu0
      %v5334 = vadd.f32 %v5186, %v5333
      %v5335 = vpop.f32.mrb[0].mxu0
      %5336 = vmatprep.mubr.bf16.mxu0 0
      %5337 = vmatmul.mubr.bf16.gmra.mrb[0].mxu0 %v5213
      %v5338 = vpop.f32.mrb[0].mxu0
      %v5339 = vadd.f32 %v5186, %v5338
      %v5340 = vpop.f32.mrb[0].mxu0
      %v5341 = vpop.f32.mrb[0].mxu0
      %v5342 = vadd.f32 %v5186, %v5341
      %v5343 = vpop.f32.mrb[0].mxu0
      %5344 = vmatprep.mubr.bf16.mxu0 0
      %5345 = vmatmul.mubr.bf16.gmra.mrb[0].mxu0 %v5216
      %v5346 = vpop.f32.mrb[0].mxu0
      %v5347 = vadd.f32 %v5186, %v5346
      %v5348 = vpop.f32.mrb[0].mxu0
      %v5349 = vpop.f32.mrb[0].mxu0
      %v5350 = vadd.f32 %v5186, %v5349
      %v5351 = vpop.f32.mrb[0].mxu0
      %5352 = vmatprep.mubr.bf16.mxu0 0
      %5353 = vmatmul.mubr.bf16.gmra.mrb[0].mxu0 %v5219
      %v5354 = vpop.f32.mrb[0].mxu0
      %v5355 = vadd.f32 %v5186, %v5354
      %v5356 = vpop.f32.mrb[0].mxu0
      %v5357 = vpop.f32.mrb[0].mxu0
      %v5358 = vadd.f32 %v5186, %v5357
      %v5359 = vpop.f32.mrb[0].mxu0
      %5360 = vmatprep.mubr.bf16.mxu0 0
      %5361 = vmatmul.mubr.bf16.gmra.mrb[0].mxu0 %v5222
      %v5362 = vpop.f32.mrb[0].mxu0
      %v5363 = vadd.f32 %v5186, %v5362
      %v5364 = vpop.f32.mrb[0].mxu0
      %v5365 = vpop.f32.mrb[0].mxu0
      %v5366 = vadd.f32 %v5186, %v5365
      %v5367 = vpop.f32.mrb[0].mxu0
      %5368 = vmatprep.mubr.bf16.mxu0 0
      %5369 = vmatmul.mubr.bf16.gmra.mrb[0].mxu0 %v5225
      %v5370 = vpop.f32.mrb[0].mxu0
      %v5371 = vadd.f32 %v5186, %v5370
      %v5372 = vpop.f32.mrb[0].mxu0
      %v5373 = vpop.f32.mrb[0].mxu0
      %v5374 = vadd.f32 %v5186, %v5373
      %v5375 = vpop.f32.mrb[0].mxu0
      %5376 = vmatprep.mubr.bf16.mxu0 0
      %5377 = vmatmul.mubr.bf16.gmra.mrb[0].mxu0 %v5228
      %v5378 = vpop.f32.mrb[0].mxu0
      %v5379 = vadd.f32 %v5186, %v5378
      %v5380 = vpop.f32.mrb[0].mxu0
      %v5381 = vpop.f32.mrb[0].mxu0
      %v5382 = vadd.f32 %v5186, %v5381
      %v5383 = vpop.f32.mrb[0].mxu0
      %5384 = vmatprep.mubr.bf16.mxu0 0
      %5385 = vmatmul.mubr.bf16.gmra.mrb[0].mxu0 %v5231
      %v5386 = vpop.f32.mrb[0].mxu0
      %v5387 = vadd.f32 %v5186, %v5386
      %v5388 = vpop.f32.mrb[0].mxu0
      %v5389 = vpop.f32.mrb[0].mxu0
      %v5390 = vadd.f32 %v5186, %v5389
      %v5391 = vpop.f32.mrb[0].mxu0
      %5392 = vmatprep.mubr.bf16.mxu0 0
      %5393 = vmatmul.mubr.bf16.gmra.mrb[0].mxu0 %v5234
      %v5394 = vpop.f32.mrb[0].mxu0
      %v5395 = vadd.f32 %v5186, %v5394
      %v5396 = vpop.f32.mrb[0].mxu0
      %v5397 = vpop.f32.mrb[0].mxu0
      %v5398 = vadd.f32 %v5186, %v5397
      %v5399 = vpop.f32.mrb[0].mxu0
      %5400 = vdwg.mxu0
      %5401 = vst.msk [vmem:[%s548] sm:$0xff] %vm550, %v5275
      %5402 = vst.msk [vmem:[%s548 + $0x8] sm:$0xff] %vm550, %v5278
      %5403 = vst.msk [vmem:[%s548 + $0x10] sm:$0xff] %vm550, %v5283
      %5404 = vst.msk [vmem:[%s548 + $0x18] sm:$0xff] %vm550, %v5286
      %5405 = vst.msk [vmem:[%s548 + $0x20] sm:$0xff] %vm550, %v5291
      %5406 = vst.msk [vmem:[%s548 + $0x28] sm:$0xff] %vm550, %v5294
      %5407 = vst.msk [vmem:[%s548 + $0x30] sm:$0xff] %vm550, %v5299
      %5408 = vst.msk [vmem:[%s548 + $0x38] sm:$0xff] %vm550, %v5302
      %5409 = vst.msk [vmem:[%s548 + $0x40] sm:$0xff] %vm550, %v5307
      %5410 = vst.msk [vmem:[%s548 + $0x48] sm:$0xff] %vm550, %v5310
      %5411 = vst.msk [vmem:[%s548 + $0x50] sm:$0xff] %vm550, %v5315
      %5412 = vst.msk [vmem:[%s548 + $0x58] sm:$0xff] %vm550, %v5318
      %5413 = vst.msk [vmem:[%s548 + $0x60] sm:$0xff] %vm550, %v5323
      %5414 = vst.msk [vmem:[%s548 + $0x68] sm:$0xff] %vm550, %v5326
      %5415 = vst.msk [vmem:[%s548 + $0x70] sm:$0xff] %vm550, %v5331
      %5416 = vst.msk [vmem:[%s548 + $0x78] sm:$0xff] %vm550, %v5334
      %5417 = vst.msk [vmem:[%s548 + $0x80] sm:$0xff] %vm550, %v5339
      %5418 = vst.msk [vmem:[%s548 + $0x88] sm:$0xff] %vm550, %v5342
      %5419 = vst.msk [vmem:[%s548 + $0x90] sm:$0xff] %vm550, %v5347
      %5420 = vst.msk [vmem:[%s548 + $0x98] sm:$0xff] %vm550, %v5350
      %5421 = vst.msk [vmem:[%s548 + $0xa0] sm:$0xff] %vm550, %v5355
      %5422 = vst.msk [vmem:[%s548 + $0xa8] sm:$0xff] %vm550, %v5358
      %5423 = vst.msk [vmem:[%s548 + $0xb0] sm:$0xff] %vm550, %v5363
      %5424 = vst.msk [vmem:[%s548 + $0xb8] sm:$0xff] %vm550, %v5366
      %5425 = vst.msk [vmem:[%s548 + $0xc0] sm:$0xff] %vm550, %v5371
      %5426 = vst.msk [vmem:[%s548 + $0xc8] sm:$0xff] %vm550, %v5374
      %5427 = vst.msk [vmem:[%s548 + $0xd0] sm:$0xff] %vm550, %v5379
      %5428 = vst.msk [vmem:[%s548 + $0xd8] sm:$0xff] %vm550, %v5382
      %5429 = vst.msk [vmem:[%s548 + $0xe0] sm:$0xff] %vm550, %v5387
      %5430 = vst.msk [vmem:[%s548 + $0xe8] sm:$0xff] %vm550, %v5390
      %5431 = vst.msk [vmem:[%s548 + $0xf0] sm:$0xff] %vm550, %v5395
      %5432 = vst.msk [vmem:[%s548 + $0xf8] sm:$0xff] %vm550, %v5398
      %p5433 = scmp.lt.s32.totalorder %s28, 1
      %s5434 = scalar_select %p5433, %s28, 1
      %s5435 = smul.addr %s5434, 32
      %s5436 = smul.addr %s5435, 8
      %s5437 = scalar_lea.vmem %s17, %s5436
      // Predicated region
      $region89: #{tpu_custom_call.1} parent=87 // pred_check
        %p5438 = pneg %p408
      $region90: #{tpu_custom_call.1} parent=87 // pred_check_branch
        %5440 = sbr.rel (%p5438) target = $region92
      $region91: #{tpu_custom_call.1} parent=87 // pred_region
        _
      $region92: #{tpu_custom_call.1} parent=87 // pred_fallthru
        _
    $region88: #{tpu_custom_call.1} parent=5 // pred_fallthru
      _
    %p5441 = scmp.le.s32.totalorder 2, %s23
    // Predicated region
    $region93: #{tpu_custom_call.1} parent=5 // pred_check
      %p5442 = pneg %p5441
    $region94: #{tpu_custom_call.1} parent=5 // pred_check_branch
      %5444 = sbr.rel (%p5442) target = $region96
    $region95: #{tpu_custom_call.1} parent=5 // pred_region
      %s5445 = ssub.s32 %s23, 2
      // Predicated region
      $region97: #{tpu_custom_call.1} parent=95 // pred_check
        %p5446 = pneg %p414
      $region98: #{tpu_custom_call.1} parent=95 // pred_check_branch
        %5448 = sbr.rel (%p5446) target = $region100
      $region99: #{tpu_custom_call.1} parent=95 // pred_region
        %p5449 = scmp.lt.s32.totalorder %s29, 1
        %s5450 = scalar_select %p5449, %s29, 1
        %s5451 = smul.addr %s5450, 32
        %s5452 = smul.addr %s5451, 8
        %s5453 = scalar_lea.vmem %s17, %s5452
      $region100: #{tpu_custom_call.1} parent=95 // pred_fallthru
        _
    $region96: #{tpu_custom_call.1} parent=5 // pred_fallthru
      _
  $region6: #{tpu_custom_call.1} parent=0 // loop_footer
    %s27 = sadd.s32 1, %s23
  $region7: #{tpu_custom_call.1} parent=0 // loop_footer_branch
    %22 = sbr.rel target = $region3
  $region8: #{tpu_custom_call.1} parent=0 // loop_exit
    _

</llo_original>
